<compile_context>
chip_gen: v6e
topology: v6e:2x2x1
jax: 0.10.0
libtpu: 0.0.40
codegen_flags: <defaults>
</compile_context>

<pallas_src>
import functools

import jax
import jax.numpy as jnp
from jax.experimental import pallas as pl
from jax.experimental.pallas import tpu as pltpu


# ---------------------------------------------------------------------------
# Pallas kernels
# ---------------------------------------------------------------------------

def _mm_bias_kernel(a_ref, w_ref, b_ref, o_ref, *, relu):
    # a: (TM, K) bf16, w: (K, Cout) bf16, b: (1, Cout) f32 -> o: (TM, Cout) bf16
    acc = jnp.dot(a_ref[...], w_ref[...], preferred_element_type=jnp.float32)
    acc = acc + b_ref[...]
    if relu:
        acc = jnp.maximum(acc, 0.0)
    o_ref[...] = acc.astype(o_ref.dtype)


def _fire_expand_kernel(x_ref, w1_ref, w3_ref, b1_ref, b3_ref, o_ref, *, wp):
    # x_ref : (Hp*Wp + pad, Cs)  flattened zero-padded squeeze activation (one image)
    # w1_ref: (Cs, E1)           expand1x1 weights
    # w3_ref: (9, Cs, E3)        expand3x3 weights (tap-major: k = dy*3 + dx)
    # o_ref : (L, E1+E3) with L = H*Wp  ("wide" rows; the 2 invalid wrap columns per row are
    #                                    cropped by the caller)
    L = o_ref.shape[0]
    # expand1x1: the window-center tap lives at flat offset Wp + 1
    a1 = jnp.dot(x_ref[pl.ds(wp + 1, L), :], w1_ref[...],
                 preferred_element_type=jnp.float32) + b1_ref[...]
    # expand3x3: nine shifted taps accumulated on the MXU (im2col stays in VMEM)
    a3 = jnp.dot(x_ref[pl.ds(0, L), :], w3_ref[0],
                 preferred_element_type=jnp.float32)
    for k in range(1, 9):
        off = (k // 3) * wp + (k % 3)
        a3 = a3 + jnp.dot(x_ref[pl.ds(off, L), :], w3_ref[k],
                          preferred_element_type=jnp.float32)
    a3 = a3 + b3_ref[...]
    # ReLU + channel concat (single lane-dense store of 128/256/384/512 channels)
    out = jnp.maximum(jnp.concatenate([a1, a3], axis=-1), 0.0)
    o_ref[...] = out.astype(o_ref.dtype)


def _pool3x3_wide_kernel(x_ref, o_ref, *, relu):
    # x_ref: (Hp, Wp, C) one image / channel block; o_ref: (Hp-2, Wp-2, C) = stride-1 window maxima
    hv = o_ref.shape[0]
    wv = o_ref.shape[1]
    a = jnp.maximum(jnp.maximum(x_ref[0:hv], x_ref[1:hv + 1]), x_ref[2:hv + 2])
    m = jnp.maximum(jnp.maximum(a[:, 0:wv, :], a[:, 1:wv + 1, :]), a[:, 2:wv + 2, :])
    if relu:                      # fused ReLU of the pool INPUT (max is monotone)
        m = jnp.maximum(m, 0.0)
    o_ref[...] = m.astype(o_ref.dtype)


# ---------------------------------------------------------------------------
# Wrappers
# ---------------------------------------------------------------------------

def _matmul_bias(a, w, b, *, relu, tm=256):
    # a: (M, K) bf16, w: (K, Cout) bf16, b: (Cout,) f32 -> (M, Cout) bf16
    M, K = a.shape
    Cout = w.shape[1]
    tm = M if M <= tm else tm          # single full block for small M; ragged last tile otherwise
    return pl.pallas_call(
        functools.partial(_mm_bias_kernel, relu=relu),
        out_shape=jax.ShapeDtypeStruct((M, Cout), jnp.bfloat16),
        grid=(pl.cdiv(M, tm),),
        in_specs=[
            pl.BlockSpec((tm, K), lambda i: (i, 0)),
            pl.BlockSpec((K, Cout), lambda i: (0, 0)),
            pl.BlockSpec((1, Cout), lambda i: (0, 0)),
        ],
        out_specs=pl.BlockSpec((tm, Cout), lambda i: (i, 0)),
        compiler_params=pltpu.CompilerParams(dimension_semantics=("parallel",)),
    )(a, w, b.reshape(1, Cout).astype(jnp.float32))


def conv1_3x3_s2(x, w, b):
    # Conv2d(3, 64, kernel_size=3, stride=2), no padding, PRE-ReLU output.
    # x: (N, H, W, 3) bf16; w: (27, 64) bf16 (dy, dx, cin - major); b: (64,) f32.
    N, H, W, Cin = x.shape
    Ho = (H - 3) // 2 + 1
    Wo = (W - 3) // 2 + 1
    cols = []
    for dy in range(3):
        for dx in range(3):
            cols.append(x[:, dy:dy + 2 * Ho:2, dx:dx + 2 * Wo:2, :])
    a = jnp.concatenate(cols, axis=-1).reshape(N * Ho * Wo, 9 * Cin)
    out = _matmul_bias(a, w, b, relu=False)
    return out.reshape(N, Ho, Wo, w.shape[1])


_TAIL_PAD = 8  # spare flat rows so all nine shifted taps stay in-bounds


def _fire_expand(s, w1, w3, b1, b3):
    # Fused expand1x1 + expand3x3 (+ ReLU + channel concat) of a Fire module.
    # s: (N, H, W, Cs) post-ReLU squeeze activation, bf16.
    N, H, W, Cs = s.shape
    E1, E3 = w1.shape[1], w3.shape[2]
    Hp, Wp = H + 2, W + 2
    L = H * Wp
    flat = jnp.pad(s, ((0, 0), (1, 1), (1, 1), (0, 0))).reshape(N, Hp * Wp, Cs)
    flat = jnp.pad(flat, ((0, 0), (0, _TAIL_PAD), (0, 0)))
    wide = pl.pallas_call(
        functools.partial(_fire_expand_kernel, wp=Wp),
        out_shape=jax.ShapeDtypeStruct((N, L, E1 + E3), jnp.bfloat16),
        grid=(N,),
        in_specs=[
            pl.BlockSpec((None, Hp * Wp + _TAIL_PAD, Cs), lambda n: (n, 0, 0)),
            pl.BlockSpec((Cs, E1), lambda n: (0, 0)),
            pl.BlockSpec((9, Cs, E3), lambda n: (0, 0, 0)),
            pl.BlockSpec((1, E1), lambda n: (0, 0)),
            pl.BlockSpec((1, E3), lambda n: (0, 0)),
        ],
        out_specs=pl.BlockSpec((None, L, E1 + E3), lambda n: (n, 0, 0)),
        compiler_params=pltpu.CompilerParams(dimension_semantics=("parallel",)),
    )(flat, w1, w3, b1, b3)
    # drop the two invalid "wrap" columns per output row
    return wide.reshape(N, H, Wp, E1 + E3)[:, :, :W, :]


def fire(x, p):
    # squeeze (1x1, ReLU) -> fused expand1x1/expand3x3 (ReLU, concat)
    N, H, W, Cin = x.shape
    sq = _matmul_bias(x.reshape(N * H * W, Cin), p['w_sq'], p['b_sq'], relu=True)
    sq = sq.reshape(N, H, W, p['w_sq'].shape[1])
    return _fire_expand(sq, p['w_e1'], p['w_e3'], p['b_e1'], p['b_e3'])


def maxpool_3x3_s2_ceil(x, *, relu=False):
    # PyTorch MaxPool2d(kernel_size=3, stride=2, ceil_mode=True); optional fused ReLU of the input.
    N, H, W, C = x.shape
    Ho = -(-(H - 3) // 2) + 1
    Wo = -(-(W - 3) // 2) + 1
    Hp = max(H, 2 * Ho + 1)
    Wp = max(W, 2 * Wo + 1)
    if Hp > H or Wp > W:
        x = jnp.pad(x, ((0, 0), (0, Hp - H), (0, Wp - W), (0, 0)),
                    constant_values=-jnp.inf)
    Hv, Wv = Hp - 2, Wp - 2
    cb = C if C < 128 else 128
    wide = pl.pallas_call(
        functools.partial(_pool3x3_wide_kernel, relu=relu),
        out_shape=jax.ShapeDtypeStruct((N, Hv, Wv, C), x.dtype),
        grid=(N, C // cb),
        in_specs=[pl.BlockSpec((None, Hp, Wp, cb), lambda n, c: (n, 0, 0, c))],
        out_specs=pl.BlockSpec((None, Hv, Wv, cb), lambda n, c: (n, 0, 0, c)),
        compiler_params=pltpu.CompilerParams(
            dimension_semantics=("parallel", "parallel")),
    )(x)
    # stride-2 subsample of the dense window maxima (cheap XLA slice)
    return wide[:, 0:2 * Ho - 1:2, 0:2 * Wo - 1:2, :]


# ---------------------------------------------------------------------------
# SqueezeNet 1.1 parameters (deterministic synthetic init)
# ---------------------------------------------------------------------------

_FIRE_CFG = {
    # name: (cin, squeeze, expand1x1, expand3x3)   -- SqueezeNet 1.1
    'fire3': (64, 16, 64, 64),
    'fire4': (128, 16, 64, 64),
    'fire6': (128, 32, 128, 128),
    'fire7': (256, 32, 128, 128),
    'fire9': (256, 48, 192, 192),
    'fire10': (384, 48, 192, 192),
    'fire11': (384, 64, 256, 256),
    'fire12': (512, 64, 256, 256),
}


def _conv_init(key, kh, kw, cin, cout):
    kw_, kb_ = jax.random.split(key)
    w = jax.random.normal(kw_, (kh, kw, cin, cout), jnp.float32) * 0.05
    b = jax.random.normal(kb_, (cout,), jnp.float32) * 0.01
    return w.astype(jnp.bfloat16), b


def init_params(key):
    # TODO(synk): torchvision pretrained SqueezeNet1.1 weights are not bundled; deterministic
    # synthetic parameters with identical shapes are used instead.
    params = {}
    key, sub = jax.random.split(key)
    w, b = _conv_init(sub, 3, 3, 3, 64)
    params['conv1_w'] = w.reshape(27, 64)          # (kh*kw*Cin, Cout), matches im2col ordering
    params['conv1_b'] = b
    for name, (cin, sq, e1, e3) in _FIRE_CFG.items():
        key, k1, k2, k3 = jax.random.split(key, 4)
        wsq, bsq = _conv_init(k1, 1, 1, cin, sq)
        we1, be1 = _conv_init(k2, 1, 1, sq, e1)
        we3, be3 = _conv_init(k3, 3, 3, sq, e3)
        params[name] = {
            'w_sq': wsq.reshape(cin, sq), 'b_sq': bsq,
            'w_e1': we1.reshape(sq, e1),
            'w_e3': we3.reshape(9, sq, e3),
            'b_e1': be1.reshape(1, e1),
            'b_e3': be3.reshape(1, e3),
        }
    return params


# ---------------------------------------------------------------------------
# LightWeight_feat.forward  (SqueezeNet 1.1, sel_feat_layer={0,4,7,12}, sel_layer=4)
# ---------------------------------------------------------------------------

def lightweight_feat_forward(x_nchw, params):
    x = jnp.transpose(x_nchw, (0, 2, 3, 1)).astype(jnp.bfloat16)   # NCHW -> NHWC, bf16
    feat = []

    # features[0]: Conv2d(3, 64, k=3, s=2)   (feature captured pre-ReLU, ii == 0)
    x = conv1_3x3_s2(x, params['conv1_w'], params['conv1_b'])
    feat.append(x)
    # features[1] ReLU + features[2] MaxPool2d(3, 2, ceil_mode=True)  (ReLU fused into the pool)
    x = maxpool_3x3_s2_ceil(x, relu=True)
    # features[3], features[4]
    x = fire(x, params['fire3'])
    x = fire(x, params['fire4'])
    feat.append(x)                                  # ii == 4
    # features[5]
    x = maxpool_3x3_s2_ceil(x)
    # features[6], features[7]
    x = fire(x, params['fire6'])
    x = fire(x, params['fire7'])
    feat.append(x)                                  # ii == 7
    # features[8]
    x = maxpool_3x3_s2_ceil(x)
    # features[9..12]
    x = fire(x, params['fire9'])
    x = fire(x, params['fire10'])
    x = fire(x, params['fire11'])
    x = fire(x, params['fire12'])
    feat.append(x)                                  # ii == 12 -> len(feat) == 4 -> return

    to_nchw = lambda t: jnp.transpose(t.astype(jnp.float32), (0, 3, 1, 2))
    return to_nchw(x), [to_nchw(f) for f in feat]


# ---------------------------------------------------------------------------

if __name__ == "__main__":
    key = jax.random.PRNGKey(0)
    key, pkey, xkey = jax.random.split(key, 3)
    params = init_params(pkey)

    # small RGB input (the real module uses 224x224x3; 32x32x3 keeps all shapes valid)
    x = jax.random.normal(xkey, (2, 3, 32, 32), jnp.float32)  # NCHW, like PyTorch

    fwd = jax.jit(lightweight_feat_forward)
    out, feats = fwd(x, params)
    out = jax.block_until_ready(out)
    feats = [jax.block_until_ready(f) for f in feats]

    # sanity: feat shapes follow SqueezeNet 1.1 with a 32x32 input
    assert feats[0].shape == (2, 64, 15, 15)
    assert feats[1].shape == (2, 128, 7, 7)
    assert feats[2].shape == (2, 256, 3, 3)
    assert feats[3].shape == (2, 512, 1, 1)
    assert out.shape == feats[3].shape
    assert bool(jnp.all(jnp.isfinite(out)))

    print("KERNEL_OK")
</pallas_src>

<mosaic_0001>
module attributes {stable_mosaic.version = 11 : i64} {
  func.func @_mm_bias_kernel(%arg0: i32, %arg1: memref<256x27xbf16, #tpu.memory_space<vmem>>, %arg2: memref<27x64xbf16, #tpu.memory_space<vmem>>, %arg3: memref<1x64xf32, #tpu.memory_space<vmem>>, %arg4: memref<256x64xbf16, #tpu.memory_space<vmem>>) attributes {dimension_semantics = [#tpu.dimension_semantics<parallel>], iteration_bounds = array<i64: 2>, scalar_prefetch = 0 : i64, scratch_operands = 0 : i64, tpu.core_type = #tpu.core_type<tc>, window_params = [{transform_indices = @transform_0, window_bounds = array<i64: 256, 27>}, {pipeline_mode = #tpu.pipeline_mode<synchronous>, transform_indices = @transform_1, window_bounds = array<i64: 27, 64>}, {pipeline_mode = #tpu.pipeline_mode<synchronous>, transform_indices = @transform_2, window_bounds = array<i64: 1, 64>}, {transform_indices = @transform_3, window_bounds = array<i64: 256, 64>}]} {
    %c0 = arith.constant 0 : index
    %c0_0 = arith.constant 0 : index
    %0 = vector.load %arg1[%c0, %c0_0] : memref<256x27xbf16, #tpu.memory_space<vmem>>, vector<256x27xbf16>
    %c0_1 = arith.constant 0 : index
    %c0_2 = arith.constant 0 : index
    %1 = vector.load %arg2[%c0_1, %c0_2] : memref<27x64xbf16, #tpu.memory_space<vmem>>, vector<27x64xbf16>
    %cst = arith.constant dense<0.000000e+00> : vector<256x64xf32>
    %2 = tpu.matmul %0, %1, %cst {dimension_numbers = #tpu.dot_dimension_numbers<[1], [0], [0], [1], [0, 0, 1, 1], [], []>} : vector<256x27xbf16>, vector<27x64xbf16>, vector<256x64xf32> -> vector<256x64xf32>
    %c0_3 = arith.constant 0 : index
    %c0_4 = arith.constant 0 : index
    %3 = vector.load %arg3[%c0_3, %c0_4] : memref<1x64xf32, #tpu.memory_space<vmem>>, vector<1x64xf32>
    %4 = vector.broadcast %3 : vector<1x64xf32> to vector<256x64xf32>
    %5 = arith.addf %2, %4 : vector<256x64xf32>
    %6 = arith.truncf %5 : vector<256x64xf32> to vector<256x64xbf16>
    %c0_5 = arith.constant 0 : index
    %c0_6 = arith.constant 0 : index
    %7 = vector.load %arg4[%c0_5, %c0_6] : memref<256x64xbf16, #tpu.memory_space<vmem>>, vector<256x64xbf16>
    tpu.vector_store %arg4[%c0_5, %c0_6], %6 {strides = array<i32>} : memref<256x64xbf16, #tpu.memory_space<vmem>>, vector<256x64xbf16>,
    return
  }
  func.func @transform_0(%arg0: i32) -> (i32, i32) {
    %c0_i32 = arith.constant 0 : i32
    %c0_i32_0 = arith.constant 0 : i32
    return %arg0, %c0_i32 : i32, i32
  }
  func.func @transform_1(%arg0: i32) -> (i32, i32) {
    %c0_i32 = arith.constant 0 : i32
    %c0_i32_0 = arith.constant 0 : i32
    %c0_i32_1 = arith.constant 0 : i32
    return %c0_i32, %c0_i32_0 : i32, i32
  }
  func.func @transform_2(%arg0: i32) -> (i32, i32) {
    %c0_i32 = arith.constant 0 : i32
    %c0_i32_0 = arith.constant 0 : i32
    %c0_i32_1 = arith.constant 0 : i32
    return %c0_i32, %c0_i32_0 : i32, i32
  }
  func.func @transform_3(%arg0: i32) -> (i32, i32) {
    %c0_i32 = arith.constant 0 : i32
    %c0_i32_0 = arith.constant 0 : i32
    return %arg0, %c0_i32 : i32, i32
  }
}

module attributes {stable_mosaic.version = 11 : i64} {
  func.func @_pool3x3_wide_kernel(%arg0: i32, %arg1: i32, %arg2: memref<1x15x15x64xbf16, #tpu.memory_space<vmem>>, %arg3: memref<1x13x13x64xbf16, #tpu.memory_space<vmem>>) attributes {dimension_semantics = [#tpu.dimension_semantics<parallel>, #tpu.dimension_semantics<parallel>], iteration_bounds = array<i64: 2, 1>, scalar_prefetch = 0 : i64, scratch_operands = 0 : i64, tpu.core_type = #tpu.core_type<tc>, window_params = [{transform_indices = @transform_0, window_bounds = array<i64: 1, 15, 15, 64>}, {transform_indices = @transform_1, window_bounds = array<i64: 1, 13, 13, 64>}]} {
    %c0 = arith.constant 0 : index
    %c0_0 = arith.constant 0 : index
    %c0_1 = arith.constant 0 : index
    %c0_2 = arith.constant 0 : index
    %0 = vector.load %arg2[%c0, %c0_0, %c0_1, %c0_2] : memref<1x15x15x64xbf16, #tpu.memory_space<vmem>>, vector<1x13x15x64xbf16>
    %1 = vector.shape_cast %0 : vector<1x13x15x64xbf16> to vector<13x15x64xbf16>
    %c0_3 = arith.constant 0 : index
    %c1 = arith.constant 1 : index
    %c0_4 = arith.constant 0 : index
    %c0_5 = arith.constant 0 : index
    %2 = vector.load %arg2[%c0_3, %c1, %c0_4, %c0_5] : memref<1x15x15x64xbf16, #tpu.memory_space<vmem>>, vector<1x13x15x64xbf16>
    %3 = vector.shape_cast %2 : vector<1x13x15x64xbf16> to vector<13x15x64xbf16>
    %4 = arith.maximumf %1, %3 : vector<13x15x64xbf16>
    %c0_6 = arith.constant 0 : index
    %c2 = arith.constant 2 : index
    %c0_7 = arith.constant 0 : index
    %c0_8 = arith.constant 0 : index
    %5 = vector.load %arg2[%c0_6, %c2, %c0_7, %c0_8] : memref<1x15x15x64xbf16, #tpu.memory_space<vmem>>, vector<1x13x15x64xbf16>
    %6 = vector.shape_cast %5 : vector<1x13x15x64xbf16> to vector<13x15x64xbf16>
    %7 = arith.maximumf %4, %6 : vector<13x15x64xbf16>
    %8 = vector.extract_strided_slice %7 {offsets = [0, 0, 0], sizes = [13, 13, 64], strides = [1, 1, 1]} : vector<13x15x64xbf16> to vector<13x13x64xbf16>
    %9 = vector.extract_strided_slice %7 {offsets = [0, 1, 0], sizes = [13, 13, 64], strides = [1, 1, 1]} : vector<13x15x64xbf16> to vector<13x13x64xbf16>
    %10 = arith.maximumf %8, %9 : vector<13x13x64xbf16>
    %11 = vector.extract_strided_slice %7 {offsets = [0, 2, 0], sizes = [13, 13, 64], strides = [1, 1, 1]} : vector<13x15x64xbf16> to vector<13x13x64xbf16>
    %12 = arith.maximumf %10, %11 : vector<13x13x64xbf16>
    %cst = arith.constant 0.000000e+00 : bf16
    %13 = vector.broadcast %cst : bf16 to vector<13x13x64xbf16>
    %14 = arith.maximumf %12, %13 : vector<13x13x64xbf16>
    %c0_9 = arith.constant 0 : index
    %c0_10 = arith.constant 0 : index
    %c0_11 = arith.constant 0 : index
    %c0_12 = arith.constant 0 : index
    %15 = vector.load %arg3[%c0_9, %c0_10, %c0_11, %c0_12] : memref<1x13x13x64xbf16, #tpu.memory_space<vmem>>, vector<1x13x13x64xbf16>
    %16 = vector.shape_cast %15 : vector<1x13x13x64xbf16> to vector<13x13x64xbf16>
    %17 = vector.shape_cast %14 : vector<13x13x64xbf16> to vector<1x13x13x64xbf16>
    tpu.vector_store %arg3[%c0_9, %c0_10, %c0_11, %c0_12], %17 {strides = array<i32>} : memref<1x13x13x64xbf16, #tpu.memory_space<vmem>>, vector<1x13x13x64xbf16>,
    return
  }
  func.func @transform_0(%arg0: i32, %arg1: i32) -> (i32, i32, i32, i32) {
    %c0_i32 = arith.constant 0 : i32
    %c0_i32_0 = arith.constant 0 : i32
    %c0_i32_1 = arith.constant 0 : i32
    return %arg0, %c0_i32, %c0_i32_0, %arg1 : i32, i32, i32, i32
  }
  func.func @transform_1(%arg0: i32, %arg1: i32) -> (i32, i32, i32, i32) {
    %c0_i32 = arith.constant 0 : i32
    %c0_i32_0 = arith.constant 0 : i32
    %c0_i32_1 = arith.constant 0 : i32
    return %arg0, %c0_i32, %c0_i32_0, %arg1 : i32, i32, i32, i32
  }
}

module attributes {stable_mosaic.version = 11 : i64} {
  func.func @_mm_bias_kernel(%arg0: i32, %arg1: memref<98x64xbf16, #tpu.memory_space<vmem>>, %arg2: memref<64x16xbf16, #tpu.memory_space<vmem>>, %arg3: memref<1x16xf32, #tpu.memory_space<vmem>>, %arg4: memref<98x16xbf16, #tpu.memory_space<vmem>>) attributes {dimension_semantics = [#tpu.dimension_semantics<parallel>], iteration_bounds = array<i64: 1>, scalar_prefetch = 0 : i64, scratch_operands = 0 : i64, tpu.core_type = #tpu.core_type<tc>, window_params = [{transform_indices = @transform_0, window_bounds = array<i64: 98, 64>}, {pipeline_mode = #tpu.pipeline_mode<synchronous>, transform_indices = @transform_1, window_bounds = array<i64: 64, 16>}, {pipeline_mode = #tpu.pipeline_mode<synchronous>, transform_indices = @transform_2, window_bounds = array<i64: 1, 16>}, {transform_indices = @transform_3, window_bounds = array<i64: 98, 16>}]} {
    %c0 = arith.constant 0 : index
    %c0_0 = arith.constant 0 : index
    %0 = vector.load %arg1[%c0, %c0_0] : memref<98x64xbf16, #tpu.memory_space<vmem>>, vector<98x64xbf16>
    %c0_1 = arith.constant 0 : index
    %c0_2 = arith.constant 0 : index
    %1 = vector.load %arg2[%c0_1, %c0_2] : memref<64x16xbf16, #tpu.memory_space<vmem>>, vector<64x16xbf16>
    %cst = arith.constant dense<0.000000e+00> : vector<98x16xf32>
    %2 = tpu.matmul %0, %1, %cst {dimension_numbers = #tpu.dot_dimension_numbers<[1], [0], [0], [1], [0, 0, 1, 1], [], []>} : vector<98x64xbf16>, vector<64x16xbf16>, vector<98x16xf32> -> vector<98x16xf32>
    %c0_3 = arith.constant 0 : index
    %c0_4 = arith.constant 0 : index
    %3 = vector.load %arg3[%c0_3, %c0_4] : memref<1x16xf32, #tpu.memory_space<vmem>>, vector<1x16xf32>
    %4 = vector.broadcast %3 : vector<1x16xf32> to vector<98x16xf32>
    %5 = arith.addf %2, %4 : vector<98x16xf32>
    %cst_5 = arith.constant 0.000000e+00 : f32
    %6 = vector.broadcast %cst_5 : f32 to vector<98x16xf32>
    %7 = arith.maximumf %5, %6 : vector<98x16xf32>
    %8 = arith.truncf %7 : vector<98x16xf32> to vector<98x16xbf16>
    %c0_6 = arith.constant 0 : index
    %c0_7 = arith.constant 0 : index
    %9 = vector.load %arg4[%c0_6, %c0_7] : memref<98x16xbf16, #tpu.memory_space<vmem>>, vector<98x16xbf16>
    tpu.vector_store %arg4[%c0_6, %c0_7], %8 {strides = array<i32>} : memref<98x16xbf16, #tpu.memory_space<vmem>>, vector<98x16xbf16>,
    return
  }
  func.func @transform_0(%arg0: i32) -> (i32, i32) {
    %c0_i32 = arith.constant 0 : i32
    %c0_i32_0 = arith.constant 0 : i32
    return %arg0, %c0_i32 : i32, i32
  }
  func.func @transform_1(%arg0: i32) -> (i32, i32) {
    %c0_i32 = arith.constant 0 : i32
    %c0_i32_0 = arith.constant 0 : i32
    %c0_i32_1 = arith.constant 0 : i32
    return %c0_i32, %c0_i32_0 : i32, i32
  }
  func.func @transform_2(%arg0: i32) -> (i32, i32) {
    %c0_i32 = arith.constant 0 : i32
    %c0_i32_0 = arith.constant 0 : i32
    %c0_i32_1 = arith.constant 0 : i32
    return %c0_i32, %c0_i32_0 : i32, i32
  }
  func.func @transform_3(%arg0: i32) -> (i32, i32) {
    %c0_i32 = arith.constant 0 : i32
    %c0_i32_0 = arith.constant 0 : i32
    return %arg0, %c0_i32 : i32, i32
  }
}

module attributes {stable_mosaic.version = 11 : i64} {
  func.func @_fire_expand_kernel(%arg0: i32, %arg1: memref<1x89x16xbf16, #tpu.memory_space<vmem>>, %arg2: memref<16x64xbf16, #tpu.memory_space<vmem>>, %arg3: memref<9x16x64xbf16, #tpu.memory_space<vmem>>, %arg4: memref<1x64xf32, #tpu.memory_space<vmem>>, %arg5: memref<1x64xf32, #tpu.memory_space<vmem>>, %arg6: memref<1x63x128xbf16, #tpu.memory_space<vmem>>) attributes {dimension_semantics = [#tpu.dimension_semantics<parallel>], iteration_bounds = array<i64: 2>, scalar_prefetch = 0 : i64, scratch_operands = 0 : i64, tpu.core_type = #tpu.core_type<tc>, window_params = [{transform_indices = @transform_0, window_bounds = array<i64: 1, 89, 16>}, {pipeline_mode = #tpu.pipeline_mode<synchronous>, transform_indices = @transform_1, window_bounds = array<i64: 16, 64>}, {pipeline_mode = #tpu.pipeline_mode<synchronous>, transform_indices = @transform_2, window_bounds = array<i64: 9, 16, 64>}, {pipeline_mode = #tpu.pipeline_mode<synchronous>, transform_indices = @transform_3, window_bounds = array<i64: 1, 64>}, {pipeline_mode = #tpu.pipeline_mode<synchronous>, transform_indices = @transform_4, window_bounds = array<i64: 1, 64>}, {transform_indices = @transform_5, window_bounds = array<i64: 1, 63, 128>}]} {
    %c0 = arith.constant 0 : index
    %c10 = arith.constant 10 : index
    %c0_0 = arith.constant 0 : index
    %0 = vector.load %arg1[%c0, %c10, %c0_0] : memref<1x89x16xbf16, #tpu.memory_space<vmem>>, vector<1x63x16xbf16>
    %1 = vector.shape_cast %0 : vector<1x63x16xbf16> to vector<63x16xbf16>
    %c0_1 = arith.constant 0 : index
    %c0_2 = arith.constant 0 : index
    %2 = vector.load %arg2[%c0_1, %c0_2] : memref<16x64xbf16, #tpu.memory_space<vmem>>, vector<16x64xbf16>
    %cst = arith.constant dense<0.000000e+00> : vector<63x64xf32>
    %3 = tpu.matmul %1, %2, %cst {dimension_numbers = #tpu.dot_dimension_numbers<[1], [0], [0], [1], [0, 0, 1, 1], [], []>} : vector<63x16xbf16>, vector<16x64xbf16>, vector<63x64xf32> -> vector<63x64xf32>
    %c0_3 = arith.constant 0 : index
    %c0_4 = arith.constant 0 : index
    %4 = vector.load %arg4[%c0_3, %c0_4] : memref<1x64xf32, #tpu.memory_space<vmem>>, vector<1x64xf32>
    %5 = vector.broadcast %4 : vector<1x64xf32> to vector<63x64xf32>
    %6 = arith.addf %3, %5 : vector<63x64xf32>
    %c0_5 = arith.constant 0 : index
    %c0_6 = arith.constant 0 : index
    %c0_7 = arith.constant 0 : index
    %7 = vector.load %arg1[%c0_5, %c0_6, %c0_7] : memref<1x89x16xbf16, #tpu.memory_space<vmem>>, vector<1x63x16xbf16>
    %8 = vector.shape_cast %7 : vector<1x63x16xbf16> to vector<63x16xbf16>
    %c0_8 = arith.constant 0 : index
    %c0_9 = arith.constant 0 : index
    %c0_10 = arith.constant 0 : index
    %9 = vector.load %arg3[%c0_8, %c0_9, %c0_10] : memref<9x16x64xbf16, #tpu.memory_space<vmem>>, vector<1x16x64xbf16>
    %10 = vector.shape_cast %9 : vector<1x16x64xbf16> to vector<16x64xbf16>
    %cst_11 = arith.constant dense<0.000000e+00> : vector<63x64xf32>
    %11 = tpu.matmul %8, %10, %cst_11 {dimension_numbers = #tpu.dot_dimension_numbers<[1], [0], [0], [1], [0, 0, 1, 1], [], []>} : vector<63x16xbf16>, vector<16x64xbf16>, vector<63x64xf32> -> vector<63x64xf32>
    %c0_12 = arith.constant 0 : index
    %c1 = arith.constant 1 : index
    %c0_13 = arith.constant 0 : index
    %12 = vector.load %arg1[%c0_12, %c1, %c0_13] : memref<1x89x16xbf16, #tpu.memory_space<vmem>>, vector<1x63x16xbf16>
    %13 = vector.shape_cast %12 : vector<1x63x16xbf16> to vector<63x16xbf16>
    %c1_14 = arith.constant 1 : index
    %c0_15 = arith.constant 0 : index
    %c0_16 = arith.constant 0 : index
    %14 = vector.load %arg3[%c1_14, %c0_15, %c0_16] : memref<9x16x64xbf16, #tpu.memory_space<vmem>>, vector<1x16x64xbf16>
    %15 = vector.shape_cast %14 : vector<1x16x64xbf16> to vector<16x64xbf16>
    %cst_17 = arith.constant dense<0.000000e+00> : vector<63x64xf32>
    %16 = tpu.matmul %13, %15, %cst_17 {dimension_numbers = #tpu.dot_dimension_numbers<[1], [0], [0], [1], [0, 0, 1, 1], [], []>} : vector<63x16xbf16>, vector<16x64xbf16>, vector<63x64xf32> -> vector<63x64xf32>
    %17 = arith.addf %11, %16 : vector<63x64xf32>
    %c0_18 = arith.constant 0 : index
    %c2 = arith.constant 2 : index
    %c0_19 = arith.constant 0 : index
    %18 = vector.load %arg1[%c0_18, %c2, %c0_19] : memref<1x89x16xbf16, #tpu.memory_space<vmem>>, vector<1x63x16xbf16>
    %19 = vector.shape_cast %18 : vector<1x63x16xbf16> to vector<63x16xbf16>
    %c2_20 = arith.constant 2 : index
    %c0_21 = arith.constant 0 : index
    %c0_22 = arith.constant 0 : index
    %20 = vector.load %arg3[%c2_20, %c0_21, %c0_22] : memref<9x16x64xbf16, #tpu.memory_space<vmem>>, vector<1x16x64xbf16>
    %21 = vector.shape_cast %20 : vector<1x16x64xbf16> to vector<16x64xbf16>
    %cst_23 = arith.constant dense<0.000000e+00> : vector<63x64xf32>
    %22 = tpu.matmul %19, %21, %cst_23 {dimension_numbers = #tpu.dot_dimension_numbers<[1], [0], [0], [1], [0, 0, 1, 1], [], []>} : vector<63x16xbf16>, vector<16x64xbf16>, vector<63x64xf32> -> vector<63x64xf32>
    %23 = arith.addf %17, %22 : vector<63x64xf32>
    %c0_24 = arith.constant 0 : index
    %c9 = arith.constant 9 : index
    %c0_25 = arith.constant 0 : index
    %24 = vector.load %arg1[%c0_24, %c9, %c0_25] : memref<1x89x16xbf16, #tpu.memory_space<vmem>>, vector<1x63x16xbf16>
    %25 = vector.shape_cast %24 : vector<1x63x16xbf16> to vector<63x16xbf16>
    %c3 = arith.constant 3 : index
    %c0_26 = arith.constant 0 : index
    %c0_27 = arith.constant 0 : index
    %26 = vector.load %arg3[%c3, %c0_26, %c0_27] : memref<9x16x64xbf16, #tpu.memory_space<vmem>>, vector<1x16x64xbf16>
    %27 = vector.shape_cast %26 : vector<1x16x64xbf16> to vector<16x64xbf16>
    %cst_28 = arith.constant dense<0.000000e+00> : vector<63x64xf32>
    %28 = tpu.matmul %25, %27, %cst_28 {dimension_numbers = #tpu.dot_dimension_numbers<[1], [0], [0], [1], [0, 0, 1, 1], [], []>} : vector<63x16xbf16>, vector<16x64xbf16>, vector<63x64xf32> -> vector<63x64xf32>
    %29 = arith.addf %23, %28 : vector<63x64xf32>
    %c0_29 = arith.constant 0 : index
    %c10_30 = arith.constant 10 : index
    %c0_31 = arith.constant 0 : index
    %30 = vector.load %arg1[%c0_29, %c10_30, %c0_31] : memref<1x89x16xbf16, #tpu.memory_space<vmem>>, vector<1x63x16xbf16>
    %31 = vector.shape_cast %30 : vector<1x63x16xbf16> to vector<63x16xbf16>
    %c4 = arith.constant 4 : index
    %c0_32 = arith.constant 0 : index
    %c0_33 = arith.constant 0 : index
    %32 = vector.load %arg3[%c4, %c0_32, %c0_33] : memref<9x16x64xbf16, #tpu.memory_space<vmem>>, vector<1x16x64xbf16>
    %33 = vector.shape_cast %32 : vector<1x16x64xbf16> to vector<16x64xbf16>
    %cst_34 = arith.constant dense<0.000000e+00> : vector<63x64xf32>
    %34 = tpu.matmul %31, %33, %cst_34 {dimension_numbers = #tpu.dot_dimension_numbers<[1], [0], [0], [1], [0, 0, 1, 1], [], []>} : vector<63x16xbf16>, vector<16x64xbf16>, vector<63x64xf32> -> vector<63x64xf32>
    %35 = arith.addf %29, %34 : vector<63x64xf32>
    %c0_35 = arith.constant 0 : index
    %c11 = arith.constant 11 : index
    %c0_36 = arith.constant 0 : index
    %36 = vector.load %arg1[%c0_35, %c11, %c0_36] : memref<1x89x16xbf16, #tpu.memory_space<vmem>>, vector<1x63x16xbf16>
    %37 = vector.shape_cast %36 : vector<1x63x16xbf16> to vector<63x16xbf16>
    %c5 = arith.constant 5 : index
    %c0_37 = arith.constant 0 : index
    %c0_38 = arith.constant 0 : index
    %38 = vector.load %arg3[%c5, %c0_37, %c0_38] : memref<9x16x64xbf16, #tpu.memory_space<vmem>>, vector<1x16x64xbf16>
    %39 = vector.shape_cast %38 : vector<1x16x64xbf16> to vector<16x64xbf16>
    %cst_39 = arith.constant dense<0.000000e+00> : vector<63x64xf32>
    %40 = tpu.matmul %37, %39, %cst_39 {dimension_numbers = #tpu.dot_dimension_numbers<[1], [0], [0], [1], [0, 0, 1, 1], [], []>} : vector<63x16xbf16>, vector<16x64xbf16>, vector<63x64xf32> -> vector<63x64xf32>
    %41 = arith.addf %35, %40 : vector<63x64xf32>
    %c0_40 = arith.constant 0 : index
    %c18 = arith.constant 18 : index
    %c0_41 = arith.constant 0 : index
    %42 = vector.load %arg1[%c0_40, %c18, %c0_41] : memref<1x89x16xbf16, #tpu.memory_space<vmem>>, vector<1x63x16xbf16>
    %43 = vector.shape_cast %42 : vector<1x63x16xbf16> to vector<63x16xbf16>
    %c6 = arith.constant 6 : index
    %c0_42 = arith.constant 0 : index
    %c0_43 = arith.constant 0 : index
    %44 = vector.load %arg3[%c6, %c0_42, %c0_43] : memref<9x16x64xbf16, #tpu.memory_space<vmem>>, vector<1x16x64xbf16>
    %45 = vector.shape_cast %44 : vector<1x16x64xbf16> to vector<16x64xbf16>
    %cst_44 = arith.constant dense<0.000000e+00> : vector<63x64xf32>
    %46 = tpu.matmul %43, %45, %cst_44 {dimension_numbers = #tpu.dot_dimension_numbers<[1], [0], [0], [1], [0, 0, 1, 1], [], []>} : vector<63x16xbf16>, vector<16x64xbf16>, vector<63x64xf32> -> vector<63x64xf32>
    %47 = arith.addf %41, %46 : vector<63x64xf32>
    %c0_45 = arith.constant 0 : index
    %c19 = arith.constant 19 : index
    %c0_46 = arith.constant 0 : index
    %48 = vector.load %arg1[%c0_45, %c19, %c0_46] : memref<1x89x16xbf16, #tpu.memory_space<vmem>>, vector<1x63x16xbf16>
    %49 = vector.shape_cast %48 : vector<1x63x16xbf16> to vector<63x16xbf16>
    %c7 = arith.constant 7 : index
    %c0_47 = arith.constant 0 : index
    %c0_48 = arith.constant 0 : index
    %50 = vector.load %arg3[%c7, %c0_47, %c0_48] : memref<9x16x64xbf16, #tpu.memory_space<vmem>>, vector<1x16x64xbf16>
    %51 = vector.shape_cast %50 : vector<1x16x64xbf16> to vector<16x64xbf16>
    %cst_49 = arith.constant dense<0.000000e+00> : vector<63x64xf32>
    %52 = tpu.matmul %49, %51, %cst_49 {dimension_numbers = #tpu.dot_dimension_numbers<[1], [0], [0], [1], [0, 0, 1, 1], [], []>} : vector<63x16xbf16>, vector<16x64xbf16>, vector<63x64xf32> -> vector<63x64xf32>
    %53 = arith.addf %47, %52 : vector<63x64xf32>
    %c0_50 = arith.constant 0 : index
    %c20 = arith.constant 20 : index
    %c0_51 = arith.constant 0 : index
    %54 = vector.load %arg1[%c0_50, %c20, %c0_51] : memref<1x89x16xbf16, #tpu.memory_space<vmem>>, vector<1x63x16xbf16>
    %55 = vector.shape_cast %54 : vector<1x63x16xbf16> to vector<63x16xbf16>
    %c8 = arith.constant 8 : index
    %c0_52 = arith.constant 0 : index
    %c0_53 = arith.constant 0 : index
    %56 = vector.load %arg3[%c8, %c0_52, %c0_53] : memref<9x16x64xbf16, #tpu.memory_space<vmem>>, vector<1x16x64xbf16>
    %57 = vector.shape_cast %56 : vector<1x16x64xbf16> to vector<16x64xbf16>
    %cst_54 = arith.constant dense<0.000000e+00> : vector<63x64xf32>
    %58 = tpu.matmul %55, %57, %cst_54 {dimension_numbers = #tpu.dot_dimension_numbers<[1], [0], [0], [1], [0, 0, 1, 1], [], []>} : vector<63x16xbf16>, vector<16x64xbf16>, vector<63x64xf32> -> vector<63x64xf32>
    %59 = arith.addf %53, %58 : vector<63x64xf32>
    %c0_55 = arith.constant 0 : index
    %c0_56 = arith.constant 0 : index
    %60 = vector.load %arg5[%c0_55, %c0_56] : memref<1x64xf32, #tpu.memory_space<vmem>>, vector<1x64xf32>
    %61 = vector.broadcast %60 : vector<1x64xf32> to vector<63x64xf32>
    %62 = arith.addf %59, %61 : vector<63x64xf32>
    %63 = tpu.concatenate %6, %62 in 1 : vector<63x64xf32>, vector<63x64xf32> -> vector<63x128xf32>
    %cst_57 = arith.constant 0.000000e+00 : f32
    %64 = vector.broadcast %cst_57 : f32 to vector<63x128xf32>
    %65 = arith.maximumf %63, %64 : vector<63x128xf32>
    %66 = arith.truncf %65 : vector<63x128xf32> to vector<63x128xbf16>
    %c0_58 = arith.constant 0 : index
    %c0_59 = arith.constant 0 : index
    %c0_60 = arith.constant 0 : index
    %67 = vector.load %arg6[%c0_58, %c0_59, %c0_60] : memref<1x63x128xbf16, #tpu.memory_space<vmem>>, vector<1x63x128xbf16>
    %68 = vector.shape_cast %67 : vector<1x63x128xbf16> to vector<63x128xbf16>
    %69 = vector.shape_cast %66 : vector<63x128xbf16> to vector<1x63x128xbf16>
    tpu.vector_store %arg6[%c0_58, %c0_59, %c0_60], %69 {strides = array<i32>} : memref<1x63x128xbf16, #tpu.memory_space<vmem>>, vector<1x63x128xbf16>,
    return
  }
  func.func @transform_0(%arg0: i32) -> (i32, i32, i32) {
    %c0_i32 = arith.constant 0 : i32
    %c0_i32_0 = arith.constant 0 : i32
    %c0_i32_1 = arith.constant 0 : i32
    return %arg0, %c0_i32, %c0_i32_0 : i32, i32, i32
  }
  func.func @transform_1(%arg0: i32) -> (i32, i32) {
    %c0_i32 = arith.constant 0 : i32
    %c0_i32_0 = arith.constant 0 : i32
    %c0_i32_1 = arith.constant 0 : i32
    return %c0_i32, %c0_i32_0 : i32, i32
  }
  func.func @transform_2(%arg0: i32) -> (i32, i32, i32) {
    %c0_i32 = arith.constant 0 : i32
    %c0_i32_0 = arith.constant 0 : i32
    %c0_i32_1 = arith.constant 0 : i32
    %c0_i32_2 = arith.constant 0 : i32
    return %c0_i32, %c0_i32_0, %c0_i32_1 : i32, i32, i32
  }
  func.func @transform_3(%arg0: i32) -> (i32, i32) {
    %c0_i32 = arith.constant 0 : i32
    %c0_i32_0 = arith.constant 0 : i32
    %c0_i32_1 = arith.constant 0 : i32
    return %c0_i32, %c0_i32_0 : i32, i32
  }
  func.func @transform_4(%arg0: i32) -> (i32, i32) {
    %c0_i32 = arith.constant 0 : i32
    %c0_i32_0 = arith.constant 0 : i32
    %c0_i32_1 = arith.constant 0 : i32
    return %c0_i32, %c0_i32_0 : i32, i32
  }
  func.func @transform_5(%arg0: i32) -> (i32, i32, i32) {
    %c0_i32 = arith.constant 0 : i32
    %c0_i32_0 = arith.constant 0 : i32
    %c0_i32_1 = arith.constant 0 : i32
    return %arg0, %c0_i32, %c0_i32_0 : i32, i32, i32
  }
}

module attributes {stable_mosaic.version = 11 : i64} {
  func.func @_mm_bias_kernel(%arg0: i32, %arg1: memref<98x128xbf16, #tpu.memory_space<vmem>>, %arg2: memref<128x16xbf16, #tpu.memory_space<vmem>>, %arg3: memref<1x16xf32, #tpu.memory_space<vmem>>, %arg4: memref<98x16xbf16, #tpu.memory_space<vmem>>) attributes {dimension_semantics = [#tpu.dimension_semantics<parallel>], iteration_bounds = array<i64: 1>, scalar_prefetch = 0 : i64, scratch_operands = 0 : i64, tpu.core_type = #tpu.core_type<tc>, window_params = [{transform_indices = @transform_0, window_bounds = array<i64: 98, 128>}, {pipeline_mode = #tpu.pipeline_mode<synchronous>, transform_indices = @transform_1, window_bounds = array<i64: 128, 16>}, {pipeline_mode = #tpu.pipeline_mode<synchronous>, transform_indices = @transform_2, window_bounds = array<i64: 1, 16>}, {transform_indices = @transform_3, window_bounds = array<i64: 98, 16>}]} {
    %c0 = arith.constant 0 : index
    %c0_0 = arith.constant 0 : index
    %0 = vector.load %arg1[%c0, %c0_0] : memref<98x128xbf16, #tpu.memory_space<vmem>>, vector<98x128xbf16>
    %c0_1 = arith.constant 0 : index
    %c0_2 = arith.constant 0 : index
    %1 = vector.load %arg2[%c0_1, %c0_2] : memref<128x16xbf16, #tpu.memory_space<vmem>>, vector<128x16xbf16>
    %cst = arith.constant dense<0.000000e+00> : vector<98x16xf32>
    %2 = tpu.matmul %0, %1, %cst {dimension_numbers = #tpu.dot_dimension_numbers<[1], [0], [0], [1], [0, 0, 1, 1], [], []>} : vector<98x128xbf16>, vector<128x16xbf16>, vector<98x16xf32> -> vector<98x16xf32>
    %c0_3 = arith.constant 0 : index
    %c0_4 = arith.constant 0 : index
    %3 = vector.load %arg3[%c0_3, %c0_4] : memref<1x16xf32, #tpu.memory_space<vmem>>, vector<1x16xf32>
    %4 = vector.broadcast %3 : vector<1x16xf32> to vector<98x16xf32>
    %5 = arith.addf %2, %4 : vector<98x16xf32>
    %cst_5 = arith.constant 0.000000e+00 : f32
    %6 = vector.broadcast %cst_5 : f32 to vector<98x16xf32>
    %7 = arith.maximumf %5, %6 : vector<98x16xf32>
    %8 = arith.truncf %7 : vector<98x16xf32> to vector<98x16xbf16>
    %c0_6 = arith.constant 0 : index
    %c0_7 = arith.constant 0 : index
    %9 = vector.load %arg4[%c0_6, %c0_7] : memref<98x16xbf16, #tpu.memory_space<vmem>>, vector<98x16xbf16>
    tpu.vector_store %arg4[%c0_6, %c0_7], %8 {strides = array<i32>} : memref<98x16xbf16, #tpu.memory_space<vmem>>, vector<98x16xbf16>,
    return
  }
  func.func @transform_0(%arg0: i32) -> (i32, i32) {
    %c0_i32 = arith.constant 0 : i32
    %c0_i32_0 = arith.constant 0 : i32
    return %arg0, %c0_i32 : i32, i32
  }
  func.func @transform_1(%arg0: i32) -> (i32, i32) {
    %c0_i32 = arith.constant 0 : i32
    %c0_i32_0 = arith.constant 0 : i32
    %c0_i32_1 = arith.constant 0 : i32
    return %c0_i32, %c0_i32_0 : i32, i32
  }
  func.func @transform_2(%arg0: i32) -> (i32, i32) {
    %c0_i32 = arith.constant 0 : i32
    %c0_i32_0 = arith.constant 0 : i32
    %c0_i32_1 = arith.constant 0 : i32
    return %c0_i32, %c0_i32_0 : i32, i32
  }
  func.func @transform_3(%arg0: i32) -> (i32, i32) {
    %c0_i32 = arith.constant 0 : i32
    %c0_i32_0 = arith.constant 0 : i32
    return %arg0, %c0_i32 : i32, i32
  }
}

module attributes {stable_mosaic.version = 11 : i64} {
  func.func @_pool3x3_wide_kernel(%arg0: i32, %arg1: i32, %arg2: memref<1x7x7x128xbf16, #tpu.memory_space<vmem>>, %arg3: memref<1x5x5x128xbf16, #tpu.memory_space<vmem>>) attributes {dimension_semantics = [#tpu.dimension_semantics<parallel>, #tpu.dimension_semantics<parallel>], iteration_bounds = array<i64: 2, 1>, scalar_prefetch = 0 : i64, scratch_operands = 0 : i64, tpu.core_type = #tpu.core_type<tc>, window_params = [{transform_indices = @transform_0, window_bounds = array<i64: 1, 7, 7, 128>}, {transform_indices = @transform_1, window_bounds = array<i64: 1, 5, 5, 128>}]} {
    %c0 = arith.constant 0 : index
    %c0_0 = arith.constant 0 : index
    %c0_1 = arith.constant 0 : index
    %c0_2 = arith.constant 0 : index
    %0 = vector.load %arg2[%c0, %c0_0, %c0_1, %c0_2] : memref<1x7x7x128xbf16, #tpu.memory_space<vmem>>, vector<1x5x7x128xbf16>
    %1 = vector.shape_cast %0 : vector<1x5x7x128xbf16> to vector<5x7x128xbf16>
    %c0_3 = arith.constant 0 : index
    %c1 = arith.constant 1 : index
    %c0_4 = arith.constant 0 : index
    %c0_5 = arith.constant 0 : index
    %2 = vector.load %arg2[%c0_3, %c1, %c0_4, %c0_5] : memref<1x7x7x128xbf16, #tpu.memory_space<vmem>>, vector<1x5x7x128xbf16>
    %3 = vector.shape_cast %2 : vector<1x5x7x128xbf16> to vector<5x7x128xbf16>
    %4 = arith.maximumf %1, %3 : vector<5x7x128xbf16>
    %c0_6 = arith.constant 0 : index
    %c2 = arith.constant 2 : index
    %c0_7 = arith.constant 0 : index
    %c0_8 = arith.constant 0 : index
    %5 = vector.load %arg2[%c0_6, %c2, %c0_7, %c0_8] : memref<1x7x7x128xbf16, #tpu.memory_space<vmem>>, vector<1x5x7x128xbf16>
    %6 = vector.shape_cast %5 : vector<1x5x7x128xbf16> to vector<5x7x128xbf16>
    %7 = arith.maximumf %4, %6 : vector<5x7x128xbf16>
    %8 = vector.extract_strided_slice %7 {offsets = [0, 0, 0], sizes = [5, 5, 128], strides = [1, 1, 1]} : vector<5x7x128xbf16> to vector<5x5x128xbf16>
    %9 = vector.extract_strided_slice %7 {offsets = [0, 1, 0], sizes = [5, 5, 128], strides = [1, 1, 1]} : vector<5x7x128xbf16> to vector<5x5x128xbf16>
    %10 = arith.maximumf %8, %9 : vector<5x5x128xbf16>
    %11 = vector.extract_strided_slice %7 {offsets = [0, 2, 0], sizes = [5, 5, 128], strides = [1, 1, 1]} : vector<5x7x128xbf16> to vector<5x5x128xbf16>
    %12 = arith.maximumf %10, %11 : vector<5x5x128xbf16>
    %c0_9 = arith.constant 0 : index
    %c0_10 = arith.constant 0 : index
    %c0_11 = arith.constant 0 : index
    %c0_12 = arith.constant 0 : index
    %13 = vector.load %arg3[%c0_9, %c0_10, %c0_11, %c0_12] : memref<1x5x5x128xbf16, #tpu.memory_space<vmem>>, vector<1x5x5x128xbf16>
    %14 = vector.shape_cast %13 : vector<1x5x5x128xbf16> to vector<5x5x128xbf16>
    %15 = vector.shape_cast %12 : vector<5x5x128xbf16> to vector<1x5x5x128xbf16>
    tpu.vector_store %arg3[%c0_9, %c0_10, %c0_11, %c0_12], %15 {strides = array<i32>} : memref<1x5x5x128xbf16, #tpu.memory_space<vmem>>, vector<1x5x5x128xbf16>,
    return
  }
  func.func @transform_0(%arg0: i32, %arg1: i32) -> (i32, i32, i32, i32) {
    %c0_i32 = arith.constant 0 : i32
    %c0_i32_0 = arith.constant 0 : i32
    %c0_i32_1 = arith.constant 0 : i32
    return %arg0, %c0_i32, %c0_i32_0, %arg1 : i32, i32, i32, i32
  }
  func.func @transform_1(%arg0: i32, %arg1: i32) -> (i32, i32, i32, i32) {
    %c0_i32 = arith.constant 0 : i32
    %c0_i32_0 = arith.constant 0 : i32
    %c0_i32_1 = arith.constant 0 : i32
    return %arg0, %c0_i32, %c0_i32_0, %arg1 : i32, i32, i32, i32
  }
}

module attributes {stable_mosaic.version = 11 : i64} {
  func.func @_mm_bias_kernel(%arg0: i32, %arg1: memref<18x128xbf16, #tpu.memory_space<vmem>>, %arg2: memref<128x32xbf16, #tpu.memory_space<vmem>>, %arg3: memref<1x32xf32, #tpu.memory_space<vmem>>, %arg4: memref<18x32xbf16, #tpu.memory_space<vmem>>) attributes {dimension_semantics = [#tpu.dimension_semantics<parallel>], iteration_bounds = array<i64: 1>, scalar_prefetch = 0 : i64, scratch_operands = 0 : i64, tpu.core_type = #tpu.core_type<tc>, window_params = [{transform_indices = @transform_0, window_bounds = array<i64: 18, 128>}, {pipeline_mode = #tpu.pipeline_mode<synchronous>, transform_indices = @transform_1, window_bounds = array<i64: 128, 32>}, {pipeline_mode = #tpu.pipeline_mode<synchronous>, transform_indices = @transform_2, window_bounds = array<i64: 1, 32>}, {transform_indices = @transform_3, window_bounds = array<i64: 18, 32>}]} {
    %c0 = arith.constant 0 : index
    %c0_0 = arith.constant 0 : index
    %0 = vector.load %arg1[%c0, %c0_0] : memref<18x128xbf16, #tpu.memory_space<vmem>>, vector<18x128xbf16>
    %c0_1 = arith.constant 0 : index
    %c0_2 = arith.constant 0 : index
    %1 = vector.load %arg2[%c0_1, %c0_2] : memref<128x32xbf16, #tpu.memory_space<vmem>>, vector<128x32xbf16>
    %cst = arith.constant dense<0.000000e+00> : vector<18x32xf32>
    %2 = tpu.matmul %0, %1, %cst {dimension_numbers = #tpu.dot_dimension_numbers<[1], [0], [0], [1], [0, 0, 1, 1], [], []>} : vector<18x128xbf16>, vector<128x32xbf16>, vector<18x32xf32> -> vector<18x32xf32>
    %c0_3 = arith.constant 0 : index
    %c0_4 = arith.constant 0 : index
    %3 = vector.load %arg3[%c0_3, %c0_4] : memref<1x32xf32, #tpu.memory_space<vmem>>, vector<1x32xf32>
    %4 = vector.broadcast %3 : vector<1x32xf32> to vector<18x32xf32>
    %5 = arith.addf %2, %4 : vector<18x32xf32>
    %cst_5 = arith.constant 0.000000e+00 : f32
    %6 = vector.broadcast %cst_5 : f32 to vector<18x32xf32>
    %7 = arith.maximumf %5, %6 : vector<18x32xf32>
    %8 = arith.truncf %7 : vector<18x32xf32> to vector<18x32xbf16>
    %c0_6 = arith.constant 0 : index
    %c0_7 = arith.constant 0 : index
    %9 = vector.load %arg4[%c0_6, %c0_7] : memref<18x32xbf16, #tpu.memory_space<vmem>>, vector<18x32xbf16>
    tpu.vector_store %arg4[%c0_6, %c0_7], %8 {strides = array<i32>} : memref<18x32xbf16, #tpu.memory_space<vmem>>, vector<18x32xbf16>,
    return
  }
  func.func @transform_0(%arg0: i32) -> (i32, i32) {
    %c0_i32 = arith.constant 0 : i32
    %c0_i32_0 = arith.constant 0 : i32
    return %arg0, %c0_i32 : i32, i32
  }
  func.func @transform_1(%arg0: i32) -> (i32, i32) {
    %c0_i32 = arith.constant 0 : i32
    %c0_i32_0 = arith.constant 0 : i32
    %c0_i32_1 = arith.constant 0 : i32
    return %c0_i32, %c0_i32_0 : i32, i32
  }
  func.func @transform_2(%arg0: i32) -> (i32, i32) {
    %c0_i32 = arith.constant 0 : i32
    %c0_i32_0 = arith.constant 0 : i32
    %c0_i32_1 = arith.constant 0 : i32
    return %c0_i32, %c0_i32_0 : i32, i32
  }
  func.func @transform_3(%arg0: i32) -> (i32, i32) {
    %c0_i32 = arith.constant 0 : i32
    %c0_i32_0 = arith.constant 0 : i32
    return %arg0, %c0_i32 : i32, i32
  }
}

module attributes {stable_mosaic.version = 11 : i64} {
  func.func @_fire_expand_kernel(%arg0: i32, %arg1: memref<1x33x32xbf16, #tpu.memory_space<vmem>>, %arg2: memref<32x128xbf16, #tpu.memory_space<vmem>>, %arg3: memref<9x32x128xbf16, #tpu.memory_space<vmem>>, %arg4: memref<1x128xf32, #tpu.memory_space<vmem>>, %arg5: memref<1x128xf32, #tpu.memory_space<vmem>>, %arg6: memref<1x15x256xbf16, #tpu.memory_space<vmem>>) attributes {dimension_semantics = [#tpu.dimension_semantics<parallel>], iteration_bounds = array<i64: 2>, scalar_prefetch = 0 : i64, scratch_operands = 0 : i64, tpu.core_type = #tpu.core_type<tc>, window_params = [{transform_indices = @transform_0, window_bounds = array<i64: 1, 33, 32>}, {pipeline_mode = #tpu.pipeline_mode<synchronous>, transform_indices = @transform_1, window_bounds = array<i64: 32, 128>}, {pipeline_mode = #tpu.pipeline_mode<synchronous>, transform_indices = @transform_2, window_bounds = array<i64: 9, 32, 128>}, {pipeline_mode = #tpu.pipeline_mode<synchronous>, transform_indices = @transform_3, window_bounds = array<i64: 1, 128>}, {pipeline_mode = #tpu.pipeline_mode<synchronous>, transform_indices = @transform_4, window_bounds = array<i64: 1, 128>}, {transform_indices = @transform_5, window_bounds = array<i64: 1, 15, 256>}]} {
    %c0 = arith.constant 0 : index
    %c6 = arith.constant 6 : index
    %c0_0 = arith.constant 0 : index
    %0 = vector.load %arg1[%c0, %c6, %c0_0] : memref<1x33x32xbf16, #tpu.memory_space<vmem>>, vector<1x15x32xbf16>
    %1 = vector.shape_cast %0 : vector<1x15x32xbf16> to vector<15x32xbf16>
    %c0_1 = arith.constant 0 : index
    %c0_2 = arith.constant 0 : index
    %2 = vector.load %arg2[%c0_1, %c0_2] : memref<32x128xbf16, #tpu.memory_space<vmem>>, vector<32x128xbf16>
    %cst = arith.constant dense<0.000000e+00> : vector<15x128xf32>
    %3 = tpu.matmul %1, %2, %cst {dimension_numbers = #tpu.dot_dimension_numbers<[1], [0], [0], [1], [0, 0, 1, 1], [], []>} : vector<15x32xbf16>, vector<32x128xbf16>, vector<15x128xf32> -> vector<15x128xf32>
    %c0_3 = arith.constant 0 : index
    %c0_4 = arith.constant 0 : index
    %4 = vector.load %arg4[%c0_3, %c0_4] : memref<1x128xf32, #tpu.memory_space<vmem>>, vector<1x128xf32>
    %5 = vector.broadcast %4 : vector<1x128xf32> to vector<15x128xf32>
    %6 = arith.addf %3, %5 : vector<15x128xf32>
    %c0_5 = arith.constant 0 : index
    %c0_6 = arith.constant 0 : index
    %c0_7 = arith.constant 0 : index
    %7 = vector.load %arg1[%c0_5, %c0_6, %c0_7] : memref<1x33x32xbf16, #tpu.memory_space<vmem>>, vector<1x15x32xbf16>
    %8 = vector.shape_cast %7 : vector<1x15x32xbf16> to vector<15x32xbf16>
    %c0_8 = arith.constant 0 : index
    %c0_9 = arith.constant 0 : index
    %c0_10 = arith.constant 0 : index
    %9 = vector.load %arg3[%c0_8, %c0_9, %c0_10] : memref<9x32x128xbf16, #tpu.memory_space<vmem>>, vector<1x32x128xbf16>
    %10 = vector.shape_cast %9 : vector<1x32x128xbf16> to vector<32x128xbf16>
    %cst_11 = arith.constant dense<0.000000e+00> : vector<15x128xf32>
    %11 = tpu.matmul %8, %10, %cst_11 {dimension_numbers = #tpu.dot_dimension_numbers<[1], [0], [0], [1], [0, 0, 1, 1], [], []>} : vector<15x32xbf16>, vector<32x128xbf16>, vector<15x128xf32> -> vector<15x128xf32>
    %c0_12 = arith.constant 0 : index
    %c1 = arith.constant 1 : index
    %c0_13 = arith.constant 0 : index
    %12 = vector.load %arg1[%c0_12, %c1, %c0_13] : memref<1x33x32xbf16, #tpu.memory_space<vmem>>, vector<1x15x32xbf16>
    %13 = vector.shape_cast %12 : vector<1x15x32xbf16> to vector<15x32xbf16>
    %c1_14 = arith.constant 1 : index
    %c0_15 = arith.constant 0 : index
    %c0_16 = arith.constant 0 : index
    %14 = vector.load %arg3[%c1_14, %c0_15, %c0_16] : memref<9x32x128xbf16, #tpu.memory_space<vmem>>, vector<1x32x128xbf16>
    %15 = vector.shape_cast %14 : vector<1x32x128xbf16> to vector<32x128xbf16>
    %cst_17 = arith.constant dense<0.000000e+00> : vector<15x128xf32>
    %16 = tpu.matmul %13, %15, %cst_17 {dimension_numbers = #tpu.dot_dimension_numbers<[1], [0], [0], [1], [0, 0, 1, 1], [], []>} : vector<15x32xbf16>, vector<32x128xbf16>, vector<15x128xf32> -> vector<15x128xf32>
    %17 = arith.addf %11, %16 : vector<15x128xf32>
    %c0_18 = arith.constant 0 : index
    %c2 = arith.constant 2 : index
    %c0_19 = arith.constant 0 : index
    %18 = vector.load %arg1[%c0_18, %c2, %c0_19] : memref<1x33x32xbf16, #tpu.memory_space<vmem>>, vector<1x15x32xbf16>
    %19 = vector.shape_cast %18 : vector<1x15x32xbf16> to vector<15x32xbf16>
    %c2_20 = arith.constant 2 : index
    %c0_21 = arith.constant 0 : index
    %c0_22 = arith.constant 0 : index
    %20 = vector.load %arg3[%c2_20, %c0_21, %c0_22] : memref<9x32x128xbf16, #tpu.memory_space<vmem>>, vector<1x32x128xbf16>
    %21 = vector.shape_cast %20 : vector<1x32x128xbf16> to vector<32x128xbf16>
    %cst_23 = arith.constant dense<0.000000e+00> : vector<15x128xf32>
    %22 = tpu.matmul %19, %21, %cst_23 {dimension_numbers = #tpu.dot_dimension_numbers<[1], [0], [0], [1], [0, 0, 1, 1], [], []>} : vector<15x32xbf16>, vector<32x128xbf16>, vector<15x128xf32> -> vector<15x128xf32>
    %23 = arith.addf %17, %22 : vector<15x128xf32>
    %c0_24 = arith.constant 0 : index
    %c5 = arith.constant 5 : index
    %c0_25 = arith.constant 0 : index
    %24 = vector.load %arg1[%c0_24, %c5, %c0_25] : memref<1x33x32xbf16, #tpu.memory_space<vmem>>, vector<1x15x32xbf16>
    %25 = vector.shape_cast %24 : vector<1x15x32xbf16> to vector<15x32xbf16>
    %c3 = arith.constant 3 : index
    %c0_26 = arith.constant 0 : index
    %c0_27 = arith.constant 0 : index
    %26 = vector.load %arg3[%c3, %c0_26, %c0_27] : memref<9x32x128xbf16, #tpu.memory_space<vmem>>, vector<1x32x128xbf16>
    %27 = vector.shape_cast %26 : vector<1x32x128xbf16> to vector<32x128xbf16>
    %cst_28 = arith.constant dense<0.000000e+00> : vector<15x128xf32>
    %28 = tpu.matmul %25, %27, %cst_28 {dimension_numbers = #tpu.dot_dimension_numbers<[1], [0], [0], [1], [0, 0, 1, 1], [], []>} : vector<15x32xbf16>, vector<32x128xbf16>, vector<15x128xf32> -> vector<15x128xf32>
    %29 = arith.addf %23, %28 : vector<15x128xf32>
    %c0_29 = arith.constant 0 : index
    %c6_30 = arith.constant 6 : index
    %c0_31 = arith.constant 0 : index
    %30 = vector.load %arg1[%c0_29, %c6_30, %c0_31] : memref<1x33x32xbf16, #tpu.memory_space<vmem>>, vector<1x15x32xbf16>
    %31 = vector.shape_cast %30 : vector<1x15x32xbf16> to vector<15x32xbf16>
    %c4 = arith.constant 4 : index
    %c0_32 = arith.constant 0 : index
    %c0_33 = arith.constant 0 : index
    %32 = vector.load %arg3[%c4, %c0_32, %c0_33] : memref<9x32x128xbf16, #tpu.memory_space<vmem>>, vector<1x32x128xbf16>
    %33 = vector.shape_cast %32 : vector<1x32x128xbf16> to vector<32x128xbf16>
    %cst_34 = arith.constant dense<0.000000e+00> : vector<15x128xf32>
    %34 = tpu.matmul %31, %33, %cst_34 {dimension_numbers = #tpu.dot_dimension_numbers<[1], [0], [0], [1], [0, 0, 1, 1], [], []>} : vector<15x32xbf16>, vector<32x128xbf16>, vector<15x128xf32> -> vector<15x128xf32>
    %35 = arith.addf %29, %34 : vector<15x128xf32>
    %c0_35 = arith.constant 0 : index
    %c7 = arith.constant 7 : index
    %c0_36 = arith.constant 0 : index
    %36 = vector.load %arg1[%c0_35, %c7, %c0_36] : memref<1x33x32xbf16, #tpu.memory_space<vmem>>, vector<1x15x32xbf16>
    %37 = vector.shape_cast %36 : vector<1x15x32xbf16> to vector<15x32xbf16>
    %c5_37 = arith.constant 5 : index
    %c0_38 = arith.constant 0 : index
    %c0_39 = arith.constant 0 : index
    %38 = vector.load %arg3[%c5_37, %c0_38, %c0_39] : memref<9x32x128xbf16, #tpu.memory_space<vmem>>, vector<1x32x128xbf16>
    %39 = vector.shape_cast %38 : vector<1x32x128xbf16> to vector<32x128xbf16>
    %cst_40 = arith.constant dense<0.000000e+00> : vector<15x128xf32>
    %40 = tpu.matmul %37, %39, %cst_40 {dimension_numbers = #tpu.dot_dimension_numbers<[1], [0], [0], [1], [0, 0, 1, 1], [], []>} : vector<15x32xbf16>, vector<32x128xbf16>, vector<15x128xf32> -> vector<15x128xf32>
    %41 = arith.addf %35, %40 : vector<15x128xf32>
    %c0_41 = arith.constant 0 : index
    %c10 = arith.constant 10 : index
    %c0_42 = arith.constant 0 : index
    %42 = vector.load %arg1[%c0_41, %c10, %c0_42] : memref<1x33x32xbf16, #tpu.memory_space<vmem>>, vector<1x15x32xbf16>
    %43 = vector.shape_cast %42 : vector<1x15x32xbf16> to vector<15x32xbf16>
    %c6_43 = arith.constant 6 : index
    %c0_44 = arith.constant 0 : index
    %c0_45 = arith.constant 0 : index
    %44 = vector.load %arg3[%c6_43, %c0_44, %c0_45] : memref<9x32x128xbf16, #tpu.memory_space<vmem>>, vector<1x32x128xbf16>
    %45 = vector.shape_cast %44 : vector<1x32x128xbf16> to vector<32x128xbf16>
    %cst_46 = arith.constant dense<0.000000e+00> : vector<15x128xf32>
    %46 = tpu.matmul %43, %45, %cst_46 {dimension_numbers = #tpu.dot_dimension_numbers<[1], [0], [0], [1], [0, 0, 1, 1], [], []>} : vector<15x32xbf16>, vector<32x128xbf16>, vector<15x128xf32> -> vector<15x128xf32>
    %47 = arith.addf %41, %46 : vector<15x128xf32>
    %c0_47 = arith.constant 0 : index
    %c11 = arith.constant 11 : index
    %c0_48 = arith.constant 0 : index
    %48 = vector.load %arg1[%c0_47, %c11, %c0_48] : memref<1x33x32xbf16, #tpu.memory_space<vmem>>, vector<1x15x32xbf16>
    %49 = vector.shape_cast %48 : vector<1x15x32xbf16> to vector<15x32xbf16>
    %c7_49 = arith.constant 7 : index
    %c0_50 = arith.constant 0 : index
    %c0_51 = arith.constant 0 : index
    %50 = vector.load %arg3[%c7_49, %c0_50, %c0_51] : memref<9x32x128xbf16, #tpu.memory_space<vmem>>, vector<1x32x128xbf16>
    %51 = vector.shape_cast %50 : vector<1x32x128xbf16> to vector<32x128xbf16>
    %cst_52 = arith.constant dense<0.000000e+00> : vector<15x128xf32>
    %52 = tpu.matmul %49, %51, %cst_52 {dimension_numbers = #tpu.dot_dimension_numbers<[1], [0], [0], [1], [0, 0, 1, 1], [], []>} : vector<15x32xbf16>, vector<32x128xbf16>, vector<15x128xf32> -> vector<15x128xf32>
    %53 = arith.addf %47, %52 : vector<15x128xf32>
    %c0_53 = arith.constant 0 : index
    %c12 = arith.constant 12 : index
    %c0_54 = arith.constant 0 : index
    %54 = vector.load %arg1[%c0_53, %c12, %c0_54] : memref<1x33x32xbf16, #tpu.memory_space<vmem>>, vector<1x15x32xbf16>
    %55 = vector.shape_cast %54 : vector<1x15x32xbf16> to vector<15x32xbf16>
    %c8 = arith.constant 8 : index
    %c0_55 = arith.constant 0 : index
    %c0_56 = arith.constant 0 : index
    %56 = vector.load %arg3[%c8, %c0_55, %c0_56] : memref<9x32x128xbf16, #tpu.memory_space<vmem>>, vector<1x32x128xbf16>
    %57 = vector.shape_cast %56 : vector<1x32x128xbf16> to vector<32x128xbf16>
    %cst_57 = arith.constant dense<0.000000e+00> : vector<15x128xf32>
    %58 = tpu.matmul %55, %57, %cst_57 {dimension_numbers = #tpu.dot_dimension_numbers<[1], [0], [0], [1], [0, 0, 1, 1], [], []>} : vector<15x32xbf16>, vector<32x128xbf16>, vector<15x128xf32> -> vector<15x128xf32>
    %59 = arith.addf %53, %58 : vector<15x128xf32>
    %c0_58 = arith.constant 0 : index
    %c0_59 = arith.constant 0 : index
    %60 = vector.load %arg5[%c0_58, %c0_59] : memref<1x128xf32, #tpu.memory_space<vmem>>, vector<1x128xf32>
    %61 = vector.broadcast %60 : vector<1x128xf32> to vector<15x128xf32>
    %62 = arith.addf %59, %61 : vector<15x128xf32>
    %63 = tpu.concatenate %6, %62 in 1 : vector<15x128xf32>, vector<15x128xf32> -> vector<15x256xf32>
    %cst_60 = arith.constant 0.000000e+00 : f32
    %64 = vector.broadcast %cst_60 : f32 to vector<15x256xf32>
    %65 = arith.maximumf %63, %64 : vector<15x256xf32>
    %66 = arith.truncf %65 : vector<15x256xf32> to vector<15x256xbf16>
    %c0_61 = arith.constant 0 : index
    %c0_62 = arith.constant 0 : index
    %c0_63 = arith.constant 0 : index
    %67 = vector.load %arg6[%c0_61, %c0_62, %c0_63] : memref<1x15x256xbf16, #tpu.memory_space<vmem>>, vector<1x15x256xbf16>
    %68 = vector.shape_cast %67 : vector<1x15x256xbf16> to vector<15x256xbf16>
    %69 = vector.shape_cast %66 : vector<15x256xbf16> to vector<1x15x256xbf16>
    tpu.vector_store %arg6[%c0_61, %c0_62, %c0_63], %69 {strides = array<i32>} : memref<1x15x256xbf16, #tpu.memory_space<vmem>>, vector<1x15x256xbf16>,
    return
  }
  func.func @transform_0(%arg0: i32) -> (i32, i32, i32) {
    %c0_i32 = arith.constant 0 : i32
    %c0_i32_0 = arith.constant 0 : i32
    %c0_i32_1 = arith.constant 0 : i32
    return %arg0, %c0_i32, %c0_i32_0 : i32, i32, i32
  }
  func.func @transform_1(%arg0: i32) -> (i32, i32) {
    %c0_i32 = arith.constant 0 : i32
    %c0_i32_0 = arith.constant 0 : i32
    %c0_i32_1 = arith.constant 0 : i32
    return %c0_i32, %c0_i32_0 : i32, i32
  }
  func.func @transform_2(%arg0: i32) -> (i32, i32, i32) {
    %c0_i32 = arith.constant 0 : i32
    %c0_i32_0 = arith.constant 0 : i32
    %c0_i32_1 = arith.constant 0 : i32
    %c0_i32_2 = arith.constant 0 : i32
    return %c0_i32, %c0_i32_0, %c0_i32_1 : i32, i32, i32
  }
  func.func @transform_3(%arg0: i32) -> (i32, i32) {
    %c0_i32 = arith.constant 0 : i32
    %c0_i32_0 = arith.constant 0 : i32
    %c0_i32_1 = arith.constant 0 : i32
    return %c0_i32, %c0_i32_0 : i32, i32
  }
  func.func @transform_4(%arg0: i32) -> (i32, i32) {
    %c0_i32 = arith.constant 0 : i32
    %c0_i32_0 = arith.constant 0 : i32
    %c0_i32_1 = arith.constant 0 : i32
    return %c0_i32, %c0_i32_0 : i32, i32
  }
  func.func @transform_5(%arg0: i32) -> (i32, i32, i32) {
    %c0_i32 = arith.constant 0 : i32
    %c0_i32_0 = arith.constant 0 : i32
    %c0_i32_1 = arith.constant 0 : i32
    return %arg0, %c0_i32, %c0_i32_0 : i32, i32, i32
  }
}

module attributes {stable_mosaic.version = 11 : i64} {
  func.func @_pool3x3_wide_kernel(%arg0: i32, %arg1: i32, %arg2: memref<1x3x3x128xbf16, #tpu.memory_space<vmem>>, %arg3: memref<1x1x1x128xbf16, #tpu.memory_space<vmem>>) attributes {dimension_semantics = [#tpu.dimension_semantics<parallel>, #tpu.dimension_semantics<parallel>], iteration_bounds = array<i64: 2, 2>, scalar_prefetch = 0 : i64, scratch_operands = 0 : i64, tpu.core_type = #tpu.core_type<tc>, window_params = [{transform_indices = @transform_0, window_bounds = array<i64: 1, 3, 3, 128>}, {transform_indices = @transform_1, window_bounds = array<i64: 1, 1, 1, 128>}]} {
    %c0 = arith.constant 0 : index
    %c0_0 = arith.constant 0 : index
    %c0_1 = arith.constant 0 : index
    %c0_2 = arith.constant 0 : index
    %0 = vector.load %arg2[%c0, %c0_0, %c0_1, %c0_2] : memref<1x3x3x128xbf16, #tpu.memory_space<vmem>>, vector<1x1x3x128xbf16>
    %1 = vector.shape_cast %0 : vector<1x1x3x128xbf16> to vector<1x3x128xbf16>
    %c0_3 = arith.constant 0 : index
    %c1 = arith.constant 1 : index
    %c0_4 = arith.constant 0 : index
    %c0_5 = arith.constant 0 : index
    %2 = vector.load %arg2[%c0_3, %c1, %c0_4, %c0_5] : memref<1x3x3x128xbf16, #tpu.memory_space<vmem>>, vector<1x1x3x128xbf16>
    %3 = vector.shape_cast %2 : vector<1x1x3x128xbf16> to vector<1x3x128xbf16>
    %4 = arith.maximumf %1, %3 : vector<1x3x128xbf16>
    %c0_6 = arith.constant 0 : index
    %c2 = arith.constant 2 : index
    %c0_7 = arith.constant 0 : index
    %c0_8 = arith.constant 0 : index
    %5 = vector.load %arg2[%c0_6, %c2, %c0_7, %c0_8] : memref<1x3x3x128xbf16, #tpu.memory_space<vmem>>, vector<1x1x3x128xbf16>
    %6 = vector.shape_cast %5 : vector<1x1x3x128xbf16> to vector<1x3x128xbf16>
    %7 = arith.maximumf %4, %6 : vector<1x3x128xbf16>
    %8 = vector.extract_strided_slice %7 {offsets = [0, 0, 0], sizes = [1, 1, 128], strides = [1, 1, 1]} : vector<1x3x128xbf16> to vector<1x1x128xbf16>
    %9 = vector.extract_strided_slice %7 {offsets = [0, 1, 0], sizes = [1, 1, 128], strides = [1, 1, 1]} : vector<1x3x128xbf16> to vector<1x1x128xbf16>
    %10 = arith.maximumf %8, %9 : vector<1x1x128xbf16>
    %11 = vector.extract_strided_slice %7 {offsets = [0, 2, 0], sizes = [1, 1, 128], strides = [1, 1, 1]} : vector<1x3x128xbf16> to vector<1x1x128xbf16>
    %12 = arith.maximumf %10, %11 : vector<1x1x128xbf16>
    %c0_9 = arith.constant 0 : index
    %c0_10 = arith.constant 0 : index
    %c0_11 = arith.constant 0 : index
    %c0_12 = arith.constant 0 : index
    %13 = vector.load %arg3[%c0_9, %c0_10, %c0_11, %c0_12] : memref<1x1x1x128xbf16, #tpu.memory_space<vmem>>, vector<1x1x1x128xbf16>
    %14 = vector.shape_cast %13 : vector<1x1x1x128xbf16> to vector<1x1x128xbf16>
    %15 = vector.shape_cast %12 : vector<1x1x128xbf16> to vector<1x1x1x128xbf16>
    tpu.vector_store %arg3[%c0_9, %c0_10, %c0_11, %c0_12], %15 {strides = array<i32>} : memref<1x1x1x128xbf16, #tpu.memory_space<vmem>>, vector<1x1x1x128xbf16>,
    return
  }
  func.func @transform_0(%arg0: i32, %arg1: i32) -> (i32, i32, i32, i32) {
    %c0_i32 = arith.constant 0 : i32
    %c0_i32_0 = arith.constant 0 : i32
    %c0_i32_1 = arith.constant 0 : i32
    return %arg0, %c0_i32, %c0_i32_0, %arg1 : i32, i32, i32, i32
  }
  func.func @transform_1(%arg0: i32, %arg1: i32) -> (i32, i32, i32, i32) {
    %c0_i32 = arith.constant 0 : i32
    %c0_i32_0 = arith.constant 0 : i32
    %c0_i32_1 = arith.constant 0 : i32
    return %arg0, %c0_i32, %c0_i32_0, %arg1 : i32, i32, i32, i32
  }
}

module attributes {stable_mosaic.version = 11 : i64} {
  func.func @_mm_bias_kernel(%arg0: i32, %arg1: memref<18x256xbf16, #tpu.memory_space<vmem>>, %arg2: memref<256x32xbf16, #tpu.memory_space<vmem>>, %arg3: memref<1x32xf32, #tpu.memory_space<vmem>>, %arg4: memref<18x32xbf16, #tpu.memory_space<vmem>>) attributes {dimension_semantics = [#tpu.dimension_semantics<parallel>], iteration_bounds = array<i64: 1>, scalar_prefetch = 0 : i64, scratch_operands = 0 : i64, tpu.core_type = #tpu.core_type<tc>, window_params = [{transform_indices = @transform_0, window_bounds = array<i64: 18, 256>}, {pipeline_mode = #tpu.pipeline_mode<synchronous>, transform_indices = @transform_1, window_bounds = array<i64: 256, 32>}, {pipeline_mode = #tpu.pipeline_mode<synchronous>, transform_indices = @transform_2, window_bounds = array<i64: 1, 32>}, {transform_indices = @transform_3, window_bounds = array<i64: 18, 32>}]} {
    %c0 = arith.constant 0 : index
    %c0_0 = arith.constant 0 : index
    %0 = vector.load %arg1[%c0, %c0_0] : memref<18x256xbf16, #tpu.memory_space<vmem>>, vector<18x256xbf16>
    %c0_1 = arith.constant 0 : index
    %c0_2 = arith.constant 0 : index
    %1 = vector.load %arg2[%c0_1, %c0_2] : memref<256x32xbf16, #tpu.memory_space<vmem>>, vector<256x32xbf16>
    %cst = arith.constant dense<0.000000e+00> : vector<18x32xf32>
    %2 = tpu.matmul %0, %1, %cst {dimension_numbers = #tpu.dot_dimension_numbers<[1], [0], [0], [1], [0, 0, 1, 1], [], []>} : vector<18x256xbf16>, vector<256x32xbf16>, vector<18x32xf32> -> vector<18x32xf32>
    %c0_3 = arith.constant 0 : index
    %c0_4 = arith.constant 0 : index
    %3 = vector.load %arg3[%c0_3, %c0_4] : memref<1x32xf32, #tpu.memory_space<vmem>>, vector<1x32xf32>
    %4 = vector.broadcast %3 : vector<1x32xf32> to vector<18x32xf32>
    %5 = arith.addf %2, %4 : vector<18x32xf32>
    %cst_5 = arith.constant 0.000000e+00 : f32
    %6 = vector.broadcast %cst_5 : f32 to vector<18x32xf32>
    %7 = arith.maximumf %5, %6 : vector<18x32xf32>
    %8 = arith.truncf %7 : vector<18x32xf32> to vector<18x32xbf16>
    %c0_6 = arith.constant 0 : index
    %c0_7 = arith.constant 0 : index
    %9 = vector.load %arg4[%c0_6, %c0_7] : memref<18x32xbf16, #tpu.memory_space<vmem>>, vector<18x32xbf16>
    tpu.vector_store %arg4[%c0_6, %c0_7], %8 {strides = array<i32>} : memref<18x32xbf16, #tpu.memory_space<vmem>>, vector<18x32xbf16>,
    return
  }
  func.func @transform_0(%arg0: i32) -> (i32, i32) {
    %c0_i32 = arith.constant 0 : i32
    %c0_i32_0 = arith.constant 0 : i32
    return %arg0, %c0_i32 : i32, i32
  }
  func.func @transform_1(%arg0: i32) -> (i32, i32) {
    %c0_i32 = arith.constant 0 : i32
    %c0_i32_0 = arith.constant 0 : i32
    %c0_i32_1 = arith.constant 0 : i32
    return %c0_i32, %c0_i32_0 : i32, i32
  }
  func.func @transform_2(%arg0: i32) -> (i32, i32) {
    %c0_i32 = arith.constant 0 : i32
    %c0_i32_0 = arith.constant 0 : i32
    %c0_i32_1 = arith.constant 0 : i32
    return %c0_i32, %c0_i32_0 : i32, i32
  }
  func.func @transform_3(%arg0: i32) -> (i32, i32) {
    %c0_i32 = arith.constant 0 : i32
    %c0_i32_0 = arith.constant 0 : i32
    return %arg0, %c0_i32 : i32, i32
  }
}

module attributes {stable_mosaic.version = 11 : i64} {
  func.func @_mm_bias_kernel(%arg0: i32, %arg1: memref<2x256xbf16, #tpu.memory_space<vmem>>, %arg2: memref<256x48xbf16, #tpu.memory_space<vmem>>, %arg3: memref<1x48xf32, #tpu.memory_space<vmem>>, %arg4: memref<2x48xbf16, #tpu.memory_space<vmem>>) attributes {dimension_semantics = [#tpu.dimension_semantics<parallel>], iteration_bounds = array<i64: 1>, scalar_prefetch = 0 : i64, scratch_operands = 0 : i64, tpu.core_type = #tpu.core_type<tc>, window_params = [{transform_indices = @transform_0, window_bounds = array<i64: 2, 256>}, {pipeline_mode = #tpu.pipeline_mode<synchronous>, transform_indices = @transform_1, window_bounds = array<i64: 256, 48>}, {pipeline_mode = #tpu.pipeline_mode<synchronous>, transform_indices = @transform_2, window_bounds = array<i64: 1, 48>}, {transform_indices = @transform_3, window_bounds = array<i64: 2, 48>}]} {
    %c0 = arith.constant 0 : index
    %c0_0 = arith.constant 0 : index
    %0 = vector.load %arg1[%c0, %c0_0] : memref<2x256xbf16, #tpu.memory_space<vmem>>, vector<2x256xbf16>
    %c0_1 = arith.constant 0 : index
    %c0_2 = arith.constant 0 : index
    %1 = vector.load %arg2[%c0_1, %c0_2] : memref<256x48xbf16, #tpu.memory_space<vmem>>, vector<256x48xbf16>
    %cst = arith.constant dense<0.000000e+00> : vector<2x48xf32>
    %2 = tpu.matmul %0, %1, %cst {dimension_numbers = #tpu.dot_dimension_numbers<[1], [0], [0], [1], [0, 0, 1, 1], [], []>} : vector<2x256xbf16>, vector<256x48xbf16>, vector<2x48xf32> -> vector<2x48xf32>
    %c0_3 = arith.constant 0 : index
    %c0_4 = arith.constant 0 : index
    %3 = vector.load %arg3[%c0_3, %c0_4] : memref<1x48xf32, #tpu.memory_space<vmem>>, vector<1x48xf32>
    %4 = vector.broadcast %3 : vector<1x48xf32> to vector<2x48xf32>
    %5 = arith.addf %2, %4 : vector<2x48xf32>
    %cst_5 = arith.constant 0.000000e+00 : f32
    %6 = vector.broadcast %cst_5 : f32 to vector<2x48xf32>
    %7 = arith.maximumf %5, %6 : vector<2x48xf32>
    %8 = arith.truncf %7 : vector<2x48xf32> to vector<2x48xbf16>
    %c0_6 = arith.constant 0 : index
    %c0_7 = arith.constant 0 : index
    %9 = vector.load %arg4[%c0_6, %c0_7] : memref<2x48xbf16, #tpu.memory_space<vmem>>, vector<2x48xbf16>
    tpu.vector_store %arg4[%c0_6, %c0_7], %8 {strides = array<i32>} : memref<2x48xbf16, #tpu.memory_space<vmem>>, vector<2x48xbf16>,
    return
  }
  func.func @transform_0(%arg0: i32) -> (i32, i32) {
    %c0_i32 = arith.constant 0 : i32
    %c0_i32_0 = arith.constant 0 : i32
    return %arg0, %c0_i32 : i32, i32
  }
  func.func @transform_1(%arg0: i32) -> (i32, i32) {
    %c0_i32 = arith.constant 0 : i32
    %c0_i32_0 = arith.constant 0 : i32
    %c0_i32_1 = arith.constant 0 : i32
    return %c0_i32, %c0_i32_0 : i32, i32
  }
  func.func @transform_2(%arg0: i32) -> (i32, i32) {
    %c0_i32 = arith.constant 0 : i32
    %c0_i32_0 = arith.constant 0 : i32
    %c0_i32_1 = arith.constant 0 : i32
    return %c0_i32, %c0_i32_0 : i32, i32
  }
  func.func @transform_3(%arg0: i32) -> (i32, i32) {
    %c0_i32 = arith.constant 0 : i32
    %c0_i32_0 = arith.constant 0 : i32
    return %arg0, %c0_i32 : i32, i32
  }
}

module attributes {stable_mosaic.version = 11 : i64} {
  func.func @_fire_expand_kernel(%arg0: i32, %arg1: memref<1x17x48xbf16, #tpu.memory_space<vmem>>, %arg2: memref<48x192xbf16, #tpu.memory_space<vmem>>, %arg3: memref<9x48x192xbf16, #tpu.memory_space<vmem>>, %arg4: memref<1x192xf32, #tpu.memory_space<vmem>>, %arg5: memref<1x192xf32, #tpu.memory_space<vmem>>, %arg6: memref<1x3x384xbf16, #tpu.memory_space<vmem>>) attributes {dimension_semantics = [#tpu.dimension_semantics<parallel>], iteration_bounds = array<i64: 2>, scalar_prefetch = 0 : i64, scratch_operands = 0 : i64, tpu.core_type = #tpu.core_type<tc>, window_params = [{transform_indices = @transform_0, window_bounds = array<i64: 1, 17, 48>}, {pipeline_mode = #tpu.pipeline_mode<synchronous>, transform_indices = @transform_1, window_bounds = array<i64: 48, 192>}, {pipeline_mode = #tpu.pipeline_mode<synchronous>, transform_indices = @transform_2, window_bounds = array<i64: 9, 48, 192>}, {pipeline_mode = #tpu.pipeline_mode<synchronous>, transform_indices = @transform_3, window_bounds = array<i64: 1, 192>}, {pipeline_mode = #tpu.pipeline_mode<synchronous>, transform_indices = @transform_4, window_bounds = array<i64: 1, 192>}, {transform_indices = @transform_5, window_bounds = array<i64: 1, 3, 384>}]} {
    %c0 = arith.constant 0 : index
    %c4 = arith.constant 4 : index
    %c0_0 = arith.constant 0 : index
    %0 = vector.load %arg1[%c0, %c4, %c0_0] : memref<1x17x48xbf16, #tpu.memory_space<vmem>>, vector<1x3x48xbf16>
    %1 = vector.shape_cast %0 : vector<1x3x48xbf16> to vector<3x48xbf16>
    %c0_1 = arith.constant 0 : index
    %c0_2 = arith.constant 0 : index
    %2 = vector.load %arg2[%c0_1, %c0_2] : memref<48x192xbf16, #tpu.memory_space<vmem>>, vector<48x192xbf16>
    %cst = arith.constant dense<0.000000e+00> : vector<3x192xf32>
    %3 = tpu.matmul %1, %2, %cst {dimension_numbers = #tpu.dot_dimension_numbers<[1], [0], [0], [1], [0, 0, 1, 1], [], []>} : vector<3x48xbf16>, vector<48x192xbf16>, vector<3x192xf32> -> vector<3x192xf32>
    %c0_3 = arith.constant 0 : index
    %c0_4 = arith.constant 0 : index
    %4 = vector.load %arg4[%c0_3, %c0_4] : memref<1x192xf32, #tpu.memory_space<vmem>>, vector<1x192xf32>
    %5 = vector.broadcast %4 : vector<1x192xf32> to vector<3x192xf32>
    %6 = arith.addf %3, %5 : vector<3x192xf32>
    %c0_5 = arith.constant 0 : index
    %c0_6 = arith.constant 0 : index
    %c0_7 = arith.constant 0 : index
    %7 = vector.load %arg1[%c0_5, %c0_6, %c0_7] : memref<1x17x48xbf16, #tpu.memory_space<vmem>>, vector<1x3x48xbf16>
    %8 = vector.shape_cast %7 : vector<1x3x48xbf16> to vector<3x48xbf16>
    %c0_8 = arith.constant 0 : index
    %c0_9 = arith.constant 0 : index
    %c0_10 = arith.constant 0 : index
    %9 = vector.load %arg3[%c0_8, %c0_9, %c0_10] : memref<9x48x192xbf16, #tpu.memory_space<vmem>>, vector<1x48x192xbf16>
    %10 = vector.shape_cast %9 : vector<1x48x192xbf16> to vector<48x192xbf16>
    %cst_11 = arith.constant dense<0.000000e+00> : vector<3x192xf32>
    %11 = tpu.matmul %8, %10, %cst_11 {dimension_numbers = #tpu.dot_dimension_numbers<[1], [0], [0], [1], [0, 0, 1, 1], [], []>} : vector<3x48xbf16>, vector<48x192xbf16>, vector<3x192xf32> -> vector<3x192xf32>
    %c0_12 = arith.constant 0 : index
    %c1 = arith.constant 1 : index
    %c0_13 = arith.constant 0 : index
    %12 = vector.load %arg1[%c0_12, %c1, %c0_13] : memref<1x17x48xbf16, #tpu.memory_space<vmem>>, vector<1x3x48xbf16>
    %13 = vector.shape_cast %12 : vector<1x3x48xbf16> to vector<3x48xbf16>
    %c1_14 = arith.constant 1 : index
    %c0_15 = arith.constant 0 : index
    %c0_16 = arith.constant 0 : index
    %14 = vector.load %arg3[%c1_14, %c0_15, %c0_16] : memref<9x48x192xbf16, #tpu.memory_space<vmem>>, vector<1x48x192xbf16>
    %15 = vector.shape_cast %14 : vector<1x48x192xbf16> to vector<48x192xbf16>
    %cst_17 = arith.constant dense<0.000000e+00> : vector<3x192xf32>
    %16 = tpu.matmul %13, %15, %cst_17 {dimension_numbers = #tpu.dot_dimension_numbers<[1], [0], [0], [1], [0, 0, 1, 1], [], []>} : vector<3x48xbf16>, vector<48x192xbf16>, vector<3x192xf32> -> vector<3x192xf32>
    %17 = arith.addf %11, %16 : vector<3x192xf32>
    %c0_18 = arith.constant 0 : index
    %c2 = arith.constant 2 : index
    %c0_19 = arith.constant 0 : index
    %18 = vector.load %arg1[%c0_18, %c2, %c0_19] : memref<1x17x48xbf16, #tpu.memory_space<vmem>>, vector<1x3x48xbf16>
    %19 = vector.shape_cast %18 : vector<1x3x48xbf16> to vector<3x48xbf16>
    %c2_20 = arith.constant 2 : index
    %c0_21 = arith.constant 0 : index
    %c0_22 = arith.constant 0 : index
    %20 = vector.load %arg3[%c2_20, %c0_21, %c0_22] : memref<9x48x192xbf16, #tpu.memory_space<vmem>>, vector<1x48x192xbf16>
    %21 = vector.shape_cast %20 : vector<1x48x192xbf16> to vector<48x192xbf16>
    %cst_23 = arith.constant dense<0.000000e+00> : vector<3x192xf32>
    %22 = tpu.matmul %19, %21, %cst_23 {dimension_numbers = #tpu.dot_dimension_numbers<[1], [0], [0], [1], [0, 0, 1, 1], [], []>} : vector<3x48xbf16>, vector<48x192xbf16>, vector<3x192xf32> -> vector<3x192xf32>
    %23 = arith.addf %17, %22 : vector<3x192xf32>
    %c0_24 = arith.constant 0 : index
    %c3 = arith.constant 3 : index
    %c0_25 = arith.constant 0 : index
    %24 = vector.load %arg1[%c0_24, %c3, %c0_25] : memref<1x17x48xbf16, #tpu.memory_space<vmem>>, vector<1x3x48xbf16>
    %25 = vector.shape_cast %24 : vector<1x3x48xbf16> to vector<3x48xbf16>
    %c3_26 = arith.constant 3 : index
    %c0_27 = arith.constant 0 : index
    %c0_28 = arith.constant 0 : index
    %26 = vector.load %arg3[%c3_26, %c0_27, %c0_28] : memref<9x48x192xbf16, #tpu.memory_space<vmem>>, vector<1x48x192xbf16>
    %27 = vector.shape_cast %26 : vector<1x48x192xbf16> to vector<48x192xbf16>
    %cst_29 = arith.constant dense<0.000000e+00> : vector<3x192xf32>
    %28 = tpu.matmul %25, %27, %cst_29 {dimension_numbers = #tpu.dot_dimension_numbers<[1], [0], [0], [1], [0, 0, 1, 1], [], []>} : vector<3x48xbf16>, vector<48x192xbf16>, vector<3x192xf32> -> vector<3x192xf32>
    %29 = arith.addf %23, %28 : vector<3x192xf32>
    %c0_30 = arith.constant 0 : index
    %c4_31 = arith.constant 4 : index
    %c0_32 = arith.constant 0 : index
    %30 = vector.load %arg1[%c0_30, %c4_31, %c0_32] : memref<1x17x48xbf16, #tpu.memory_space<vmem>>, vector<1x3x48xbf16>
    %31 = vector.shape_cast %30 : vector<1x3x48xbf16> to vector<3x48xbf16>
    %c4_33 = arith.constant 4 : index
    %c0_34 = arith.constant 0 : index
    %c0_35 = arith.constant 0 : index
    %32 = vector.load %arg3[%c4_33, %c0_34, %c0_35] : memref<9x48x192xbf16, #tpu.memory_space<vmem>>, vector<1x48x192xbf16>
    %33 = vector.shape_cast %32 : vector<1x48x192xbf16> to vector<48x192xbf16>
    %cst_36 = arith.constant dense<0.000000e+00> : vector<3x192xf32>
    %34 = tpu.matmul %31, %33, %cst_36 {dimension_numbers = #tpu.dot_dimension_numbers<[1], [0], [0], [1], [0, 0, 1, 1], [], []>} : vector<3x48xbf16>, vector<48x192xbf16>, vector<3x192xf32> -> vector<3x192xf32>
    %35 = arith.addf %29, %34 : vector<3x192xf32>
    %c0_37 = arith.constant 0 : index
    %c5 = arith.constant 5 : index
    %c0_38 = arith.constant 0 : index
    %36 = vector.load %arg1[%c0_37, %c5, %c0_38] : memref<1x17x48xbf16, #tpu.memory_space<vmem>>, vector<1x3x48xbf16>
    %37 = vector.shape_cast %36 : vector<1x3x48xbf16> to vector<3x48xbf16>
    %c5_39 = arith.constant 5 : index
    %c0_40 = arith.constant 0 : index
    %c0_41 = arith.constant 0 : index
    %38 = vector.load %arg3[%c5_39, %c0_40, %c0_41] : memref<9x48x192xbf16, #tpu.memory_space<vmem>>, vector<1x48x192xbf16>
    %39 = vector.shape_cast %38 : vector<1x48x192xbf16> to vector<48x192xbf16>
    %cst_42 = arith.constant dense<0.000000e+00> : vector<3x192xf32>
    %40 = tpu.matmul %37, %39, %cst_42 {dimension_numbers = #tpu.dot_dimension_numbers<[1], [0], [0], [1], [0, 0, 1, 1], [], []>} : vector<3x48xbf16>, vector<48x192xbf16>, vector<3x192xf32> -> vector<3x192xf32>
    %41 = arith.addf %35, %40 : vector<3x192xf32>
    %c0_43 = arith.constant 0 : index
    %c6 = arith.constant 6 : index
    %c0_44 = arith.constant 0 : index
    %42 = vector.load %arg1[%c0_43, %c6, %c0_44] : memref<1x17x48xbf16, #tpu.memory_space<vmem>>, vector<1x3x48xbf16>
    %43 = vector.shape_cast %42 : vector<1x3x48xbf16> to vector<3x48xbf16>
    %c6_45 = arith.constant 6 : index
    %c0_46 = arith.constant 0 : index
    %c0_47 = arith.constant 0 : index
    %44 = vector.load %arg3[%c6_45, %c0_46, %c0_47] : memref<9x48x192xbf16, #tpu.memory_space<vmem>>, vector<1x48x192xbf16>
    %45 = vector.shape_cast %44 : vector<1x48x192xbf16> to vector<48x192xbf16>
    %cst_48 = arith.constant dense<0.000000e+00> : vector<3x192xf32>
    %46 = tpu.matmul %43, %45, %cst_48 {dimension_numbers = #tpu.dot_dimension_numbers<[1], [0], [0], [1], [0, 0, 1, 1], [], []>} : vector<3x48xbf16>, vector<48x192xbf16>, vector<3x192xf32> -> vector<3x192xf32>
    %47 = arith.addf %41, %46 : vector<3x192xf32>
    %c0_49 = arith.constant 0 : index
    %c7 = arith.constant 7 : index
    %c0_50 = arith.constant 0 : index
    %48 = vector.load %arg1[%c0_49, %c7, %c0_50] : memref<1x17x48xbf16, #tpu.memory_space<vmem>>, vector<1x3x48xbf16>
    %49 = vector.shape_cast %48 : vector<1x3x48xbf16> to vector<3x48xbf16>
    %c7_51 = arith.constant 7 : index
    %c0_52 = arith.constant 0 : index
    %c0_53 = arith.constant 0 : index
    %50 = vector.load %arg3[%c7_51, %c0_52, %c0_53] : memref<9x48x192xbf16, #tpu.memory_space<vmem>>, vector<1x48x192xbf16>
    %51 = vector.shape_cast %50 : vector<1x48x192xbf16> to vector<48x192xbf16>
    %cst_54 = arith.constant dense<0.000000e+00> : vector<3x192xf32>
    %52 = tpu.matmul %49, %51, %cst_54 {dimension_numbers = #tpu.dot_dimension_numbers<[1], [0], [0], [1], [0, 0, 1, 1], [], []>} : vector<3x48xbf16>, vector<48x192xbf16>, vector<3x192xf32> -> vector<3x192xf32>
    %53 = arith.addf %47, %52 : vector<3x192xf32>
    %c0_55 = arith.constant 0 : index
    %c8 = arith.constant 8 : index
    %c0_56 = arith.constant 0 : index
    %54 = vector.load %arg1[%c0_55, %c8, %c0_56] : memref<1x17x48xbf16, #tpu.memory_space<vmem>>, vector<1x3x48xbf16>
    %55 = vector.shape_cast %54 : vector<1x3x48xbf16> to vector<3x48xbf16>
    %c8_57 = arith.constant 8 : index
    %c0_58 = arith.constant 0 : index
    %c0_59 = arith.constant 0 : index
    %56 = vector.load %arg3[%c8_57, %c0_58, %c0_59] : memref<9x48x192xbf16, #tpu.memory_space<vmem>>, vector<1x48x192xbf16>
    %57 = vector.shape_cast %56 : vector<1x48x192xbf16> to vector<48x192xbf16>
    %cst_60 = arith.constant dense<0.000000e+00> : vector<3x192xf32>
    %58 = tpu.matmul %55, %57, %cst_60 {dimension_numbers = #tpu.dot_dimension_numbers<[1], [0], [0], [1], [0, 0, 1, 1], [], []>} : vector<3x48xbf16>, vector<48x192xbf16>, vector<3x192xf32> -> vector<3x192xf32>
    %59 = arith.addf %53, %58 : vector<3x192xf32>
    %c0_61 = arith.constant 0 : index
    %c0_62 = arith.constant 0 : index
    %60 = vector.load %arg5[%c0_61, %c0_62] : memref<1x192xf32, #tpu.memory_space<vmem>>, vector<1x192xf32>
    %61 = vector.broadcast %60 : vector<1x192xf32> to vector<3x192xf32>
    %62 = arith.addf %59, %61 : vector<3x192xf32>
    %63 = tpu.concatenate %6, %62 in 1 : vector<3x192xf32>, vector<3x192xf32> -> vector<3x384xf32>
    %cst_63 = arith.constant 0.000000e+00 : f32
    %64 = vector.broadcast %cst_63 : f32 to vector<3x384xf32>
    %65 = arith.maximumf %63, %64 : vector<3x384xf32>
    %66 = arith.truncf %65 : vector<3x384xf32> to vector<3x384xbf16>
    %c0_64 = arith.constant 0 : index
    %c0_65 = arith.constant 0 : index
    %c0_66 = arith.constant 0 : index
    %67 = vector.load %arg6[%c0_64, %c0_65, %c0_66] : memref<1x3x384xbf16, #tpu.memory_space<vmem>>, vector<1x3x384xbf16>
    %68 = vector.shape_cast %67 : vector<1x3x384xbf16> to vector<3x384xbf16>
    %69 = vector.shape_cast %66 : vector<3x384xbf16> to vector<1x3x384xbf16>
    tpu.vector_store %arg6[%c0_64, %c0_65, %c0_66], %69 {strides = array<i32>} : memref<1x3x384xbf16, #tpu.memory_space<vmem>>, vector<1x3x384xbf16>,
    return
  }
  func.func @transform_0(%arg0: i32) -> (i32, i32, i32) {
    %c0_i32 = arith.constant 0 : i32
    %c0_i32_0 = arith.constant 0 : i32
    %c0_i32_1 = arith.constant 0 : i32
    return %arg0, %c0_i32, %c0_i32_0 : i32, i32, i32
  }
  func.func @transform_1(%arg0: i32) -> (i32, i32) {
    %c0_i32 = arith.constant 0 : i32
    %c0_i32_0 = arith.constant 0 : i32
    %c0_i32_1 = arith.constant 0 : i32
    return %c0_i32, %c0_i32_0 : i32, i32
  }
  func.func @transform_2(%arg0: i32) -> (i32, i32, i32) {
    %c0_i32 = arith.constant 0 : i32
    %c0_i32_0 = arith.constant 0 : i32
    %c0_i32_1 = arith.constant 0 : i32
    %c0_i32_2 = arith.constant 0 : i32
    return %c0_i32, %c0_i32_0, %c0_i32_1 : i32, i32, i32
  }
  func.func @transform_3(%arg0: i32) -> (i32, i32) {
    %c0_i32 = arith.constant 0 : i32
    %c0_i32_0 = arith.constant 0 : i32
    %c0_i32_1 = arith.constant 0 : i32
    return %c0_i32, %c0_i32_0 : i32, i32
  }
  func.func @transform_4(%arg0: i32) -> (i32, i32) {
    %c0_i32 = arith.constant 0 : i32
    %c0_i32_0 = arith.constant 0 : i32
    %c0_i32_1 = arith.constant 0 : i32
    return %c0_i32, %c0_i32_0 : i32, i32
  }
  func.func @transform_5(%arg0: i32) -> (i32, i32, i32) {
    %c0_i32 = arith.constant 0 : i32
    %c0_i32_0 = arith.constant 0 : i32
    %c0_i32_1 = arith.constant 0 : i32
    return %arg0, %c0_i32, %c0_i32_0 : i32, i32, i32
  }
}

module attributes {stable_mosaic.version = 11 : i64} {
  func.func @_mm_bias_kernel(%arg0: i32, %arg1: memref<2x384xbf16, #tpu.memory_space<vmem>>, %arg2: memref<384x48xbf16, #tpu.memory_space<vmem>>, %arg3: memref<1x48xf32, #tpu.memory_space<vmem>>, %arg4: memref<2x48xbf16, #tpu.memory_space<vmem>>) attributes {dimension_semantics = [#tpu.dimension_semantics<parallel>], iteration_bounds = array<i64: 1>, scalar_prefetch = 0 : i64, scratch_operands = 0 : i64, tpu.core_type = #tpu.core_type<tc>, window_params = [{transform_indices = @transform_0, window_bounds = array<i64: 2, 384>}, {pipeline_mode = #tpu.pipeline_mode<synchronous>, transform_indices = @transform_1, window_bounds = array<i64: 384, 48>}, {pipeline_mode = #tpu.pipeline_mode<synchronous>, transform_indices = @transform_2, window_bounds = array<i64: 1, 48>}, {transform_indices = @transform_3, window_bounds = array<i64: 2, 48>}]} {
    %c0 = arith.constant 0 : index
    %c0_0 = arith.constant 0 : index
    %0 = vector.load %arg1[%c0, %c0_0] : memref<2x384xbf16, #tpu.memory_space<vmem>>, vector<2x384xbf16>
    %c0_1 = arith.constant 0 : index
    %c0_2 = arith.constant 0 : index
    %1 = vector.load %arg2[%c0_1, %c0_2] : memref<384x48xbf16, #tpu.memory_space<vmem>>, vector<384x48xbf16>
    %cst = arith.constant dense<0.000000e+00> : vector<2x48xf32>
    %2 = tpu.matmul %0, %1, %cst {dimension_numbers = #tpu.dot_dimension_numbers<[1], [0], [0], [1], [0, 0, 1, 1], [], []>} : vector<2x384xbf16>, vector<384x48xbf16>, vector<2x48xf32> -> vector<2x48xf32>
    %c0_3 = arith.constant 0 : index
    %c0_4 = arith.constant 0 : index
    %3 = vector.load %arg3[%c0_3, %c0_4] : memref<1x48xf32, #tpu.memory_space<vmem>>, vector<1x48xf32>
    %4 = vector.broadcast %3 : vector<1x48xf32> to vector<2x48xf32>
    %5 = arith.addf %2, %4 : vector<2x48xf32>
    %cst_5 = arith.constant 0.000000e+00 : f32
    %6 = vector.broadcast %cst_5 : f32 to vector<2x48xf32>
    %7 = arith.maximumf %5, %6 : vector<2x48xf32>
    %8 = arith.truncf %7 : vector<2x48xf32> to vector<2x48xbf16>
    %c0_6 = arith.constant 0 : index
    %c0_7 = arith.constant 0 : index
    %9 = vector.load %arg4[%c0_6, %c0_7] : memref<2x48xbf16, #tpu.memory_space<vmem>>, vector<2x48xbf16>
    tpu.vector_store %arg4[%c0_6, %c0_7], %8 {strides = array<i32>} : memref<2x48xbf16, #tpu.memory_space<vmem>>, vector<2x48xbf16>,
    return
  }
  func.func @transform_0(%arg0: i32) -> (i32, i32) {
    %c0_i32 = arith.constant 0 : i32
    %c0_i32_0 = arith.constant 0 : i32
    return %arg0, %c0_i32 : i32, i32
  }
  func.func @transform_1(%arg0: i32) -> (i32, i32) {
    %c0_i32 = arith.constant 0 : i32
    %c0_i32_0 = arith.constant 0 : i32
    %c0_i32_1 = arith.constant 0 : i32
    return %c0_i32, %c0_i32_0 : i32, i32
  }
  func.func @transform_2(%arg0: i32) -> (i32, i32) {
    %c0_i32 = arith.constant 0 : i32
    %c0_i32_0 = arith.constant 0 : i32
    %c0_i32_1 = arith.constant 0 : i32
    return %c0_i32, %c0_i32_0 : i32, i32
  }
  func.func @transform_3(%arg0: i32) -> (i32, i32) {
    %c0_i32 = arith.constant 0 : i32
    %c0_i32_0 = arith.constant 0 : i32
    return %arg0, %c0_i32 : i32, i32
  }
}

module attributes {stable_mosaic.version = 11 : i64} {
  func.func @_mm_bias_kernel(%arg0: i32, %arg1: memref<2x384xbf16, #tpu.memory_space<vmem>>, %arg2: memref<384x64xbf16, #tpu.memory_space<vmem>>, %arg3: memref<1x64xf32, #tpu.memory_space<vmem>>, %arg4: memref<2x64xbf16, #tpu.memory_space<vmem>>) attributes {dimension_semantics = [#tpu.dimension_semantics<parallel>], iteration_bounds = array<i64: 1>, scalar_prefetch = 0 : i64, scratch_operands = 0 : i64, tpu.core_type = #tpu.core_type<tc>, window_params = [{transform_indices = @transform_0, window_bounds = array<i64: 2, 384>}, {pipeline_mode = #tpu.pipeline_mode<synchronous>, transform_indices = @transform_1, window_bounds = array<i64: 384, 64>}, {pipeline_mode = #tpu.pipeline_mode<synchronous>, transform_indices = @transform_2, window_bounds = array<i64: 1, 64>}, {transform_indices = @transform_3, window_bounds = array<i64: 2, 64>}]} {
    %c0 = arith.constant 0 : index
    %c0_0 = arith.constant 0 : index
    %0 = vector.load %arg1[%c0, %c0_0] : memref<2x384xbf16, #tpu.memory_space<vmem>>, vector<2x384xbf16>
    %c0_1 = arith.constant 0 : index
    %c0_2 = arith.constant 0 : index
    %1 = vector.load %arg2[%c0_1, %c0_2] : memref<384x64xbf16, #tpu.memory_space<vmem>>, vector<384x64xbf16>
    %cst = arith.constant dense<0.000000e+00> : vector<2x64xf32>
    %2 = tpu.matmul %0, %1, %cst {dimension_numbers = #tpu.dot_dimension_numbers<[1], [0], [0], [1], [0, 0, 1, 1], [], []>} : vector<2x384xbf16>, vector<384x64xbf16>, vector<2x64xf32> -> vector<2x64xf32>
    %c0_3 = arith.constant 0 : index
    %c0_4 = arith.constant 0 : index
    %3 = vector.load %arg3[%c0_3, %c0_4] : memref<1x64xf32, #tpu.memory_space<vmem>>, vector<1x64xf32>
    %4 = vector.broadcast %3 : vector<1x64xf32> to vector<2x64xf32>
    %5 = arith.addf %2, %4 : vector<2x64xf32>
    %cst_5 = arith.constant 0.000000e+00 : f32
    %6 = vector.broadcast %cst_5 : f32 to vector<2x64xf32>
    %7 = arith.maximumf %5, %6 : vector<2x64xf32>
    %8 = arith.truncf %7 : vector<2x64xf32> to vector<2x64xbf16>
    %c0_6 = arith.constant 0 : index
    %c0_7 = arith.constant 0 : index
    %9 = vector.load %arg4[%c0_6, %c0_7] : memref<2x64xbf16, #tpu.memory_space<vmem>>, vector<2x64xbf16>
    tpu.vector_store %arg4[%c0_6, %c0_7], %8 {strides = array<i32>} : memref<2x64xbf16, #tpu.memory_space<vmem>>, vector<2x64xbf16>,
    return
  }
  func.func @transform_0(%arg0: i32) -> (i32, i32) {
    %c0_i32 = arith.constant 0 : i32
    %c0_i32_0 = arith.constant 0 : i32
    return %arg0, %c0_i32 : i32, i32
  }
  func.func @transform_1(%arg0: i32) -> (i32, i32) {
    %c0_i32 = arith.constant 0 : i32
    %c0_i32_0 = arith.constant 0 : i32
    %c0_i32_1 = arith.constant 0 : i32
    return %c0_i32, %c0_i32_0 : i32, i32
  }
  func.func @transform_2(%arg0: i32) -> (i32, i32) {
    %c0_i32 = arith.constant 0 : i32
    %c0_i32_0 = arith.constant 0 : i32
    %c0_i32_1 = arith.constant 0 : i32
    return %c0_i32, %c0_i32_0 : i32, i32
  }
  func.func @transform_3(%arg0: i32) -> (i32, i32) {
    %c0_i32 = arith.constant 0 : i32
    %c0_i32_0 = arith.constant 0 : i32
    return %arg0, %c0_i32 : i32, i32
  }
}

module attributes {stable_mosaic.version = 11 : i64} {
  func.func @_fire_expand_kernel(%arg0: i32, %arg1: memref<1x17x64xbf16, #tpu.memory_space<vmem>>, %arg2: memref<64x256xbf16, #tpu.memory_space<vmem>>, %arg3: memref<9x64x256xbf16, #tpu.memory_space<vmem>>, %arg4: memref<1x256xf32, #tpu.memory_space<vmem>>, %arg5: memref<1x256xf32, #tpu.memory_space<vmem>>, %arg6: memref<1x3x512xbf16, #tpu.memory_space<vmem>>) attributes {dimension_semantics = [#tpu.dimension_semantics<parallel>], iteration_bounds = array<i64: 2>, scalar_prefetch = 0 : i64, scratch_operands = 0 : i64, tpu.core_type = #tpu.core_type<tc>, window_params = [{transform_indices = @transform_0, window_bounds = array<i64: 1, 17, 64>}, {pipeline_mode = #tpu.pipeline_mode<synchronous>, transform_indices = @transform_1, window_bounds = array<i64: 64, 256>}, {pipeline_mode = #tpu.pipeline_mode<synchronous>, transform_indices = @transform_2, window_bounds = array<i64: 9, 64, 256>}, {pipeline_mode = #tpu.pipeline_mode<synchronous>, transform_indices = @transform_3, window_bounds = array<i64: 1, 256>}, {pipeline_mode = #tpu.pipeline_mode<synchronous>, transform_indices = @transform_4, window_bounds = array<i64: 1, 256>}, {transform_indices = @transform_5, window_bounds = array<i64: 1, 3, 512>}]} {
    %c0 = arith.constant 0 : index
    %c4 = arith.constant 4 : index
    %c0_0 = arith.constant 0 : index
    %0 = vector.load %arg1[%c0, %c4, %c0_0] : memref<1x17x64xbf16, #tpu.memory_space<vmem>>, vector<1x3x64xbf16>
    %1 = vector.shape_cast %0 : vector<1x3x64xbf16> to vector<3x64xbf16>
    %c0_1 = arith.constant 0 : index
    %c0_2 = arith.constant 0 : index
    %2 = vector.load %arg2[%c0_1, %c0_2] : memref<64x256xbf16, #tpu.memory_space<vmem>>, vector<64x256xbf16>
    %cst = arith.constant dense<0.000000e+00> : vector<3x256xf32>
    %3 = tpu.matmul %1, %2, %cst {dimension_numbers = #tpu.dot_dimension_numbers<[1], [0], [0], [1], [0, 0, 1, 1], [], []>} : vector<3x64xbf16>, vector<64x256xbf16>, vector<3x256xf32> -> vector<3x256xf32>
    %c0_3 = arith.constant 0 : index
    %c0_4 = arith.constant 0 : index
    %4 = vector.load %arg4[%c0_3, %c0_4] : memref<1x256xf32, #tpu.memory_space<vmem>>, vector<1x256xf32>
    %5 = vector.broadcast %4 : vector<1x256xf32> to vector<3x256xf32>
    %6 = arith.addf %3, %5 : vector<3x256xf32>
    %c0_5 = arith.constant 0 : index
    %c0_6 = arith.constant 0 : index
    %c0_7 = arith.constant 0 : index
    %7 = vector.load %arg1[%c0_5, %c0_6, %c0_7] : memref<1x17x64xbf16, #tpu.memory_space<vmem>>, vector<1x3x64xbf16>
    %8 = vector.shape_cast %7 : vector<1x3x64xbf16> to vector<3x64xbf16>
    %c0_8 = arith.constant 0 : index
    %c0_9 = arith.constant 0 : index
    %c0_10 = arith.constant 0 : index
    %9 = vector.load %arg3[%c0_8, %c0_9, %c0_10] : memref<9x64x256xbf16, #tpu.memory_space<vmem>>, vector<1x64x256xbf16>
    %10 = vector.shape_cast %9 : vector<1x64x256xbf16> to vector<64x256xbf16>
    %cst_11 = arith.constant dense<0.000000e+00> : vector<3x256xf32>
    %11 = tpu.matmul %8, %10, %cst_11 {dimension_numbers = #tpu.dot_dimension_numbers<[1], [0], [0], [1], [0, 0, 1, 1], [], []>} : vector<3x64xbf16>, vector<64x256xbf16>, vector<3x256xf32> -> vector<3x256xf32>
    %c0_12 = arith.constant 0 : index
    %c1 = arith.constant 1 : index
    %c0_13 = arith.constant 0 : index
    %12 = vector.load %arg1[%c0_12, %c1, %c0_13] : memref<1x17x64xbf16, #tpu.memory_space<vmem>>, vector<1x3x64xbf16>
    %13 = vector.shape_cast %12 : vector<1x3x64xbf16> to vector<3x64xbf16>
    %c1_14 = arith.constant 1 : index
    %c0_15 = arith.constant 0 : index
    %c0_16 = arith.constant 0 : index
    %14 = vector.load %arg3[%c1_14, %c0_15, %c0_16] : memref<9x64x256xbf16, #tpu.memory_space<vmem>>, vector<1x64x256xbf16>
    %15 = vector.shape_cast %14 : vector<1x64x256xbf16> to vector<64x256xbf16>
    %cst_17 = arith.constant dense<0.000000e+00> : vector<3x256xf32>
    %16 = tpu.matmul %13, %15, %cst_17 {dimension_numbers = #tpu.dot_dimension_numbers<[1], [0], [0], [1], [0, 0, 1, 1], [], []>} : vector<3x64xbf16>, vector<64x256xbf16>, vector<3x256xf32> -> vector<3x256xf32>
    %17 = arith.addf %11, %16 : vector<3x256xf32>
    %c0_18 = arith.constant 0 : index
    %c2 = arith.constant 2 : index
    %c0_19 = arith.constant 0 : index
    %18 = vector.load %arg1[%c0_18, %c2, %c0_19] : memref<1x17x64xbf16, #tpu.memory_space<vmem>>, vector<1x3x64xbf16>
    %19 = vector.shape_cast %18 : vector<1x3x64xbf16> to vector<3x64xbf16>
    %c2_20 = arith.constant 2 : index
    %c0_21 = arith.constant 0 : index
    %c0_22 = arith.constant 0 : index
    %20 = vector.load %arg3[%c2_20, %c0_21, %c0_22] : memref<9x64x256xbf16, #tpu.memory_space<vmem>>, vector<1x64x256xbf16>
    %21 = vector.shape_cast %20 : vector<1x64x256xbf16> to vector<64x256xbf16>
    %cst_23 = arith.constant dense<0.000000e+00> : vector<3x256xf32>
    %22 = tpu.matmul %19, %21, %cst_23 {dimension_numbers = #tpu.dot_dimension_numbers<[1], [0], [0], [1], [0, 0, 1, 1], [], []>} : vector<3x64xbf16>, vector<64x256xbf16>, vector<3x256xf32> -> vector<3x256xf32>
    %23 = arith.addf %17, %22 : vector<3x256xf32>
    %c0_24 = arith.constant 0 : index
    %c3 = arith.constant 3 : index
    %c0_25 = arith.constant 0 : index
    %24 = vector.load %arg1[%c0_24, %c3, %c0_25] : memref<1x17x64xbf16, #tpu.memory_space<vmem>>, vector<1x3x64xbf16>
    %25 = vector.shape_cast %24 : vector<1x3x64xbf16> to vector<3x64xbf16>
    %c3_26 = arith.constant 3 : index
    %c0_27 = arith.constant 0 : index
    %c0_28 = arith.constant 0 : index
    %26 = vector.load %arg3[%c3_26, %c0_27, %c0_28] : memref<9x64x256xbf16, #tpu.memory_space<vmem>>, vector<1x64x256xbf16>
    %27 = vector.shape_cast %26 : vector<1x64x256xbf16> to vector<64x256xbf16>
    %cst_29 = arith.constant dense<0.000000e+00> : vector<3x256xf32>
    %28 = tpu.matmul %25, %27, %cst_29 {dimension_numbers = #tpu.dot_dimension_numbers<[1], [0], [0], [1], [0, 0, 1, 1], [], []>} : vector<3x64xbf16>, vector<64x256xbf16>, vector<3x256xf32> -> vector<3x256xf32>
    %29 = arith.addf %23, %28 : vector<3x256xf32>
    %c0_30 = arith.constant 0 : index
    %c4_31 = arith.constant 4 : index
    %c0_32 = arith.constant 0 : index
    %30 = vector.load %arg1[%c0_30, %c4_31, %c0_32] : memref<1x17x64xbf16, #tpu.memory_space<vmem>>, vector<1x3x64xbf16>
    %31 = vector.shape_cast %30 : vector<1x3x64xbf16> to vector<3x64xbf16>
    %c4_33 = arith.constant 4 : index
    %c0_34 = arith.constant 0 : index
    %c0_35 = arith.constant 0 : index
    %32 = vector.load %arg3[%c4_33, %c0_34, %c0_35] : memref<9x64x256xbf16, #tpu.memory_space<vmem>>, vector<1x64x256xbf16>
    %33 = vector.shape_cast %32 : vector<1x64x256xbf16> to vector<64x256xbf16>
    %cst_36 = arith.constant dense<0.000000e+00> : vector<3x256xf32>
    %34 = tpu.matmul %31, %33, %cst_36 {dimension_numbers = #tpu.dot_dimension_numbers<[1], [0], [0], [1], [0, 0, 1, 1], [], []>} : vector<3x64xbf16>, vector<64x256xbf16>, vector<3x256xf32> -> vector<3x256xf32>
    %35 = arith.addf %29, %34 : vector<3x256xf32>
    %c0_37 = arith.constant 0 : index
    %c5 = arith.constant 5 : index
    %c0_38 = arith.constant 0 : index
    %36 = vector.load %arg1[%c0_37, %c5, %c0_38] : memref<1x17x64xbf16, #tpu.memory_space<vmem>>, vector<1x3x64xbf16>
    %37 = vector.shape_cast %36 : vector<1x3x64xbf16> to vector<3x64xbf16>
    %c5_39 = arith.constant 5 : index
    %c0_40 = arith.constant 0 : index
    %c0_41 = arith.constant 0 : index
    %38 = vector.load %arg3[%c5_39, %c0_40, %c0_41] : memref<9x64x256xbf16, #tpu.memory_space<vmem>>, vector<1x64x256xbf16>
    %39 = vector.shape_cast %38 : vector<1x64x256xbf16> to vector<64x256xbf16>
    %cst_42 = arith.constant dense<0.000000e+00> : vector<3x256xf32>
    %40 = tpu.matmul %37, %39, %cst_42 {dimension_numbers = #tpu.dot_dimension_numbers<[1], [0], [0], [1], [0, 0, 1, 1], [], []>} : vector<3x64xbf16>, vector<64x256xbf16>, vector<3x256xf32> -> vector<3x256xf32>
    %41 = arith.addf %35, %40 : vector<3x256xf32>
    %c0_43 = arith.constant 0 : index
    %c6 = arith.constant 6 : index
    %c0_44 = arith.constant 0 : index
    %42 = vector.load %arg1[%c0_43, %c6, %c0_44] : memref<1x17x64xbf16, #tpu.memory_space<vmem>>, vector<1x3x64xbf16>
    %43 = vector.shape_cast %42 : vector<1x3x64xbf16> to vector<3x64xbf16>
    %c6_45 = arith.constant 6 : index
    %c0_46 = arith.constant 0 : index
    %c0_47 = arith.constant 0 : index
    %44 = vector.load %arg3[%c6_45, %c0_46, %c0_47] : memref<9x64x256xbf16, #tpu.memory_space<vmem>>, vector<1x64x256xbf16>
    %45 = vector.shape_cast %44 : vector<1x64x256xbf16> to vector<64x256xbf16>
    %cst_48 = arith.constant dense<0.000000e+00> : vector<3x256xf32>
    %46 = tpu.matmul %43, %45, %cst_48 {dimension_numbers = #tpu.dot_dimension_numbers<[1], [0], [0], [1], [0, 0, 1, 1], [], []>} : vector<3x64xbf16>, vector<64x256xbf16>, vector<3x256xf32> -> vector<3x256xf32>
    %47 = arith.addf %41, %46 : vector<3x256xf32>
    %c0_49 = arith.constant 0 : index
    %c7 = arith.constant 7 : index
    %c0_50 = arith.constant 0 : index
    %48 = vector.load %arg1[%c0_49, %c7, %c0_50] : memref<1x17x64xbf16, #tpu.memory_space<vmem>>, vector<1x3x64xbf16>
    %49 = vector.shape_cast %48 : vector<1x3x64xbf16> to vector<3x64xbf16>
    %c7_51 = arith.constant 7 : index
    %c0_52 = arith.constant 0 : index
    %c0_53 = arith.constant 0 : index
    %50 = vector.load %arg3[%c7_51, %c0_52, %c0_53] : memref<9x64x256xbf16, #tpu.memory_space<vmem>>, vector<1x64x256xbf16>
    %51 = vector.shape_cast %50 : vector<1x64x256xbf16> to vector<64x256xbf16>
    %cst_54 = arith.constant dense<0.000000e+00> : vector<3x256xf32>
    %52 = tpu.matmul %49, %51, %cst_54 {dimension_numbers = #tpu.dot_dimension_numbers<[1], [0], [0], [1], [0, 0, 1, 1], [], []>} : vector<3x64xbf16>, vector<64x256xbf16>, vector<3x256xf32> -> vector<3x256xf32>
    %53 = arith.addf %47, %52 : vector<3x256xf32>
    %c0_55 = arith.constant 0 : index
    %c8 = arith.constant 8 : index
    %c0_56 = arith.constant 0 : index
    %54 = vector.load %arg1[%c0_55, %c8, %c0_56] : memref<1x17x64xbf16, #tpu.memory_space<vmem>>, vector<1x3x64xbf16>
    %55 = vector.shape_cast %54 : vector<1x3x64xbf16> to vector<3x64xbf16>
    %c8_57 = arith.constant 8 : index
    %c0_58 = arith.constant 0 : index
    %c0_59 = arith.constant 0 : index
    %56 = vector.load %arg3[%c8_57, %c0_58, %c0_59] : memref<9x64x256xbf16, #tpu.memory_space<vmem>>, vector<1x64x256xbf16>
    %57 = vector.shape_cast %56 : vector<1x64x256xbf16> to vector<64x256xbf16>
    %cst_60 = arith.constant dense<0.000000e+00> : vector<3x256xf32>
    %58 = tpu.matmul %55, %57, %cst_60 {dimension_numbers = #tpu.dot_dimension_numbers<[1], [0], [0], [1], [0, 0, 1, 1], [], []>} : vector<3x64xbf16>, vector<64x256xbf16>, vector<3x256xf32> -> vector<3x256xf32>
    %59 = arith.addf %53, %58 : vector<3x256xf32>
    %c0_61 = arith.constant 0 : index
    %c0_62 = arith.constant 0 : index
    %60 = vector.load %arg5[%c0_61, %c0_62] : memref<1x256xf32, #tpu.memory_space<vmem>>, vector<1x256xf32>
    %61 = vector.broadcast %60 : vector<1x256xf32> to vector<3x256xf32>
    %62 = arith.addf %59, %61 : vector<3x256xf32>
    %63 = tpu.concatenate %6, %62 in 1 : vector<3x256xf32>, vector<3x256xf32> -> vector<3x512xf32>
    %cst_63 = arith.constant 0.000000e+00 : f32
    %64 = vector.broadcast %cst_63 : f32 to vector<3x512xf32>
    %65 = arith.maximumf %63, %64 : vector<3x512xf32>
    %66 = arith.truncf %65 : vector<3x512xf32> to vector<3x512xbf16>
    %c0_64 = arith.constant 0 : index
    %c0_65 = arith.constant 0 : index
    %c0_66 = arith.constant 0 : index
    %67 = vector.load %arg6[%c0_64, %c0_65, %c0_66] : memref<1x3x512xbf16, #tpu.memory_space<vmem>>, vector<1x3x512xbf16>
    %68 = vector.shape_cast %67 : vector<1x3x512xbf16> to vector<3x512xbf16>
    %69 = vector.shape_cast %66 : vector<3x512xbf16> to vector<1x3x512xbf16>
    tpu.vector_store %arg6[%c0_64, %c0_65, %c0_66], %69 {strides = array<i32>} : memref<1x3x512xbf16, #tpu.memory_space<vmem>>, vector<1x3x512xbf16>,
    return
  }
  func.func @transform_0(%arg0: i32) -> (i32, i32, i32) {
    %c0_i32 = arith.constant 0 : i32
    %c0_i32_0 = arith.constant 0 : i32
    %c0_i32_1 = arith.constant 0 : i32
    return %arg0, %c0_i32, %c0_i32_0 : i32, i32, i32
  }
  func.func @transform_1(%arg0: i32) -> (i32, i32) {
    %c0_i32 = arith.constant 0 : i32
    %c0_i32_0 = arith.constant 0 : i32
    %c0_i32_1 = arith.constant 0 : i32
    return %c0_i32, %c0_i32_0 : i32, i32
  }
  func.func @transform_2(%arg0: i32) -> (i32, i32, i32) {
    %c0_i32 = arith.constant 0 : i32
    %c0_i32_0 = arith.constant 0 : i32
    %c0_i32_1 = arith.constant 0 : i32
    %c0_i32_2 = arith.constant 0 : i32
    return %c0_i32, %c0_i32_0, %c0_i32_1 : i32, i32, i32
  }
  func.func @transform_3(%arg0: i32) -> (i32, i32) {
    %c0_i32 = arith.constant 0 : i32
    %c0_i32_0 = arith.constant 0 : i32
    %c0_i32_1 = arith.constant 0 : i32
    return %c0_i32, %c0_i32_0 : i32, i32
  }
  func.func @transform_4(%arg0: i32) -> (i32, i32) {
    %c0_i32 = arith.constant 0 : i32
    %c0_i32_0 = arith.constant 0 : i32
    %c0_i32_1 = arith.constant 0 : i32
    return %c0_i32, %c0_i32_0 : i32, i32
  }
  func.func @transform_5(%arg0: i32) -> (i32, i32, i32) {
    %c0_i32 = arith.constant 0 : i32
    %c0_i32_0 = arith.constant 0 : i32
    %c0_i32_1 = arith.constant 0 : i32
    return %arg0, %c0_i32, %c0_i32_0 : i32, i32, i32
  }
}

module attributes {stable_mosaic.version = 11 : i64} {
  func.func @_mm_bias_kernel(%arg0: i32, %arg1: memref<2x512xbf16, #tpu.memory_space<vmem>>, %arg2: memref<512x64xbf16, #tpu.memory_space<vmem>>, %arg3: memref<1x64xf32, #tpu.memory_space<vmem>>, %arg4: memref<2x64xbf16, #tpu.memory_space<vmem>>) attributes {dimension_semantics = [#tpu.dimension_semantics<parallel>], iteration_bounds = array<i64: 1>, scalar_prefetch = 0 : i64, scratch_operands = 0 : i64, tpu.core_type = #tpu.core_type<tc>, window_params = [{transform_indices = @transform_0, window_bounds = array<i64: 2, 512>}, {pipeline_mode = #tpu.pipeline_mode<synchronous>, transform_indices = @transform_1, window_bounds = array<i64: 512, 64>}, {pipeline_mode = #tpu.pipeline_mode<synchronous>, transform_indices = @transform_2, window_bounds = array<i64: 1, 64>}, {transform_indices = @transform_3, window_bounds = array<i64: 2, 64>}]} {
    %c0 = arith.constant 0 : index
    %c0_0 = arith.constant 0 : index
    %0 = vector.load %arg1[%c0, %c0_0] : memref<2x512xbf16, #tpu.memory_space<vmem>>, vector<2x512xbf16>
    %c0_1 = arith.constant 0 : index
    %c0_2 = arith.constant 0 : index
    %1 = vector.load %arg2[%c0_1, %c0_2] : memref<512x64xbf16, #tpu.memory_space<vmem>>, vector<512x64xbf16>
    %cst = arith.constant dense<0.000000e+00> : vector<2x64xf32>
    %2 = tpu.matmul %0, %1, %cst {dimension_numbers = #tpu.dot_dimension_numbers<[1], [0], [0], [1], [0, 0, 1, 1], [], []>} : vector<2x512xbf16>, vector<512x64xbf16>, vector<2x64xf32> -> vector<2x64xf32>
    %c0_3 = arith.constant 0 : index
    %c0_4 = arith.constant 0 : index
    %3 = vector.load %arg3[%c0_3, %c0_4] : memref<1x64xf32, #tpu.memory_space<vmem>>, vector<1x64xf32>
    %4 = vector.broadcast %3 : vector<1x64xf32> to vector<2x64xf32>
    %5 = arith.addf %2, %4 : vector<2x64xf32>
    %cst_5 = arith.constant 0.000000e+00 : f32
    %6 = vector.broadcast %cst_5 : f32 to vector<2x64xf32>
    %7 = arith.maximumf %5, %6 : vector<2x64xf32>
    %8 = arith.truncf %7 : vector<2x64xf32> to vector<2x64xbf16>
    %c0_6 = arith.constant 0 : index
    %c0_7 = arith.constant 0 : index
    %9 = vector.load %arg4[%c0_6, %c0_7] : memref<2x64xbf16, #tpu.memory_space<vmem>>, vector<2x64xbf16>
    tpu.vector_store %arg4[%c0_6, %c0_7], %8 {strides = array<i32>} : memref<2x64xbf16, #tpu.memory_space<vmem>>, vector<2x64xbf16>,
    return
  }
  func.func @transform_0(%arg0: i32) -> (i32, i32) {
    %c0_i32 = arith.constant 0 : i32
    %c0_i32_0 = arith.constant 0 : i32
    return %arg0, %c0_i32 : i32, i32
  }
  func.func @transform_1(%arg0: i32) -> (i32, i32) {
    %c0_i32 = arith.constant 0 : i32
    %c0_i32_0 = arith.constant 0 : i32
    %c0_i32_1 = arith.constant 0 : i32
    return %c0_i32, %c0_i32_0 : i32, i32
  }
  func.func @transform_2(%arg0: i32) -> (i32, i32) {
    %c0_i32 = arith.constant 0 : i32
    %c0_i32_0 = arith.constant 0 : i32
    %c0_i32_1 = arith.constant 0 : i32
    return %c0_i32, %c0_i32_0 : i32, i32
  }
  func.func @transform_3(%arg0: i32) -> (i32, i32) {
    %c0_i32 = arith.constant 0 : i32
    %c0_i32_0 = arith.constant 0 : i32
    return %arg0, %c0_i32 : i32, i32
  }
}

</mosaic_0001>

<llo_original>
// kernel: lightweight_feat_forward.22
$region0: #{lightweight_feat_forward.22}
  #allocation0 [shape = 'u32[]', space=smem, size = 0x4, offset = 0x4, fixed_abs, tag = 'smem constant byte address 0x4 - core index']
  #allocation1 [shape = 'u32[144,128]{1,0:T(1,128)}', space=vmem, size = 0x12000, scoped, tag = 'internal scratch']
  %s0 = inlined_call_operand.vmem [shape: bf16[98,64], index: 0, kind: input, shape index: {}]
  %s1 = inlined_call_operand.vmem [shape: bf16[64,16], index: 1, kind: input, shape index: {}]
  %s2 = inlined_call_operand.vmem [shape: f32[1,16], index: 2, kind: input, shape index: {}]
  %s3 = inlined_call_operand.vmem [shape: bf16[98,16], index: 3, kind: output, shape index: {}]
  %s4 = sld [smem:[#allocation0]]
  $region22: #{lightweight_feat_forward.22} parent=0
    _
  %s6 = ssub.s32 1, %s4
  %s7 = scalar_select 0, %s6, %s4
  // Predicated region
  $region2: #{lightweight_feat_forward.22} parent=0 // pred_check
    _
  $region3: #{lightweight_feat_forward.22} parent=0 // pred_check_branch
    %9 = sbr.rel (0) target = $region5
  $region4: #{lightweight_feat_forward.22} parent=0 // pred_region
    _
  $region5: #{lightweight_feat_forward.22} parent=0 // pred_fallthru
    _
  // Predicated region
  $region6: #{lightweight_feat_forward.22} parent=0 // pred_check
    _
  $region7: #{lightweight_feat_forward.22} parent=0 // pred_check_branch
    %11 = sbr.rel (0) target = $region9
  $region8: #{lightweight_feat_forward.22} parent=0 // pred_region
    _
  $region9: #{lightweight_feat_forward.22} parent=0 // pred_fallthru
    _
  // Predicated region
  $region10: #{lightweight_feat_forward.22} parent=0 // pred_check
    _
  $region11: #{lightweight_feat_forward.22} parent=0 // pred_check_branch
    %13 = sbr.rel (0) target = $region13
  $region12: #{lightweight_feat_forward.22} parent=0 // pred_region
    _
  $region13: #{lightweight_feat_forward.22} parent=0 // pred_fallthru
    _
  %v15 = vld [vmem:[%s0] sm:$0xf]
  %v16 = vld [vmem:[%s0 + $0x4] sm:$0xf]
  %v17 = vld [vmem:[%s0 + $0x8] sm:$0xf]
  %v18 = vld [vmem:[%s0 + $0xc] sm:$0xf]
  %v19 = vld [vmem:[%s0 + $0x10] sm:$0xf]
  %v20 = vld [vmem:[%s0 + $0x14] sm:$0xf]
  %v21 = vld [vmem:[%s0 + $0x18] sm:$0xf]
  %v22 = vld [vmem:[%s0 + $0x1c] sm:$0xf]
  %v23 = vld [vmem:[%s0 + $0x20] sm:$0xf]
  %v24 = vld [vmem:[%s0 + $0x24] sm:$0xf]
  %v25 = vld [vmem:[%s0 + $0x28] sm:$0xf]
  %v26 = vld [vmem:[%s0 + $0x2c] sm:$0xf]
  %v27 = vld [vmem:[%s0 + $0x30] sm:$0x1]
  %v28 = vld [vmem:[%s1] sm:$0xf]
  %v29 = vld [vmem:[%s1 + $0x4] sm:$0xf]
  %v30 = vld [vmem:[%s1 + $0x8] sm:$0xf]
  %v31 = vld [vmem:[%s1 + $0xc] sm:$0xf]
  %v32 = vld [vmem:[%s1 + $0x10] sm:$0xf]
  %v33 = vld [vmem:[%s1 + $0x14] sm:$0xf]
  %v34 = vld [vmem:[%s1 + $0x18] sm:$0xf]
  %v35 = vld [vmem:[%s1 + $0x1c] sm:$0xf]
  %v36 = vld [vmem:[%s2] sm:$0x1]
  %v38 = vlaneseq
  %v39 = vshrl.u32 %v38, 7
  %v40 = vsub.s32 0, %v39
  %v41 = vrot.slane %v36, %v40
  %v56 = vunpack.c.l.b16 %v15
  %v57 = vunpack.c.l.b16 %v16
  %v58 = vunpack.c.l.b16 %v17
  %v59 = vunpack.c.l.b16 %v18
  %v60 = vunpack.c.l.b16 %v19
  %v61 = vunpack.c.l.b16 %v20
  %v62 = vunpack.c.l.b16 %v21
  %v63 = vunpack.c.l.b16 %v22
  %v64 = vunpack.c.l.b16 %v23
  %v65 = vunpack.c.l.b16 %v24
  %v66 = vunpack.c.l.b16 %v25
  %v67 = vunpack.c.l.b16 %v26
  %v68 = vunpack.c.l.b16 %v27
  %v69 = vpack.c.b16 %v57, %v56
  %v70 = vpack.c.b16 %v59, %v58
  %v71 = vpack.c.b16 %v61, %v60
  %v72 = vpack.c.b16 %v63, %v62
  %v73 = vpack.c.b16 %v65, %v64
  %v74 = vpack.c.b16 %v67, %v66
  %v75 = vpack.c.b16 %v68, %v68
  %v84 = vunpack.c.l.b16 %v28
  %v85 = vunpack.c.l.b16 %v29
  %v86 = vunpack.c.l.b16 %v30
  %v87 = vunpack.c.l.b16 %v31
  %v88 = vunpack.c.l.b16 %v32
  %v89 = vunpack.c.l.b16 %v33
  %v90 = vunpack.c.l.b16 %v34
  %v91 = vunpack.c.l.b16 %v35
  %v92 = vpack.c.b16 %v85, %v84
  %v93 = vpack.c.b16 %v87, %v86
  %v94 = vpack.c.b16 %v89, %v88
  %v95 = vpack.c.b16 %v91, %v90
  %vm100 = vcmask 523264
  %v102 = vsel %vm100, %v69, 0
  %v105 = vsel %vm100, %v70, 0
  %v108 = vsel %vm100, %v71, 0
  %v111 = vsel %vm100, %v72, 0
  %v114 = vsel %vm100, %v73, 0
  %v117 = vsel %vm100, %v74, 0
  %v120 = vsel %vm100, %v75, 0
  %122 = vmatprep.subr.bf16.mxu0 0
  %123 = vmatpush1.bf16.msra.mxu0 0
  %124 = vmatprep.subr.bf16.mxu0 0
  %125 = vmatpush1.bf16.msra.mxu0 0
  %126 = vmatprep.subr.bf16.mxu0 0
  %127 = vmatpush1.bf16.msra.mxu0 0
  %128 = vmatprep.subr.bf16.mxu0 0
  %129 = vmatpush1.bf16.msra.mxu0 0
  %130 = vmatprep.subr.bf16.mxu0 0
  %131 = vmatpush1.bf16.msra.mxu0 %v95
  %132 = vmatprep.subr.bf16.mxu0 0
  %133 = vmatpush1.bf16.msra.mxu0 %v94
  %134 = vmatprep.subr.bf16.mxu0 0
  %135 = vmatpush1.bf16.msra.mxu0 %v93
  %136 = vmatprep.subr.bf16.mxu0 0
  %137 = vmatpush1.bf16.msra.mxu0 %v92
  %138 = vmatprep.subr.bf16.mxu0 0
  %139 = vmatpush2.bf16.msra.mxu0 0
  %140 = vmatprep.subr.bf16.mxu0 0
  %141 = vmatpush2.bf16.msra.mxu0 0
  %142 = vmatprep.subr.bf16.mxu0 0
  %143 = vmatpush2.bf16.msra.mxu0 0
  %144 = vmatprep.subr.bf16.mxu0 0
  %145 = vmatpush2.bf16.msra.mxu0 0
  %146 = vmatprep.subr.bf16.mxu0 0
  %147 = vmatpush2.bf16.msra.mxu0 0
  %148 = vmatprep.subr.bf16.mxu0 0
  %149 = vmatpush2.bf16.msra.mxu0 0
  %150 = vmatprep.subr.bf16.mxu0 0
  %151 = vmatpush2.bf16.msra.mxu0 0
  %152 = vmatprep.subr.bf16.mxu0 0
  %153 = vmatpush2.bf16.msra.mxu0 0
  %154 = vmatprep.mubr.bf16.mxu0 0
  %155 = vmatmul.mubr.bf16.gmra.mxu0 %v102
  %v156 = vpop.f32.mrf.mxu0
  %v157 = vadd.f32 %v41, %v156
  %v158 = vpop.f32.mrf.mxu0
  %v159 = vpop.f32.mrf.mxu0
  %v160 = vadd.f32 %v41, %v159
  %v161 = vpop.f32.mrf.mxu0
  %162 = vmatprep.mubr.bf16.mxu0 0
  %163 = vmatmul.mubr.bf16.gmra.mxu0 %v105
  %v164 = vpop.f32.mrf.mxu0
  %v165 = vadd.f32 %v41, %v164
  %v166 = vpop.f32.mrf.mxu0
  %v167 = vpop.f32.mrf.mxu0
  %v168 = vadd.f32 %v41, %v167
  %v169 = vpop.f32.mrf.mxu0
  %170 = vmatprep.mubr.bf16.mxu0 0
  %171 = vmatmul.mubr.bf16.gmra.mxu0 %v108
  %v172 = vpop.f32.mrf.mxu0
  %v173 = vadd.f32 %v41, %v172
  %v174 = vpop.f32.mrf.mxu0
  %v175 = vpop.f32.mrf.mxu0
  %v176 = vadd.f32 %v41, %v175
  %v177 = vpop.f32.mrf.mxu0
  %178 = vmatprep.mubr.bf16.mxu0 0
  %179 = vmatmul.mubr.bf16.gmra.mxu0 %v111
  %v180 = vpop.f32.mrf.mxu0
  %v181 = vadd.f32 %v41, %v180
  %v182 = vpop.f32.mrf.mxu0
  %v183 = vpop.f32.mrf.mxu0
  %v184 = vadd.f32 %v41, %v183
  %v185 = vpop.f32.mrf.mxu0
  %186 = vmatprep.mubr.bf16.mxu0 0
  %187 = vmatmul.mubr.bf16.gmra.mxu0 %v114
  %v188 = vpop.f32.mrf.mxu0
  %v189 = vadd.f32 %v41, %v188
  %v190 = vpop.f32.mrf.mxu0
  %v191 = vpop.f32.mrf.mxu0
  %v192 = vadd.f32 %v41, %v191
  %v193 = vpop.f32.mrf.mxu0
  %194 = vmatprep.mubr.bf16.mxu0 0
  %195 = vmatmul.mubr.bf16.gmra.mxu0 %v117
  %v196 = vpop.f32.mrf.mxu0
  %v197 = vadd.f32 %v41, %v196
  %v198 = vpop.f32.mrf.mxu0
  %v199 = vpop.f32.mrf.mxu0
  %v200 = vadd.f32 %v41, %v199
  %v201 = vpop.f32.mrf.mxu0
  %202 = vmatprep.mubr.bf16.mxu0 0
  %203 = vmatmul.mubr.bf16.gmra.mxu0 %v120
  %v204 = vpop.f32.mrf.mxu0
  %v205 = vadd.f32 %v41, %v204
  %v206 = vpop.f32.mrf.mxu0
  %v207 = vpop.f32.mrf.mxu0
  %v208 = vpop.f32.mrf.mxu0
  %209 = vdwg.mxu0
  %v210 = vmax.f32 %v157, 0.0
  %v211 = vmax.f32 %v160, 0.0
  %v212 = vmax.f32 %v165, 0.0
  %v213 = vmax.f32 %v168, 0.0
  %v214 = vmax.f32 %v173, 0.0
  %v215 = vmax.f32 %v176, 0.0
  %v216 = vmax.f32 %v181, 0.0
  %v217 = vmax.f32 %v184, 0.0
  %v218 = vmax.f32 %v189, 0.0
  %v219 = vmax.f32 %v192, 0.0
  %v220 = vmax.f32 %v197, 0.0
  %v221 = vmax.f32 %v200, 0.0
  %v222 = vmax.f32 %v205, 0.0
  %v223 = vpack.c.bf16 %v211, %v210
  %v224 = vpack.c.bf16 %v213, %v212
  %v225 = vpack.c.bf16 %v215, %v214
  %v226 = vpack.c.bf16 %v217, %v216
  %v227 = vpack.c.bf16 %v219, %v218
  %v228 = vpack.c.bf16 %v221, %v220
  %v229 = vpack.c.bf16 %v222, %v222
  %v237 = vunpack.c.l.b16 %v223
  %v238 = vunpack.c.h.b16 %v223
  %v239 = vunpack.c.l.b16 %v224
  %v240 = vunpack.c.h.b16 %v224
  %v241 = vunpack.c.l.b16 %v225
  %v242 = vunpack.c.h.b16 %v225
  %v243 = vunpack.c.l.b16 %v226
  %v244 = vunpack.c.h.b16 %v226
  %v245 = vunpack.c.l.b16 %v227
  %v246 = vunpack.c.h.b16 %v227
  %v247 = vunpack.c.l.b16 %v228
  %v248 = vunpack.c.h.b16 %v228
  %v249 = vunpack.c.l.b16 %v229
  %v250 = vpack.c.b16 %v237, %v237
  %v251 = vpack.c.b16 %v238, %v238
  %v252 = vpack.c.b16 %v239, %v239
  %v253 = vpack.c.b16 %v240, %v240
  %v254 = vpack.c.b16 %v241, %v241
  %v255 = vpack.c.b16 %v242, %v242
  %v256 = vpack.c.b16 %v243, %v243
  %v257 = vpack.c.b16 %v244, %v244
  %v258 = vpack.c.b16 %v245, %v245
  %v259 = vpack.c.b16 %v246, %v246
  %v260 = vpack.c.b16 %v247, %v247
  %v261 = vpack.c.b16 %v248, %v248
  %v262 = vpack.c.b16 %v249, %v249
  %vm276 = vcmask 125952
  %277 = vst.msk [vmem:[%s3] sm:$0xf] %vm276, %v250
  %278 = vst.msk [vmem:[%s3 + $0x4] sm:$0xf] %vm276, %v251
  %279 = vst.msk [vmem:[%s3 + $0x8] sm:$0xf] %vm276, %v252
  %280 = vst.msk [vmem:[%s3 + $0xc] sm:$0xf] %vm276, %v253
  %281 = vst.msk [vmem:[%s3 + $0x10] sm:$0xf] %vm276, %v254
  %282 = vst.msk [vmem:[%s3 + $0x14] sm:$0xf] %vm276, %v255
  %283 = vst.msk [vmem:[%s3 + $0x18] sm:$0xf] %vm276, %v256
  %284 = vst.msk [vmem:[%s3 + $0x1c] sm:$0xf] %vm276, %v257
  %285 = vst.msk [vmem:[%s3 + $0x20] sm:$0xf] %vm276, %v258
  %286 = vst.msk [vmem:[%s3 + $0x24] sm:$0xf] %vm276, %v259
  %287 = vst.msk [vmem:[%s3 + $0x28] sm:$0xf] %vm276, %v260
  %288 = vst.msk [vmem:[%s3 + $0x2c] sm:$0xf] %vm276, %v261
  %vm289 = vcmask 122880
  %290 = vst.msk [vmem:[%s3 + $0x30] sm:$0x1] %vm289, %v262
  // Predicated region
  $region14: #{lightweight_feat_forward.22} parent=0 // pred_check
    _
  $region15: #{lightweight_feat_forward.22} parent=0 // pred_check_branch
    %292 = sbr.rel (0) target = $region17
  $region16: #{lightweight_feat_forward.22} parent=0 // pred_region
    _
  $region17: #{lightweight_feat_forward.22} parent=0 // pred_fallthru
    _
  // Predicated region
  $region18: #{lightweight_feat_forward.22} parent=0 // pred_check
    _
  $region19: #{lightweight_feat_forward.22} parent=0 // pred_check_branch
    %294 = sbr.rel (0) target = $region21
  $region20: #{lightweight_feat_forward.22} parent=0 // pred_region
    _
  $region21: #{lightweight_feat_forward.22} parent=0 // pred_fallthru
    _

// kernel: lightweight_feat_forward.20
$region0: #{lightweight_feat_forward.20}
  #allocation0 [shape = 'u32[]', space=smem, size = 0x4, offset = 0x4, fixed_abs, tag = 'smem constant byte address 0x4 - core index']
  #allocation1 [shape = 'u32[144,128]{1,0:T(1,128)}', space=vmem, size = 0x12000, scoped, tag = 'internal scratch']
  %s0 = inlined_call_operand.vmem [shape: bf16[450,27], index: 0, kind: input, shape index: {}]
  %s1 = inlined_call_operand.vmem [shape: bf16[27,64], index: 1, kind: input, shape index: {}]
  %s2 = inlined_call_operand.vmem [shape: f32[1,64], index: 2, kind: input, shape index: {}]
  %s3 = inlined_call_operand.vmem [shape: bf16[450,64], index: 3, kind: output, shape index: {}]
  %s4 = sld [smem:[#allocation0]]
  $region89: #{lightweight_feat_forward.20} parent=0
    _
  %s6 = ssub.s32 1, %s4
  %s7 = scalar_select 0, %s6, %s4
  $region1: #{lightweight_feat_forward.20} parent=0
    #allocation2 [shape = 'u8[131072]{0}', space=vmem, size = 0x20000, scoped, tag = 'output window, operand 0']
    loop: start=0, step=1, limit=4
    $region2: #{lightweight_feat_forward.20} parent=1 // loop_pre_header
      _
    $region3: #{lightweight_feat_forward.20} parent=1 // loop_header
      %s9 = sphi 0, %s13
      %p10 = scmp.ge.s32.totalorder %s9, 4
      %s19 = sphi 0, %s21
      %s22 = sphi 0, %s19
      %s23 = sphi 0, %s22
      %s39 = sphi 0, %s23
      %s43 = sphi 0, %s43
      %s45 = sphi 0, %s43
      %s46 = sphi 0, %s45
      %s60 = sphi 0, %s46
      %s64 = sphi 0, %s64
      %s66 = sphi 0, %s64
      %s67 = sphi 0, %s66
      %s81 = sphi 0, %s67
      %s87 = sphi 0, %s89
      %s90 = sphi 0, %s87
      %s91 = sphi 0, %s90
      %s107 = sphi 0, %s91
    $region4: #{lightweight_feat_forward.20} parent=1 // loop_header_branch
      %12 = sbr.rel (%p10) target = $region8
    $region5: #{lightweight_feat_forward.20} parent=1 // loop_body
      %s14 = ssub.s32 %s9, 1
      %s15 = ssub.s32 %s9, 2
      %s16 = sadd.s32 %s9, 1
      %s17 = ssub.s32 %s9, %s16
      %p18 = scmp.eq.s32.totalorder %s17, 0
      %s20 = sadd.s32 %s19, 1
      %s21 = scalar_select %p18, %s19, %s20
      %p24 = pneg %p18
      %p25 = scmp.eq.s32.totalorder %s9, 1
      %p26 = por %p24, %p25
      %p27 = scmp.ne.s32.totalorder %s19, %s22
      %p28 = scmp.eq.s32.totalorder %s9, 0
      %p29 = por %p27, %p28
      %p30 = scmp.ne.s32.totalorder %s19, %s22
      %p31 = scmp.eq.s32.totalorder %s14, 1
      %p32 = por %p30, %p31
      %p33 = scmp.ne.s32.totalorder %s22, %s23
      %p34 = scmp.eq.s32.totalorder %s14, 0
      %p35 = por %p33, %p34
      %p36 = scmp.ne.s32.totalorder %s22, %s23
      %p37 = scmp.eq.s32.totalorder %s15, 1
      %p38 = por %p36, %p37
      %p40 = scmp.ne.s32.totalorder %s23, %s39
      %p41 = scmp.eq.s32.totalorder %s15, 0
      %p42 = por %p40, %p41
      %s44 = sadd.s32 %s43, 1
      %p47 = scmp.eq.s32.totalorder %s9, 1
      %p48 = scmp.ne.s32.totalorder %s43, %s45
      %p49 = scmp.eq.s32.totalorder %s9, 0
      %p50 = por %p48, %p49
      %p51 = scmp.ne.s32.totalorder %s43, %s45
      %p52 = scmp.eq.s32.totalorder %s14, 1
      %p53 = por %p51, %p52
      %p54 = scmp.ne.s32.totalorder %s45, %s46
      %p55 = scmp.eq.s32.totalorder %s14, 0
      %p56 = por %p54, %p55
      %p57 = scmp.ne.s32.totalorder %s45, %s46
      %p58 = scmp.eq.s32.totalorder %s15, 1
      %p59 = por %p57, %p58
      %p61 = scmp.ne.s32.totalorder %s46, %s60
      %p62 = scmp.eq.s32.totalorder %s15, 0
      %p63 = por %p61, %p62
      %s65 = sadd.s32 %s64, 1
      %p68 = scmp.eq.s32.totalorder %s9, 1
      %p69 = scmp.ne.s32.totalorder %s64, %s66
      %p70 = scmp.eq.s32.totalorder %s9, 0
      %p71 = por %p69, %p70
      %p72 = scmp.ne.s32.totalorder %s64, %s66
      %p73 = scmp.eq.s32.totalorder %s14, 1
      %p74 = por %p72, %p73
      %p75 = scmp.ne.s32.totalorder %s66, %s67
      %p76 = scmp.eq.s32.totalorder %s14, 0
      %p77 = por %p75, %p76
      %p78 = scmp.ne.s32.totalorder %s66, %s67
      %p79 = scmp.eq.s32.totalorder %s15, 1
      %p80 = por %p78, %p79
      %p82 = scmp.ne.s32.totalorder %s67, %s81
      %p83 = scmp.eq.s32.totalorder %s15, 0
      %p84 = por %p82, %p83
      %s85 = ssub.s32 %s9, %s16
      %p86 = scmp.eq.s32.totalorder %s85, 0
      %s88 = sadd.s32 %s87, 1
      %s89 = scalar_select %p86, %s87, %s88
      %p92 = pneg %p86
      %p93 = scmp.eq.s32.totalorder %s9, 1
      %p94 = por %p92, %p93
      %p95 = scmp.ne.s32.totalorder %s87, %s90
      %p96 = scmp.eq.s32.totalorder %s9, 0
      %p97 = por %p95, %p96
      %p98 = scmp.ne.s32.totalorder %s87, %s90
      %p99 = scmp.eq.s32.totalorder %s14, 1
      %p100 = por %p98, %p99
      %p101 = scmp.ne.s32.totalorder %s90, %s91
      %p102 = scmp.eq.s32.totalorder %s14, 0
      %p103 = por %p101, %p102
      %p104 = scmp.ne.s32.totalorder %s90, %s91
      %p105 = scmp.eq.s32.totalorder %s15, 1
      %p106 = por %p104, %p105
      %p108 = scmp.ne.s32.totalorder %s91, %s107
      %p109 = scmp.eq.s32.totalorder %s15, 0
      %p110 = por %p108, %p109
      %p111 = scmp.le.s32.totalorder 1, %s9
      %p112 = scmp.lt.s32.totalorder %s9, 3
      %p113 = pnand %p111, %p112
      %p114 = pneg %p113
      // Predicated region
      $region9: #{lightweight_feat_forward.20} parent=5 // pred_check
        _
      $region10: #{lightweight_feat_forward.20} parent=5 // pred_check_branch
        %116 = sbr.rel (%p113) target = $region12
      $region11: #{lightweight_feat_forward.20} parent=5 // pred_region
        %s117 = ssub.s32 %s9, 1
        // Predicated region
        $region13: #{lightweight_feat_forward.20} parent=11 // pred_check
          %p118 = pneg %p56
        $region14: #{lightweight_feat_forward.20} parent=11 // pred_check_branch
          %120 = sbr.rel (%p118) target = $region16
        $region15: #{lightweight_feat_forward.20} parent=11 // pred_region
          _
        $region16: #{lightweight_feat_forward.20} parent=11 // pred_fallthru
          _
        // Predicated region
        $region17: #{lightweight_feat_forward.20} parent=11 // pred_check
          %p121 = pneg %p77
        $region18: #{lightweight_feat_forward.20} parent=11 // pred_check_branch
          %123 = sbr.rel (%p121) target = $region20
        $region19: #{lightweight_feat_forward.20} parent=11 // pred_region
          _
        $region20: #{lightweight_feat_forward.20} parent=11 // pred_fallthru
          _
      $region12: #{lightweight_feat_forward.20} parent=5 // pred_fallthru
        _
      %p124 = scmp.lt.s32.totalorder %s9, 2
      // Predicated region
      $region21: #{lightweight_feat_forward.20} parent=5 // pred_check
        %p125 = pneg %p124
      $region22: #{lightweight_feat_forward.20} parent=5 // pred_check_branch
        %127 = sbr.rel (%p125) target = $region24
      $region23: #{lightweight_feat_forward.20} parent=5 // pred_region
        // Predicated region
        $region25: #{lightweight_feat_forward.20} parent=23 // pred_check
          %p128 = pneg %p29
        $region26: #{lightweight_feat_forward.20} parent=23 // pred_check_branch
          %130 = sbr.rel (%p128) target = $region28
        $region27: #{lightweight_feat_forward.20} parent=23 // pred_region
          %s131 = smul.u32 32, %s9
          %s132 = ssub.s32 57, %s131
          %p133 = scmp.lt.s32.totalorder %s132, 32
          %s134 = scalar_select %p133, %s132, 32
          %s135 = smul.u32 64, %s134
          %p136 = scmp.lt.s32.totalorder %s131, 56
          %s137 = scalar_select %p136, %s131, 56
          %s138 = smul.addr %s137, 4
          %s139 = scalar_lea.vmem %s0, %s138
          %s140 = smul.u32 32, %s9
          %s141 = ssub.s32 57, %s140
          %p142 = scmp.lt.s32.totalorder %s141, 32
          %s143 = scalar_select %p142, %s141, 32
          %s144 = smul.u32 64, %s143
        $region28: #{lightweight_feat_forward.20} parent=23 // pred_fallthru
          _
      $region24: #{lightweight_feat_forward.20} parent=5 // pred_fallthru
        _
      %p145 = scmp.le.s32.totalorder 1, %s9
      %p146 = scmp.lt.s32.totalorder %s9, 3
      %p147 = pnand %p145, %p146
      %p148 = pneg %p147
      // Predicated region
      $region29: #{lightweight_feat_forward.20} parent=5 // pred_check
        _
      $region30: #{lightweight_feat_forward.20} parent=5 // pred_check_branch
        %150 = sbr.rel (%p147) target = $region32
      $region31: #{lightweight_feat_forward.20} parent=5 // pred_region
        %s151 = ssub.s32 %s9, 1
        %s152 = smul.u32 32, %s14
        %s153 = ssub.s32 57, %s152
        %p154 = scmp.lt.s32.totalorder %s153, 32
        %s155 = scalar_select %p154, %s153, 32
        %s156 = smul.u32 64, %s155
        %p157 = scmp.lt.s32.totalorder %s152, 56
        %s158 = scalar_select %p157, %s152, 56
        %s159 = smul.addr %s158, 4
        %s160 = scalar_lea.vmem %s0, %s159
        %p161 = pneg %p35
        %p162 = pneg %p32
        %p163 = pneg %p56
        %p164 = pneg %p53
        %p165 = pneg %p77
        %p166 = pneg %p74
        %p167 = pneg %p103
        %p168 = pneg %p100
        %s169 = sand.u32 %s90, 1
        %s170 = sand.u32 %s90, 1
        %s171 = smul.addr %s170, 128
        %s172 = scalar_lea.vmem [#allocation2], %s171
        %s173 = smul.u32 32, %s14
        %s174 = ssub.s32 57, %s173
        %p175 = scmp.lt.s32.totalorder %s174, 32
        %s176 = scalar_select %p175, %s174, 32
        %s177 = smul.u32 64, %s176
        %p178 = scmp.lt.s32.totalorder %s173, 56
        %s179 = scalar_select %p178, %s173, 56
        %s180 = smul.addr %s179, 4
        %s181 = scalar_lea.vmem %s0, %s180
        %s182 = smul.u32 32, %s14
        %s183 = ssub.s32 57, %s182
        %p184 = scmp.lt.s32.totalorder %s183, 32
        %s185 = scalar_select %p184, %s183, 32
        %s186 = smul.u32 64, %s185
        %s187 = smul.u32 32, %s14
        %s188 = ssub.s32 57, %s187
        %p189 = scmp.lt.s32.totalorder %s188, 32
        %s190 = scalar_select %p189, %s188, 32
        %s191 = smul.u32 64, %s190
        %v193 = vld [vmem:[%s181] sm:$0xf]
        %v194 = vld [vmem:[%s181 + $0x4] sm:$0xf]
        %v195 = vld [vmem:[%s181 + $0x8] sm:$0xf]
        %v196 = vld [vmem:[%s181 + $0xc] sm:$0xf]
        %v197 = vld [vmem:[%s181 + $0x10] sm:$0xf]
        %v198 = vld [vmem:[%s181 + $0x14] sm:$0xf]
        %v199 = vld [vmem:[%s181 + $0x18] sm:$0xf]
        %v200 = vld [vmem:[%s181 + $0x1c] sm:$0xf]
        %v201 = vld [vmem:[%s181 + $0x20] sm:$0xf]
        %v202 = vld [vmem:[%s181 + $0x24] sm:$0xf]
        %v203 = vld [vmem:[%s181 + $0x28] sm:$0xf]
        %v204 = vld [vmem:[%s181 + $0x2c] sm:$0xf]
        %v205 = vld [vmem:[%s181 + $0x30] sm:$0xf]
        %v206 = vld [vmem:[%s181 + $0x34] sm:$0xf]
        %v207 = vld [vmem:[%s181 + $0x38] sm:$0xf]
        %v208 = vld [vmem:[%s181 + $0x3c] sm:$0xf]
        %v209 = vld [vmem:[%s181 + $0x40] sm:$0xf]
        %v210 = vld [vmem:[%s181 + $0x44] sm:$0xf]
        %v211 = vld [vmem:[%s181 + $0x48] sm:$0xf]
        %v212 = vld [vmem:[%s181 + $0x4c] sm:$0xf]
        %v213 = vld [vmem:[%s181 + $0x50] sm:$0xf]
        %v214 = vld [vmem:[%s181 + $0x54] sm:$0xf]
        %v215 = vld [vmem:[%s181 + $0x58] sm:$0xf]
        %v216 = vld [vmem:[%s181 + $0x5c] sm:$0xf]
        %v217 = vld [vmem:[%s181 + $0x60] sm:$0xf]
        %v218 = vld [vmem:[%s181 + $0x64] sm:$0xf]
        %v219 = vld [vmem:[%s181 + $0x68] sm:$0xf]
        %v220 = vld [vmem:[%s181 + $0x6c] sm:$0xf]
        %v221 = vld [vmem:[%s181 + $0x70] sm:$0xf]
        %v222 = vld [vmem:[%s181 + $0x74] sm:$0xf]
        %v223 = vld [vmem:[%s181 + $0x78] sm:$0xf]
        %v224 = vld [vmem:[%s181 + $0x7c] sm:$0xf]
        %v225 = vld [vmem:[%s1] sm:$0xf]
        %v226 = vld [vmem:[%s1 + $0x4] sm:$0xf]
        %v227 = vld [vmem:[%s1 + $0x8] sm:$0xf]
        %v228 = vld [vmem:[%s1 + $0xc] sm:$0x3]
        %v229 = vld [vmem:[%s2] sm:$0x1]
        %v231 = vlaneseq
        %v232 = vshrl.u32 %v231, 7
        %v233 = vsub.s32 0, %v232
        %v234 = vrot.slane %v229, %v233
        %v268 = vunpack.c.l.b16 %v193
        %v269 = vunpack.c.l.b16 %v194
        %v270 = vunpack.c.l.b16 %v195
        %v271 = vunpack.c.l.b16 %v196
        %v272 = vunpack.c.l.b16 %v197
        %v273 = vunpack.c.l.b16 %v198
        %v274 = vunpack.c.l.b16 %v199
        %v275 = vunpack.c.l.b16 %v200
        %v276 = vunpack.c.l.b16 %v201
        %v277 = vunpack.c.l.b16 %v202
        %v278 = vunpack.c.l.b16 %v203
        %v279 = vunpack.c.l.b16 %v204
        %v280 = vunpack.c.l.b16 %v205
        %v281 = vunpack.c.l.b16 %v206
        %v282 = vunpack.c.l.b16 %v207
        %v283 = vunpack.c.l.b16 %v208
        %v284 = vunpack.c.l.b16 %v209
        %v285 = vunpack.c.l.b16 %v210
        %v286 = vunpack.c.l.b16 %v211
        %v287 = vunpack.c.l.b16 %v212
        %v288 = vunpack.c.l.b16 %v213
        %v289 = vunpack.c.l.b16 %v214
        %v290 = vunpack.c.l.b16 %v215
        %v291 = vunpack.c.l.b16 %v216
        %v292 = vunpack.c.l.b16 %v217
        %v293 = vunpack.c.l.b16 %v218
        %v294 = vunpack.c.l.b16 %v219
        %v295 = vunpack.c.l.b16 %v220
        %v296 = vunpack.c.l.b16 %v221
        %v297 = vunpack.c.l.b16 %v222
        %v298 = vunpack.c.l.b16 %v223
        %v299 = vunpack.c.l.b16 %v224
        %v300 = vpack.c.b16 %v269, %v268
        %v301 = vpack.c.b16 %v271, %v270
        %v302 = vpack.c.b16 %v273, %v272
        %v303 = vpack.c.b16 %v275, %v274
        %v304 = vpack.c.b16 %v277, %v276
        %v305 = vpack.c.b16 %v279, %v278
        %v306 = vpack.c.b16 %v281, %v280
        %v307 = vpack.c.b16 %v283, %v282
        %v308 = vpack.c.b16 %v285, %v284
        %v309 = vpack.c.b16 %v287, %v286
        %v310 = vpack.c.b16 %v289, %v288
        %v311 = vpack.c.b16 %v291, %v290
        %v312 = vpack.c.b16 %v293, %v292
        %v313 = vpack.c.b16 %v295, %v294
        %v314 = vpack.c.b16 %v297, %v296
        %v315 = vpack.c.b16 %v299, %v298
        %v320 = vunpack.c.l.b16 %v225
        %v321 = vunpack.c.l.b16 %v226
        %v322 = vunpack.c.l.b16 %v227
        %v323 = vunpack.c.l.b16 %v228
        %v324 = vpack.c.b16 %v321, %v320
        %v325 = vpack.c.b16 %v323, %v322
        %vm327 = vcmask 220160
        %v329 = vsel %vm327, %v300, 0
        %v332 = vsel %vm327, %v301, 0
        %v335 = vsel %vm327, %v302, 0
        %v338 = vsel %vm327, %v303, 0
        %v341 = vsel %vm327, %v304, 0
        %v344 = vsel %vm327, %v305, 0
        %v347 = vsel %vm327, %v306, 0
        %v350 = vsel %vm327, %v307, 0
        %v353 = vsel %vm327, %v308, 0
        %v356 = vsel %vm327, %v309, 0
        %v359 = vsel %vm327, %v310, 0
        %v362 = vsel %vm327, %v311, 0
        %v365 = vsel %vm327, %v312, 0
        %v368 = vsel %vm327, %v313, 0
        %v371 = vsel %vm327, %v314, 0
        %v374 = vsel %vm327, %v315, 0
        %vm376 = vcmask 1044480
        %vm377 = vcmask 1045504
        %v378 = vsel %vm376, 4294967295, 65535
        %v379 = vsel %vm377, %v378, 0
        %v381 = vand.u32 %v325, %v379
        %383 = vmatprep.subr.bf16.mxu0 0
        %384 = vmatpush1.bf16.msra.mxu0 0
        %385 = vmatprep.subr.bf16.mxu0 0
        %386 = vmatpush1.bf16.msra.mxu0 0
        %387 = vmatprep.subr.bf16.mxu0 0
        %388 = vmatpush1.bf16.msra.mxu0 0
        %389 = vmatprep.subr.bf16.mxu0 0
        %390 = vmatpush1.bf16.msra.mxu0 0
        %391 = vmatprep.subr.bf16.mxu0 0
        %392 = vmatpush1.bf16.msra.mxu0 0
        %393 = vmatprep.subr.bf16.mxu0 0
        %394 = vmatpush1.bf16.msra.mxu0 0
        %395 = vmatprep.subr.bf16.mxu0 0
        %396 = vmatpush1.bf16.msra.mxu0 %v381
        %397 = vmatprep.subr.bf16.mxu0 0
        %398 = vmatpush1.bf16.msra.mxu0 %v324
        %399 = vmatprep.subr.bf16.mxu0 0
        %400 = vmatpush2.bf16.msra.mxu0 0
        %401 = vmatprep.subr.bf16.mxu0 0
        %402 = vmatpush2.bf16.msra.mxu0 0
        %403 = vmatprep.subr.bf16.mxu0 0
        %404 = vmatpush2.bf16.msra.mxu0 0
        %405 = vmatprep.subr.bf16.mxu0 0
        %406 = vmatpush2.bf16.msra.mxu0 0
        %407 = vmatprep.subr.bf16.mxu0 0
        %408 = vmatpush2.bf16.msra.mxu0 0
        %409 = vmatprep.subr.bf16.mxu0 0
        %410 = vmatpush2.bf16.msra.mxu0 0
        %411 = vmatprep.subr.bf16.mxu0 0
        %412 = vmatpush2.bf16.msra.mxu0 0
        %413 = vmatprep.subr.bf16.mxu0 0
        %414 = vmatpush2.bf16.msra.mxu0 0
        %415 = vmatprep.mubr.bf16.mxu0 0
        %416 = vmatmul.mubr.bf16.gmra.mxu0 %v329
        %v417 = vpop.f32.mrf.mxu0
        %v418 = vadd.f32 %v234, %v417
        %v419 = vpop.f32.mrf.mxu0
        %v420 = vpop.f32.mrf.mxu0
        %v421 = vadd.f32 %v234, %v420
        %v422 = vpop.f32.mrf.mxu0
        %423 = vmatprep.mubr.bf16.mxu0 0
        %424 = vmatmul.mubr.bf16.gmra.mxu0 %v332
        %v425 = vpop.f32.mrf.mxu0
        %v426 = vadd.f32 %v234, %v425
        %v427 = vpop.f32.mrf.mxu0
        %v428 = vpop.f32.mrf.mxu0
        %v429 = vadd.f32 %v234, %v428
        %v430 = vpop.f32.mrf.mxu0
        %431 = vmatprep.mubr.bf16.mxu0 0
        %432 = vmatmul.mubr.bf16.gmra.mxu0 %v335
        %v433 = vpop.f32.mrf.mxu0
        %v434 = vadd.f32 %v234, %v433
        %v435 = vpop.f32.mrf.mxu0
        %v436 = vpop.f32.mrf.mxu0
        %v437 = vadd.f32 %v234, %v436
        %v438 = vpop.f32.mrf.mxu0
        %439 = vmatprep.mubr.bf16.mxu0 0
        %440 = vmatmul.mubr.bf16.gmra.mxu0 %v338
        %v441 = vpop.f32.mrf.mxu0
        %v442 = vadd.f32 %v234, %v441
        %v443 = vpop.f32.mrf.mxu0
        %v444 = vpop.f32.mrf.mxu0
        %v445 = vadd.f32 %v234, %v444
        %v446 = vpop.f32.mrf.mxu0
        %447 = vmatprep.mubr.bf16.mxu0 0
        %448 = vmatmul.mubr.bf16.gmra.mxu0 %v341
        %v449 = vpop.f32.mrf.mxu0
        %v450 = vadd.f32 %v234, %v449
        %v451 = vpop.f32.mrf.mxu0
        %v452 = vpop.f32.mrf.mxu0
        %v453 = vadd.f32 %v234, %v452
        %v454 = vpop.f32.mrf.mxu0
        %455 = vmatprep.mubr.bf16.mxu0 0
        %456 = vmatmul.mubr.bf16.gmra.mxu0 %v344
        %v457 = vpop.f32.mrf.mxu0
        %v458 = vadd.f32 %v234, %v457
        %v459 = vpop.f32.mrf.mxu0
        %v460 = vpop.f32.mrf.mxu0
        %v461 = vadd.f32 %v234, %v460
        %v462 = vpop.f32.mrf.mxu0
        %463 = vmatprep.mubr.bf16.mxu0 0
        %464 = vmatmul.mubr.bf16.gmra.mxu0 %v347
        %v465 = vpop.f32.mrf.mxu0
        %v466 = vadd.f32 %v234, %v465
        %v467 = vpop.f32.mrf.mxu0
        %v468 = vpop.f32.mrf.mxu0
        %v469 = vadd.f32 %v234, %v468
        %v470 = vpop.f32.mrf.mxu0
        %471 = vmatprep.mubr.bf16.mxu0 0
        %472 = vmatmul.mubr.bf16.gmra.mxu0 %v350
        %v473 = vpop.f32.mrf.mxu0
        %v474 = vadd.f32 %v234, %v473
        %v475 = vpop.f32.mrf.mxu0
        %v476 = vpop.f32.mrf.mxu0
        %v477 = vadd.f32 %v234, %v476
        %v478 = vpop.f32.mrf.mxu0
        %479 = vmatprep.mubr.bf16.mxu0 0
        %480 = vmatmul.mubr.bf16.gmra.mxu0 %v353
        %v481 = vpop.f32.mrf.mxu0
        %v482 = vadd.f32 %v234, %v481
        %v483 = vpop.f32.mrf.mxu0
        %v484 = vpop.f32.mrf.mxu0
        %v485 = vadd.f32 %v234, %v484
        %v486 = vpop.f32.mrf.mxu0
        %487 = vmatprep.mubr.bf16.mxu0 0
        %488 = vmatmul.mubr.bf16.gmra.mxu0 %v356
        %v489 = vpop.f32.mrf.mxu0
        %v490 = vadd.f32 %v234, %v489
        %v491 = vpop.f32.mrf.mxu0
        %v492 = vpop.f32.mrf.mxu0
        %v493 = vadd.f32 %v234, %v492
        %v494 = vpop.f32.mrf.mxu0
        %495 = vmatprep.mubr.bf16.mxu0 0
        %496 = vmatmul.mubr.bf16.gmra.mxu0 %v359
        %v497 = vpop.f32.mrf.mxu0
        %v498 = vadd.f32 %v234, %v497
        %v499 = vpop.f32.mrf.mxu0
        %v500 = vpop.f32.mrf.mxu0
        %v501 = vadd.f32 %v234, %v500
        %v502 = vpop.f32.mrf.mxu0
        %503 = vmatprep.mubr.bf16.mxu0 0
        %504 = vmatmul.mubr.bf16.gmra.mxu0 %v362
        %v505 = vpop.f32.mrf.mxu0
        %v506 = vadd.f32 %v234, %v505
        %v507 = vpop.f32.mrf.mxu0
        %v508 = vpop.f32.mrf.mxu0
        %v509 = vadd.f32 %v234, %v508
        %v510 = vpop.f32.mrf.mxu0
        %511 = vmatprep.mubr.bf16.mxu0 0
        %512 = vmatmul.mubr.bf16.gmra.mxu0 %v365
        %v513 = vpop.f32.mrf.mxu0
        %v514 = vadd.f32 %v234, %v513
        %v515 = vpop.f32.mrf.mxu0
        %v516 = vpop.f32.mrf.mxu0
        %v517 = vadd.f32 %v234, %v516
        %v518 = vpop.f32.mrf.mxu0
        %519 = vmatprep.mubr.bf16.mxu0 0
        %520 = vmatmul.mubr.bf16.gmra.mxu0 %v368
        %v521 = vpop.f32.mrf.mxu0
        %v522 = vadd.f32 %v234, %v521
        %v523 = vpop.f32.mrf.mxu0
        %v524 = vpop.f32.mrf.mxu0
        %v525 = vadd.f32 %v234, %v524
        %v526 = vpop.f32.mrf.mxu0
        %527 = vmatprep.mubr.bf16.mxu0 0
        %528 = vmatmul.mubr.bf16.gmra.mxu0 %v371
        %v529 = vpop.f32.mrf.mxu0
        %v530 = vadd.f32 %v234, %v529
        %v531 = vpop.f32.mrf.mxu0
        %v532 = vpop.f32.mrf.mxu0
        %v533 = vadd.f32 %v234, %v532
        %v534 = vpop.f32.mrf.mxu0
        %535 = vmatprep.mubr.bf16.mxu0 0
        %536 = vmatmul.mubr.bf16.gmra.mxu0 %v374
        %v537 = vpop.f32.mrf.mxu0
        %v538 = vadd.f32 %v234, %v537
        %v539 = vpop.f32.mrf.mxu0
        %v540 = vpop.f32.mrf.mxu0
        %v541 = vadd.f32 %v234, %v540
        %v542 = vpop.f32.mrf.mxu0
        %543 = vdwg.mxu0
        %v544 = vpack.c.bf16 %v421, %v418
        %v545 = vpack.c.bf16 %v429, %v426
        %v546 = vpack.c.bf16 %v437, %v434
        %v547 = vpack.c.bf16 %v445, %v442
        %v548 = vpack.c.bf16 %v453, %v450
        %v549 = vpack.c.bf16 %v461, %v458
        %v550 = vpack.c.bf16 %v469, %v466
        %v551 = vpack.c.bf16 %v477, %v474
        %v552 = vpack.c.bf16 %v485, %v482
        %v553 = vpack.c.bf16 %v493, %v490
        %v554 = vpack.c.bf16 %v501, %v498
        %v555 = vpack.c.bf16 %v509, %v506
        %v556 = vpack.c.bf16 %v517, %v514
        %v557 = vpack.c.bf16 %v525, %v522
        %v558 = vpack.c.bf16 %v533, %v530
        %v559 = vpack.c.bf16 %v541, %v538
        %v576 = vunpack.c.l.b16 %v544
        %v577 = vunpack.c.h.b16 %v544
        %v578 = vunpack.c.l.b16 %v545
        %v579 = vunpack.c.h.b16 %v545
        %v580 = vunpack.c.l.b16 %v546
        %v581 = vunpack.c.h.b16 %v546
        %v582 = vunpack.c.l.b16 %v547
        %v583 = vunpack.c.h.b16 %v547
        %v584 = vunpack.c.l.b16 %v548
        %v585 = vunpack.c.h.b16 %v548
        %v586 = vunpack.c.l.b16 %v549
        %v587 = vunpack.c.h.b16 %v549
        %v588 = vunpack.c.l.b16 %v550
        %v589 = vunpack.c.h.b16 %v550
        %v590 = vunpack.c.l.b16 %v551
        %v591 = vunpack.c.h.b16 %v551
        %v592 = vunpack.c.l.b16 %v552
        %v593 = vunpack.c.h.b16 %v552
        %v594 = vunpack.c.l.b16 %v553
        %v595 = vunpack.c.h.b16 %v553
        %v596 = vunpack.c.l.b16 %v554
        %v597 = vunpack.c.h.b16 %v554
        %v598 = vunpack.c.l.b16 %v555
        %v599 = vunpack.c.h.b16 %v555
        %v600 = vunpack.c.l.b16 %v556
        %v601 = vunpack.c.h.b16 %v556
        %v602 = vunpack.c.l.b16 %v557
        %v603 = vunpack.c.h.b16 %v557
        %v604 = vunpack.c.l.b16 %v558
        %v605 = vunpack.c.h.b16 %v558
        %v606 = vunpack.c.l.b16 %v559
        %v607 = vunpack.c.h.b16 %v559
        %v608 = vpack.c.b16 %v576, %v576
        %v609 = vpack.c.b16 %v577, %v577
        %v610 = vpack.c.b16 %v578, %v578
        %v611 = vpack.c.b16 %v579, %v579
        %v612 = vpack.c.b16 %v580, %v580
        %v613 = vpack.c.b16 %v581, %v581
        %v614 = vpack.c.b16 %v582, %v582
        %v615 = vpack.c.b16 %v583, %v583
        %v616 = vpack.c.b16 %v584, %v584
        %v617 = vpack.c.b16 %v585, %v585
        %v618 = vpack.c.b16 %v586, %v586
        %v619 = vpack.c.b16 %v587, %v587
        %v620 = vpack.c.b16 %v588, %v588
        %v621 = vpack.c.b16 %v589, %v589
        %v622 = vpack.c.b16 %v590, %v590
        %v623 = vpack.c.b16 %v591, %v591
        %v624 = vpack.c.b16 %v592, %v592
        %v625 = vpack.c.b16 %v593, %v593
        %v626 = vpack.c.b16 %v594, %v594
        %v627 = vpack.c.b16 %v595, %v595
        %v628 = vpack.c.b16 %v596, %v596
        %v629 = vpack.c.b16 %v597, %v597
        %v630 = vpack.c.b16 %v598, %v598
        %v631 = vpack.c.b16 %v599, %v599
        %v632 = vpack.c.b16 %v600, %v600
        %v633 = vpack.c.b16 %v601, %v601
        %v634 = vpack.c.b16 %v602, %v602
        %v635 = vpack.c.b16 %v603, %v603
        %v636 = vpack.c.b16 %v604, %v604
        %v637 = vpack.c.b16 %v605, %v605
        %v638 = vpack.c.b16 %v606, %v606
        %v639 = vpack.c.b16 %v607, %v607
        %vm672 = vcmask 519168
        %673 = vst.msk [vmem:[%s172] sm:$0xf] %vm672, %v608
        %674 = vst.msk [vmem:[%s172 + $0x4] sm:$0xf] %vm672, %v609
        %675 = vst.msk [vmem:[%s172 + $0x8] sm:$0xf] %vm672, %v610
        %676 = vst.msk [vmem:[%s172 + $0xc] sm:$0xf] %vm672, %v611
        %677 = vst.msk [vmem:[%s172 + $0x10] sm:$0xf] %vm672, %v612
        %678 = vst.msk [vmem:[%s172 + $0x14] sm:$0xf] %vm672, %v613
        %679 = vst.msk [vmem:[%s172 + $0x18] sm:$0xf] %vm672, %v614
        %680 = vst.msk [vmem:[%s172 + $0x1c] sm:$0xf] %vm672, %v615
        %681 = vst.msk [vmem:[%s172 + $0x20] sm:$0xf] %vm672, %v616
        %682 = vst.msk [vmem:[%s172 + $0x24] sm:$0xf] %vm672, %v617
        %683 = vst.msk [vmem:[%s172 + $0x28] sm:$0xf] %vm672, %v618
        %684 = vst.msk [vmem:[%s172 + $0x2c] sm:$0xf] %vm672, %v619
        %685 = vst.msk [vmem:[%s172 + $0x30] sm:$0xf] %vm672, %v620
        %686 = vst.msk [vmem:[%s172 + $0x34] sm:$0xf] %vm672, %v621
        %687 = vst.msk [vmem:[%s172 + $0x38] sm:$0xf] %vm672, %v622
        %688 = vst.msk [vmem:[%s172 + $0x3c] sm:$0xf] %vm672, %v623
        %689 = vst.msk [vmem:[%s172 + $0x40] sm:$0xf] %vm672, %v624
        %690 = vst.msk [vmem:[%s172 + $0x44] sm:$0xf] %vm672, %v625
        %691 = vst.msk [vmem:[%s172 + $0x48] sm:$0xf] %vm672, %v626
        %692 = vst.msk [vmem:[%s172 + $0x4c] sm:$0xf] %vm672, %v627
        %693 = vst.msk [vmem:[%s172 + $0x50] sm:$0xf] %vm672, %v628
        %694 = vst.msk [vmem:[%s172 + $0x54] sm:$0xf] %vm672, %v629
        %695 = vst.msk [vmem:[%s172 + $0x58] sm:$0xf] %vm672, %v630
        %696 = vst.msk [vmem:[%s172 + $0x5c] sm:$0xf] %vm672, %v631
        %697 = vst.msk [vmem:[%s172 + $0x60] sm:$0xf] %vm672, %v632
        %698 = vst.msk [vmem:[%s172 + $0x64] sm:$0xf] %vm672, %v633
        %699 = vst.msk [vmem:[%s172 + $0x68] sm:$0xf] %vm672, %v634
        %700 = vst.msk [vmem:[%s172 + $0x6c] sm:$0xf] %vm672, %v635
        %701 = vst.msk [vmem:[%s172 + $0x70] sm:$0xf] %vm672, %v636
        %702 = vst.msk [vmem:[%s172 + $0x74] sm:$0xf] %vm672, %v637
        %703 = vst.msk [vmem:[%s172 + $0x78] sm:$0xf] %vm672, %v638
        %704 = vst.msk [vmem:[%s172 + $0x7c] sm:$0xf] %vm672, %v639
        %s705 = sand.u32 %s90, 1
        %s706 = sand.u32 %s90, 1
        %s707 = smul.addr %s706, 128
        %s708 = scalar_lea.vmem [#allocation2], %s707
        // Predicated region
        $region33: #{lightweight_feat_forward.20} parent=31 // pred_check
          %p709 = pneg %p100
        $region34: #{lightweight_feat_forward.20} parent=31 // pred_check_branch
          %711 = sbr.rel (%p709) target = $region36
        $region35: #{lightweight_feat_forward.20} parent=31 // pred_region
          %s712 = smul.u32 32, %s14
          %s713 = ssub.s32 57, %s712
          %p714 = scmp.lt.s32.totalorder %s713, 32
          %s715 = scalar_select %p714, %s713, 32
          %s716 = smul.u32 64, %s715
          %p717 = scmp.ne.s32.totalorder 0, %s716
          %s718 = smul.addr %s712, 4
          %s719 = scalar_lea.vmem %s3, %s718
          // Predicated region
          $region37: #{lightweight_feat_forward.20} parent=35 // pred_check
            %p720 = pneg %p717
          $region38: #{lightweight_feat_forward.20} parent=35 // pred_check_branch
            %722 = sbr.rel (%p720) target = $region40
          $region39: #{lightweight_feat_forward.20} parent=35 // pred_region
            // Predicated region
            $region41: #{lightweight_feat_forward.20} parent=39 // pred_check
              _
            $region42: #{lightweight_feat_forward.20} parent=39 // pred_check_branch
              %724 = sbr.rel target = $region44
            $region43: #{lightweight_feat_forward.20} parent=39 // pred_region
              // Predicated region
              $region63: #{lightweight_feat_forward.20} parent=43 // pred_check
                _
              $region64: #{lightweight_feat_forward.20} parent=43 // pred_check_branch
                %836 = sbr.rel (0) target = $region66
              $region65: #{lightweight_feat_forward.20} parent=43 // pred_region
                %s838 = ssub.s32 16, 1
                %s839 = sshrl.u32 %s715, 5
                // While loop
                $region67: #{lightweight_feat_forward.20} parent=65 // loop_pre_header
                  _
                $region68: #{lightweight_feat_forward.20} parent=65 // loop_header
                  %s841 = sphi 0, %s843
                  %p842 = scmp.ge.s32.totalorder %s841, %s839
                  %s846 = sphi 0, %s915
                  %s847 = sphi %s708, %s918
                  %s848 = sphi %s719, %s919
                $region69: #{lightweight_feat_forward.20} parent=65 // loop_header_branch
                  %845 = sbr.rel (%p842) target = $region73
                $region70: #{lightweight_feat_forward.20} parent=65 // loop_body
                  %v849 = vld [vmem:[%s847] sm:%s838]
                  %850 = vst [vmem:[%s848] sm:%s838] %v849
                  %v851 = vld [vmem:[%s847 + $0x4] sm:%s838]
                  %852 = vst [vmem:[%s848 + $0x4] sm:%s838] %v851
                  %v853 = vld [vmem:[%s847 + $0x8] sm:%s838]
                  %854 = vst [vmem:[%s848 + $0x8] sm:%s838] %v853
                  %v855 = vld [vmem:[%s847 + $0xc] sm:%s838]
                  %856 = vst [vmem:[%s848 + $0xc] sm:%s838] %v855
                  %v857 = vld [vmem:[%s847 + $0x10] sm:%s838]
                  %858 = vst [vmem:[%s848 + $0x10] sm:%s838] %v857
                  %v859 = vld [vmem:[%s847 + $0x14] sm:%s838]
                  %860 = vst [vmem:[%s848 + $0x14] sm:%s838] %v859
                  %v861 = vld [vmem:[%s847 + $0x18] sm:%s838]
                  %862 = vst [vmem:[%s848 + $0x18] sm:%s838] %v861
                  %v863 = vld [vmem:[%s847 + $0x1c] sm:%s838]
                  %864 = vst [vmem:[%s848 + $0x1c] sm:%s838] %v863
                  %v865 = vld [vmem:[%s847 + $0x20] sm:%s838]
                  %866 = vst [vmem:[%s848 + $0x20] sm:%s838] %v865
                  %v867 = vld [vmem:[%s847 + $0x24] sm:%s838]
                  %868 = vst [vmem:[%s848 + $0x24] sm:%s838] %v867
                  %v869 = vld [vmem:[%s847 + $0x28] sm:%s838]
                  %870 = vst [vmem:[%s848 + $0x28] sm:%s838] %v869
                  %v871 = vld [vmem:[%s847 + $0x2c] sm:%s838]
                  %872 = vst [vmem:[%s848 + $0x2c] sm:%s838] %v871
                  %v873 = vld [vmem:[%s847 + $0x30] sm:%s838]
                  %874 = vst [vmem:[%s848 + $0x30] sm:%s838] %v873
                  %v875 = vld [vmem:[%s847 + $0x34] sm:%s838]
                  %876 = vst [vmem:[%s848 + $0x34] sm:%s838] %v875
                  %v877 = vld [vmem:[%s847 + $0x38] sm:%s838]
                  %878 = vst [vmem:[%s848 + $0x38] sm:%s838] %v877
                  %v879 = vld [vmem:[%s847 + $0x3c] sm:%s838]
                  %880 = vst [vmem:[%s848 + $0x3c] sm:%s838] %v879
                  %v881 = vld [vmem:[%s847 + $0x40] sm:%s838]
                  %882 = vst [vmem:[%s848 + $0x40] sm:%s838] %v881
                  %v883 = vld [vmem:[%s847 + $0x44] sm:%s838]
                  %884 = vst [vmem:[%s848 + $0x44] sm:%s838] %v883
                  %v885 = vld [vmem:[%s847 + $0x48] sm:%s838]
                  %886 = vst [vmem:[%s848 + $0x48] sm:%s838] %v885
                  %v887 = vld [vmem:[%s847 + $0x4c] sm:%s838]
                  %888 = vst [vmem:[%s848 + $0x4c] sm:%s838] %v887
                  %v889 = vld [vmem:[%s847 + $0x50] sm:%s838]
                  %890 = vst [vmem:[%s848 + $0x50] sm:%s838] %v889
                  %v891 = vld [vmem:[%s847 + $0x54] sm:%s838]
                  %892 = vst [vmem:[%s848 + $0x54] sm:%s838] %v891
                  %v893 = vld [vmem:[%s847 + $0x58] sm:%s838]
                  %894 = vst [vmem:[%s848 + $0x58] sm:%s838] %v893
                  %v895 = vld [vmem:[%s847 + $0x5c] sm:%s838]
                  %896 = vst [vmem:[%s848 + $0x5c] sm:%s838] %v895
                  %v897 = vld [vmem:[%s847 + $0x60] sm:%s838]
                  %898 = vst [vmem:[%s848 + $0x60] sm:%s838] %v897
                  %v899 = vld [vmem:[%s847 + $0x64] sm:%s838]
                  %900 = vst [vmem:[%s848 + $0x64] sm:%s838] %v899
                  %v901 = vld [vmem:[%s847 + $0x68] sm:%s838]
                  %902 = vst [vmem:[%s848 + $0x68] sm:%s838] %v901
                  %v903 = vld [vmem:[%s847 + $0x6c] sm:%s838]
                  %904 = vst [vmem:[%s848 + $0x6c] sm:%s838] %v903
                  %v905 = vld [vmem:[%s847 + $0x70] sm:%s838]
                  %906 = vst [vmem:[%s848 + $0x70] sm:%s838] %v905
                  %v907 = vld [vmem:[%s847 + $0x74] sm:%s838]
                  %908 = vst [vmem:[%s848 + $0x74] sm:%s838] %v907
                  %v909 = vld [vmem:[%s847 + $0x78] sm:%s838]
                  %910 = vst [vmem:[%s848 + $0x78] sm:%s838] %v909
                  %v911 = vld [vmem:[%s847 + $0x7c] sm:%s838]
                  %912 = vst [vmem:[%s848 + $0x7c] sm:%s838] %v911
                  %s913 = sadd.s32 1, %s846
                  %p914 = scmp.ge.s32.totalorder %s913, %s839
                  %s915 = scalar_select %p914, 0, %s913
                  %s916 = smul.u32 %s915, 128
                  %s917 = smul.u32 %s915, 128
                  %s918 = scalar_lea.vmem %s708, %s916 [#allocation2]
                  %s919 = scalar_lea.vmem %s719, %s917
                $region71: #{lightweight_feat_forward.20} parent=65 // loop_footer
                  %s843 = sadd.s32 %s841, 1
                $region72: #{lightweight_feat_forward.20} parent=65 // loop_footer_branch
                  %840 = sbr.rel target = $region68
                $region73: #{lightweight_feat_forward.20} parent=65 // loop_exit
                  _
                %s920 = sshrl.u32 %s715, 5
                %s921 = sand.u32 %s715, 31
                %s922 = smul.u32 %s920, 32
                %s923 = smul.u32 4, %s922
                %s924 = scalar_lea.vmem %s708, %s923 [#allocation2]
                %s925 = smul.u32 4, %s922
                %s926 = scalar_lea.vmem %s719, %s925
                // While loop
                $region74: #{lightweight_feat_forward.20} parent=65 // loop_pre_header
                  _
                $region75: #{lightweight_feat_forward.20} parent=65 // loop_header
                  %s928 = sphi 0, %s930
                  %p929 = scmp.ge.s32.totalorder %s928, %s921
                  %s933 = sphi 0, %s940
                  %s934 = sphi %s924, %s943
                  %s935 = sphi %s926, %s944
                $region76: #{lightweight_feat_forward.20} parent=65 // loop_header_branch
                  %932 = sbr.rel (%p929) target = $region80
                $region77: #{lightweight_feat_forward.20} parent=65 // loop_body
                  %v936 = vld [vmem:[%s934] sm:%s838]
                  %937 = vst [vmem:[%s935] sm:%s838] %v936
                  %s938 = sadd.s32 1, %s933
                  %p939 = scmp.ge.s32.totalorder %s938, %s921
                  %s940 = scalar_select %p939, 0, %s938
                  %s941 = smul.u32 %s940, 4
                  %s942 = smul.u32 %s940, 4
                  %s943 = scalar_lea.vmem %s924, %s941 [#allocation2]
                  %s944 = scalar_lea.vmem %s926, %s942
                $region78: #{lightweight_feat_forward.20} parent=65 // loop_footer
                  %s930 = sadd.s32 %s928, 1
                $region79: #{lightweight_feat_forward.20} parent=65 // loop_footer_branch
                  %927 = sbr.rel target = $region75
                $region80: #{lightweight_feat_forward.20} parent=65 // loop_exit
                  _
              $region66: #{lightweight_feat_forward.20} parent=43 // pred_fallthru
                _
            $region44: #{lightweight_feat_forward.20} parent=39 // pred_fallthru
              _
            // Predicated region
            $region45: #{lightweight_feat_forward.20} parent=39 // pred_check
              _
            $region46: #{lightweight_feat_forward.20} parent=39 // pred_check_branch
              %726 = sbr.rel (0) target = $region48
            $region47: #{lightweight_feat_forward.20} parent=39 // pred_region
              %s728 = ssub.s32 16, 1
              %s729 = sshrl.u32 %s715, 5
              // While loop
              $region49: #{lightweight_feat_forward.20} parent=47 // loop_pre_header
                _
              $region50: #{lightweight_feat_forward.20} parent=47 // loop_header
                %s731 = sphi 0, %s733
                %p732 = scmp.ge.s32.totalorder %s731, %s729
                %s736 = sphi 0, %s805
                %s737 = sphi %s708, %s808
                %s738 = sphi %s719, %s809
              $region51: #{lightweight_feat_forward.20} parent=47 // loop_header_branch
                %735 = sbr.rel (%p732) target = $region55
              $region52: #{lightweight_feat_forward.20} parent=47 // loop_body
                %v739 = vld [vmem:[%s737] sm:%s728]
                %740 = vst [vmem:[%s738] sm:%s728] %v739
                %v741 = vld [vmem:[%s737 + $0x4] sm:%s728]
                %742 = vst [vmem:[%s738 + $0x4] sm:%s728] %v741
                %v743 = vld [vmem:[%s737 + $0x8] sm:%s728]
                %744 = vst [vmem:[%s738 + $0x8] sm:%s728] %v743
                %v745 = vld [vmem:[%s737 + $0xc] sm:%s728]
                %746 = vst [vmem:[%s738 + $0xc] sm:%s728] %v745
                %v747 = vld [vmem:[%s737 + $0x10] sm:%s728]
                %748 = vst [vmem:[%s738 + $0x10] sm:%s728] %v747
                %v749 = vld [vmem:[%s737 + $0x14] sm:%s728]
                %750 = vst [vmem:[%s738 + $0x14] sm:%s728] %v749
                %v751 = vld [vmem:[%s737 + $0x18] sm:%s728]
                %752 = vst [vmem:[%s738 + $0x18] sm:%s728] %v751
                %v753 = vld [vmem:[%s737 + $0x1c] sm:%s728]
                %754 = vst [vmem:[%s738 + $0x1c] sm:%s728] %v753
                %v755 = vld [vmem:[%s737 + $0x20] sm:%s728]
                %756 = vst [vmem:[%s738 + $0x20] sm:%s728] %v755
                %v757 = vld [vmem:[%s737 + $0x24] sm:%s728]
                %758 = vst [vmem:[%s738 + $0x24] sm:%s728] %v757
                %v759 = vld [vmem:[%s737 + $0x28] sm:%s728]
                %760 = vst [vmem:[%s738 + $0x28] sm:%s728] %v759
                %v761 = vld [vmem:[%s737 + $0x2c] sm:%s728]
                %762 = vst [vmem:[%s738 + $0x2c] sm:%s728] %v761
                %v763 = vld [vmem:[%s737 + $0x30] sm:%s728]
                %764 = vst [vmem:[%s738 + $0x30] sm:%s728] %v763
                %v765 = vld [vmem:[%s737 + $0x34] sm:%s728]
                %766 = vst [vmem:[%s738 + $0x34] sm:%s728] %v765
                %v767 = vld [vmem:[%s737 + $0x38] sm:%s728]
                %768 = vst [vmem:[%s738 + $0x38] sm:%s728] %v767
                %v769 = vld [vmem:[%s737 + $0x3c] sm:%s728]
                %770 = vst [vmem:[%s738 + $0x3c] sm:%s728] %v769
                %v771 = vld [vmem:[%s737 + $0x40] sm:%s728]
                %772 = vst [vmem:[%s738 + $0x40] sm:%s728] %v771
                %v773 = vld [vmem:[%s737 + $0x44] sm:%s728]
                %774 = vst [vmem:[%s738 + $0x44] sm:%s728] %v773
                %v775 = vld [vmem:[%s737 + $0x48] sm:%s728]
                %776 = vst [vmem:[%s738 + $0x48] sm:%s728] %v775
                %v777 = vld [vmem:[%s737 + $0x4c] sm:%s728]
                %778 = vst [vmem:[%s738 + $0x4c] sm:%s728] %v777
                %v779 = vld [vmem:[%s737 + $0x50] sm:%s728]
                %780 = vst [vmem:[%s738 + $0x50] sm:%s728] %v779
                %v781 = vld [vmem:[%s737 + $0x54] sm:%s728]
                %782 = vst [vmem:[%s738 + $0x54] sm:%s728] %v781
                %v783 = vld [vmem:[%s737 + $0x58] sm:%s728]
                %784 = vst [vmem:[%s738 + $0x58] sm:%s728] %v783
                %v785 = vld [vmem:[%s737 + $0x5c] sm:%s728]
                %786 = vst [vmem:[%s738 + $0x5c] sm:%s728] %v785
                %v787 = vld [vmem:[%s737 + $0x60] sm:%s728]
                %788 = vst [vmem:[%s738 + $0x60] sm:%s728] %v787
                %v789 = vld [vmem:[%s737 + $0x64] sm:%s728]
                %790 = vst [vmem:[%s738 + $0x64] sm:%s728] %v789
                %v791 = vld [vmem:[%s737 + $0x68] sm:%s728]
                %792 = vst [vmem:[%s738 + $0x68] sm:%s728] %v791
                %v793 = vld [vmem:[%s737 + $0x6c] sm:%s728]
                %794 = vst [vmem:[%s738 + $0x6c] sm:%s728] %v793
                %v795 = vld [vmem:[%s737 + $0x70] sm:%s728]
                %796 = vst [vmem:[%s738 + $0x70] sm:%s728] %v795
                %v797 = vld [vmem:[%s737 + $0x74] sm:%s728]
                %798 = vst [vmem:[%s738 + $0x74] sm:%s728] %v797
                %v799 = vld [vmem:[%s737 + $0x78] sm:%s728]
                %800 = vst [vmem:[%s738 + $0x78] sm:%s728] %v799
                %v801 = vld [vmem:[%s737 + $0x7c] sm:%s728]
                %802 = vst [vmem:[%s738 + $0x7c] sm:%s728] %v801
                %s803 = sadd.s32 1, %s736
                %p804 = scmp.ge.s32.totalorder %s803, %s729
                %s805 = scalar_select %p804, 0, %s803
                %s806 = smul.u32 %s805, 128
                %s807 = smul.u32 %s805, 128
                %s808 = scalar_lea.vmem %s708, %s806 [#allocation2]
                %s809 = scalar_lea.vmem %s719, %s807
              $region53: #{lightweight_feat_forward.20} parent=47 // loop_footer
                %s733 = sadd.s32 %s731, 1
              $region54: #{lightweight_feat_forward.20} parent=47 // loop_footer_branch
                %730 = sbr.rel target = $region50
              $region55: #{lightweight_feat_forward.20} parent=47 // loop_exit
                _
              %s810 = sshrl.u32 %s715, 5
              %s811 = sand.u32 %s715, 31
              %s812 = smul.u32 %s810, 32
              %s813 = smul.u32 4, %s812
              %s814 = scalar_lea.vmem %s708, %s813 [#allocation2]
              %s815 = smul.u32 4, %s812
              %s816 = scalar_lea.vmem %s719, %s815
              // While loop
              $region56: #{lightweight_feat_forward.20} parent=47 // loop_pre_header
                _
              $region57: #{lightweight_feat_forward.20} parent=47 // loop_header
                %s818 = sphi 0, %s820
                %p819 = scmp.ge.s32.totalorder %s818, %s811
                %s823 = sphi 0, %s830
                %s824 = sphi %s814, %s833
                %s825 = sphi %s816, %s834
              $region58: #{lightweight_feat_forward.20} parent=47 // loop_header_branch
                %822 = sbr.rel (%p819) target = $region62
              $region59: #{lightweight_feat_forward.20} parent=47 // loop_body
                %v826 = vld [vmem:[%s824] sm:%s728]
                %827 = vst [vmem:[%s825] sm:%s728] %v826
                %s828 = sadd.s32 1, %s823
                %p829 = scmp.ge.s32.totalorder %s828, %s811
                %s830 = scalar_select %p829, 0, %s828
                %s831 = smul.u32 %s830, 4
                %s832 = smul.u32 %s830, 4
                %s833 = scalar_lea.vmem %s814, %s831 [#allocation2]
                %s834 = scalar_lea.vmem %s816, %s832
              $region60: #{lightweight_feat_forward.20} parent=47 // loop_footer
                %s820 = sadd.s32 %s818, 1
              $region61: #{lightweight_feat_forward.20} parent=47 // loop_footer_branch
                %817 = sbr.rel target = $region57
              $region62: #{lightweight_feat_forward.20} parent=47 // loop_exit
                _
            $region48: #{lightweight_feat_forward.20} parent=39 // pred_fallthru
              _
          $region40: #{lightweight_feat_forward.20} parent=35 // pred_fallthru
            _
          %945 = vnop
        $region36: #{lightweight_feat_forward.20} parent=31 // pred_fallthru
          _
      $region32: #{lightweight_feat_forward.20} parent=5 // pred_fallthru
        _
      %p946 = scmp.le.s32.totalorder 2, %s9
      // Predicated region
      $region81: #{lightweight_feat_forward.20} parent=5 // pred_check
        %p947 = pneg %p946
      $region82: #{lightweight_feat_forward.20} parent=5 // pred_check_branch
        %949 = sbr.rel (%p947) target = $region84
      $region83: #{lightweight_feat_forward.20} parent=5 // pred_region
        %s950 = ssub.s32 %s9, 2
        // Predicated region
        $region85: #{lightweight_feat_forward.20} parent=83 // pred_check
          %p951 = pneg %p106
        $region86: #{lightweight_feat_forward.20} parent=83 // pred_check_branch
          %953 = sbr.rel (%p951) target = $region88
        $region87: #{lightweight_feat_forward.20} parent=83 // pred_region
          %s954 = sand.u32 %s91, 1
          %s955 = sand.u32 %s91, 1
          %s956 = smul.addr %s955, 128
          %s957 = scalar_lea.vmem [#allocation2], %s956
        $region88: #{lightweight_feat_forward.20} parent=83 // pred_fallthru
          _
      $region84: #{lightweight_feat_forward.20} parent=5 // pred_fallthru
        _
    $region6: #{lightweight_feat_forward.20} parent=1 // loop_footer
      %s13 = sadd.s32 1, %s9
    $region7: #{lightweight_feat_forward.20} parent=1 // loop_footer_branch
      %8 = sbr.rel target = $region3
    $region8: #{lightweight_feat_forward.20} parent=1 // loop_exit
      _

// kernel: lightweight_feat_forward.21
$region0: #{lightweight_feat_forward.21}
  #allocation0 [shape = 'u32[]', space=smem, size = 0x4, offset = 0x4, fixed_abs, tag = 'smem constant byte address 0x4 - core index']
  #allocation1 [shape = 'u32[144,128]{1,0:T(1,128)}', space=vmem, size = 0x12000, scoped, tag = 'internal scratch']
  %s0 = inlined_call_operand.vmem [shape: bf16[2,15,15,64], index: 0, kind: input, shape index: {}]
  %s1 = inlined_call_operand.vmem [shape: bf16[2,13,13,64], index: 1, kind: output, shape index: {}]
  %s2 = sld [smem:[#allocation0]]
  $region37: #{lightweight_feat_forward.21} parent=0
    _
  %s4 = ssub.s32 1, %s2
  %s5 = scalar_select 0, %s4, %s2
  loop: start=0, step=1, limit=4
  $region2: #{lightweight_feat_forward.21} parent=0 // loop_pre_header
    _
  $region3: #{lightweight_feat_forward.21} parent=0 // loop_header
    %s7 = sphi 0, %s11
    %p8 = scmp.ge.s32.totalorder %s7, 4
    %s14 = sphi 0, %s26
    %s15 = sphi 0, %s22
    %s16 = sphi 0, %s14
    %s17 = sphi 0, %s15
    %s18 = sphi 0, %s16
    %s19 = sphi 0, %s17
    %s31 = sphi 0, %s33
    %s34 = sphi 0, %s31
    %s35 = sphi 0, %s34
    %s51 = sphi 0, %s35
    %s59 = sphi 0, %s61
    %s62 = sphi 0, %s59
    %s63 = sphi 0, %s62
    %s79 = sphi 0, %s63
  $region4: #{lightweight_feat_forward.21} parent=0 // loop_header_branch
    %10 = sbr.rel (%p8) target = $region8
  $region5: #{lightweight_feat_forward.21} parent=0 // loop_body
    %s12 = ssub.s32 %s7, 1
    %s13 = ssub.s32 %s7, 2
    %s20 = sadd.s32 1, %s15
    %p21 = scmp.ge.s32.totalorder %s20, 1
    %s22 = scalar_select %p21, 0, %s20
    %s23 = sadd.s32 1, %s14
    %s24 = scalar_select %p21, %s23, %s14
    %p25 = scmp.ge.s32.totalorder %s24, 2
    %s26 = scalar_select %p25, 0, %s24
    %s27 = ssub.s32 %s14, %s26
    %s28 = ssub.s32 %s15, %s22
    %s29 = sor.u32 %s27, %s28
    %p30 = scmp.eq.s32.totalorder %s29, 0
    %s32 = sadd.s32 %s31, 1
    %s33 = scalar_select %p30, %s31, %s32
    %p36 = pneg %p30
    %p37 = scmp.eq.s32.totalorder %s7, 1
    %p38 = por %p36, %p37
    %p39 = scmp.ne.s32.totalorder %s31, %s34
    %p40 = scmp.eq.s32.totalorder %s7, 0
    %p41 = por %p39, %p40
    %p42 = scmp.ne.s32.totalorder %s31, %s34
    %p43 = scmp.eq.s32.totalorder %s12, 1
    %p44 = por %p42, %p43
    %p45 = scmp.ne.s32.totalorder %s34, %s35
    %p46 = scmp.eq.s32.totalorder %s12, 0
    %p47 = por %p45, %p46
    %p48 = scmp.ne.s32.totalorder %s34, %s35
    %p49 = scmp.eq.s32.totalorder %s13, 1
    %p50 = por %p48, %p49
    %p52 = scmp.ne.s32.totalorder %s35, %s51
    %p53 = scmp.eq.s32.totalorder %s13, 0
    %p54 = por %p52, %p53
    %s55 = ssub.s32 %s14, %s26
    %s56 = ssub.s32 %s15, %s22
    %s57 = sor.u32 %s55, %s56
    %p58 = scmp.eq.s32.totalorder %s57, 0
    %s60 = sadd.s32 %s59, 1
    %s61 = scalar_select %p58, %s59, %s60
    %p64 = pneg %p58
    %p65 = scmp.eq.s32.totalorder %s7, 1
    %p66 = por %p64, %p65
    %p67 = scmp.ne.s32.totalorder %s59, %s62
    %p68 = scmp.eq.s32.totalorder %s7, 0
    %p69 = por %p67, %p68
    %p70 = scmp.ne.s32.totalorder %s59, %s62
    %p71 = scmp.eq.s32.totalorder %s12, 1
    %p72 = por %p70, %p71
    %p73 = scmp.ne.s32.totalorder %s62, %s63
    %p74 = scmp.eq.s32.totalorder %s12, 0
    %p75 = por %p73, %p74
    %p76 = scmp.ne.s32.totalorder %s62, %s63
    %p77 = scmp.eq.s32.totalorder %s13, 1
    %p78 = por %p76, %p77
    %p80 = scmp.ne.s32.totalorder %s63, %s79
    %p81 = scmp.eq.s32.totalorder %s13, 0
    %p82 = por %p80, %p81
    %p83 = scmp.le.s32.totalorder 1, %s7
    %p84 = scmp.lt.s32.totalorder %s7, 3
    %p85 = pnand %p83, %p84
    %p86 = pneg %p85
    // Predicated region
    $region9: #{lightweight_feat_forward.21} parent=5 // pred_check
      _
    $region10: #{lightweight_feat_forward.21} parent=5 // pred_check_branch
      %88 = sbr.rel (%p85) target = $region12
    $region11: #{lightweight_feat_forward.21} parent=5 // pred_region
      %s89 = ssub.s32 %s7, 1
    $region12: #{lightweight_feat_forward.21} parent=5 // pred_fallthru
      _
    %p90 = scmp.lt.s32.totalorder %s7, 2
    // Predicated region
    $region13: #{lightweight_feat_forward.21} parent=5 // pred_check
      %p91 = pneg %p90
    $region14: #{lightweight_feat_forward.21} parent=5 // pred_check_branch
      %93 = sbr.rel (%p91) target = $region16
    $region15: #{lightweight_feat_forward.21} parent=5 // pred_region
      // Predicated region
      $region17: #{lightweight_feat_forward.21} parent=15 // pred_check
        %p94 = pneg %p41
      $region18: #{lightweight_feat_forward.21} parent=15 // pred_check_branch
        %96 = sbr.rel (%p94) target = $region20
      $region19: #{lightweight_feat_forward.21} parent=15 // pred_region
        %p97 = scmp.lt.s32.totalorder %s14, 1
        %s98 = scalar_select %p97, %s14, 1
        %p99 = scmp.lt.s32.totalorder %s15, 0
        %s100 = scalar_select %p99, %s15, 0
        %s101 = smul.addr %s98, 30
        %s102 = sadd.s32 %s100, %s101
        %s103 = smul.addr %s102, 4
        %s104 = scalar_lea.vmem %s0, %s103
      $region20: #{lightweight_feat_forward.21} parent=15 // pred_fallthru
        _
    $region16: #{lightweight_feat_forward.21} parent=5 // pred_fallthru
      _
    %p105 = scmp.le.s32.totalorder 1, %s7
    %p106 = scmp.lt.s32.totalorder %s7, 3
    %p107 = pnand %p105, %p106
    %p108 = pneg %p107
    // Predicated region
    $region21: #{lightweight_feat_forward.21} parent=5 // pred_check
      _
    $region22: #{lightweight_feat_forward.21} parent=5 // pred_check_branch
      %110 = sbr.rel (%p107) target = $region24
    $region23: #{lightweight_feat_forward.21} parent=5 // pred_region
      %s111 = ssub.s32 %s7, 1
      %p112 = scmp.lt.s32.totalorder %s16, 1
      %s113 = scalar_select %p112, %s16, 1
      %p114 = scmp.lt.s32.totalorder %s17, 0
      %s115 = scalar_select %p114, %s17, 0
      %s116 = smul.addr %s113, 30
      %s117 = sadd.s32 %s115, %s116
      %s118 = smul.addr %s117, 4
      %s119 = scalar_lea.vmem %s0, %s118
      %p120 = pneg %p47
      %p121 = pneg %p44
      %p122 = pneg %p75
      %p123 = pneg %p72
      %p124 = scmp.lt.s32.totalorder %s16, 1
      %s125 = scalar_select %p124, %s16, 1
      %p126 = scmp.lt.s32.totalorder %s17, 0
      %s127 = scalar_select %p126, %s17, 0
      %s128 = smul.addr %s125, 26
      %s129 = sadd.s32 %s127, %s128
      %s130 = smul.addr %s129, 4
      %s131 = scalar_lea.vmem %s1, %s130
      %p132 = scmp.lt.s32.totalorder %s16, 1
      %s133 = scalar_select %p132, %s16, 1
      %p134 = scmp.lt.s32.totalorder %s17, 0
      %s135 = scalar_select %p134, %s17, 0
      %s136 = smul.addr %s133, 30
      %s137 = sadd.s32 %s135, %s136
      %s138 = smul.addr %s137, 4
      %s139 = scalar_lea.vmem %s0, %s138
      %p140 = scmp.lt.s32.totalorder %s16, 1
      %s141 = scalar_select %p140, %s16, 1
      %p142 = scmp.lt.s32.totalorder %s17, 0
      %s143 = scalar_select %p142, %s17, 0
      %s144 = smul.addr %s141, 26
      %s145 = sadd.s32 %s143, %s144
      %s146 = smul.addr %s145, 4
      %s147 = scalar_lea.vmem %s1, %s146
      %v149 = vld [vmem:[%s139] sm:$0xf]
      %v150 = vld [vmem:[%s139 + $0x4] sm:$0xf]
      %v151 = vld [vmem:[%s139 + $0x8] sm:$0xf]
      %v152 = vld [vmem:[%s139 + $0xc] sm:$0xf]
      %v153 = vld [vmem:[%s139 + $0x10] sm:$0xf]
      %v154 = vld [vmem:[%s139 + $0x14] sm:$0xf]
      %v155 = vld [vmem:[%s139 + $0x18] sm:$0xf]
      %v156 = vld [vmem:[%s139 + $0x1c] sm:$0xf]
      %v157 = vld [vmem:[%s139 + $0x20] sm:$0xf]
      %v158 = vld [vmem:[%s139 + $0x24] sm:$0xf]
      %v159 = vld [vmem:[%s139 + $0x28] sm:$0xf]
      %v160 = vld [vmem:[%s139 + $0x2c] sm:$0xf]
      %v161 = vld [vmem:[%s139 + $0x30] sm:$0xf]
      %v162 = vld [vmem:[%s139 + $0x34] sm:$0xf]
      %v163 = vld [vmem:[%s139 + $0x38] sm:$0xf]
      %v164 = vld [vmem:[%s139 + $0x3c] sm:$0xf]
      %v165 = vld [vmem:[%s139 + $0x40] sm:$0xf]
      %v166 = vld [vmem:[%s139 + $0x44] sm:$0xf]
      %v167 = vld [vmem:[%s139 + $0x48] sm:$0xf]
      %v168 = vld [vmem:[%s139 + $0x4c] sm:$0xf]
      %v169 = vld [vmem:[%s139 + $0x50] sm:$0xf]
      %v170 = vld [vmem:[%s139 + $0x54] sm:$0xf]
      %v171 = vld [vmem:[%s139 + $0x58] sm:$0xf]
      %v172 = vld [vmem:[%s139 + $0x5c] sm:$0xf]
      %v173 = vld [vmem:[%s139 + $0x60] sm:$0xf]
      %v174 = vld [vmem:[%s139 + $0x64] sm:$0xf]
      %s175 = scalar_lea.vmem %s139, 8
      %v176 = vld [vmem:[%s175] sm:$0xf]
      %v177 = vld [vmem:[%s175 + $0x4] sm:$0xf]
      %v178 = vld [vmem:[%s175 + $0x8] sm:$0xf]
      %v179 = vld [vmem:[%s175 + $0xc] sm:$0xf]
      %v180 = vld [vmem:[%s175 + $0x10] sm:$0xf]
      %v181 = vld [vmem:[%s175 + $0x14] sm:$0xf]
      %v182 = vld [vmem:[%s175 + $0x18] sm:$0xf]
      %v183 = vld [vmem:[%s175 + $0x1c] sm:$0xf]
      %v184 = vld [vmem:[%s175 + $0x20] sm:$0xf]
      %v185 = vld [vmem:[%s175 + $0x24] sm:$0xf]
      %v186 = vld [vmem:[%s175 + $0x28] sm:$0xf]
      %v187 = vld [vmem:[%s175 + $0x2c] sm:$0xf]
      %v188 = vld [vmem:[%s175 + $0x30] sm:$0xf]
      %v189 = vld [vmem:[%s175 + $0x34] sm:$0xf]
      %v190 = vld [vmem:[%s175 + $0x38] sm:$0xf]
      %v191 = vld [vmem:[%s175 + $0x3c] sm:$0xf]
      %v192 = vld [vmem:[%s175 + $0x40] sm:$0xf]
      %v193 = vld [vmem:[%s175 + $0x44] sm:$0xf]
      %v194 = vld [vmem:[%s175 + $0x48] sm:$0xf]
      %v195 = vld [vmem:[%s175 + $0x4c] sm:$0xf]
      %v196 = vld [vmem:[%s175 + $0x50] sm:$0xf]
      %v197 = vld [vmem:[%s175 + $0x54] sm:$0xf]
      %v198 = vld [vmem:[%s175 + $0x58] sm:$0xf]
      %v199 = vld [vmem:[%s175 + $0x5c] sm:$0xf]
      %v200 = vld [vmem:[%s175 + $0x60] sm:$0xf]
      %v201 = vld [vmem:[%s175 + $0x64] sm:$0xf]
      %v202 = vmax.bf16 %v149, %v176
      %v203 = vmax.bf16 %v150, %v177
      %v204 = vmax.bf16 %v151, %v178
      %v205 = vmax.bf16 %v152, %v179
      %v206 = vmax.bf16 %v153, %v180
      %v207 = vmax.bf16 %v154, %v181
      %v208 = vmax.bf16 %v155, %v182
      %v209 = vmax.bf16 %v156, %v183
      %v210 = vmax.bf16 %v157, %v184
      %v211 = vmax.bf16 %v158, %v185
      %v212 = vmax.bf16 %v159, %v186
      %v213 = vmax.bf16 %v160, %v187
      %v214 = vmax.bf16 %v161, %v188
      %v215 = vmax.bf16 %v162, %v189
      %v216 = vmax.bf16 %v163, %v190
      %v217 = vmax.bf16 %v164, %v191
      %v218 = vmax.bf16 %v165, %v192
      %v219 = vmax.bf16 %v166, %v193
      %v220 = vmax.bf16 %v167, %v194
      %v221 = vmax.bf16 %v168, %v195
      %v222 = vmax.bf16 %v169, %v196
      %v223 = vmax.bf16 %v170, %v197
      %v224 = vmax.bf16 %v171, %v198
      %v225 = vmax.bf16 %v172, %v199
      %v226 = vmax.bf16 %v173, %v200
      %v227 = vmax.bf16 %v174, %v201
      %s228 = scalar_lea.vmem %s139, 16
      %v229 = vld [vmem:[%s228] sm:$0xf]
      %v230 = vld [vmem:[%s228 + $0x4] sm:$0xf]
      %v231 = vld [vmem:[%s228 + $0x8] sm:$0xf]
      %v232 = vld [vmem:[%s228 + $0xc] sm:$0xf]
      %v233 = vld [vmem:[%s228 + $0x10] sm:$0xf]
      %v234 = vld [vmem:[%s228 + $0x14] sm:$0xf]
      %v235 = vld [vmem:[%s228 + $0x18] sm:$0xf]
      %v236 = vld [vmem:[%s228 + $0x1c] sm:$0xf]
      %v237 = vld [vmem:[%s228 + $0x20] sm:$0xf]
      %v238 = vld [vmem:[%s228 + $0x24] sm:$0xf]
      %v239 = vld [vmem:[%s228 + $0x28] sm:$0xf]
      %v240 = vld [vmem:[%s228 + $0x2c] sm:$0xf]
      %v241 = vld [vmem:[%s228 + $0x30] sm:$0xf]
      %v242 = vld [vmem:[%s228 + $0x34] sm:$0xf]
      %v243 = vld [vmem:[%s228 + $0x38] sm:$0xf]
      %v244 = vld [vmem:[%s228 + $0x3c] sm:$0xf]
      %v245 = vld [vmem:[%s228 + $0x40] sm:$0xf]
      %v246 = vld [vmem:[%s228 + $0x44] sm:$0xf]
      %v247 = vld [vmem:[%s228 + $0x48] sm:$0xf]
      %v248 = vld [vmem:[%s228 + $0x4c] sm:$0xf]
      %v249 = vld [vmem:[%s228 + $0x50] sm:$0xf]
      %v250 = vld [vmem:[%s228 + $0x54] sm:$0xf]
      %v251 = vld [vmem:[%s228 + $0x58] sm:$0xf]
      %v252 = vld [vmem:[%s228 + $0x5c] sm:$0xf]
      %v253 = vld [vmem:[%s228 + $0x60] sm:$0xf]
      %v254 = vld [vmem:[%s228 + $0x64] sm:$0xf]
      %v255 = vmax.bf16 %v202, %v229
      %v256 = vmax.bf16 %v203, %v230
      %v257 = vmax.bf16 %v204, %v231
      %v258 = vmax.bf16 %v205, %v232
      %v259 = vmax.bf16 %v206, %v233
      %v260 = vmax.bf16 %v207, %v234
      %v261 = vmax.bf16 %v208, %v235
      %v262 = vmax.bf16 %v209, %v236
      %v263 = vmax.bf16 %v210, %v237
      %v264 = vmax.bf16 %v211, %v238
      %v265 = vmax.bf16 %v212, %v239
      %v266 = vmax.bf16 %v213, %v240
      %v267 = vmax.bf16 %v214, %v241
      %v268 = vmax.bf16 %v215, %v242
      %v269 = vmax.bf16 %v216, %v243
      %v270 = vmax.bf16 %v217, %v244
      %v271 = vmax.bf16 %v218, %v245
      %v272 = vmax.bf16 %v219, %v246
      %v273 = vmax.bf16 %v220, %v247
      %v274 = vmax.bf16 %v221, %v248
      %v275 = vmax.bf16 %v222, %v249
      %v276 = vmax.bf16 %v223, %v250
      %v277 = vmax.bf16 %v224, %v251
      %v278 = vmax.bf16 %v225, %v252
      %v279 = vmax.bf16 %v226, %v253
      %v280 = vmax.bf16 %v227, %v254
      %vm281 = vsmask.f32 3328
      %vm282 = vsmask.f32 7440
      %vm283 = vmor %vm281, %vm282
      %v285 = vshrl.u32 %v255, 16
      %v287 = vrot.slane %v285, 4
      %v288 = vshll.u32 %v255, 16
      %v290 = vrot.slane %v288, 5
      %v291 = vor.u32 %v287, %v290
      %v292 = vrot.slane %v291, 4
      %v294 = vshll.u32 %v256, 16
      %v296 = vrot.slane %v294, 5
      %v297 = vsel %vm283, %v292, %v296
      %v298 = vshrl.u32 %v256, 16
      %v300 = vrot.slane %v298, 4
      %v301 = vor.u32 %v300, %v296
      %v302 = vrot.slane %v301, 4
      %v304 = vshrl.u32 %v257, 16
      %v306 = vrot.slane %v304, 4
      %v307 = vshll.u32 %v257, 16
      %v309 = vrot.slane %v307, 5
      %v310 = vor.u32 %v306, %v309
      %v311 = vrot.slane %v310, 4
      %v313 = vshll.u32 %v258, 16
      %v315 = vrot.slane %v313, 5
      %v316 = vsel %vm283, %v311, %v315
      %v317 = vshrl.u32 %v258, 16
      %v319 = vrot.slane %v317, 4
      %v320 = vor.u32 %v319, %v315
      %v321 = vrot.slane %v320, 4
      %v323 = vshrl.u32 %v259, 16
      %v325 = vrot.slane %v323, 4
      %v326 = vshll.u32 %v259, 16
      %v328 = vrot.slane %v326, 5
      %v329 = vor.u32 %v325, %v328
      %v330 = vrot.slane %v329, 4
      %v332 = vshll.u32 %v260, 16
      %v334 = vrot.slane %v332, 5
      %v335 = vsel %vm283, %v330, %v334
      %v336 = vshrl.u32 %v260, 16
      %v338 = vrot.slane %v336, 4
      %v339 = vor.u32 %v338, %v334
      %v340 = vrot.slane %v339, 4
      %v342 = vshrl.u32 %v261, 16
      %v344 = vrot.slane %v342, 4
      %v345 = vshll.u32 %v261, 16
      %v347 = vrot.slane %v345, 5
      %v348 = vor.u32 %v344, %v347
      %v349 = vrot.slane %v348, 4
      %v351 = vshll.u32 %v262, 16
      %v353 = vrot.slane %v351, 5
      %v354 = vsel %vm283, %v349, %v353
      %v355 = vshrl.u32 %v262, 16
      %v357 = vrot.slane %v355, 4
      %v358 = vor.u32 %v357, %v353
      %v359 = vrot.slane %v358, 4
      %v361 = vshrl.u32 %v263, 16
      %v363 = vrot.slane %v361, 4
      %v364 = vshll.u32 %v263, 16
      %v366 = vrot.slane %v364, 5
      %v367 = vor.u32 %v363, %v366
      %v368 = vrot.slane %v367, 4
      %v370 = vshll.u32 %v264, 16
      %v372 = vrot.slane %v370, 5
      %v373 = vsel %vm283, %v368, %v372
      %v374 = vshrl.u32 %v264, 16
      %v376 = vrot.slane %v374, 4
      %v377 = vor.u32 %v376, %v372
      %v378 = vrot.slane %v377, 4
      %v380 = vshrl.u32 %v265, 16
      %v382 = vrot.slane %v380, 4
      %v383 = vshll.u32 %v265, 16
      %v385 = vrot.slane %v383, 5
      %v386 = vor.u32 %v382, %v385
      %v387 = vrot.slane %v386, 4
      %v389 = vshll.u32 %v266, 16
      %v391 = vrot.slane %v389, 5
      %v392 = vsel %vm283, %v387, %v391
      %v393 = vshrl.u32 %v266, 16
      %v395 = vrot.slane %v393, 4
      %v396 = vor.u32 %v395, %v391
      %v397 = vrot.slane %v396, 4
      %v399 = vshrl.u32 %v267, 16
      %v401 = vrot.slane %v399, 4
      %v402 = vshll.u32 %v267, 16
      %v404 = vrot.slane %v402, 5
      %v405 = vor.u32 %v401, %v404
      %v406 = vrot.slane %v405, 4
      %v408 = vshll.u32 %v268, 16
      %v410 = vrot.slane %v408, 5
      %v411 = vsel %vm283, %v406, %v410
      %v412 = vshrl.u32 %v268, 16
      %v414 = vrot.slane %v412, 4
      %v415 = vor.u32 %v414, %v410
      %v416 = vrot.slane %v415, 4
      %v418 = vshrl.u32 %v269, 16
      %v420 = vrot.slane %v418, 4
      %v421 = vshll.u32 %v269, 16
      %v423 = vrot.slane %v421, 5
      %v424 = vor.u32 %v420, %v423
      %v425 = vrot.slane %v424, 4
      %v427 = vshll.u32 %v270, 16
      %v429 = vrot.slane %v427, 5
      %v430 = vsel %vm283, %v425, %v429
      %v431 = vshrl.u32 %v270, 16
      %v433 = vrot.slane %v431, 4
      %v434 = vor.u32 %v433, %v429
      %v435 = vrot.slane %v434, 4
      %v437 = vshrl.u32 %v271, 16
      %v439 = vrot.slane %v437, 4
      %v440 = vshll.u32 %v271, 16
      %v442 = vrot.slane %v440, 5
      %v443 = vor.u32 %v439, %v442
      %v444 = vrot.slane %v443, 4
      %v446 = vshll.u32 %v272, 16
      %v448 = vrot.slane %v446, 5
      %v449 = vsel %vm283, %v444, %v448
      %v450 = vshrl.u32 %v272, 16
      %v452 = vrot.slane %v450, 4
      %v453 = vor.u32 %v452, %v448
      %v454 = vrot.slane %v453, 4
      %v456 = vshrl.u32 %v273, 16
      %v458 = vrot.slane %v456, 4
      %v459 = vshll.u32 %v273, 16
      %v461 = vrot.slane %v459, 5
      %v462 = vor.u32 %v458, %v461
      %v463 = vrot.slane %v462, 4
      %v465 = vshll.u32 %v274, 16
      %v467 = vrot.slane %v465, 5
      %v468 = vsel %vm283, %v463, %v467
      %v469 = vshrl.u32 %v274, 16
      %v471 = vrot.slane %v469, 4
      %v472 = vor.u32 %v471, %v467
      %v473 = vrot.slane %v472, 4
      %v475 = vshrl.u32 %v275, 16
      %v477 = vrot.slane %v475, 4
      %v478 = vshll.u32 %v275, 16
      %v480 = vrot.slane %v478, 5
      %v481 = vor.u32 %v477, %v480
      %v482 = vrot.slane %v481, 4
      %v484 = vshll.u32 %v276, 16
      %v486 = vrot.slane %v484, 5
      %v487 = vsel %vm283, %v482, %v486
      %v488 = vshrl.u32 %v276, 16
      %v490 = vrot.slane %v488, 4
      %v491 = vor.u32 %v490, %v486
      %v492 = vrot.slane %v491, 4
      %v494 = vshrl.u32 %v277, 16
      %v496 = vrot.slane %v494, 4
      %v497 = vshll.u32 %v277, 16
      %v499 = vrot.slane %v497, 5
      %v500 = vor.u32 %v496, %v499
      %v501 = vrot.slane %v500, 4
      %v503 = vshll.u32 %v278, 16
      %v505 = vrot.slane %v503, 5
      %v506 = vsel %vm283, %v501, %v505
      %v507 = vshrl.u32 %v278, 16
      %v509 = vrot.slane %v507, 4
      %v510 = vor.u32 %v509, %v505
      %v511 = vrot.slane %v510, 4
      %v513 = vshrl.u32 %v279, 16
      %v515 = vrot.slane %v513, 4
      %v516 = vshll.u32 %v279, 16
      %v518 = vrot.slane %v516, 5
      %v519 = vor.u32 %v515, %v518
      %v520 = vrot.slane %v519, 4
      %v522 = vshll.u32 %v280, 16
      %v524 = vrot.slane %v522, 5
      %v525 = vsel %vm283, %v520, %v524
      %v526 = vshrl.u32 %v280, 16
      %v528 = vrot.slane %v526, 4
      %v529 = vor.u32 %v528, %v524
      %v530 = vrot.slane %v529, 4
      %v557 = vmax.bf16 %v255, %v297
      %v558 = vmax.bf16 %v256, %v302
      %v559 = vmax.bf16 %v257, %v316
      %v560 = vmax.bf16 %v258, %v321
      %v561 = vmax.bf16 %v259, %v335
      %v562 = vmax.bf16 %v260, %v340
      %v563 = vmax.bf16 %v261, %v354
      %v564 = vmax.bf16 %v262, %v359
      %v565 = vmax.bf16 %v263, %v373
      %v566 = vmax.bf16 %v264, %v378
      %v567 = vmax.bf16 %v265, %v392
      %v568 = vmax.bf16 %v266, %v397
      %v569 = vmax.bf16 %v267, %v411
      %v570 = vmax.bf16 %v268, %v416
      %v571 = vmax.bf16 %v269, %v430
      %v572 = vmax.bf16 %v270, %v435
      %v573 = vmax.bf16 %v271, %v449
      %v574 = vmax.bf16 %v272, %v454
      %v575 = vmax.bf16 %v273, %v468
      %v576 = vmax.bf16 %v274, %v473
      %v577 = vmax.bf16 %v275, %v487
      %v578 = vmax.bf16 %v276, %v492
      %v579 = vmax.bf16 %v277, %v506
      %v580 = vmax.bf16 %v278, %v511
      %v581 = vmax.bf16 %v279, %v525
      %v582 = vmax.bf16 %v280, %v530
      %vm609 = vcmask 1042432
      %vm610 = vcmask 1046532
      %vm611 = vmor %vm609, %vm610
      %v612 = vrot.slane %v255, 5
      %v613 = vrot.slane %v612, 4
      %v614 = vrot.slane %v256, 5
      %v615 = vsel %vm611, %v613, %v614
      %v616 = vrot.slane %v614, 4
      %v617 = vrot.slane %v257, 5
      %v618 = vrot.slane %v617, 4
      %v619 = vrot.slane %v258, 5
      %v620 = vsel %vm611, %v618, %v619
      %v621 = vrot.slane %v619, 4
      %v622 = vrot.slane %v259, 5
      %v623 = vrot.slane %v622, 4
      %v624 = vrot.slane %v260, 5
      %v625 = vsel %vm611, %v623, %v624
      %v626 = vrot.slane %v624, 4
      %v627 = vrot.slane %v261, 5
      %v628 = vrot.slane %v627, 4
      %v629 = vrot.slane %v262, 5
      %v630 = vsel %vm611, %v628, %v629
      %v631 = vrot.slane %v629, 4
      %v632 = vrot.slane %v263, 5
      %v633 = vrot.slane %v632, 4
      %v634 = vrot.slane %v264, 5
      %v635 = vsel %vm611, %v633, %v634
      %v636 = vrot.slane %v634, 4
      %v637 = vrot.slane %v265, 5
      %v638 = vrot.slane %v637, 4
      %v639 = vrot.slane %v266, 5
      %v640 = vsel %vm611, %v638, %v639
      %v641 = vrot.slane %v639, 4
      %v642 = vrot.slane %v267, 5
      %v643 = vrot.slane %v642, 4
      %v644 = vrot.slane %v268, 5
      %v645 = vsel %vm611, %v643, %v644
      %v646 = vrot.slane %v644, 4
      %v647 = vrot.slane %v269, 5
      %v648 = vrot.slane %v647, 4
      %v649 = vrot.slane %v270, 5
      %v650 = vsel %vm611, %v648, %v649
      %v651 = vrot.slane %v649, 4
      %v652 = vrot.slane %v271, 5
      %v653 = vrot.slane %v652, 4
      %v654 = vrot.slane %v272, 5
      %v655 = vsel %vm611, %v653, %v654
      %v656 = vrot.slane %v654, 4
      %v657 = vrot.slane %v273, 5
      %v658 = vrot.slane %v657, 4
      %v659 = vrot.slane %v274, 5
      %v660 = vsel %vm611, %v658, %v659
      %v661 = vrot.slane %v659, 4
      %v662 = vrot.slane %v275, 5
      %v663 = vrot.slane %v662, 4
      %v664 = vrot.slane %v276, 5
      %v665 = vsel %vm611, %v663, %v664
      %v666 = vrot.slane %v664, 4
      %v667 = vrot.slane %v277, 5
      %v668 = vrot.slane %v667, 4
      %v669 = vrot.slane %v278, 5
      %v670 = vsel %vm611, %v668, %v669
      %v671 = vrot.slane %v669, 4
      %v672 = vrot.slane %v279, 5
      %v673 = vrot.slane %v672, 4
      %v674 = vrot.slane %v280, 5
      %v675 = vsel %vm611, %v673, %v674
      %v676 = vrot.slane %v674, 4
      %v703 = vmax.bf16 %v557, %v615
      %v704 = vmax.bf16 %v558, %v616
      %v705 = vmax.bf16 %v559, %v620
      %v706 = vmax.bf16 %v560, %v621
      %v707 = vmax.bf16 %v561, %v625
      %v708 = vmax.bf16 %v562, %v626
      %v709 = vmax.bf16 %v563, %v630
      %v710 = vmax.bf16 %v564, %v631
      %v711 = vmax.bf16 %v565, %v635
      %v712 = vmax.bf16 %v566, %v636
      %v713 = vmax.bf16 %v567, %v640
      %v714 = vmax.bf16 %v568, %v641
      %v715 = vmax.bf16 %v569, %v645
      %v716 = vmax.bf16 %v570, %v646
      %v717 = vmax.bf16 %v571, %v650
      %v718 = vmax.bf16 %v572, %v651
      %v719 = vmax.bf16 %v573, %v655
      %v720 = vmax.bf16 %v574, %v656
      %v721 = vmax.bf16 %v575, %v660
      %v722 = vmax.bf16 %v576, %v661
      %v723 = vmax.bf16 %v577, %v665
      %v724 = vmax.bf16 %v578, %v666
      %v725 = vmax.bf16 %v579, %v670
      %v726 = vmax.bf16 %v580, %v671
      %v727 = vmax.bf16 %v581, %v675
      %v728 = vmax.bf16 %v582, %v676
      %v729 = vmax.bf16 %v703, 0
      %v730 = vmax.bf16 %v704, 0
      %v731 = vmax.bf16 %v705, 0
      %v732 = vmax.bf16 %v706, 0
      %v733 = vmax.bf16 %v707, 0
      %v734 = vmax.bf16 %v708, 0
      %v735 = vmax.bf16 %v709, 0
      %v736 = vmax.bf16 %v710, 0
      %v737 = vmax.bf16 %v711, 0
      %v738 = vmax.bf16 %v712, 0
      %v739 = vmax.bf16 %v713, 0
      %v740 = vmax.bf16 %v714, 0
      %v741 = vmax.bf16 %v715, 0
      %v742 = vmax.bf16 %v716, 0
      %v743 = vmax.bf16 %v717, 0
      %v744 = vmax.bf16 %v718, 0
      %v745 = vmax.bf16 %v719, 0
      %v746 = vmax.bf16 %v720, 0
      %v747 = vmax.bf16 %v721, 0
      %v748 = vmax.bf16 %v722, 0
      %v749 = vmax.bf16 %v723, 0
      %v750 = vmax.bf16 %v724, 0
      %v751 = vmax.bf16 %v725, 0
      %v752 = vmax.bf16 %v726, 0
      %v753 = vmax.bf16 %v727, 0
      %v754 = vmax.bf16 %v728, 0
      %vm755 = vcmask 519168
      %756 = vst.msk [vmem:[%s147] sm:$0xf] %vm755, %v729
      %vm757 = vcmask 518144
      %vm758 = vsmask.f32 2304
      %vm759 = vmand %vm757, %vm758
      %v760 = vld [vmem:[%s147 + $0x4] sm:$0x7]
      %v761 = vsel %vm759, %v730, %v760
      %762 = vst [vmem:[%s147 + $0x4] sm:$0x7] %v761
      %763 = vst.msk [vmem:[%s147 + $0x8] sm:$0xf] %vm755, %v731
      %v764 = vld [vmem:[%s147 + $0xc] sm:$0x7]
      %v765 = vsel %vm759, %v732, %v764
      %766 = vst [vmem:[%s147 + $0xc] sm:$0x7] %v765
      %767 = vst.msk [vmem:[%s147 + $0x10] sm:$0xf] %vm755, %v733
      %v768 = vld [vmem:[%s147 + $0x14] sm:$0x7]
      %v769 = vsel %vm759, %v734, %v768
      %770 = vst [vmem:[%s147 + $0x14] sm:$0x7] %v769
      %771 = vst.msk [vmem:[%s147 + $0x18] sm:$0xf] %vm755, %v735
      %v772 = vld [vmem:[%s147 + $0x1c] sm:$0x7]
      %v773 = vsel %vm759, %v736, %v772
      %774 = vst [vmem:[%s147 + $0x1c] sm:$0x7] %v773
      %775 = vst.msk [vmem:[%s147 + $0x20] sm:$0xf] %vm755, %v737
      %v776 = vld [vmem:[%s147 + $0x24] sm:$0x7]
      %v777 = vsel %vm759, %v738, %v776
      %778 = vst [vmem:[%s147 + $0x24] sm:$0x7] %v777
      %779 = vst.msk [vmem:[%s147 + $0x28] sm:$0xf] %vm755, %v739
      %v780 = vld [vmem:[%s147 + $0x2c] sm:$0x7]
      %v781 = vsel %vm759, %v740, %v780
      %782 = vst [vmem:[%s147 + $0x2c] sm:$0x7] %v781
      %783 = vst.msk [vmem:[%s147 + $0x30] sm:$0xf] %vm755, %v741
      %v784 = vld [vmem:[%s147 + $0x34] sm:$0x7]
      %v785 = vsel %vm759, %v742, %v784
      %786 = vst [vmem:[%s147 + $0x34] sm:$0x7] %v785
      %787 = vst.msk [vmem:[%s147 + $0x38] sm:$0xf] %vm755, %v743
      %v788 = vld [vmem:[%s147 + $0x3c] sm:$0x7]
      %v789 = vsel %vm759, %v744, %v788
      %790 = vst [vmem:[%s147 + $0x3c] sm:$0x7] %v789
      %791 = vst.msk [vmem:[%s147 + $0x40] sm:$0xf] %vm755, %v745
      %v792 = vld [vmem:[%s147 + $0x44] sm:$0x7]
      %v793 = vsel %vm759, %v746, %v792
      %794 = vst [vmem:[%s147 + $0x44] sm:$0x7] %v793
      %795 = vst.msk [vmem:[%s147 + $0x48] sm:$0xf] %vm755, %v747
      %v796 = vld [vmem:[%s147 + $0x4c] sm:$0x7]
      %v797 = vsel %vm759, %v748, %v796
      %798 = vst [vmem:[%s147 + $0x4c] sm:$0x7] %v797
      %799 = vst.msk [vmem:[%s147 + $0x50] sm:$0xf] %vm755, %v749
      %v800 = vld [vmem:[%s147 + $0x54] sm:$0x7]
      %v801 = vsel %vm759, %v750, %v800
      %802 = vst [vmem:[%s147 + $0x54] sm:$0x7] %v801
      %803 = vst.msk [vmem:[%s147 + $0x58] sm:$0xf] %vm755, %v751
      %v804 = vld [vmem:[%s147 + $0x5c] sm:$0x7]
      %v805 = vsel %vm759, %v752, %v804
      %806 = vst [vmem:[%s147 + $0x5c] sm:$0x7] %v805
      %807 = vst.msk [vmem:[%s147 + $0x60] sm:$0xf] %vm755, %v753
      %v808 = vld [vmem:[%s147 + $0x64] sm:$0x7]
      %v809 = vsel %vm759, %v754, %v808
      %810 = vst [vmem:[%s147 + $0x64] sm:$0x7] %v809
      %p811 = scmp.lt.s32.totalorder %s16, 1
      %s812 = scalar_select %p811, %s16, 1
      %p813 = scmp.lt.s32.totalorder %s17, 0
      %s814 = scalar_select %p813, %s17, 0
      %s815 = smul.addr %s812, 26
      %s816 = sadd.s32 %s814, %s815
      %s817 = smul.addr %s816, 4
      %s818 = scalar_lea.vmem %s1, %s817
      // Predicated region
      $region25: #{lightweight_feat_forward.21} parent=23 // pred_check
        %p819 = pneg %p72
      $region26: #{lightweight_feat_forward.21} parent=23 // pred_check_branch
        %821 = sbr.rel (%p819) target = $region28
      $region27: #{lightweight_feat_forward.21} parent=23 // pred_region
        _
      $region28: #{lightweight_feat_forward.21} parent=23 // pred_fallthru
        _
    $region24: #{lightweight_feat_forward.21} parent=5 // pred_fallthru
      _
    %p822 = scmp.le.s32.totalorder 2, %s7
    // Predicated region
    $region29: #{lightweight_feat_forward.21} parent=5 // pred_check
      %p823 = pneg %p822
    $region30: #{lightweight_feat_forward.21} parent=5 // pred_check_branch
      %825 = sbr.rel (%p823) target = $region32
    $region31: #{lightweight_feat_forward.21} parent=5 // pred_region
      %s826 = ssub.s32 %s7, 2
      // Predicated region
      $region33: #{lightweight_feat_forward.21} parent=31 // pred_check
        %p827 = pneg %p78
      $region34: #{lightweight_feat_forward.21} parent=31 // pred_check_branch
        %829 = sbr.rel (%p827) target = $region36
      $region35: #{lightweight_feat_forward.21} parent=31 // pred_region
        %p830 = scmp.lt.s32.totalorder %s18, 1
        %s831 = scalar_select %p830, %s18, 1
        %p832 = scmp.lt.s32.totalorder %s19, 0
        %s833 = scalar_select %p832, %s19, 0
        %s834 = smul.addr %s831, 26
        %s835 = sadd.s32 %s833, %s834
        %s836 = smul.addr %s835, 4
        %s837 = scalar_lea.vmem %s1, %s836
      $region36: #{lightweight_feat_forward.21} parent=31 // pred_fallthru
        _
    $region32: #{lightweight_feat_forward.21} parent=5 // pred_fallthru
      _
  $region6: #{lightweight_feat_forward.21} parent=0 // loop_footer
    %s11 = sadd.s32 1, %s7
  $region7: #{lightweight_feat_forward.21} parent=0 // loop_footer_branch
    %6 = sbr.rel target = $region3
  $region8: #{lightweight_feat_forward.21} parent=0 // loop_exit
    _

// kernel: lightweight_feat_forward.26
$region0: #{lightweight_feat_forward.26}
  #allocation0 [shape = 'u32[]', space=smem, size = 0x4, offset = 0x4, fixed_abs, tag = 'smem constant byte address 0x4 - core index']
  #allocation1 [shape = 'u32[144,128]{1,0:T(1,128)}', space=vmem, size = 0x12000, scoped, tag = 'internal scratch']
  %s0 = inlined_call_operand.vmem [shape: bf16[2,7,7,128], index: 0, kind: input, shape index: {}]
  %s1 = inlined_call_operand.vmem [shape: bf16[2,5,5,128], index: 1, kind: output, shape index: {}]
  %s2 = sld [smem:[#allocation0]]
  $region37: #{lightweight_feat_forward.26} parent=0
    _
  %s4 = ssub.s32 1, %s2
  %s5 = scalar_select 0, %s4, %s2
  loop: start=0, step=1, limit=4
  $region2: #{lightweight_feat_forward.26} parent=0 // loop_pre_header
    _
  $region3: #{lightweight_feat_forward.26} parent=0 // loop_header
    %s7 = sphi 0, %s11
    %p8 = scmp.ge.s32.totalorder %s7, 4
    %s14 = sphi 0, %s26
    %s15 = sphi 0, %s22
    %s16 = sphi 0, %s14
    %s17 = sphi 0, %s15
    %s18 = sphi 0, %s16
    %s19 = sphi 0, %s17
    %s31 = sphi 0, %s33
    %s34 = sphi 0, %s31
    %s35 = sphi 0, %s34
    %s51 = sphi 0, %s35
    %s59 = sphi 0, %s61
    %s62 = sphi 0, %s59
    %s63 = sphi 0, %s62
    %s79 = sphi 0, %s63
  $region4: #{lightweight_feat_forward.26} parent=0 // loop_header_branch
    %10 = sbr.rel (%p8) target = $region8
  $region5: #{lightweight_feat_forward.26} parent=0 // loop_body
    %s12 = ssub.s32 %s7, 1
    %s13 = ssub.s32 %s7, 2
    %s20 = sadd.s32 1, %s15
    %p21 = scmp.ge.s32.totalorder %s20, 1
    %s22 = scalar_select %p21, 0, %s20
    %s23 = sadd.s32 1, %s14
    %s24 = scalar_select %p21, %s23, %s14
    %p25 = scmp.ge.s32.totalorder %s24, 2
    %s26 = scalar_select %p25, 0, %s24
    %s27 = ssub.s32 %s14, %s26
    %s28 = ssub.s32 %s15, %s22
    %s29 = sor.u32 %s27, %s28
    %p30 = scmp.eq.s32.totalorder %s29, 0
    %s32 = sadd.s32 %s31, 1
    %s33 = scalar_select %p30, %s31, %s32
    %p36 = pneg %p30
    %p37 = scmp.eq.s32.totalorder %s7, 1
    %p38 = por %p36, %p37
    %p39 = scmp.ne.s32.totalorder %s31, %s34
    %p40 = scmp.eq.s32.totalorder %s7, 0
    %p41 = por %p39, %p40
    %p42 = scmp.ne.s32.totalorder %s31, %s34
    %p43 = scmp.eq.s32.totalorder %s12, 1
    %p44 = por %p42, %p43
    %p45 = scmp.ne.s32.totalorder %s34, %s35
    %p46 = scmp.eq.s32.totalorder %s12, 0
    %p47 = por %p45, %p46
    %p48 = scmp.ne.s32.totalorder %s34, %s35
    %p49 = scmp.eq.s32.totalorder %s13, 1
    %p50 = por %p48, %p49
    %p52 = scmp.ne.s32.totalorder %s35, %s51
    %p53 = scmp.eq.s32.totalorder %s13, 0
    %p54 = por %p52, %p53
    %s55 = ssub.s32 %s14, %s26
    %s56 = ssub.s32 %s15, %s22
    %s57 = sor.u32 %s55, %s56
    %p58 = scmp.eq.s32.totalorder %s57, 0
    %s60 = sadd.s32 %s59, 1
    %s61 = scalar_select %p58, %s59, %s60
    %p64 = pneg %p58
    %p65 = scmp.eq.s32.totalorder %s7, 1
    %p66 = por %p64, %p65
    %p67 = scmp.ne.s32.totalorder %s59, %s62
    %p68 = scmp.eq.s32.totalorder %s7, 0
    %p69 = por %p67, %p68
    %p70 = scmp.ne.s32.totalorder %s59, %s62
    %p71 = scmp.eq.s32.totalorder %s12, 1
    %p72 = por %p70, %p71
    %p73 = scmp.ne.s32.totalorder %s62, %s63
    %p74 = scmp.eq.s32.totalorder %s12, 0
    %p75 = por %p73, %p74
    %p76 = scmp.ne.s32.totalorder %s62, %s63
    %p77 = scmp.eq.s32.totalorder %s13, 1
    %p78 = por %p76, %p77
    %p80 = scmp.ne.s32.totalorder %s63, %s79
    %p81 = scmp.eq.s32.totalorder %s13, 0
    %p82 = por %p80, %p81
    %p83 = scmp.le.s32.totalorder 1, %s7
    %p84 = scmp.lt.s32.totalorder %s7, 3
    %p85 = pnand %p83, %p84
    %p86 = pneg %p85
    // Predicated region
    $region9: #{lightweight_feat_forward.26} parent=5 // pred_check
      _
    $region10: #{lightweight_feat_forward.26} parent=5 // pred_check_branch
      %88 = sbr.rel (%p85) target = $region12
    $region11: #{lightweight_feat_forward.26} parent=5 // pred_region
      %s89 = ssub.s32 %s7, 1
    $region12: #{lightweight_feat_forward.26} parent=5 // pred_fallthru
      _
    %p90 = scmp.lt.s32.totalorder %s7, 2
    // Predicated region
    $region13: #{lightweight_feat_forward.26} parent=5 // pred_check
      %p91 = pneg %p90
    $region14: #{lightweight_feat_forward.26} parent=5 // pred_check_branch
      %93 = sbr.rel (%p91) target = $region16
    $region15: #{lightweight_feat_forward.26} parent=5 // pred_region
      // Predicated region
      $region17: #{lightweight_feat_forward.26} parent=15 // pred_check
        %p94 = pneg %p41
      $region18: #{lightweight_feat_forward.26} parent=15 // pred_check_branch
        %96 = sbr.rel (%p94) target = $region20
      $region19: #{lightweight_feat_forward.26} parent=15 // pred_region
        %p97 = scmp.lt.s32.totalorder %s14, 1
        %s98 = scalar_select %p97, %s14, 1
        %p99 = scmp.lt.s32.totalorder %s15, 0
        %s100 = scalar_select %p99, %s15, 0
        %s101 = smul.addr %s98, 7
        %s102 = sadd.s32 %s100, %s101
        %s103 = smul.addr %s102, 4
        %s104 = scalar_lea.vmem %s0, %s103
      $region20: #{lightweight_feat_forward.26} parent=15 // pred_fallthru
        _
    $region16: #{lightweight_feat_forward.26} parent=5 // pred_fallthru
      _
    %p105 = scmp.le.s32.totalorder 1, %s7
    %p106 = scmp.lt.s32.totalorder %s7, 3
    %p107 = pnand %p105, %p106
    %p108 = pneg %p107
    // Predicated region
    $region21: #{lightweight_feat_forward.26} parent=5 // pred_check
      _
    $region22: #{lightweight_feat_forward.26} parent=5 // pred_check_branch
      %110 = sbr.rel (%p107) target = $region24
    $region23: #{lightweight_feat_forward.26} parent=5 // pred_region
      %s111 = ssub.s32 %s7, 1
      %p112 = scmp.lt.s32.totalorder %s16, 1
      %s113 = scalar_select %p112, %s16, 1
      %p114 = scmp.lt.s32.totalorder %s17, 0
      %s115 = scalar_select %p114, %s17, 0
      %s116 = smul.addr %s113, 7
      %s117 = sadd.s32 %s115, %s116
      %s118 = smul.addr %s117, 4
      %s119 = scalar_lea.vmem %s0, %s118
      %p120 = pneg %p47
      %p121 = pneg %p44
      %p122 = pneg %p75
      %p123 = pneg %p72
      %p124 = scmp.lt.s32.totalorder %s16, 1
      %s125 = scalar_select %p124, %s16, 1
      %p126 = scmp.lt.s32.totalorder %s17, 0
      %s127 = scalar_select %p126, %s17, 0
      %s128 = smul.addr %s125, 5
      %s129 = sadd.s32 %s127, %s128
      %s130 = smul.addr %s129, 4
      %s131 = scalar_lea.vmem %s1, %s130
      %p132 = scmp.lt.s32.totalorder %s16, 1
      %s133 = scalar_select %p132, %s16, 1
      %p134 = scmp.lt.s32.totalorder %s17, 0
      %s135 = scalar_select %p134, %s17, 0
      %s136 = smul.addr %s133, 7
      %s137 = sadd.s32 %s135, %s136
      %s138 = smul.addr %s137, 4
      %s139 = scalar_lea.vmem %s0, %s138
      %p140 = scmp.lt.s32.totalorder %s16, 1
      %s141 = scalar_select %p140, %s16, 1
      %p142 = scmp.lt.s32.totalorder %s17, 0
      %s143 = scalar_select %p142, %s17, 0
      %s144 = smul.addr %s141, 5
      %s145 = sadd.s32 %s143, %s144
      %s146 = smul.addr %s145, 4
      %s147 = scalar_lea.vmem %s1, %s146
      %v148 = vld [vmem:[%s139] sm:$0xf]
      %v149 = vld [vmem:[%s139 + $0x4] sm:$0xf]
      %v150 = vld [vmem:[%s139 + $0x8] sm:$0xf]
      %v151 = vld [vmem:[%s139 + $0xc] sm:$0xf]
      %v152 = vld [vmem:[%s139 + $0x10] sm:$0xf]
      %s153 = scalar_lea.vmem %s139, 4
      %v154 = vld [vmem:[%s153] sm:$0xf]
      %v155 = vld [vmem:[%s153 + $0x4] sm:$0xf]
      %v156 = vld [vmem:[%s153 + $0x8] sm:$0xf]
      %v157 = vld [vmem:[%s153 + $0xc] sm:$0xf]
      %v158 = vld [vmem:[%s153 + $0x10] sm:$0xf]
      %v159 = vmax.bf16 %v148, %v154
      %v160 = vmax.bf16 %v149, %v155
      %v161 = vmax.bf16 %v150, %v156
      %v162 = vmax.bf16 %v151, %v157
      %v163 = vmax.bf16 %v152, %v158
      %s164 = scalar_lea.vmem %s139, 8
      %v165 = vld [vmem:[%s164] sm:$0xf]
      %v166 = vld [vmem:[%s164 + $0x4] sm:$0xf]
      %v167 = vld [vmem:[%s164 + $0x8] sm:$0xf]
      %v168 = vld [vmem:[%s164 + $0xc] sm:$0xf]
      %v169 = vld [vmem:[%s164 + $0x10] sm:$0xf]
      %v170 = vmax.bf16 %v159, %v165
      %v171 = vmax.bf16 %v160, %v166
      %v172 = vmax.bf16 %v161, %v167
      %v173 = vmax.bf16 %v162, %v168
      %v174 = vmax.bf16 %v163, %v169
      %v176 = vshrl.u32 %v170, 16
      %v178 = vrot.slane %v176, 4
      %v179 = vshll.u32 %v170, 16
      %v181 = vrot.slane %v179, 5
      %v182 = vor.u32 %v178, %v181
      %v183 = vrot.slane %v182, 4
      %v185 = vshrl.u32 %v171, 16
      %v187 = vrot.slane %v185, 4
      %v188 = vshll.u32 %v171, 16
      %v190 = vrot.slane %v188, 5
      %v191 = vor.u32 %v187, %v190
      %v192 = vrot.slane %v191, 4
      %v194 = vshrl.u32 %v172, 16
      %v196 = vrot.slane %v194, 4
      %v197 = vshll.u32 %v172, 16
      %v199 = vrot.slane %v197, 5
      %v200 = vor.u32 %v196, %v199
      %v201 = vrot.slane %v200, 4
      %v203 = vshrl.u32 %v173, 16
      %v205 = vrot.slane %v203, 4
      %v206 = vshll.u32 %v173, 16
      %v208 = vrot.slane %v206, 5
      %v209 = vor.u32 %v205, %v208
      %v210 = vrot.slane %v209, 4
      %v212 = vshrl.u32 %v174, 16
      %v214 = vrot.slane %v212, 4
      %v215 = vshll.u32 %v174, 16
      %v217 = vrot.slane %v215, 5
      %v218 = vor.u32 %v214, %v217
      %v219 = vrot.slane %v218, 4
      %v225 = vmax.bf16 %v170, %v183
      %v226 = vmax.bf16 %v171, %v192
      %v227 = vmax.bf16 %v172, %v201
      %v228 = vmax.bf16 %v173, %v210
      %v229 = vmax.bf16 %v174, %v219
      %v235 = vrot.slane %v170, 5
      %v236 = vrot.slane %v235, 4
      %v237 = vrot.slane %v171, 5
      %v238 = vrot.slane %v237, 4
      %v239 = vrot.slane %v172, 5
      %v240 = vrot.slane %v239, 4
      %v241 = vrot.slane %v173, 5
      %v242 = vrot.slane %v241, 4
      %v243 = vrot.slane %v174, 5
      %v244 = vrot.slane %v243, 4
      %v250 = vmax.bf16 %v225, %v236
      %v251 = vmax.bf16 %v226, %v238
      %v252 = vmax.bf16 %v227, %v240
      %v253 = vmax.bf16 %v228, %v242
      %v254 = vmax.bf16 %v229, %v244
      %vm255 = vcmask 1042432
      %vm256 = vsmask.f32 2304
      %vm257 = vmand %vm255, %vm256
      %v258 = vld [vmem:[%s147] sm:$0x7]
      %v259 = vsel %vm257, %v250, %v258
      %260 = vst [vmem:[%s147] sm:$0x7] %v259
      %v261 = vld [vmem:[%s147 + $0x4] sm:$0x7]
      %v262 = vsel %vm257, %v251, %v261
      %263 = vst [vmem:[%s147 + $0x4] sm:$0x7] %v262
      %v264 = vld [vmem:[%s147 + $0x8] sm:$0x7]
      %v265 = vsel %vm257, %v252, %v264
      %266 = vst [vmem:[%s147 + $0x8] sm:$0x7] %v265
      %v267 = vld [vmem:[%s147 + $0xc] sm:$0x7]
      %v268 = vsel %vm257, %v253, %v267
      %269 = vst [vmem:[%s147 + $0xc] sm:$0x7] %v268
      %v270 = vld [vmem:[%s147 + $0x10] sm:$0x7]
      %v271 = vsel %vm257, %v254, %v270
      %272 = vst [vmem:[%s147 + $0x10] sm:$0x7] %v271
      %p273 = scmp.lt.s32.totalorder %s16, 1
      %s274 = scalar_select %p273, %s16, 1
      %p275 = scmp.lt.s32.totalorder %s17, 0
      %s276 = scalar_select %p275, %s17, 0
      %s277 = smul.addr %s274, 5
      %s278 = sadd.s32 %s276, %s277
      %s279 = smul.addr %s278, 4
      %s280 = scalar_lea.vmem %s1, %s279
      // Predicated region
      $region25: #{lightweight_feat_forward.26} parent=23 // pred_check
        %p281 = pneg %p72
      $region26: #{lightweight_feat_forward.26} parent=23 // pred_check_branch
        %283 = sbr.rel (%p281) target = $region28
      $region27: #{lightweight_feat_forward.26} parent=23 // pred_region
        _
      $region28: #{lightweight_feat_forward.26} parent=23 // pred_fallthru
        _
    $region24: #{lightweight_feat_forward.26} parent=5 // pred_fallthru
      _
    %p284 = scmp.le.s32.totalorder 2, %s7
    // Predicated region
    $region29: #{lightweight_feat_forward.26} parent=5 // pred_check
      %p285 = pneg %p284
    $region30: #{lightweight_feat_forward.26} parent=5 // pred_check_branch
      %287 = sbr.rel (%p285) target = $region32
    $region31: #{lightweight_feat_forward.26} parent=5 // pred_region
      %s288 = ssub.s32 %s7, 2
      // Predicated region
      $region33: #{lightweight_feat_forward.26} parent=31 // pred_check
        %p289 = pneg %p78
      $region34: #{lightweight_feat_forward.26} parent=31 // pred_check_branch
        %291 = sbr.rel (%p289) target = $region36
      $region35: #{lightweight_feat_forward.26} parent=31 // pred_region
        %p292 = scmp.lt.s32.totalorder %s18, 1
        %s293 = scalar_select %p292, %s18, 1
        %p294 = scmp.lt.s32.totalorder %s19, 0
        %s295 = scalar_select %p294, %s19, 0
        %s296 = smul.addr %s293, 5
        %s297 = sadd.s32 %s295, %s296
        %s298 = smul.addr %s297, 4
        %s299 = scalar_lea.vmem %s1, %s298
      $region36: #{lightweight_feat_forward.26} parent=31 // pred_fallthru
        _
    $region32: #{lightweight_feat_forward.26} parent=5 // pred_fallthru
      _
  $region6: #{lightweight_feat_forward.26} parent=0 // loop_footer
    %s11 = sadd.s32 1, %s7
  $region7: #{lightweight_feat_forward.26} parent=0 // loop_footer_branch
    %6 = sbr.rel target = $region3
  $region8: #{lightweight_feat_forward.26} parent=0 // loop_exit
    _

// kernel: lightweight_feat_forward.24
$region0: #{lightweight_feat_forward.24}
  #allocation0 [shape = 'u32[]', space=smem, size = 0x4, offset = 0x4, fixed_abs, tag = 'smem constant byte address 0x4 - core index']
  #allocation1 [shape = 'u32[144,128]{1,0:T(1,128)}', space=vmem, size = 0x12000, scoped, tag = 'internal scratch']
  %s0 = inlined_call_operand.vmem [shape: bf16[98,128], index: 0, kind: input, shape index: {}]
  %s1 = inlined_call_operand.vmem [shape: bf16[128,16], index: 1, kind: input, shape index: {}]
  %s2 = inlined_call_operand.vmem [shape: f32[1,16], index: 2, kind: input, shape index: {}]
  %s3 = inlined_call_operand.vmem [shape: bf16[98,16], index: 3, kind: output, shape index: {}]
  %s4 = sld [smem:[#allocation0]]
  $region22: #{lightweight_feat_forward.24} parent=0
    _
  %s6 = ssub.s32 1, %s4
  %s7 = scalar_select 0, %s6, %s4
  // Predicated region
  $region2: #{lightweight_feat_forward.24} parent=0 // pred_check
    _
  $region3: #{lightweight_feat_forward.24} parent=0 // pred_check_branch
    %9 = sbr.rel (0) target = $region5
  $region4: #{lightweight_feat_forward.24} parent=0 // pred_region
    _
  $region5: #{lightweight_feat_forward.24} parent=0 // pred_fallthru
    _
  // Predicated region
  $region6: #{lightweight_feat_forward.24} parent=0 // pred_check
    _
  $region7: #{lightweight_feat_forward.24} parent=0 // pred_check_branch
    %11 = sbr.rel (0) target = $region9
  $region8: #{lightweight_feat_forward.24} parent=0 // pred_region
    _
  $region9: #{lightweight_feat_forward.24} parent=0 // pred_fallthru
    _
  // Predicated region
  $region10: #{lightweight_feat_forward.24} parent=0 // pred_check
    _
  $region11: #{lightweight_feat_forward.24} parent=0 // pred_check_branch
    %13 = sbr.rel (0) target = $region13
  $region12: #{lightweight_feat_forward.24} parent=0 // pred_region
    _
  $region13: #{lightweight_feat_forward.24} parent=0 // pred_fallthru
    _
  %v15 = vld [vmem:[%s0] sm:$0xf]
  %v16 = vld [vmem:[%s0 + $0x4] sm:$0xf]
  %v17 = vld [vmem:[%s0 + $0x8] sm:$0xf]
  %v18 = vld [vmem:[%s0 + $0xc] sm:$0xf]
  %v19 = vld [vmem:[%s0 + $0x10] sm:$0xf]
  %v20 = vld [vmem:[%s0 + $0x14] sm:$0xf]
  %v21 = vld [vmem:[%s0 + $0x18] sm:$0xf]
  %v22 = vld [vmem:[%s0 + $0x1c] sm:$0xf]
  %v23 = vld [vmem:[%s0 + $0x20] sm:$0xf]
  %v24 = vld [vmem:[%s0 + $0x24] sm:$0xf]
  %v25 = vld [vmem:[%s0 + $0x28] sm:$0xf]
  %v26 = vld [vmem:[%s0 + $0x2c] sm:$0xf]
  %v27 = vld [vmem:[%s0 + $0x30] sm:$0x1]
  %v28 = vld [vmem:[%s1] sm:$0xf]
  %v29 = vld [vmem:[%s1 + $0x4] sm:$0xf]
  %v30 = vld [vmem:[%s1 + $0x8] sm:$0xf]
  %v31 = vld [vmem:[%s1 + $0xc] sm:$0xf]
  %v32 = vld [vmem:[%s1 + $0x10] sm:$0xf]
  %v33 = vld [vmem:[%s1 + $0x14] sm:$0xf]
  %v34 = vld [vmem:[%s1 + $0x18] sm:$0xf]
  %v35 = vld [vmem:[%s1 + $0x1c] sm:$0xf]
  %v36 = vld [vmem:[%s1 + $0x20] sm:$0xf]
  %v37 = vld [vmem:[%s1 + $0x24] sm:$0xf]
  %v38 = vld [vmem:[%s1 + $0x28] sm:$0xf]
  %v39 = vld [vmem:[%s1 + $0x2c] sm:$0xf]
  %v40 = vld [vmem:[%s1 + $0x30] sm:$0xf]
  %v41 = vld [vmem:[%s1 + $0x34] sm:$0xf]
  %v42 = vld [vmem:[%s1 + $0x38] sm:$0xf]
  %v43 = vld [vmem:[%s1 + $0x3c] sm:$0xf]
  %v44 = vld [vmem:[%s2] sm:$0x1]
  %v46 = vlaneseq
  %v47 = vshrl.u32 %v46, 7
  %v48 = vsub.s32 0, %v47
  %v49 = vrot.slane %v44, %v48
  %v64 = vunpack.c.l.b16 %v15
  %v65 = vunpack.c.l.b16 %v16
  %v66 = vunpack.c.l.b16 %v17
  %v67 = vunpack.c.l.b16 %v18
  %v68 = vunpack.c.l.b16 %v19
  %v69 = vunpack.c.l.b16 %v20
  %v70 = vunpack.c.l.b16 %v21
  %v71 = vunpack.c.l.b16 %v22
  %v72 = vunpack.c.l.b16 %v23
  %v73 = vunpack.c.l.b16 %v24
  %v74 = vunpack.c.l.b16 %v25
  %v75 = vunpack.c.l.b16 %v26
  %v76 = vunpack.c.l.b16 %v27
  %v77 = vpack.c.b16 %v65, %v64
  %v78 = vpack.c.b16 %v67, %v66
  %v79 = vpack.c.b16 %v69, %v68
  %v80 = vpack.c.b16 %v71, %v70
  %v81 = vpack.c.b16 %v73, %v72
  %v82 = vpack.c.b16 %v75, %v74
  %v83 = vpack.c.b16 %v76, %v76
  %v107 = vunpack.c.l.b16 %v28
  %v108 = vunpack.c.l.b16 %v29
  %v109 = vunpack.c.l.b16 %v30
  %v110 = vunpack.c.l.b16 %v31
  %v111 = vunpack.c.l.b16 %v32
  %v112 = vunpack.c.l.b16 %v33
  %v113 = vunpack.c.l.b16 %v34
  %v114 = vunpack.c.l.b16 %v35
  %v115 = vunpack.c.l.b16 %v36
  %v116 = vunpack.c.l.b16 %v37
  %v117 = vunpack.c.l.b16 %v38
  %v118 = vunpack.c.l.b16 %v39
  %v119 = vunpack.c.l.b16 %v40
  %v120 = vunpack.c.l.b16 %v41
  %v121 = vunpack.c.l.b16 %v42
  %v122 = vunpack.c.l.b16 %v43
  %v123 = vpack.c.b16 %v108, %v107
  %v124 = vpack.c.b16 %v110, %v109
  %v125 = vpack.c.b16 %v112, %v111
  %v126 = vpack.c.b16 %v114, %v113
  %v127 = vpack.c.b16 %v116, %v115
  %v128 = vpack.c.b16 %v118, %v117
  %v129 = vpack.c.b16 %v120, %v119
  %v130 = vpack.c.b16 %v122, %v121
  %139 = vmatprep.subr.bf16.mxu0 0
  %140 = vmatpush1.bf16.msra.mxu0 %v130
  %141 = vmatprep.subr.bf16.mxu0 0
  %142 = vmatpush1.bf16.msra.mxu0 %v129
  %143 = vmatprep.subr.bf16.mxu0 0
  %144 = vmatpush1.bf16.msra.mxu0 %v128
  %145 = vmatprep.subr.bf16.mxu0 0
  %146 = vmatpush1.bf16.msra.mxu0 %v127
  %147 = vmatprep.subr.bf16.mxu0 0
  %148 = vmatpush1.bf16.msra.mxu0 %v126
  %149 = vmatprep.subr.bf16.mxu0 0
  %150 = vmatpush1.bf16.msra.mxu0 %v125
  %151 = vmatprep.subr.bf16.mxu0 0
  %152 = vmatpush1.bf16.msra.mxu0 %v124
  %153 = vmatprep.subr.bf16.mxu0 0
  %154 = vmatpush1.bf16.msra.mxu0 %v123
  %155 = vmatprep.subr.bf16.mxu0 0
  %156 = vmatpush2.bf16.msra.mxu0 0
  %157 = vmatprep.subr.bf16.mxu0 0
  %158 = vmatpush2.bf16.msra.mxu0 0
  %159 = vmatprep.subr.bf16.mxu0 0
  %160 = vmatpush2.bf16.msra.mxu0 0
  %161 = vmatprep.subr.bf16.mxu0 0
  %162 = vmatpush2.bf16.msra.mxu0 0
  %163 = vmatprep.subr.bf16.mxu0 0
  %164 = vmatpush2.bf16.msra.mxu0 0
  %165 = vmatprep.subr.bf16.mxu0 0
  %166 = vmatpush2.bf16.msra.mxu0 0
  %167 = vmatprep.subr.bf16.mxu0 0
  %168 = vmatpush2.bf16.msra.mxu0 0
  %169 = vmatprep.subr.bf16.mxu0 0
  %170 = vmatpush2.bf16.msra.mxu0 0
  %171 = vmatprep.mubr.bf16.mxu0 0
  %172 = vmatmul.mubr.bf16.gmra.mxu0 %v77
  %v173 = vpop.f32.mrf.mxu0
  %v174 = vadd.f32 %v49, %v173
  %v175 = vpop.f32.mrf.mxu0
  %v176 = vpop.f32.mrf.mxu0
  %v177 = vadd.f32 %v49, %v176
  %v178 = vpop.f32.mrf.mxu0
  %179 = vmatprep.mubr.bf16.mxu0 0
  %180 = vmatmul.mubr.bf16.gmra.mxu0 %v78
  %v181 = vpop.f32.mrf.mxu0
  %v182 = vadd.f32 %v49, %v181
  %v183 = vpop.f32.mrf.mxu0
  %v184 = vpop.f32.mrf.mxu0
  %v185 = vadd.f32 %v49, %v184
  %v186 = vpop.f32.mrf.mxu0
  %187 = vmatprep.mubr.bf16.mxu0 0
  %188 = vmatmul.mubr.bf16.gmra.mxu0 %v79
  %v189 = vpop.f32.mrf.mxu0
  %v190 = vadd.f32 %v49, %v189
  %v191 = vpop.f32.mrf.mxu0
  %v192 = vpop.f32.mrf.mxu0
  %v193 = vadd.f32 %v49, %v192
  %v194 = vpop.f32.mrf.mxu0
  %195 = vmatprep.mubr.bf16.mxu0 0
  %196 = vmatmul.mubr.bf16.gmra.mxu0 %v80
  %v197 = vpop.f32.mrf.mxu0
  %v198 = vadd.f32 %v49, %v197
  %v199 = vpop.f32.mrf.mxu0
  %v200 = vpop.f32.mrf.mxu0
  %v201 = vadd.f32 %v49, %v200
  %v202 = vpop.f32.mrf.mxu0
  %203 = vmatprep.mubr.bf16.mxu0 0
  %204 = vmatmul.mubr.bf16.gmra.mxu0 %v81
  %v205 = vpop.f32.mrf.mxu0
  %v206 = vadd.f32 %v49, %v205
  %v207 = vpop.f32.mrf.mxu0
  %v208 = vpop.f32.mrf.mxu0
  %v209 = vadd.f32 %v49, %v208
  %v210 = vpop.f32.mrf.mxu0
  %211 = vmatprep.mubr.bf16.mxu0 0
  %212 = vmatmul.mubr.bf16.gmra.mxu0 %v82
  %v213 = vpop.f32.mrf.mxu0
  %v214 = vadd.f32 %v49, %v213
  %v215 = vpop.f32.mrf.mxu0
  %v216 = vpop.f32.mrf.mxu0
  %v217 = vadd.f32 %v49, %v216
  %v218 = vpop.f32.mrf.mxu0
  %219 = vmatprep.mubr.bf16.mxu0 0
  %220 = vmatmul.mubr.bf16.gmra.mxu0 %v83
  %v221 = vpop.f32.mrf.mxu0
  %v222 = vadd.f32 %v49, %v221
  %v223 = vpop.f32.mrf.mxu0
  %v224 = vpop.f32.mrf.mxu0
  %v225 = vpop.f32.mrf.mxu0
  %226 = vdwg.mxu0
  %v227 = vmax.f32 %v174, 0.0
  %v228 = vmax.f32 %v177, 0.0
  %v229 = vmax.f32 %v182, 0.0
  %v230 = vmax.f32 %v185, 0.0
  %v231 = vmax.f32 %v190, 0.0
  %v232 = vmax.f32 %v193, 0.0
  %v233 = vmax.f32 %v198, 0.0
  %v234 = vmax.f32 %v201, 0.0
  %v235 = vmax.f32 %v206, 0.0
  %v236 = vmax.f32 %v209, 0.0
  %v237 = vmax.f32 %v214, 0.0
  %v238 = vmax.f32 %v217, 0.0
  %v239 = vmax.f32 %v222, 0.0
  %v240 = vpack.c.bf16 %v228, %v227
  %v241 = vpack.c.bf16 %v230, %v229
  %v242 = vpack.c.bf16 %v232, %v231
  %v243 = vpack.c.bf16 %v234, %v233
  %v244 = vpack.c.bf16 %v236, %v235
  %v245 = vpack.c.bf16 %v238, %v237
  %v246 = vpack.c.bf16 %v239, %v239
  %v254 = vunpack.c.l.b16 %v240
  %v255 = vunpack.c.h.b16 %v240
  %v256 = vunpack.c.l.b16 %v241
  %v257 = vunpack.c.h.b16 %v241
  %v258 = vunpack.c.l.b16 %v242
  %v259 = vunpack.c.h.b16 %v242
  %v260 = vunpack.c.l.b16 %v243
  %v261 = vunpack.c.h.b16 %v243
  %v262 = vunpack.c.l.b16 %v244
  %v263 = vunpack.c.h.b16 %v244
  %v264 = vunpack.c.l.b16 %v245
  %v265 = vunpack.c.h.b16 %v245
  %v266 = vunpack.c.l.b16 %v246
  %v267 = vpack.c.b16 %v254, %v254
  %v268 = vpack.c.b16 %v255, %v255
  %v269 = vpack.c.b16 %v256, %v256
  %v270 = vpack.c.b16 %v257, %v257
  %v271 = vpack.c.b16 %v258, %v258
  %v272 = vpack.c.b16 %v259, %v259
  %v273 = vpack.c.b16 %v260, %v260
  %v274 = vpack.c.b16 %v261, %v261
  %v275 = vpack.c.b16 %v262, %v262
  %v276 = vpack.c.b16 %v263, %v263
  %v277 = vpack.c.b16 %v264, %v264
  %v278 = vpack.c.b16 %v265, %v265
  %v279 = vpack.c.b16 %v266, %v266
  %vm293 = vcmask 125952
  %294 = vst.msk [vmem:[%s3] sm:$0xf] %vm293, %v267
  %295 = vst.msk [vmem:[%s3 + $0x4] sm:$0xf] %vm293, %v268
  %296 = vst.msk [vmem:[%s3 + $0x8] sm:$0xf] %vm293, %v269
  %297 = vst.msk [vmem:[%s3 + $0xc] sm:$0xf] %vm293, %v270
  %298 = vst.msk [vmem:[%s3 + $0x10] sm:$0xf] %vm293, %v271
  %299 = vst.msk [vmem:[%s3 + $0x14] sm:$0xf] %vm293, %v272
  %300 = vst.msk [vmem:[%s3 + $0x18] sm:$0xf] %vm293, %v273
  %301 = vst.msk [vmem:[%s3 + $0x1c] sm:$0xf] %vm293, %v274
  %302 = vst.msk [vmem:[%s3 + $0x20] sm:$0xf] %vm293, %v275
  %303 = vst.msk [vmem:[%s3 + $0x24] sm:$0xf] %vm293, %v276
  %304 = vst.msk [vmem:[%s3 + $0x28] sm:$0xf] %vm293, %v277
  %305 = vst.msk [vmem:[%s3 + $0x2c] sm:$0xf] %vm293, %v278
  %vm306 = vcmask 122880
  %307 = vst.msk [vmem:[%s3 + $0x30] sm:$0x1] %vm306, %v279
  // Predicated region
  $region14: #{lightweight_feat_forward.24} parent=0 // pred_check
    _
  $region15: #{lightweight_feat_forward.24} parent=0 // pred_check_branch
    %309 = sbr.rel (0) target = $region17
  $region16: #{lightweight_feat_forward.24} parent=0 // pred_region
    _
  $region17: #{lightweight_feat_forward.24} parent=0 // pred_fallthru
    _
  // Predicated region
  $region18: #{lightweight_feat_forward.24} parent=0 // pred_check
    _
  $region19: #{lightweight_feat_forward.24} parent=0 // pred_check_branch
    %311 = sbr.rel (0) target = $region21
  $region20: #{lightweight_feat_forward.24} parent=0 // pred_region
    _
  $region21: #{lightweight_feat_forward.24} parent=0 // pred_fallthru
    _

// kernel: lightweight_feat_forward.27
$region0: #{lightweight_feat_forward.27}
  #allocation0 [shape = 'u32[]', space=smem, size = 0x4, offset = 0x4, fixed_abs, tag = 'smem constant byte address 0x4 - core index']
  #allocation1 [shape = 'u32[144,128]{1,0:T(1,128)}', space=vmem, size = 0x12000, scoped, tag = 'internal scratch']
  %s0 = inlined_call_operand.vmem [shape: bf16[18,128], index: 0, kind: input, shape index: {}]
  %s1 = inlined_call_operand.vmem [shape: bf16[128,32], index: 1, kind: input, shape index: {}]
  %s2 = inlined_call_operand.vmem [shape: f32[1,32], index: 2, kind: input, shape index: {}]
  %s3 = inlined_call_operand.vmem [shape: bf16[18,32], index: 3, kind: output, shape index: {}]
  %s4 = sld [smem:[#allocation0]]
  $region22: #{lightweight_feat_forward.27} parent=0
    _
  %s6 = ssub.s32 1, %s4
  %s7 = scalar_select 0, %s6, %s4
  // Predicated region
  $region2: #{lightweight_feat_forward.27} parent=0 // pred_check
    _
  $region3: #{lightweight_feat_forward.27} parent=0 // pred_check_branch
    %9 = sbr.rel (0) target = $region5
  $region4: #{lightweight_feat_forward.27} parent=0 // pred_region
    _
  $region5: #{lightweight_feat_forward.27} parent=0 // pred_fallthru
    _
  // Predicated region
  $region6: #{lightweight_feat_forward.27} parent=0 // pred_check
    _
  $region7: #{lightweight_feat_forward.27} parent=0 // pred_check_branch
    %11 = sbr.rel (0) target = $region9
  $region8: #{lightweight_feat_forward.27} parent=0 // pred_region
    _
  $region9: #{lightweight_feat_forward.27} parent=0 // pred_fallthru
    _
  // Predicated region
  $region10: #{lightweight_feat_forward.27} parent=0 // pred_check
    _
  $region11: #{lightweight_feat_forward.27} parent=0 // pred_check_branch
    %13 = sbr.rel (0) target = $region13
  $region12: #{lightweight_feat_forward.27} parent=0 // pred_region
    _
  $region13: #{lightweight_feat_forward.27} parent=0 // pred_fallthru
    _
  %v15 = vld [vmem:[%s0] sm:$0xf]
  %v16 = vld [vmem:[%s0 + $0x4] sm:$0xf]
  %v17 = vld [vmem:[%s0 + $0x8] sm:$0x1]
  %v18 = vld [vmem:[%s1] sm:$0xf]
  %v19 = vld [vmem:[%s1 + $0x4] sm:$0xf]
  %v20 = vld [vmem:[%s1 + $0x8] sm:$0xf]
  %v21 = vld [vmem:[%s1 + $0xc] sm:$0xf]
  %v22 = vld [vmem:[%s1 + $0x10] sm:$0xf]
  %v23 = vld [vmem:[%s1 + $0x14] sm:$0xf]
  %v24 = vld [vmem:[%s1 + $0x18] sm:$0xf]
  %v25 = vld [vmem:[%s1 + $0x1c] sm:$0xf]
  %v26 = vld [vmem:[%s1 + $0x20] sm:$0xf]
  %v27 = vld [vmem:[%s1 + $0x24] sm:$0xf]
  %v28 = vld [vmem:[%s1 + $0x28] sm:$0xf]
  %v29 = vld [vmem:[%s1 + $0x2c] sm:$0xf]
  %v30 = vld [vmem:[%s1 + $0x30] sm:$0xf]
  %v31 = vld [vmem:[%s1 + $0x34] sm:$0xf]
  %v32 = vld [vmem:[%s1 + $0x38] sm:$0xf]
  %v33 = vld [vmem:[%s1 + $0x3c] sm:$0xf]
  %v34 = vld [vmem:[%s2] sm:$0x1]
  %v36 = vlaneseq
  %v37 = vshrl.u32 %v36, 7
  %v38 = vsub.s32 0, %v37
  %v39 = vrot.slane %v34, %v38
  %v44 = vunpack.c.l.b16 %v15
  %v45 = vunpack.c.l.b16 %v16
  %v46 = vunpack.c.l.b16 %v17
  %v47 = vpack.c.b16 %v45, %v44
  %v48 = vpack.c.b16 %v46, %v46
  %v67 = vunpack.c.l.b16 %v18
  %v68 = vunpack.c.l.b16 %v19
  %v69 = vunpack.c.l.b16 %v20
  %v70 = vunpack.c.l.b16 %v21
  %v71 = vunpack.c.l.b16 %v22
  %v72 = vunpack.c.l.b16 %v23
  %v73 = vunpack.c.l.b16 %v24
  %v74 = vunpack.c.l.b16 %v25
  %v75 = vunpack.c.l.b16 %v26
  %v76 = vunpack.c.l.b16 %v27
  %v77 = vunpack.c.l.b16 %v28
  %v78 = vunpack.c.l.b16 %v29
  %v79 = vunpack.c.l.b16 %v30
  %v80 = vunpack.c.l.b16 %v31
  %v81 = vunpack.c.l.b16 %v32
  %v82 = vunpack.c.l.b16 %v33
  %v83 = vpack.c.b16 %v68, %v67
  %v84 = vpack.c.b16 %v70, %v69
  %v85 = vpack.c.b16 %v72, %v71
  %v86 = vpack.c.b16 %v74, %v73
  %v87 = vpack.c.b16 %v76, %v75
  %v88 = vpack.c.b16 %v78, %v77
  %v89 = vpack.c.b16 %v80, %v79
  %v90 = vpack.c.b16 %v82, %v81
  %99 = vmatprep.subr.bf16.mxu0 0
  %100 = vmatpush1.bf16.msra.mxu0 %v90
  %101 = vmatprep.subr.bf16.mxu0 0
  %102 = vmatpush1.bf16.msra.mxu0 %v89
  %103 = vmatprep.subr.bf16.mxu0 0
  %104 = vmatpush1.bf16.msra.mxu0 %v88
  %105 = vmatprep.subr.bf16.mxu0 0
  %106 = vmatpush1.bf16.msra.mxu0 %v87
  %107 = vmatprep.subr.bf16.mxu0 0
  %108 = vmatpush1.bf16.msra.mxu0 %v86
  %109 = vmatprep.subr.bf16.mxu0 0
  %110 = vmatpush1.bf16.msra.mxu0 %v85
  %111 = vmatprep.subr.bf16.mxu0 0
  %112 = vmatpush1.bf16.msra.mxu0 %v84
  %113 = vmatprep.subr.bf16.mxu0 0
  %114 = vmatpush1.bf16.msra.mxu0 %v83
  %115 = vmatprep.subr.bf16.mxu0 0
  %116 = vmatpush2.bf16.msra.mxu0 0
  %117 = vmatprep.subr.bf16.mxu0 0
  %118 = vmatpush2.bf16.msra.mxu0 0
  %119 = vmatprep.subr.bf16.mxu0 0
  %120 = vmatpush2.bf16.msra.mxu0 0
  %121 = vmatprep.subr.bf16.mxu0 0
  %122 = vmatpush2.bf16.msra.mxu0 0
  %123 = vmatprep.subr.bf16.mxu0 0
  %124 = vmatpush2.bf16.msra.mxu0 0
  %125 = vmatprep.subr.bf16.mxu0 0
  %126 = vmatpush2.bf16.msra.mxu0 0
  %127 = vmatprep.subr.bf16.mxu0 0
  %128 = vmatpush2.bf16.msra.mxu0 0
  %129 = vmatprep.subr.bf16.mxu0 0
  %130 = vmatpush2.bf16.msra.mxu0 0
  %131 = vmatprep.mubr.bf16.mxu0 0
  %132 = vmatmul.mubr.bf16.gmra.mxu0 %v47
  %v133 = vpop.f32.mrf.mxu0
  %v134 = vadd.f32 %v39, %v133
  %v135 = vpop.f32.mrf.mxu0
  %v136 = vpop.f32.mrf.mxu0
  %v137 = vadd.f32 %v39, %v136
  %v138 = vpop.f32.mrf.mxu0
  %139 = vmatprep.mubr.bf16.mxu0 0
  %140 = vmatmul.mubr.bf16.gmra.mxu0 %v48
  %v141 = vpop.f32.mrf.mxu0
  %v142 = vadd.f32 %v39, %v141
  %v143 = vpop.f32.mrf.mxu0
  %v144 = vpop.f32.mrf.mxu0
  %v145 = vpop.f32.mrf.mxu0
  %146 = vdwg.mxu0
  %v147 = vmax.f32 %v134, 0.0
  %v148 = vmax.f32 %v137, 0.0
  %v149 = vmax.f32 %v142, 0.0
  %v150 = vpack.c.bf16 %v148, %v147
  %v151 = vpack.c.bf16 %v149, %v149
  %v154 = vunpack.c.l.b16 %v150
  %v155 = vunpack.c.h.b16 %v150
  %v156 = vunpack.c.l.b16 %v151
  %v157 = vpack.c.b16 %v154, %v154
  %v158 = vpack.c.b16 %v155, %v155
  %v159 = vpack.c.b16 %v156, %v156
  %vm163 = vcmask 257024
  %164 = vst.msk [vmem:[%s3] sm:$0xf] %vm163, %v157
  %165 = vst.msk [vmem:[%s3 + $0x4] sm:$0xf] %vm163, %v158
  %vm166 = vcmask 253952
  %167 = vst.msk [vmem:[%s3 + $0x8] sm:$0x1] %vm166, %v159
  // Predicated region
  $region14: #{lightweight_feat_forward.27} parent=0 // pred_check
    _
  $region15: #{lightweight_feat_forward.27} parent=0 // pred_check_branch
    %169 = sbr.rel (0) target = $region17
  $region16: #{lightweight_feat_forward.27} parent=0 // pred_region
    _
  $region17: #{lightweight_feat_forward.27} parent=0 // pred_fallthru
    _
  // Predicated region
  $region18: #{lightweight_feat_forward.27} parent=0 // pred_check
    _
  $region19: #{lightweight_feat_forward.27} parent=0 // pred_check_branch
    %171 = sbr.rel (0) target = $region21
  $region20: #{lightweight_feat_forward.27} parent=0 // pred_region
    _
  $region21: #{lightweight_feat_forward.27} parent=0 // pred_fallthru
    _

// kernel: lightweight_feat_forward.23
$region0: #{lightweight_feat_forward.23}
  #allocation0 [shape = 'u32[]', space=smem, size = 0x4, offset = 0x4, fixed_abs, tag = 'smem constant byte address 0x4 - core index']
  #allocation1 [shape = 'u32[144,128]{1,0:T(1,128)}', space=vmem, size = 0x12000, scoped, tag = 'internal scratch']
  %s0 = inlined_call_operand.vmem [shape: bf16[2,89,16], index: 0, kind: input, shape index: {}]
  %s1 = inlined_call_operand.vmem [shape: bf16[16,64], index: 1, kind: input, shape index: {}]
  %s2 = inlined_call_operand.vmem [shape: bf16[9,16,64], index: 2, kind: input, shape index: {}]
  %s3 = inlined_call_operand.vmem [shape: f32[1,64], index: 3, kind: input, shape index: {}]
  %s4 = inlined_call_operand.vmem [shape: f32[1,64], index: 4, kind: input, shape index: {}]
  %s5 = inlined_call_operand.vmem [shape: bf16[2,63,128], index: 5, kind: output, shape index: {}]
  %s6 = sld [smem:[#allocation0]]
  $region53: #{lightweight_feat_forward.23} parent=0
    _
  %s8 = ssub.s32 1, %s6
  %s9 = scalar_select 0, %s8, %s6
  loop: start=0, step=1, limit=4
  $region2: #{lightweight_feat_forward.23} parent=0 // loop_pre_header
    _
  $region3: #{lightweight_feat_forward.23} parent=0 // loop_header
    %s11 = sphi 0, %s15
    %p12 = scmp.ge.s32.totalorder %s11, 4
    %s21 = sphi 0, %s23
    %s24 = sphi 0, %s21
    %s25 = sphi 0, %s24
    %s41 = sphi 0, %s25
    %s45 = sphi 0, %s45
    %s47 = sphi 0, %s45
    %s48 = sphi 0, %s47
    %s62 = sphi 0, %s48
    %s66 = sphi 0, %s66
    %s68 = sphi 0, %s66
    %s69 = sphi 0, %s68
    %s83 = sphi 0, %s69
    %s87 = sphi 0, %s87
    %s89 = sphi 0, %s87
    %s90 = sphi 0, %s89
    %s104 = sphi 0, %s90
    %s108 = sphi 0, %s108
    %s110 = sphi 0, %s108
    %s111 = sphi 0, %s110
    %s125 = sphi 0, %s111
    %s131 = sphi 0, %s133
    %s134 = sphi 0, %s131
    %s135 = sphi 0, %s134
    %s151 = sphi 0, %s135
  $region4: #{lightweight_feat_forward.23} parent=0 // loop_header_branch
    %14 = sbr.rel (%p12) target = $region8
  $region5: #{lightweight_feat_forward.23} parent=0 // loop_body
    %s16 = ssub.s32 %s11, 1
    %s17 = ssub.s32 %s11, 2
    %s18 = sadd.s32 %s11, 1
    %s19 = ssub.s32 %s11, %s18
    %p20 = scmp.eq.s32.totalorder %s19, 0
    %s22 = sadd.s32 %s21, 1
    %s23 = scalar_select %p20, %s21, %s22
    %p26 = pneg %p20
    %p27 = scmp.eq.s32.totalorder %s11, 1
    %p28 = por %p26, %p27
    %p29 = scmp.ne.s32.totalorder %s21, %s24
    %p30 = scmp.eq.s32.totalorder %s11, 0
    %p31 = por %p29, %p30
    %p32 = scmp.ne.s32.totalorder %s21, %s24
    %p33 = scmp.eq.s32.totalorder %s16, 1
    %p34 = por %p32, %p33
    %p35 = scmp.ne.s32.totalorder %s24, %s25
    %p36 = scmp.eq.s32.totalorder %s16, 0
    %p37 = por %p35, %p36
    %p38 = scmp.ne.s32.totalorder %s24, %s25
    %p39 = scmp.eq.s32.totalorder %s17, 1
    %p40 = por %p38, %p39
    %p42 = scmp.ne.s32.totalorder %s25, %s41
    %p43 = scmp.eq.s32.totalorder %s17, 0
    %p44 = por %p42, %p43
    %s46 = sadd.s32 %s45, 1
    %p49 = scmp.eq.s32.totalorder %s11, 1
    %p50 = scmp.ne.s32.totalorder %s45, %s47
    %p51 = scmp.eq.s32.totalorder %s11, 0
    %p52 = por %p50, %p51
    %p53 = scmp.ne.s32.totalorder %s45, %s47
    %p54 = scmp.eq.s32.totalorder %s16, 1
    %p55 = por %p53, %p54
    %p56 = scmp.ne.s32.totalorder %s47, %s48
    %p57 = scmp.eq.s32.totalorder %s16, 0
    %p58 = por %p56, %p57
    %p59 = scmp.ne.s32.totalorder %s47, %s48
    %p60 = scmp.eq.s32.totalorder %s17, 1
    %p61 = por %p59, %p60
    %p63 = scmp.ne.s32.totalorder %s48, %s62
    %p64 = scmp.eq.s32.totalorder %s17, 0
    %p65 = por %p63, %p64
    %s67 = sadd.s32 %s66, 1
    %p70 = scmp.eq.s32.totalorder %s11, 1
    %p71 = scmp.ne.s32.totalorder %s66, %s68
    %p72 = scmp.eq.s32.totalorder %s11, 0
    %p73 = por %p71, %p72
    %p74 = scmp.ne.s32.totalorder %s66, %s68
    %p75 = scmp.eq.s32.totalorder %s16, 1
    %p76 = por %p74, %p75
    %p77 = scmp.ne.s32.totalorder %s68, %s69
    %p78 = scmp.eq.s32.totalorder %s16, 0
    %p79 = por %p77, %p78
    %p80 = scmp.ne.s32.totalorder %s68, %s69
    %p81 = scmp.eq.s32.totalorder %s17, 1
    %p82 = por %p80, %p81
    %p84 = scmp.ne.s32.totalorder %s69, %s83
    %p85 = scmp.eq.s32.totalorder %s17, 0
    %p86 = por %p84, %p85
    %s88 = sadd.s32 %s87, 1
    %p91 = scmp.eq.s32.totalorder %s11, 1
    %p92 = scmp.ne.s32.totalorder %s87, %s89
    %p93 = scmp.eq.s32.totalorder %s11, 0
    %p94 = por %p92, %p93
    %p95 = scmp.ne.s32.totalorder %s87, %s89
    %p96 = scmp.eq.s32.totalorder %s16, 1
    %p97 = por %p95, %p96
    %p98 = scmp.ne.s32.totalorder %s89, %s90
    %p99 = scmp.eq.s32.totalorder %s16, 0
    %p100 = por %p98, %p99
    %p101 = scmp.ne.s32.totalorder %s89, %s90
    %p102 = scmp.eq.s32.totalorder %s17, 1
    %p103 = por %p101, %p102
    %p105 = scmp.ne.s32.totalorder %s90, %s104
    %p106 = scmp.eq.s32.totalorder %s17, 0
    %p107 = por %p105, %p106
    %s109 = sadd.s32 %s108, 1
    %p112 = scmp.eq.s32.totalorder %s11, 1
    %p113 = scmp.ne.s32.totalorder %s108, %s110
    %p114 = scmp.eq.s32.totalorder %s11, 0
    %p115 = por %p113, %p114
    %p116 = scmp.ne.s32.totalorder %s108, %s110
    %p117 = scmp.eq.s32.totalorder %s16, 1
    %p118 = por %p116, %p117
    %p119 = scmp.ne.s32.totalorder %s110, %s111
    %p120 = scmp.eq.s32.totalorder %s16, 0
    %p121 = por %p119, %p120
    %p122 = scmp.ne.s32.totalorder %s110, %s111
    %p123 = scmp.eq.s32.totalorder %s17, 1
    %p124 = por %p122, %p123
    %p126 = scmp.ne.s32.totalorder %s111, %s125
    %p127 = scmp.eq.s32.totalorder %s17, 0
    %p128 = por %p126, %p127
    %s129 = ssub.s32 %s11, %s18
    %p130 = scmp.eq.s32.totalorder %s129, 0
    %s132 = sadd.s32 %s131, 1
    %s133 = scalar_select %p130, %s131, %s132
    %p136 = pneg %p130
    %p137 = scmp.eq.s32.totalorder %s11, 1
    %p138 = por %p136, %p137
    %p139 = scmp.ne.s32.totalorder %s131, %s134
    %p140 = scmp.eq.s32.totalorder %s11, 0
    %p141 = por %p139, %p140
    %p142 = scmp.ne.s32.totalorder %s131, %s134
    %p143 = scmp.eq.s32.totalorder %s16, 1
    %p144 = por %p142, %p143
    %p145 = scmp.ne.s32.totalorder %s134, %s135
    %p146 = scmp.eq.s32.totalorder %s16, 0
    %p147 = por %p145, %p146
    %p148 = scmp.ne.s32.totalorder %s134, %s135
    %p149 = scmp.eq.s32.totalorder %s17, 1
    %p150 = por %p148, %p149
    %p152 = scmp.ne.s32.totalorder %s135, %s151
    %p153 = scmp.eq.s32.totalorder %s17, 0
    %p154 = por %p152, %p153
    %p155 = scmp.le.s32.totalorder 1, %s11
    %p156 = scmp.lt.s32.totalorder %s11, 3
    %p157 = pnand %p155, %p156
    %p158 = pneg %p157
    // Predicated region
    $region9: #{lightweight_feat_forward.23} parent=5 // pred_check
      _
    $region10: #{lightweight_feat_forward.23} parent=5 // pred_check_branch
      %160 = sbr.rel (%p157) target = $region12
    $region11: #{lightweight_feat_forward.23} parent=5 // pred_region
      %s161 = ssub.s32 %s11, 1
      // Predicated region
      $region13: #{lightweight_feat_forward.23} parent=11 // pred_check
        %p162 = pneg %p58
      $region14: #{lightweight_feat_forward.23} parent=11 // pred_check_branch
        %164 = sbr.rel (%p162) target = $region16
      $region15: #{lightweight_feat_forward.23} parent=11 // pred_region
        _
      $region16: #{lightweight_feat_forward.23} parent=11 // pred_fallthru
        _
      // Predicated region
      $region17: #{lightweight_feat_forward.23} parent=11 // pred_check
        %p165 = pneg %p79
      $region18: #{lightweight_feat_forward.23} parent=11 // pred_check_branch
        %167 = sbr.rel (%p165) target = $region20
      $region19: #{lightweight_feat_forward.23} parent=11 // pred_region
        _
      $region20: #{lightweight_feat_forward.23} parent=11 // pred_fallthru
        _
      // Predicated region
      $region21: #{lightweight_feat_forward.23} parent=11 // pred_check
        %p168 = pneg %p100
      $region22: #{lightweight_feat_forward.23} parent=11 // pred_check_branch
        %170 = sbr.rel (%p168) target = $region24
      $region23: #{lightweight_feat_forward.23} parent=11 // pred_region
        _
      $region24: #{lightweight_feat_forward.23} parent=11 // pred_fallthru
        _
      // Predicated region
      $region25: #{lightweight_feat_forward.23} parent=11 // pred_check
        %p171 = pneg %p121
      $region26: #{lightweight_feat_forward.23} parent=11 // pred_check_branch
        %173 = sbr.rel (%p171) target = $region28
      $region27: #{lightweight_feat_forward.23} parent=11 // pred_region
        _
      $region28: #{lightweight_feat_forward.23} parent=11 // pred_fallthru
        _
    $region12: #{lightweight_feat_forward.23} parent=5 // pred_fallthru
      _
    %p174 = scmp.lt.s32.totalorder %s11, 2
    // Predicated region
    $region29: #{lightweight_feat_forward.23} parent=5 // pred_check
      %p175 = pneg %p174
    $region30: #{lightweight_feat_forward.23} parent=5 // pred_check_branch
      %177 = sbr.rel (%p175) target = $region32
    $region31: #{lightweight_feat_forward.23} parent=5 // pred_region
      // Predicated region
      $region33: #{lightweight_feat_forward.23} parent=31 // pred_check
        %p178 = pneg %p31
      $region34: #{lightweight_feat_forward.23} parent=31 // pred_check_branch
        %180 = sbr.rel (%p178) target = $region36
      $region35: #{lightweight_feat_forward.23} parent=31 // pred_region
        %p181 = scmp.lt.s32.totalorder %s11, 1
        %s182 = scalar_select %p181, %s11, 1
        %s183 = smul.addr %s182, 12
        %s184 = smul.addr %s183, 4
        %s185 = scalar_lea.vmem %s0, %s184
      $region36: #{lightweight_feat_forward.23} parent=31 // pred_fallthru
        _
    $region32: #{lightweight_feat_forward.23} parent=5 // pred_fallthru
      _
    %p186 = scmp.le.s32.totalorder 1, %s11
    %p187 = scmp.lt.s32.totalorder %s11, 3
    %p188 = pnand %p186, %p187
    %p189 = pneg %p188
    // Predicated region
    $region37: #{lightweight_feat_forward.23} parent=5 // pred_check
      _
    $region38: #{lightweight_feat_forward.23} parent=5 // pred_check_branch
      %191 = sbr.rel (%p188) target = $region40
    $region39: #{lightweight_feat_forward.23} parent=5 // pred_region
      %s192 = ssub.s32 %s11, 1
      %p193 = scmp.lt.s32.totalorder %s16, 1
      %s194 = scalar_select %p193, %s16, 1
      %s195 = smul.addr %s194, 12
      %s196 = smul.addr %s195, 4
      %s197 = scalar_lea.vmem %s0, %s196
      %p198 = pneg %p37
      %p199 = pneg %p34
      %p200 = pneg %p58
      %p201 = pneg %p55
      %p202 = pneg %p79
      %p203 = pneg %p76
      %p204 = pneg %p100
      %p205 = pneg %p97
      %p206 = pneg %p121
      %p207 = pneg %p118
      %p208 = pneg %p147
      %p209 = pneg %p144
      %p210 = scmp.lt.s32.totalorder %s16, 1
      %s211 = scalar_select %p210, %s16, 1
      %s212 = smul.addr %s211, 8
      %s213 = smul.addr %s212, 4
      %s214 = scalar_lea.vmem %s5, %s213
      %p215 = scmp.lt.s32.totalorder %s16, 1
      %s216 = scalar_select %p215, %s16, 1
      %s217 = smul.addr %s216, 12
      %s218 = smul.addr %s217, 4
      %s219 = scalar_lea.vmem %s0, %s218
      %p220 = scmp.lt.s32.totalorder %s16, 1
      %s221 = scalar_select %p220, %s16, 1
      %s222 = smul.addr %s221, 8
      %s223 = smul.addr %s222, 4
      %s224 = scalar_lea.vmem %s5, %s223
      %v226 = vld [vmem:[%s219 + $0x4] sm:$0xe]
      %v227 = vld [vmem:[%s219 + $0x8] sm:$0xf]
      %v228 = vld [vmem:[%s219 + $0xc] sm:$0xf]
      %v229 = vld [vmem:[%s219 + $0x10] sm:$0xf]
      %v230 = vld [vmem:[%s219 + $0x14] sm:$0xf]
      %v231 = vld [vmem:[%s219 + $0x18] sm:$0xf]
      %v232 = vld [vmem:[%s219 + $0x1c] sm:$0xf]
      %v233 = vld [vmem:[%s219 + $0x20] sm:$0xf]
      %v234 = vld [vmem:[%s219 + $0x24] sm:$0x1]
      %v235 = vld [vmem:[%s1] sm:$0xf]
      %v236 = vld [vmem:[%s1 + $0x4] sm:$0xf]
      %v237 = vld [vmem:[%s3] sm:$0x1]
      %v239 = vlaneseq
      %v240 = vshrl.u32 %v239, 7
      %v241 = vsub.s32 0, %v240
      %v242 = vrot.slane %v237, %v241
      %v253 = vunpack.c.l.b16 %v226
      %v254 = vunpack.c.l.b16 %v227
      %v255 = vunpack.c.l.b16 %v228
      %v256 = vunpack.c.l.b16 %v229
      %v257 = vunpack.c.l.b16 %v230
      %v258 = vunpack.c.l.b16 %v231
      %v259 = vunpack.c.l.b16 %v232
      %v260 = vunpack.c.l.b16 %v233
      %v261 = vunpack.c.l.b16 %v234
      %v262 = vpack.c.b16 %v254, %v253
      %v263 = vpack.c.b16 %v256, %v255
      %v264 = vpack.c.b16 %v258, %v257
      %v265 = vpack.c.b16 %v260, %v259
      %v266 = vpack.c.b16 %v261, %v261
      %vm267 = vcmask 1046528
      %v268 = vrot.slane %v262, 1
      %v269 = vrot.slane %v263, 1
      %v270 = vsel %vm267, %v268, %v269
      %v271 = vrot.slane %v264, 1
      %v272 = vsel %vm267, %v269, %v271
      %v273 = vrot.slane %v265, 1
      %v274 = vsel %vm267, %v271, %v273
      %v275 = vrot.slane %v266, 1
      %v276 = vsel %vm267, %v273, %v275
      %v279 = vunpack.c.l.b16 %v235
      %v280 = vunpack.c.l.b16 %v236
      %v281 = vpack.c.b16 %v280, %v279
      %vm283 = vcmask 130048
      %v285 = vsel %vm283, %v270, 0
      %v288 = vsel %vm283, %v272, 0
      %v291 = vsel %vm283, %v274, 0
      %v294 = vsel %vm283, %v276, 0
      %296 = vmatprep.subr.bf16.mxu0 0
      %297 = vmatpush1.bf16.msra.mxu0 0
      %298 = vmatprep.subr.bf16.mxu0 0
      %299 = vmatpush1.bf16.msra.mxu0 0
      %300 = vmatprep.subr.bf16.mxu0 0
      %301 = vmatpush1.bf16.msra.mxu0 0
      %302 = vmatprep.subr.bf16.mxu0 0
      %303 = vmatpush1.bf16.msra.mxu0 0
      %304 = vmatprep.subr.bf16.mxu0 0
      %305 = vmatpush1.bf16.msra.mxu0 0
      %306 = vmatprep.subr.bf16.mxu0 0
      %307 = vmatpush1.bf16.msra.mxu0 0
      %308 = vmatprep.subr.bf16.mxu0 0
      %309 = vmatpush1.bf16.msra.mxu0 0
      %310 = vmatprep.subr.bf16.mxu0 0
      %311 = vmatpush1.bf16.msra.mxu0 %v281
      %312 = vmatprep.subr.bf16.mxu0 0
      %313 = vmatpush2.bf16.msra.mxu0 0
      %314 = vmatprep.subr.bf16.mxu0 0
      %315 = vmatpush2.bf16.msra.mxu0 0
      %316 = vmatprep.subr.bf16.mxu0 0
      %317 = vmatpush2.bf16.msra.mxu0 0
      %318 = vmatprep.subr.bf16.mxu0 0
      %319 = vmatpush2.bf16.msra.mxu0 0
      %320 = vmatprep.subr.bf16.mxu0 0
      %321 = vmatpush2.bf16.msra.mxu0 0
      %322 = vmatprep.subr.bf16.mxu0 0
      %323 = vmatpush2.bf16.msra.mxu0 0
      %324 = vmatprep.subr.bf16.mxu0 0
      %325 = vmatpush2.bf16.msra.mxu0 0
      %326 = vmatprep.subr.bf16.mxu0 0
      %327 = vmatpush2.bf16.msra.mxu0 0
      %328 = vmatprep.mubr.bf16.mxu0 0
      %329 = vmatmul.mubr.bf16.gmra.mxu0 %v285
      %v330 = vpop.f32.mrf.mxu0
      %v331 = vadd.f32 %v242, %v330
      %v332 = vpop.f32.mrf.mxu0
      %v333 = vpop.f32.mrf.mxu0
      %v334 = vadd.f32 %v242, %v333
      %v335 = vpop.f32.mrf.mxu0
      %336 = vmatprep.mubr.bf16.mxu0 0
      %337 = vmatmul.mubr.bf16.gmra.mxu0 %v288
      %v338 = vpop.f32.mrf.mxu0
      %v339 = vadd.f32 %v242, %v338
      %v340 = vpop.f32.mrf.mxu0
      %v341 = vpop.f32.mrf.mxu0
      %v342 = vadd.f32 %v242, %v341
      %v343 = vpop.f32.mrf.mxu0
      %344 = vmatprep.mubr.bf16.mxu0 0
      %345 = vmatmul.mubr.bf16.gmra.mxu0 %v291
      %v346 = vpop.f32.mrf.mxu0
      %v347 = vadd.f32 %v242, %v346
      %v348 = vpop.f32.mrf.mxu0
      %v349 = vpop.f32.mrf.mxu0
      %v350 = vadd.f32 %v242, %v349
      %v351 = vpop.f32.mrf.mxu0
      %352 = vmatprep.mubr.bf16.mxu0 0
      %353 = vmatmul.mubr.bf16.gmra.mxu0 %v294
      %v354 = vpop.f32.mrf.mxu0
      %v355 = vadd.f32 %v242, %v354
      %v356 = vpop.f32.mrf.mxu0
      %v357 = vpop.f32.mrf.mxu0
      %v358 = vadd.f32 %v242, %v357
      %v359 = vpop.f32.mrf.mxu0
      %360 = vdwg.mxu0
      %v361 = vld [vmem:[%s219] sm:$0xf]
      %v362 = vld [vmem:[%s219 + $0x4] sm:$0xf]
      %v363 = vld [vmem:[%s219 + $0x8] sm:$0xf]
      %v364 = vld [vmem:[%s219 + $0xc] sm:$0xf]
      %v365 = vld [vmem:[%s219 + $0x10] sm:$0xf]
      %v366 = vld [vmem:[%s219 + $0x14] sm:$0xf]
      %v367 = vld [vmem:[%s219 + $0x18] sm:$0xf]
      %v368 = vld [vmem:[%s219 + $0x1c] sm:$0xf]
      %v369 = vld [vmem:[%s2] sm:$0xf]
      %v370 = vld [vmem:[%s2 + $0x4] sm:$0xf]
      %s371 = scalar_lea.vmem %s2, 8
      %v372 = vld [vmem:[%s371] sm:$0xf]
      %v373 = vld [vmem:[%s371 + $0x4] sm:$0xf]
      %v382 = vunpack.c.l.b16 %v361
      %v383 = vunpack.c.l.b16 %v362
      %v384 = vunpack.c.l.b16 %v363
      %v385 = vunpack.c.l.b16 %v364
      %v386 = vunpack.c.l.b16 %v365
      %v387 = vunpack.c.l.b16 %v366
      %v388 = vunpack.c.l.b16 %v367
      %v389 = vunpack.c.l.b16 %v368
      %v390 = vpack.c.b16 %v383, %v382
      %v391 = vpack.c.b16 %v385, %v384
      %v392 = vpack.c.b16 %v387, %v386
      %v393 = vpack.c.b16 %v389, %v388
      %vm394 = vsmask.f32 7424
      %v396 = vshrl.u32 %v390, 16
      %v398 = vshll.u32 %v390, 16
      %v400 = vrot.slane %v398, 1
      %v401 = vor.u32 %v396, %v400
      %v403 = vshll.u32 %v391, 16
      %v405 = vrot.slane %v403, 1
      %v406 = vsel %vm394, %v401, %v405
      %v407 = vshrl.u32 %v391, 16
      %v409 = vor.u32 %v407, %v405
      %v411 = vshll.u32 %v392, 16
      %v413 = vrot.slane %v411, 1
      %v414 = vsel %vm394, %v409, %v413
      %v415 = vshrl.u32 %v392, 16
      %v417 = vor.u32 %v415, %v413
      %v419 = vshll.u32 %v393, 16
      %v421 = vrot.slane %v419, 1
      %v422 = vsel %vm394, %v417, %v421
      %v423 = vshrl.u32 %v393, 16
      %v425 = vor.u32 %v423, %v421
      %v428 = vunpack.c.l.b16 %v372
      %v429 = vunpack.c.l.b16 %v373
      %v430 = vpack.c.b16 %v429, %v428
      %v433 = vsel %vm283, %v406, 0
      %v436 = vsel %vm283, %v414, 0
      %v439 = vsel %vm283, %v422, 0
      %v442 = vsel %vm283, %v425, 0
      %444 = vmatprep.subr.bf16.mxu0 0
      %445 = vmatpush1.bf16.msra.mxu0 0
      %446 = vmatprep.subr.bf16.mxu0 0
      %447 = vmatpush1.bf16.msra.mxu0 0
      %448 = vmatprep.subr.bf16.mxu0 0
      %449 = vmatpush1.bf16.msra.mxu0 0
      %450 = vmatprep.subr.bf16.mxu0 0
      %451 = vmatpush1.bf16.msra.mxu0 0
      %452 = vmatprep.subr.bf16.mxu0 0
      %453 = vmatpush1.bf16.msra.mxu0 0
      %454 = vmatprep.subr.bf16.mxu0 0
      %455 = vmatpush1.bf16.msra.mxu0 0
      %456 = vmatprep.subr.bf16.mxu0 0
      %457 = vmatpush1.bf16.msra.mxu0 0
      %458 = vmatprep.subr.bf16.mxu0 0
      %459 = vmatpush1.bf16.msra.mxu0 %v430
      %460 = vmatprep.subr.bf16.mxu0 0
      %461 = vmatpush2.bf16.msra.mxu0 0
      %462 = vmatprep.subr.bf16.mxu0 0
      %463 = vmatpush2.bf16.msra.mxu0 0
      %464 = vmatprep.subr.bf16.mxu0 0
      %465 = vmatpush2.bf16.msra.mxu0 0
      %466 = vmatprep.subr.bf16.mxu0 0
      %467 = vmatpush2.bf16.msra.mxu0 0
      %468 = vmatprep.subr.bf16.mxu0 0
      %469 = vmatpush2.bf16.msra.mxu0 0
      %470 = vmatprep.subr.bf16.mxu0 0
      %471 = vmatpush2.bf16.msra.mxu0 0
      %472 = vmatprep.subr.bf16.mxu0 0
      %473 = vmatpush2.bf16.msra.mxu0 0
      %474 = vmatprep.subr.bf16.mxu0 0
      %475 = vmatpush2.bf16.msra.mxu0 0
      %476 = vmatprep.mubr.bf16.mxu0 0
      %477 = vmatmul.mubr.bf16.gmra.mxu0 %v433
      %v478 = vpop.f32.mrf.mxu0
      %v479 = vadd.f32 0.0, %v478
      %v480 = vpop.f32.mrf.mxu0
      %v481 = vpop.f32.mrf.mxu0
      %v482 = vadd.f32 0.0, %v481
      %v483 = vpop.f32.mrf.mxu0
      %484 = vmatprep.mubr.bf16.mxu0 0
      %485 = vmatmul.mubr.bf16.gmra.mxu0 %v436
      %v486 = vpop.f32.mrf.mxu0
      %v487 = vadd.f32 0.0, %v486
      %v488 = vpop.f32.mrf.mxu0
      %v489 = vpop.f32.mrf.mxu0
      %v490 = vadd.f32 0.0, %v489
      %v491 = vpop.f32.mrf.mxu0
      %492 = vmatprep.mubr.bf16.mxu0 0
      %493 = vmatmul.mubr.bf16.gmra.mxu0 %v439
      %v494 = vpop.f32.mrf.mxu0
      %v495 = vadd.f32 0.0, %v494
      %v496 = vpop.f32.mrf.mxu0
      %v497 = vpop.f32.mrf.mxu0
      %v498 = vadd.f32 0.0, %v497
      %v499 = vpop.f32.mrf.mxu0
      %500 = vmatprep.mubr.bf16.mxu0 0
      %501 = vmatmul.mubr.bf16.gmra.mxu0 %v442
      %v502 = vpop.f32.mrf.mxu0
      %v503 = vadd.f32 0.0, %v502
      %v504 = vpop.f32.mrf.mxu0
      %v505 = vpop.f32.mrf.mxu0
      %v506 = vadd.f32 0.0, %v505
      %v507 = vpop.f32.mrf.mxu0
      %508 = vdwg.mxu0
      %v511 = vunpack.c.l.b16 %v369
      %v512 = vunpack.c.l.b16 %v370
      %v513 = vpack.c.b16 %v512, %v511
      %v515 = vsel %vm283, %v390, 0
      %v517 = vsel %vm283, %v391, 0
      %v519 = vsel %vm283, %v392, 0
      %v521 = vsel %vm283, %v393, 0
      %523 = vmatprep.subr.bf16.mxu0 0
      %524 = vmatpush1.bf16.msra.mxu0 0
      %525 = vmatprep.subr.bf16.mxu0 0
      %526 = vmatpush1.bf16.msra.mxu0 0
      %527 = vmatprep.subr.bf16.mxu0 0
      %528 = vmatpush1.bf16.msra.mxu0 0
      %529 = vmatprep.subr.bf16.mxu0 0
      %530 = vmatpush1.bf16.msra.mxu0 0
      %531 = vmatprep.subr.bf16.mxu0 0
      %532 = vmatpush1.bf16.msra.mxu0 0
      %533 = vmatprep.subr.bf16.mxu0 0
      %534 = vmatpush1.bf16.msra.mxu0 0
      %535 = vmatprep.subr.bf16.mxu0 0
      %536 = vmatpush1.bf16.msra.mxu0 0
      %537 = vmatprep.subr.bf16.mxu0 0
      %538 = vmatpush1.bf16.msra.mxu0 %v513
      %539 = vmatprep.subr.bf16.mxu0 0
      %540 = vmatpush2.bf16.msra.mxu0 0
      %541 = vmatprep.subr.bf16.mxu0 0
      %542 = vmatpush2.bf16.msra.mxu0 0
      %543 = vmatprep.subr.bf16.mxu0 0
      %544 = vmatpush2.bf16.msra.mxu0 0
      %545 = vmatprep.subr.bf16.mxu0 0
      %546 = vmatpush2.bf16.msra.mxu0 0
      %547 = vmatprep.subr.bf16.mxu0 0
      %548 = vmatpush2.bf16.msra.mxu0 0
      %549 = vmatprep.subr.bf16.mxu0 0
      %550 = vmatpush2.bf16.msra.mxu0 0
      %551 = vmatprep.subr.bf16.mxu0 0
      %552 = vmatpush2.bf16.msra.mxu0 0
      %553 = vmatprep.subr.bf16.mxu0 0
      %554 = vmatpush2.bf16.msra.mxu0 0
      %555 = vmatprep.mubr.bf16.mxu0 0
      %556 = vmatmul.mubr.bf16.gmra.mxu0 %v515
      %v557 = vpop.f32.mrf.mxu0
      %v558 = vadd.f32 %v479, %v557
      %v559 = vpop.f32.mrf.mxu0
      %v560 = vpop.f32.mrf.mxu0
      %v561 = vadd.f32 %v482, %v560
      %v562 = vpop.f32.mrf.mxu0
      %563 = vmatprep.mubr.bf16.mxu0 0
      %564 = vmatmul.mubr.bf16.gmra.mxu0 %v517
      %v565 = vpop.f32.mrf.mxu0
      %v566 = vadd.f32 %v487, %v565
      %v567 = vpop.f32.mrf.mxu0
      %v568 = vpop.f32.mrf.mxu0
      %v569 = vadd.f32 %v490, %v568
      %v570 = vpop.f32.mrf.mxu0
      %571 = vmatprep.mubr.bf16.mxu0 0
      %572 = vmatmul.mubr.bf16.gmra.mxu0 %v519
      %v573 = vpop.f32.mrf.mxu0
      %v574 = vadd.f32 %v495, %v573
      %v575 = vpop.f32.mrf.mxu0
      %v576 = vpop.f32.mrf.mxu0
      %v577 = vadd.f32 %v498, %v576
      %v578 = vpop.f32.mrf.mxu0
      %579 = vmatprep.mubr.bf16.mxu0 0
      %580 = vmatmul.mubr.bf16.gmra.mxu0 %v521
      %v581 = vpop.f32.mrf.mxu0
      %v582 = vadd.f32 %v503, %v581
      %v583 = vpop.f32.mrf.mxu0
      %v584 = vpop.f32.mrf.mxu0
      %v585 = vadd.f32 %v506, %v584
      %v586 = vpop.f32.mrf.mxu0
      %587 = vdwg.mxu0
      %v588 = vld [vmem:[%s219] sm:$0xe]
      %v589 = vld [vmem:[%s219 + $0x4] sm:$0xf]
      %v590 = vld [vmem:[%s219 + $0x8] sm:$0xf]
      %v591 = vld [vmem:[%s219 + $0xc] sm:$0xf]
      %v592 = vld [vmem:[%s219 + $0x10] sm:$0xf]
      %v593 = vld [vmem:[%s219 + $0x14] sm:$0xf]
      %v594 = vld [vmem:[%s219 + $0x18] sm:$0xf]
      %v595 = vld [vmem:[%s219 + $0x1c] sm:$0xf]
      %v596 = vld [vmem:[%s219 + $0x20] sm:$0x1]
      %s597 = scalar_lea.vmem %s2, 16
      %v598 = vld [vmem:[%s597] sm:$0xf]
      %v599 = vld [vmem:[%s597 + $0x4] sm:$0xf]
      %v609 = vunpack.c.l.b16 %v588
      %v610 = vunpack.c.l.b16 %v589
      %v611 = vunpack.c.l.b16 %v590
      %v612 = vunpack.c.l.b16 %v591
      %v613 = vunpack.c.l.b16 %v592
      %v614 = vunpack.c.l.b16 %v593
      %v615 = vunpack.c.l.b16 %v594
      %v616 = vunpack.c.l.b16 %v595
      %v617 = vunpack.c.l.b16 %v596
      %v618 = vpack.c.b16 %v610, %v609
      %v619 = vpack.c.b16 %v612, %v611
      %v620 = vpack.c.b16 %v614, %v613
      %v621 = vpack.c.b16 %v616, %v615
      %v622 = vpack.c.b16 %v617, %v617
      %v623 = vrot.slane %v618, 1
      %v624 = vrot.slane %v619, 1
      %v625 = vsel %vm267, %v623, %v624
      %v626 = vrot.slane %v620, 1
      %v627 = vsel %vm267, %v624, %v626
      %v628 = vrot.slane %v621, 1
      %v629 = vsel %vm267, %v626, %v628
      %v630 = vrot.slane %v622, 1
      %v631 = vsel %vm267, %v628, %v630
      %v634 = vunpack.c.l.b16 %v598
      %v635 = vunpack.c.l.b16 %v599
      %v636 = vpack.c.b16 %v635, %v634
      %v639 = vsel %vm283, %v625, 0
      %v642 = vsel %vm283, %v627, 0
      %v645 = vsel %vm283, %v629, 0
      %v648 = vsel %vm283, %v631, 0
      %650 = vmatprep.subr.bf16.mxu0 0
      %651 = vmatpush1.bf16.msra.mxu0 0
      %652 = vmatprep.subr.bf16.mxu0 0
      %653 = vmatpush1.bf16.msra.mxu0 0
      %654 = vmatprep.subr.bf16.mxu0 0
      %655 = vmatpush1.bf16.msra.mxu0 0
      %656 = vmatprep.subr.bf16.mxu0 0
      %657 = vmatpush1.bf16.msra.mxu0 0
      %658 = vmatprep.subr.bf16.mxu0 0
      %659 = vmatpush1.bf16.msra.mxu0 0
      %660 = vmatprep.subr.bf16.mxu0 0
      %661 = vmatpush1.bf16.msra.mxu0 0
      %662 = vmatprep.subr.bf16.mxu0 0
      %663 = vmatpush1.bf16.msra.mxu0 0
      %664 = vmatprep.subr.bf16.mxu0 0
      %665 = vmatpush1.bf16.msra.mxu0 %v636
      %666 = vmatprep.subr.bf16.mxu0 0
      %667 = vmatpush2.bf16.msra.mxu0 0
      %668 = vmatprep.subr.bf16.mxu0 0
      %669 = vmatpush2.bf16.msra.mxu0 0
      %670 = vmatprep.subr.bf16.mxu0 0
      %671 = vmatpush2.bf16.msra.mxu0 0
      %672 = vmatprep.subr.bf16.mxu0 0
      %673 = vmatpush2.bf16.msra.mxu0 0
      %674 = vmatprep.subr.bf16.mxu0 0
      %675 = vmatpush2.bf16.msra.mxu0 0
      %676 = vmatprep.subr.bf16.mxu0 0
      %677 = vmatpush2.bf16.msra.mxu0 0
      %678 = vmatprep.subr.bf16.mxu0 0
      %679 = vmatpush2.bf16.msra.mxu0 0
      %680 = vmatprep.subr.bf16.mxu0 0
      %681 = vmatpush2.bf16.msra.mxu0 0
      %682 = vmatprep.mubr.bf16.mxu0 0
      %683 = vmatmul.mubr.bf16.gmra.mxu0 %v639
      %v684 = vpop.f32.mrf.mxu0
      %v685 = vadd.f32 0.0, %v684
      %v686 = vpop.f32.mrf.mxu0
      %v687 = vpop.f32.mrf.mxu0
      %v688 = vadd.f32 0.0, %v687
      %v689 = vpop.f32.mrf.mxu0
      %690 = vmatprep.mubr.bf16.mxu0 0
      %691 = vmatmul.mubr.bf16.gmra.mxu0 %v642
      %v692 = vpop.f32.mrf.mxu0
      %v693 = vadd.f32 0.0, %v692
      %v694 = vpop.f32.mrf.mxu0
      %v695 = vpop.f32.mrf.mxu0
      %v696 = vadd.f32 0.0, %v695
      %v697 = vpop.f32.mrf.mxu0
      %698 = vmatprep.mubr.bf16.mxu0 0
      %699 = vmatmul.mubr.bf16.gmra.mxu0 %v645
      %v700 = vpop.f32.mrf.mxu0
      %v701 = vadd.f32 0.0, %v700
      %v702 = vpop.f32.mrf.mxu0
      %v703 = vpop.f32.mrf.mxu0
      %v704 = vadd.f32 0.0, %v703
      %v705 = vpop.f32.mrf.mxu0
      %706 = vmatprep.mubr.bf16.mxu0 0
      %707 = vmatmul.mubr.bf16.gmra.mxu0 %v648
      %v708 = vpop.f32.mrf.mxu0
      %v709 = vadd.f32 0.0, %v708
      %v710 = vpop.f32.mrf.mxu0
      %v711 = vpop.f32.mrf.mxu0
      %v712 = vadd.f32 0.0, %v711
      %v713 = vpop.f32.mrf.mxu0
      %714 = vdwg.mxu0
      %v715 = vadd.f32 %v558, %v685
      %v716 = vadd.f32 %v561, %v688
      %v717 = vadd.f32 %v566, %v693
      %v718 = vadd.f32 %v569, %v696
      %v719 = vadd.f32 %v574, %v701
      %v720 = vadd.f32 %v577, %v704
      %v721 = vadd.f32 %v582, %v709
      %v722 = vadd.f32 %v585, %v712
      %v723 = vld [vmem:[%s219 + $0x20] sm:$0xf]
      %s724 = scalar_lea.vmem %s2, 24
      %v725 = vld [vmem:[%s724] sm:$0xf]
      %v726 = vld [vmem:[%s724 + $0x4] sm:$0xf]
      %v728 = vunpack.c.l.b16 %v723
      %v729 = vpack.c.b16 %v611, %v610
      %v730 = vpack.c.b16 %v613, %v612
      %v731 = vpack.c.b16 %v615, %v614
      %v732 = vpack.c.b16 %v728, %v616
      %v734 = vshrl.u32 %v729, 16
      %v736 = vshll.u32 %v729, 16
      %v738 = vrot.slane %v736, 1
      %v739 = vor.u32 %v734, %v738
      %v741 = vshll.u32 %v730, 16
      %v743 = vrot.slane %v741, 1
      %v744 = vsel %vm394, %v739, %v743
      %v745 = vshrl.u32 %v730, 16
      %v747 = vor.u32 %v745, %v743
      %v749 = vshll.u32 %v731, 16
      %v751 = vrot.slane %v749, 1
      %v752 = vsel %vm394, %v747, %v751
      %v753 = vshrl.u32 %v731, 16
      %v755 = vor.u32 %v753, %v751
      %v757 = vshll.u32 %v732, 16
      %v759 = vrot.slane %v757, 1
      %v760 = vsel %vm394, %v755, %v759
      %v761 = vshrl.u32 %v732, 16
      %v763 = vor.u32 %v761, %v759
      %v766 = vunpack.c.l.b16 %v725
      %v767 = vunpack.c.l.b16 %v726
      %v768 = vpack.c.b16 %v767, %v766
      %v771 = vsel %vm283, %v744, 0
      %v774 = vsel %vm283, %v752, 0
      %v777 = vsel %vm283, %v760, 0
      %v780 = vsel %vm283, %v763, 0
      %782 = vmatprep.subr.bf16.mxu0 0
      %783 = vmatpush1.bf16.msra.mxu0 0
      %784 = vmatprep.subr.bf16.mxu0 0
      %785 = vmatpush1.bf16.msra.mxu0 0
      %786 = vmatprep.subr.bf16.mxu0 0
      %787 = vmatpush1.bf16.msra.mxu0 0
      %788 = vmatprep.subr.bf16.mxu0 0
      %789 = vmatpush1.bf16.msra.mxu0 0
      %790 = vmatprep.subr.bf16.mxu0 0
      %791 = vmatpush1.bf16.msra.mxu0 0
      %792 = vmatprep.subr.bf16.mxu0 0
      %793 = vmatpush1.bf16.msra.mxu0 0
      %794 = vmatprep.subr.bf16.mxu0 0
      %795 = vmatpush1.bf16.msra.mxu0 0
      %796 = vmatprep.subr.bf16.mxu0 0
      %797 = vmatpush1.bf16.msra.mxu0 %v768
      %798 = vmatprep.subr.bf16.mxu0 0
      %799 = vmatpush2.bf16.msra.mxu0 0
      %800 = vmatprep.subr.bf16.mxu0 0
      %801 = vmatpush2.bf16.msra.mxu0 0
      %802 = vmatprep.subr.bf16.mxu0 0
      %803 = vmatpush2.bf16.msra.mxu0 0
      %804 = vmatprep.subr.bf16.mxu0 0
      %805 = vmatpush2.bf16.msra.mxu0 0
      %806 = vmatprep.subr.bf16.mxu0 0
      %807 = vmatpush2.bf16.msra.mxu0 0
      %808 = vmatprep.subr.bf16.mxu0 0
      %809 = vmatpush2.bf16.msra.mxu0 0
      %810 = vmatprep.subr.bf16.mxu0 0
      %811 = vmatpush2.bf16.msra.mxu0 0
      %812 = vmatprep.subr.bf16.mxu0 0
      %813 = vmatpush2.bf16.msra.mxu0 0
      %814 = vmatprep.mubr.bf16.mxu0 0
      %815 = vmatmul.mubr.bf16.gmra.mxu0 %v771
      %v816 = vpop.f32.mrf.mxu0
      %v817 = vadd.f32 0.0, %v816
      %v818 = vpop.f32.mrf.mxu0
      %v819 = vpop.f32.mrf.mxu0
      %v820 = vadd.f32 0.0, %v819
      %v821 = vpop.f32.mrf.mxu0
      %822 = vmatprep.mubr.bf16.mxu0 0
      %823 = vmatmul.mubr.bf16.gmra.mxu0 %v774
      %v824 = vpop.f32.mrf.mxu0
      %v825 = vadd.f32 0.0, %v824
      %v826 = vpop.f32.mrf.mxu0
      %v827 = vpop.f32.mrf.mxu0
      %v828 = vadd.f32 0.0, %v827
      %v829 = vpop.f32.mrf.mxu0
      %830 = vmatprep.mubr.bf16.mxu0 0
      %831 = vmatmul.mubr.bf16.gmra.mxu0 %v777
      %v832 = vpop.f32.mrf.mxu0
      %v833 = vadd.f32 0.0, %v832
      %v834 = vpop.f32.mrf.mxu0
      %v835 = vpop.f32.mrf.mxu0
      %v836 = vadd.f32 0.0, %v835
      %v837 = vpop.f32.mrf.mxu0
      %838 = vmatprep.mubr.bf16.mxu0 0
      %839 = vmatmul.mubr.bf16.gmra.mxu0 %v780
      %v840 = vpop.f32.mrf.mxu0
      %v841 = vadd.f32 0.0, %v840
      %v842 = vpop.f32.mrf.mxu0
      %v843 = vpop.f32.mrf.mxu0
      %v844 = vadd.f32 0.0, %v843
      %v845 = vpop.f32.mrf.mxu0
      %846 = vdwg.mxu0
      %v847 = vadd.f32 %v715, %v817
      %v848 = vadd.f32 %v716, %v820
      %v849 = vadd.f32 %v717, %v825
      %v850 = vadd.f32 %v718, %v828
      %v851 = vadd.f32 %v719, %v833
      %v852 = vadd.f32 %v720, %v836
      %v853 = vadd.f32 %v721, %v841
      %v854 = vadd.f32 %v722, %v844
      %s855 = scalar_lea.vmem %s2, 32
      %v856 = vld [vmem:[%s855] sm:$0xf]
      %v857 = vld [vmem:[%s855 + $0x4] sm:$0xf]
      %v860 = vunpack.c.l.b16 %v856
      %v861 = vunpack.c.l.b16 %v857
      %v862 = vpack.c.b16 %v861, %v860
      %864 = vmatprep.subr.bf16.mxu0 0
      %865 = vmatpush1.bf16.msra.mxu0 0
      %866 = vmatprep.subr.bf16.mxu0 0
      %867 = vmatpush1.bf16.msra.mxu0 0
      %868 = vmatprep.subr.bf16.mxu0 0
      %869 = vmatpush1.bf16.msra.mxu0 0
      %870 = vmatprep.subr.bf16.mxu0 0
      %871 = vmatpush1.bf16.msra.mxu0 0
      %872 = vmatprep.subr.bf16.mxu0 0
      %873 = vmatpush1.bf16.msra.mxu0 0
      %874 = vmatprep.subr.bf16.mxu0 0
      %875 = vmatpush1.bf16.msra.mxu0 0
      %876 = vmatprep.subr.bf16.mxu0 0
      %877 = vmatpush1.bf16.msra.mxu0 0
      %878 = vmatprep.subr.bf16.mxu0 0
      %879 = vmatpush1.bf16.msra.mxu0 %v862
      %880 = vmatprep.subr.bf16.mxu0 0
      %881 = vmatpush2.bf16.msra.mxu0 0
      %882 = vmatprep.subr.bf16.mxu0 0
      %883 = vmatpush2.bf16.msra.mxu0 0
      %884 = vmatprep.subr.bf16.mxu0 0
      %885 = vmatpush2.bf16.msra.mxu0 0
      %886 = vmatprep.subr.bf16.mxu0 0
      %887 = vmatpush2.bf16.msra.mxu0 0
      %888 = vmatprep.subr.bf16.mxu0 0
      %889 = vmatpush2.bf16.msra.mxu0 0
      %890 = vmatprep.subr.bf16.mxu0 0
      %891 = vmatpush2.bf16.msra.mxu0 0
      %892 = vmatprep.subr.bf16.mxu0 0
      %893 = vmatpush2.bf16.msra.mxu0 0
      %894 = vmatprep.subr.bf16.mxu0 0
      %895 = vmatpush2.bf16.msra.mxu0 0
      %896 = vmatprep.mubr.bf16.mxu0 0
      %897 = vmatmul.mubr.bf16.gmra.mxu0 %v285
      %v898 = vpop.f32.mrf.mxu0
      %v899 = vadd.f32 0.0, %v898
      %v900 = vpop.f32.mrf.mxu0
      %v901 = vpop.f32.mrf.mxu0
      %v902 = vadd.f32 0.0, %v901
      %v903 = vpop.f32.mrf.mxu0
      %904 = vmatprep.mubr.bf16.mxu0 0
      %905 = vmatmul.mubr.bf16.gmra.mxu0 %v288
      %v906 = vpop.f32.mrf.mxu0
      %v907 = vadd.f32 0.0, %v906
      %v908 = vpop.f32.mrf.mxu0
      %v909 = vpop.f32.mrf.mxu0
      %v910 = vadd.f32 0.0, %v909
      %v911 = vpop.f32.mrf.mxu0
      %912 = vmatprep.mubr.bf16.mxu0 0
      %913 = vmatmul.mubr.bf16.gmra.mxu0 %v291
      %v914 = vpop.f32.mrf.mxu0
      %v915 = vadd.f32 0.0, %v914
      %v916 = vpop.f32.mrf.mxu0
      %v917 = vpop.f32.mrf.mxu0
      %v918 = vadd.f32 0.0, %v917
      %v919 = vpop.f32.mrf.mxu0
      %920 = vmatprep.mubr.bf16.mxu0 0
      %921 = vmatmul.mubr.bf16.gmra.mxu0 %v294
      %v922 = vpop.f32.mrf.mxu0
      %v923 = vadd.f32 0.0, %v922
      %v924 = vpop.f32.mrf.mxu0
      %v925 = vpop.f32.mrf.mxu0
      %v926 = vadd.f32 0.0, %v925
      %v927 = vpop.f32.mrf.mxu0
      %928 = vdwg.mxu0
      %v929 = vadd.f32 %v847, %v899
      %v930 = vadd.f32 %v848, %v902
      %v931 = vadd.f32 %v849, %v907
      %v932 = vadd.f32 %v850, %v910
      %v933 = vadd.f32 %v851, %v915
      %v934 = vadd.f32 %v852, %v918
      %v935 = vadd.f32 %v853, %v923
      %v936 = vadd.f32 %v854, %v926
      %s937 = scalar_lea.vmem %s2, 40
      %v938 = vld [vmem:[%s937] sm:$0xf]
      %v939 = vld [vmem:[%s937 + $0x4] sm:$0xf]
      %vm940 = vsmask.f32 6400
      %v942 = vshrl.u32 %v262, 16
      %v944 = vrot.slane %v942, 1
      %v945 = vshll.u32 %v262, 16
      %v947 = vrot.slane %v945, 2
      %v948 = vor.u32 %v944, %v947
      %v950 = vshrl.u32 %v263, 16
      %v952 = vrot.slane %v950, 1
      %v953 = vshll.u32 %v263, 16
      %v955 = vrot.slane %v953, 2
      %v956 = vor.u32 %v952, %v955
      %v957 = vsel %vm940, %v948, %v956
      %v959 = vshrl.u32 %v264, 16
      %v961 = vrot.slane %v959, 1
      %v962 = vshll.u32 %v264, 16
      %v964 = vrot.slane %v962, 2
      %v965 = vor.u32 %v961, %v964
      %v966 = vsel %vm940, %v956, %v965
      %v968 = vshrl.u32 %v265, 16
      %v970 = vrot.slane %v968, 1
      %v971 = vshll.u32 %v265, 16
      %v973 = vrot.slane %v971, 2
      %v974 = vor.u32 %v970, %v973
      %v975 = vsel %vm940, %v965, %v974
      %v977 = vshrl.u32 %v266, 16
      %v979 = vrot.slane %v977, 1
      %v980 = vshll.u32 %v266, 16
      %v982 = vrot.slane %v980, 2
      %v983 = vor.u32 %v979, %v982
      %v984 = vsel %vm940, %v974, %v983
      %v987 = vunpack.c.l.b16 %v938
      %v988 = vunpack.c.l.b16 %v939
      %v989 = vpack.c.b16 %v988, %v987
      %v992 = vsel %vm283, %v957, 0
      %v995 = vsel %vm283, %v966, 0
      %v998 = vsel %vm283, %v975, 0
      %v1001 = vsel %vm283, %v984, 0
      %1003 = vmatprep.subr.bf16.mxu0 0
      %1004 = vmatpush1.bf16.msra.mxu0 0
      %1005 = vmatprep.subr.bf16.mxu0 0
      %1006 = vmatpush1.bf16.msra.mxu0 0
      %1007 = vmatprep.subr.bf16.mxu0 0
      %1008 = vmatpush1.bf16.msra.mxu0 0
      %1009 = vmatprep.subr.bf16.mxu0 0
      %1010 = vmatpush1.bf16.msra.mxu0 0
      %1011 = vmatprep.subr.bf16.mxu0 0
      %1012 = vmatpush1.bf16.msra.mxu0 0
      %1013 = vmatprep.subr.bf16.mxu0 0
      %1014 = vmatpush1.bf16.msra.mxu0 0
      %1015 = vmatprep.subr.bf16.mxu0 0
      %1016 = vmatpush1.bf16.msra.mxu0 0
      %1017 = vmatprep.subr.bf16.mxu0 0
      %1018 = vmatpush1.bf16.msra.mxu0 %v989
      %1019 = vmatprep.subr.bf16.mxu0 0
      %1020 = vmatpush2.bf16.msra.mxu0 0
      %1021 = vmatprep.subr.bf16.mxu0 0
      %1022 = vmatpush2.bf16.msra.mxu0 0
      %1023 = vmatprep.subr.bf16.mxu0 0
      %1024 = vmatpush2.bf16.msra.mxu0 0
      %1025 = vmatprep.subr.bf16.mxu0 0
      %1026 = vmatpush2.bf16.msra.mxu0 0
      %1027 = vmatprep.subr.bf16.mxu0 0
      %1028 = vmatpush2.bf16.msra.mxu0 0
      %1029 = vmatprep.subr.bf16.mxu0 0
      %1030 = vmatpush2.bf16.msra.mxu0 0
      %1031 = vmatprep.subr.bf16.mxu0 0
      %1032 = vmatpush2.bf16.msra.mxu0 0
      %1033 = vmatprep.subr.bf16.mxu0 0
      %1034 = vmatpush2.bf16.msra.mxu0 0
      %1035 = vmatprep.mubr.bf16.mxu0 0
      %1036 = vmatmul.mubr.bf16.gmra.mxu0 %v992
      %v1037 = vpop.f32.mrf.mxu0
      %v1038 = vadd.f32 0.0, %v1037
      %v1039 = vpop.f32.mrf.mxu0
      %v1040 = vpop.f32.mrf.mxu0
      %v1041 = vadd.f32 0.0, %v1040
      %v1042 = vpop.f32.mrf.mxu0
      %1043 = vmatprep.mubr.bf16.mxu0 0
      %1044 = vmatmul.mubr.bf16.gmra.mxu0 %v995
      %v1045 = vpop.f32.mrf.mxu0
      %v1046 = vadd.f32 0.0, %v1045
      %v1047 = vpop.f32.mrf.mxu0
      %v1048 = vpop.f32.mrf.mxu0
      %v1049 = vadd.f32 0.0, %v1048
      %v1050 = vpop.f32.mrf.mxu0
      %1051 = vmatprep.mubr.bf16.mxu0 0
      %1052 = vmatmul.mubr.bf16.gmra.mxu0 %v998
      %v1053 = vpop.f32.mrf.mxu0
      %v1054 = vadd.f32 0.0, %v1053
      %v1055 = vpop.f32.mrf.mxu0
      %v1056 = vpop.f32.mrf.mxu0
      %v1057 = vadd.f32 0.0, %v1056
      %v1058 = vpop.f32.mrf.mxu0
      %1059 = vmatprep.mubr.bf16.mxu0 0
      %1060 = vmatmul.mubr.bf16.gmra.mxu0 %v1001
      %v1061 = vpop.f32.mrf.mxu0
      %v1062 = vadd.f32 0.0, %v1061
      %v1063 = vpop.f32.mrf.mxu0
      %v1064 = vpop.f32.mrf.mxu0
      %v1065 = vadd.f32 0.0, %v1064
      %v1066 = vpop.f32.mrf.mxu0
      %1067 = vdwg.mxu0
      %v1068 = vadd.f32 %v929, %v1038
      %v1069 = vadd.f32 %v930, %v1041
      %v1070 = vadd.f32 %v931, %v1046
      %v1071 = vadd.f32 %v932, %v1049
      %v1072 = vadd.f32 %v933, %v1054
      %v1073 = vadd.f32 %v934, %v1057
      %v1074 = vadd.f32 %v935, %v1062
      %v1075 = vadd.f32 %v936, %v1065
      %v1076 = vld [vmem:[%s219 + $0x8] sm:$0xe]
      %v1077 = vld [vmem:[%s219 + $0xc] sm:$0xf]
      %v1078 = vld [vmem:[%s219 + $0x10] sm:$0xf]
      %v1079 = vld [vmem:[%s219 + $0x14] sm:$0xf]
      %v1080 = vld [vmem:[%s219 + $0x18] sm:$0xf]
      %v1081 = vld [vmem:[%s219 + $0x1c] sm:$0xf]
      %v1082 = vld [vmem:[%s219 + $0x20] sm:$0xf]
      %v1083 = vld [vmem:[%s219 + $0x24] sm:$0xf]
      %v1084 = vld [vmem:[%s219 + $0x28] sm:$0x1]
      %s1085 = scalar_lea.vmem %s2, 48
      %v1086 = vld [vmem:[%s1085] sm:$0xf]
      %v1087 = vld [vmem:[%s1085 + $0x4] sm:$0xf]
      %v1097 = vunpack.c.l.b16 %v1076
      %v1098 = vunpack.c.l.b16 %v1077
      %v1099 = vunpack.c.l.b16 %v1078
      %v1100 = vunpack.c.l.b16 %v1079
      %v1101 = vunpack.c.l.b16 %v1080
      %v1102 = vunpack.c.l.b16 %v1081
      %v1103 = vunpack.c.l.b16 %v1082
      %v1104 = vunpack.c.l.b16 %v1083
      %v1105 = vunpack.c.l.b16 %v1084
      %v1106 = vpack.c.b16 %v1098, %v1097
      %v1107 = vpack.c.b16 %v1100, %v1099
      %v1108 = vpack.c.b16 %v1102, %v1101
      %v1109 = vpack.c.b16 %v1104, %v1103
      %v1110 = vpack.c.b16 %v1105, %v1105
      %v1111 = vrot.slane %v1106, 1
      %v1112 = vrot.slane %v1107, 1
      %v1113 = vsel %vm267, %v1111, %v1112
      %v1114 = vrot.slane %v1108, 1
      %v1115 = vsel %vm267, %v1112, %v1114
      %v1116 = vrot.slane %v1109, 1
      %v1117 = vsel %vm267, %v1114, %v1116
      %v1118 = vrot.slane %v1110, 1
      %v1119 = vsel %vm267, %v1116, %v1118
      %v1122 = vunpack.c.l.b16 %v1086
      %v1123 = vunpack.c.l.b16 %v1087
      %v1124 = vpack.c.b16 %v1123, %v1122
      %v1127 = vsel %vm283, %v1113, 0
      %v1130 = vsel %vm283, %v1115, 0
      %v1133 = vsel %vm283, %v1117, 0
      %v1136 = vsel %vm283, %v1119, 0
      %1138 = vmatprep.subr.bf16.mxu0 0
      %1139 = vmatpush1.bf16.msra.mxu0 0
      %1140 = vmatprep.subr.bf16.mxu0 0
      %1141 = vmatpush1.bf16.msra.mxu0 0
      %1142 = vmatprep.subr.bf16.mxu0 0
      %1143 = vmatpush1.bf16.msra.mxu0 0
      %1144 = vmatprep.subr.bf16.mxu0 0
      %1145 = vmatpush1.bf16.msra.mxu0 0
      %1146 = vmatprep.subr.bf16.mxu0 0
      %1147 = vmatpush1.bf16.msra.mxu0 0
      %1148 = vmatprep.subr.bf16.mxu0 0
      %1149 = vmatpush1.bf16.msra.mxu0 0
      %1150 = vmatprep.subr.bf16.mxu0 0
      %1151 = vmatpush1.bf16.msra.mxu0 0
      %1152 = vmatprep.subr.bf16.mxu0 0
      %1153 = vmatpush1.bf16.msra.mxu0 %v1124
      %1154 = vmatprep.subr.bf16.mxu0 0
      %1155 = vmatpush2.bf16.msra.mxu0 0
      %1156 = vmatprep.subr.bf16.mxu0 0
      %1157 = vmatpush2.bf16.msra.mxu0 0
      %1158 = vmatprep.subr.bf16.mxu0 0
      %1159 = vmatpush2.bf16.msra.mxu0 0
      %1160 = vmatprep.subr.bf16.mxu0 0
      %1161 = vmatpush2.bf16.msra.mxu0 0
      %1162 = vmatprep.subr.bf16.mxu0 0
      %1163 = vmatpush2.bf16.msra.mxu0 0
      %1164 = vmatprep.subr.bf16.mxu0 0
      %1165 = vmatpush2.bf16.msra.mxu0 0
      %1166 = vmatprep.subr.bf16.mxu0 0
      %1167 = vmatpush2.bf16.msra.mxu0 0
      %1168 = vmatprep.subr.bf16.mxu0 0
      %1169 = vmatpush2.bf16.msra.mxu0 0
      %1170 = vmatprep.mubr.bf16.mxu0 0
      %1171 = vmatmul.mubr.bf16.gmra.mxu0 %v1127
      %v1172 = vpop.f32.mrf.mxu0
      %v1173 = vadd.f32 0.0, %v1172
      %v1174 = vpop.f32.mrf.mxu0
      %v1175 = vpop.f32.mrf.mxu0
      %v1176 = vadd.f32 0.0, %v1175
      %v1177 = vpop.f32.mrf.mxu0
      %1178 = vmatprep.mubr.bf16.mxu0 0
      %1179 = vmatmul.mubr.bf16.gmra.mxu0 %v1130
      %v1180 = vpop.f32.mrf.mxu0
      %v1181 = vadd.f32 0.0, %v1180
      %v1182 = vpop.f32.mrf.mxu0
      %v1183 = vpop.f32.mrf.mxu0
      %v1184 = vadd.f32 0.0, %v1183
      %v1185 = vpop.f32.mrf.mxu0
      %1186 = vmatprep.mubr.bf16.mxu0 0
      %1187 = vmatmul.mubr.bf16.gmra.mxu0 %v1133
      %v1188 = vpop.f32.mrf.mxu0
      %v1189 = vadd.f32 0.0, %v1188
      %v1190 = vpop.f32.mrf.mxu0
      %v1191 = vpop.f32.mrf.mxu0
      %v1192 = vadd.f32 0.0, %v1191
      %v1193 = vpop.f32.mrf.mxu0
      %1194 = vmatprep.mubr.bf16.mxu0 0
      %1195 = vmatmul.mubr.bf16.gmra.mxu0 %v1136
      %v1196 = vpop.f32.mrf.mxu0
      %v1197 = vadd.f32 0.0, %v1196
      %v1198 = vpop.f32.mrf.mxu0
      %v1199 = vpop.f32.mrf.mxu0
      %v1200 = vadd.f32 0.0, %v1199
      %v1201 = vpop.f32.mrf.mxu0
      %1202 = vdwg.mxu0
      %v1203 = vadd.f32 %v1068, %v1173
      %v1204 = vadd.f32 %v1069, %v1176
      %v1205 = vadd.f32 %v1070, %v1181
      %v1206 = vadd.f32 %v1071, %v1184
      %v1207 = vadd.f32 %v1072, %v1189
      %v1208 = vadd.f32 %v1073, %v1192
      %v1209 = vadd.f32 %v1074, %v1197
      %v1210 = vadd.f32 %v1075, %v1200
      %s1211 = scalar_lea.vmem %s2, 56
      %v1212 = vld [vmem:[%s1211] sm:$0xf]
      %v1213 = vld [vmem:[%s1211 + $0x4] sm:$0xf]
      %v1215 = vshrl.u32 %v1106, 16
      %v1217 = vrot.slane %v1215, 1
      %v1218 = vshll.u32 %v1106, 16
      %v1220 = vrot.slane %v1218, 2
      %v1221 = vor.u32 %v1217, %v1220
      %v1223 = vshrl.u32 %v1107, 16
      %v1225 = vrot.slane %v1223, 1
      %v1226 = vshll.u32 %v1107, 16
      %v1228 = vrot.slane %v1226, 2
      %v1229 = vor.u32 %v1225, %v1228
      %v1230 = vsel %vm940, %v1221, %v1229
      %v1232 = vshrl.u32 %v1108, 16
      %v1234 = vrot.slane %v1232, 1
      %v1235 = vshll.u32 %v1108, 16
      %v1237 = vrot.slane %v1235, 2
      %v1238 = vor.u32 %v1234, %v1237
      %v1239 = vsel %vm940, %v1229, %v1238
      %v1241 = vshrl.u32 %v1109, 16
      %v1243 = vrot.slane %v1241, 1
      %v1244 = vshll.u32 %v1109, 16
      %v1246 = vrot.slane %v1244, 2
      %v1247 = vor.u32 %v1243, %v1246
      %v1248 = vsel %vm940, %v1238, %v1247
      %v1250 = vshrl.u32 %v1110, 16
      %v1252 = vrot.slane %v1250, 1
      %v1253 = vshll.u32 %v1110, 16
      %v1255 = vrot.slane %v1253, 2
      %v1256 = vor.u32 %v1252, %v1255
      %v1257 = vsel %vm940, %v1247, %v1256
      %v1260 = vunpack.c.l.b16 %v1212
      %v1261 = vunpack.c.l.b16 %v1213
      %v1262 = vpack.c.b16 %v1261, %v1260
      %v1265 = vsel %vm283, %v1230, 0
      %v1268 = vsel %vm283, %v1239, 0
      %v1271 = vsel %vm283, %v1248, 0
      %v1274 = vsel %vm283, %v1257, 0
      %1276 = vmatprep.subr.bf16.mxu0 0
      %1277 = vmatpush1.bf16.msra.mxu0 0
      %1278 = vmatprep.subr.bf16.mxu0 0
      %1279 = vmatpush1.bf16.msra.mxu0 0
      %1280 = vmatprep.subr.bf16.mxu0 0
      %1281 = vmatpush1.bf16.msra.mxu0 0
      %1282 = vmatprep.subr.bf16.mxu0 0
      %1283 = vmatpush1.bf16.msra.mxu0 0
      %1284 = vmatprep.subr.bf16.mxu0 0
      %1285 = vmatpush1.bf16.msra.mxu0 0
      %1286 = vmatprep.subr.bf16.mxu0 0
      %1287 = vmatpush1.bf16.msra.mxu0 0
      %1288 = vmatprep.subr.bf16.mxu0 0
      %1289 = vmatpush1.bf16.msra.mxu0 0
      %1290 = vmatprep.subr.bf16.mxu0 0
      %1291 = vmatpush1.bf16.msra.mxu0 %v1262
      %1292 = vmatprep.subr.bf16.mxu0 0
      %1293 = vmatpush2.bf16.msra.mxu0 0
      %1294 = vmatprep.subr.bf16.mxu0 0
      %1295 = vmatpush2.bf16.msra.mxu0 0
      %1296 = vmatprep.subr.bf16.mxu0 0
      %1297 = vmatpush2.bf16.msra.mxu0 0
      %1298 = vmatprep.subr.bf16.mxu0 0
      %1299 = vmatpush2.bf16.msra.mxu0 0
      %1300 = vmatprep.subr.bf16.mxu0 0
      %1301 = vmatpush2.bf16.msra.mxu0 0
      %1302 = vmatprep.subr.bf16.mxu0 0
      %1303 = vmatpush2.bf16.msra.mxu0 0
      %1304 = vmatprep.subr.bf16.mxu0 0
      %1305 = vmatpush2.bf16.msra.mxu0 0
      %1306 = vmatprep.subr.bf16.mxu0 0
      %1307 = vmatpush2.bf16.msra.mxu0 0
      %1308 = vmatprep.mubr.bf16.mxu0 0
      %1309 = vmatmul.mubr.bf16.gmra.mxu0 %v1265
      %v1310 = vpop.f32.mrf.mxu0
      %v1311 = vadd.f32 0.0, %v1310
      %v1312 = vpop.f32.mrf.mxu0
      %v1313 = vpop.f32.mrf.mxu0
      %v1314 = vadd.f32 0.0, %v1313
      %v1315 = vpop.f32.mrf.mxu0
      %1316 = vmatprep.mubr.bf16.mxu0 0
      %1317 = vmatmul.mubr.bf16.gmra.mxu0 %v1268
      %v1318 = vpop.f32.mrf.mxu0
      %v1319 = vadd.f32 0.0, %v1318
      %v1320 = vpop.f32.mrf.mxu0
      %v1321 = vpop.f32.mrf.mxu0
      %v1322 = vadd.f32 0.0, %v1321
      %v1323 = vpop.f32.mrf.mxu0
      %1324 = vmatprep.mubr.bf16.mxu0 0
      %1325 = vmatmul.mubr.bf16.gmra.mxu0 %v1271
      %v1326 = vpop.f32.mrf.mxu0
      %v1327 = vadd.f32 0.0, %v1326
      %v1328 = vpop.f32.mrf.mxu0
      %v1329 = vpop.f32.mrf.mxu0
      %v1330 = vadd.f32 0.0, %v1329
      %v1331 = vpop.f32.mrf.mxu0
      %1332 = vmatprep.mubr.bf16.mxu0 0
      %1333 = vmatmul.mubr.bf16.gmra.mxu0 %v1274
      %v1334 = vpop.f32.mrf.mxu0
      %v1335 = vadd.f32 0.0, %v1334
      %v1336 = vpop.f32.mrf.mxu0
      %v1337 = vpop.f32.mrf.mxu0
      %v1338 = vadd.f32 0.0, %v1337
      %v1339 = vpop.f32.mrf.mxu0
      %1340 = vdwg.mxu0
      %v1341 = vadd.f32 %v1203, %v1311
      %v1342 = vadd.f32 %v1204, %v1314
      %v1343 = vadd.f32 %v1205, %v1319
      %v1344 = vadd.f32 %v1206, %v1322
      %v1345 = vadd.f32 %v1207, %v1327
      %v1346 = vadd.f32 %v1208, %v1330
      %v1347 = vadd.f32 %v1209, %v1335
      %v1348 = vadd.f32 %v1210, %v1338
      %v1349 = vld [vmem:[%s219 + $0x8] sm:$0xc]
      %v1350 = vld [vmem:[%s219 + $0x28] sm:$0x3]
      %s1351 = scalar_lea.vmem %s2, 64
      %v1352 = vld [vmem:[%s1351] sm:$0xf]
      %v1353 = vld [vmem:[%s1351 + $0x4] sm:$0xf]
      %v1356 = vunpack.c.l.b16 %v1349
      %v1357 = vunpack.c.l.b16 %v1350
      %v1358 = vpack.c.b16 %v1098, %v1356
      %v1359 = vpack.c.b16 %v1357, %v1357
      %vm1360 = vcmask 1045504
      %v1361 = vrot.slane %v1358, 2
      %v1362 = vrot.slane %v1107, 2
      %v1363 = vsel %vm1360, %v1361, %v1362
      %v1364 = vrot.slane %v1108, 2
      %v1365 = vsel %vm1360, %v1362, %v1364
      %v1366 = vrot.slane %v1109, 2
      %v1367 = vsel %vm1360, %v1364, %v1366
      %v1368 = vrot.slane %v1359, 2
      %v1369 = vsel %vm1360, %v1366, %v1368
      %v1372 = vunpack.c.l.b16 %v1352
      %v1373 = vunpack.c.l.b16 %v1353
      %v1374 = vpack.c.b16 %v1373, %v1372
      %v1377 = vsel %vm283, %v1363, 0
      %v1380 = vsel %vm283, %v1365, 0
      %v1383 = vsel %vm283, %v1367, 0
      %v1386 = vsel %vm283, %v1369, 0
      %1388 = vmatprep.subr.bf16.mxu0 0
      %1389 = vmatpush1.bf16.msra.mxu0 0
      %1390 = vmatprep.subr.bf16.mxu0 0
      %1391 = vmatpush1.bf16.msra.mxu0 0
      %1392 = vmatprep.subr.bf16.mxu0 0
      %1393 = vmatpush1.bf16.msra.mxu0 0
      %1394 = vmatprep.subr.bf16.mxu0 0
      %1395 = vmatpush1.bf16.msra.mxu0 0
      %1396 = vmatprep.subr.bf16.mxu0 0
      %1397 = vmatpush1.bf16.msra.mxu0 0
      %1398 = vmatprep.subr.bf16.mxu0 0
      %1399 = vmatpush1.bf16.msra.mxu0 0
      %1400 = vmatprep.subr.bf16.mxu0 0
      %1401 = vmatpush1.bf16.msra.mxu0 0
      %1402 = vmatprep.subr.bf16.mxu0 0
      %1403 = vmatpush1.bf16.msra.mxu0 %v1374
      %1404 = vmatprep.subr.bf16.mxu0 0
      %1405 = vmatpush2.bf16.msra.mxu0 0
      %1406 = vmatprep.subr.bf16.mxu0 0
      %1407 = vmatpush2.bf16.msra.mxu0 0
      %1408 = vmatprep.subr.bf16.mxu0 0
      %1409 = vmatpush2.bf16.msra.mxu0 0
      %1410 = vmatprep.subr.bf16.mxu0 0
      %1411 = vmatpush2.bf16.msra.mxu0 0
      %1412 = vmatprep.subr.bf16.mxu0 0
      %1413 = vmatpush2.bf16.msra.mxu0 0
      %1414 = vmatprep.subr.bf16.mxu0 0
      %1415 = vmatpush2.bf16.msra.mxu0 0
      %1416 = vmatprep.subr.bf16.mxu0 0
      %1417 = vmatpush2.bf16.msra.mxu0 0
      %1418 = vmatprep.subr.bf16.mxu0 0
      %1419 = vmatpush2.bf16.msra.mxu0 0
      %1420 = vmatprep.mubr.bf16.mxu0 0
      %1421 = vmatmul.mubr.bf16.gmra.mxu0 %v1377
      %v1422 = vpop.f32.mrf.mxu0
      %v1423 = vadd.f32 0.0, %v1422
      %v1424 = vpop.f32.mrf.mxu0
      %v1425 = vpop.f32.mrf.mxu0
      %v1426 = vadd.f32 0.0, %v1425
      %v1427 = vpop.f32.mrf.mxu0
      %1428 = vmatprep.mubr.bf16.mxu0 0
      %1429 = vmatmul.mubr.bf16.gmra.mxu0 %v1380
      %v1430 = vpop.f32.mrf.mxu0
      %v1431 = vadd.f32 0.0, %v1430
      %v1432 = vpop.f32.mrf.mxu0
      %v1433 = vpop.f32.mrf.mxu0
      %v1434 = vadd.f32 0.0, %v1433
      %v1435 = vpop.f32.mrf.mxu0
      %1436 = vmatprep.mubr.bf16.mxu0 0
      %1437 = vmatmul.mubr.bf16.gmra.mxu0 %v1383
      %v1438 = vpop.f32.mrf.mxu0
      %v1439 = vadd.f32 0.0, %v1438
      %v1440 = vpop.f32.mrf.mxu0
      %v1441 = vpop.f32.mrf.mxu0
      %v1442 = vadd.f32 0.0, %v1441
      %v1443 = vpop.f32.mrf.mxu0
      %1444 = vmatprep.mubr.bf16.mxu0 0
      %1445 = vmatmul.mubr.bf16.gmra.mxu0 %v1386
      %v1446 = vpop.f32.mrf.mxu0
      %v1447 = vadd.f32 0.0, %v1446
      %v1448 = vpop.f32.mrf.mxu0
      %v1449 = vpop.f32.mrf.mxu0
      %v1450 = vadd.f32 0.0, %v1449
      %v1451 = vpop.f32.mrf.mxu0
      %1452 = vdwg.mxu0
      %v1453 = vadd.f32 %v1341, %v1423
      %v1454 = vadd.f32 %v1342, %v1426
      %v1455 = vadd.f32 %v1343, %v1431
      %v1456 = vadd.f32 %v1344, %v1434
      %v1457 = vadd.f32 %v1345, %v1439
      %v1458 = vadd.f32 %v1346, %v1442
      %v1459 = vadd.f32 %v1347, %v1447
      %v1460 = vadd.f32 %v1348, %v1450
      %v1461 = vld [vmem:[%s4] sm:$0x1]
      %v1463 = vlaneseq
      %v1464 = vshrl.u32 %v1463, 7
      %v1465 = vsub.s32 0, %v1464
      %v1466 = vrot.slane %v1461, %v1465
      %v1468 = vadd.f32 %v1453, %v1466
      %v1469 = vadd.f32 %v1454, %v1466
      %v1470 = vadd.f32 %v1455, %v1466
      %v1471 = vadd.f32 %v1456, %v1466
      %v1472 = vadd.f32 %v1457, %v1466
      %v1473 = vadd.f32 %v1458, %v1466
      %v1474 = vadd.f32 %v1459, %v1466
      %v1475 = vadd.f32 %v1460, %v1466
      %1484 = vrot.lane.b32.xlu0 %v1468, 64
      %v1485 = vpop.permute.xlu0 %1484
      %1486 = vrot.lane.b32.xlu0 %v1469, 64
      %v1487 = vpop.permute.xlu0 %1486
      %1488 = vrot.lane.b32.xlu0 %v1470, 64
      %v1489 = vpop.permute.xlu0 %1488
      %1490 = vrot.lane.b32.xlu0 %v1471, 64
      %v1491 = vpop.permute.xlu0 %1490
      %1492 = vrot.lane.b32.xlu0 %v1472, 64
      %v1493 = vpop.permute.xlu0 %1492
      %1494 = vrot.lane.b32.xlu0 %v1473, 64
      %v1495 = vpop.permute.xlu0 %1494
      %1496 = vrot.lane.b32.xlu0 %v1474, 64
      %v1497 = vpop.permute.xlu0 %1496
      %1498 = vrot.lane.b32.xlu0 %v1475, 64
      %v1499 = vpop.permute.xlu0 %1498
      %vm1508 = vcmask 523264
      %v1509 = vsel %vm1508, %v331, %v1485
      %v1510 = vsel %vm1508, %v334, %v1487
      %v1511 = vsel %vm1508, %v339, %v1489
      %v1512 = vsel %vm1508, %v342, %v1491
      %v1513 = vsel %vm1508, %v347, %v1493
      %v1514 = vsel %vm1508, %v350, %v1495
      %v1515 = vsel %vm1508, %v355, %v1497
      %v1516 = vsel %vm1508, %v358, %v1499
      %v1517 = vmax.f32 %v1509, 0.0
      %v1518 = vmax.f32 %v1510, 0.0
      %v1519 = vmax.f32 %v1511, 0.0
      %v1520 = vmax.f32 %v1512, 0.0
      %v1521 = vmax.f32 %v1513, 0.0
      %v1522 = vmax.f32 %v1514, 0.0
      %v1523 = vmax.f32 %v1515, 0.0
      %v1524 = vmax.f32 %v1516, 0.0
      %v1525 = vpack.c.bf16 %v1518, %v1517
      %v1526 = vpack.c.bf16 %v1520, %v1519
      %v1527 = vpack.c.bf16 %v1522, %v1521
      %v1528 = vpack.c.bf16 %v1524, %v1523
      %v1533 = vunpack.c.l.b16 %v1525
      %v1534 = vunpack.c.h.b16 %v1525
      %v1535 = vunpack.c.l.b16 %v1526
      %v1536 = vunpack.c.h.b16 %v1526
      %v1537 = vunpack.c.l.b16 %v1527
      %v1538 = vunpack.c.h.b16 %v1527
      %v1539 = vunpack.c.l.b16 %v1528
      %v1540 = vunpack.c.h.b16 %v1528
      %v1541 = vpack.c.b16 %v1533, %v1533
      %v1542 = vpack.c.b16 %v1534, %v1534
      %v1543 = vpack.c.b16 %v1535, %v1535
      %v1544 = vpack.c.b16 %v1536, %v1536
      %v1545 = vpack.c.b16 %v1537, %v1537
      %v1546 = vpack.c.b16 %v1538, %v1538
      %v1547 = vpack.c.b16 %v1539, %v1539
      %v1548 = vpack.c.b16 %v1540, %v1540
      %1557 = vst [vmem:[%s224] sm:$0xf] %v1541
      %1558 = vst [vmem:[%s224 + $0x4] sm:$0xf] %v1542
      %1559 = vst [vmem:[%s224 + $0x8] sm:$0xf] %v1543
      %1560 = vst [vmem:[%s224 + $0xc] sm:$0xf] %v1544
      %1561 = vst [vmem:[%s224 + $0x10] sm:$0xf] %v1545
      %1562 = vst [vmem:[%s224 + $0x14] sm:$0xf] %v1546
      %1563 = vst [vmem:[%s224 + $0x18] sm:$0xf] %v1547
      %vm1564 = vcmask 1043456
      %vm1565 = vsmask.f32 3328
      %vm1566 = vmand %vm1564, %vm1565
      %v1567 = vld [vmem:[%s224 + $0x1c] sm:$0xf]
      %v1568 = vsel %vm1566, %v1548, %v1567
      %1569 = vst [vmem:[%s224 + $0x1c] sm:$0xf] %v1568
      %p1570 = scmp.lt.s32.totalorder %s16, 1
      %s1571 = scalar_select %p1570, %s16, 1
      %s1572 = smul.addr %s1571, 8
      %s1573 = smul.addr %s1572, 4
      %s1574 = scalar_lea.vmem %s5, %s1573
      // Predicated region
      $region41: #{lightweight_feat_forward.23} parent=39 // pred_check
        %p1575 = pneg %p144
      $region42: #{lightweight_feat_forward.23} parent=39 // pred_check_branch
        %1577 = sbr.rel (%p1575) target = $region44
      $region43: #{lightweight_feat_forward.23} parent=39 // pred_region
        _
      $region44: #{lightweight_feat_forward.23} parent=39 // pred_fallthru
        _
    $region40: #{lightweight_feat_forward.23} parent=5 // pred_fallthru
      _
    %p1578 = scmp.le.s32.totalorder 2, %s11
    // Predicated region
    $region45: #{lightweight_feat_forward.23} parent=5 // pred_check
      %p1579 = pneg %p1578
    $region46: #{lightweight_feat_forward.23} parent=5 // pred_check_branch
      %1581 = sbr.rel (%p1579) target = $region48
    $region47: #{lightweight_feat_forward.23} parent=5 // pred_region
      %s1582 = ssub.s32 %s11, 2
      // Predicated region
      $region49: #{lightweight_feat_forward.23} parent=47 // pred_check
        %p1583 = pneg %p150
      $region50: #{lightweight_feat_forward.23} parent=47 // pred_check_branch
        %1585 = sbr.rel (%p1583) target = $region52
      $region51: #{lightweight_feat_forward.23} parent=47 // pred_region
        %p1586 = scmp.lt.s32.totalorder %s17, 1
        %s1587 = scalar_select %p1586, %s17, 1
        %s1588 = smul.addr %s1587, 8
        %s1589 = smul.addr %s1588, 4
        %s1590 = scalar_lea.vmem %s5, %s1589
      $region52: #{lightweight_feat_forward.23} parent=47 // pred_fallthru
        _
    $region48: #{lightweight_feat_forward.23} parent=5 // pred_fallthru
      _
  $region6: #{lightweight_feat_forward.23} parent=0 // loop_footer
    %s15 = sadd.s32 1, %s11
  $region7: #{lightweight_feat_forward.23} parent=0 // loop_footer_branch
    %10 = sbr.rel target = $region3
  $region8: #{lightweight_feat_forward.23} parent=0 // loop_exit
    _

// kernel: lightweight_feat_forward.31
$region0: #{lightweight_feat_forward.31}
  #allocation0 [shape = 'u32[]', space=smem, size = 0x4, offset = 0x4, fixed_abs, tag = 'smem constant byte address 0x4 - core index']
  #allocation1 [shape = 'u32[144,128]{1,0:T(1,128)}', space=vmem, size = 0x12000, scoped, tag = 'internal scratch']
  %s0 = inlined_call_operand.vmem [shape: bf16[2,3,3,256], index: 0, kind: input, shape index: {}]
  %s1 = inlined_call_operand.vmem [shape: bf16[2,1,1,256], index: 1, kind: output, shape index: {}]
  %s2 = sld [smem:[#allocation0]]
  $region71: #{lightweight_feat_forward.31} parent=0
    _
  %s4 = ssub.s32 1, %s2
  %s5 = scalar_select 0, %s4, %s2
  $region1: #{lightweight_feat_forward.31} parent=0
    #allocation2 [shape = 'u8[6144]{0}', space=vmem, size = 0x1800, scoped, tag = 'input window, operand 0']
    loop: start=0, step=1, limit=6
    $region2: #{lightweight_feat_forward.31} parent=1 // loop_pre_header
      _
    $region3: #{lightweight_feat_forward.31} parent=1 // loop_header
      %s7 = sphi 0, %s11
      %p8 = scmp.ge.s32.totalorder %s7, 6
      %s14 = sphi 0, %s26
      %s15 = sphi 0, %s22
      %s16 = sphi 0, %s14
      %s17 = sphi 0, %s15
      %s18 = sphi 0, %s16
      %s19 = sphi 0, %s17
      %s31 = sphi 0, %s33
      %s34 = sphi 0, %s31
      %s35 = sphi 0, %s34
      %s51 = sphi 0, %s35
      %s59 = sphi 0, %s61
      %s62 = sphi 0, %s59
      %s63 = sphi 0, %s62
      %s79 = sphi 0, %s63
    $region4: #{lightweight_feat_forward.31} parent=1 // loop_header_branch
      %10 = sbr.rel (%p8) target = $region8
    $region5: #{lightweight_feat_forward.31} parent=1 // loop_body
      %s12 = ssub.s32 %s7, 1
      %s13 = ssub.s32 %s7, 2
      %s20 = sadd.s32 1, %s15
      %p21 = scmp.ge.s32.totalorder %s20, 2
      %s22 = scalar_select %p21, 0, %s20
      %s23 = sadd.s32 1, %s14
      %s24 = scalar_select %p21, %s23, %s14
      %p25 = scmp.ge.s32.totalorder %s24, 2
      %s26 = scalar_select %p25, 0, %s24
      %s27 = ssub.s32 %s14, %s26
      %s28 = ssub.s32 %s15, %s22
      %s29 = sor.u32 %s27, %s28
      %p30 = scmp.eq.s32.totalorder %s29, 0
      %s32 = sadd.s32 %s31, 1
      %s33 = scalar_select %p30, %s31, %s32
      %p36 = pneg %p30
      %p37 = scmp.eq.s32.totalorder %s7, 3
      %p38 = por %p36, %p37
      %p39 = scmp.ne.s32.totalorder %s31, %s34
      %p40 = scmp.eq.s32.totalorder %s7, 0
      %p41 = por %p39, %p40
      %p42 = scmp.ne.s32.totalorder %s31, %s34
      %p43 = scmp.eq.s32.totalorder %s12, 3
      %p44 = por %p42, %p43
      %p45 = scmp.ne.s32.totalorder %s34, %s35
      %p46 = scmp.eq.s32.totalorder %s12, 0
      %p47 = por %p45, %p46
      %p48 = scmp.ne.s32.totalorder %s34, %s35
      %p49 = scmp.eq.s32.totalorder %s13, 3
      %p50 = por %p48, %p49
      %p52 = scmp.ne.s32.totalorder %s35, %s51
      %p53 = scmp.eq.s32.totalorder %s13, 0
      %p54 = por %p52, %p53
      %s55 = ssub.s32 %s14, %s26
      %s56 = ssub.s32 %s15, %s22
      %s57 = sor.u32 %s55, %s56
      %p58 = scmp.eq.s32.totalorder %s57, 0
      %s60 = sadd.s32 %s59, 1
      %s61 = scalar_select %p58, %s59, %s60
      %p64 = pneg %p58
      %p65 = scmp.eq.s32.totalorder %s7, 3
      %p66 = por %p64, %p65
      %p67 = scmp.ne.s32.totalorder %s59, %s62
      %p68 = scmp.eq.s32.totalorder %s7, 0
      %p69 = por %p67, %p68
      %p70 = scmp.ne.s32.totalorder %s59, %s62
      %p71 = scmp.eq.s32.totalorder %s12, 3
      %p72 = por %p70, %p71
      %p73 = scmp.ne.s32.totalorder %s62, %s63
      %p74 = scmp.eq.s32.totalorder %s12, 0
      %p75 = por %p73, %p74
      %p76 = scmp.ne.s32.totalorder %s62, %s63
      %p77 = scmp.eq.s32.totalorder %s13, 3
      %p78 = por %p76, %p77
      %p80 = scmp.ne.s32.totalorder %s63, %s79
      %p81 = scmp.eq.s32.totalorder %s13, 0
      %p82 = por %p80, %p81
      %p83 = scmp.le.s32.totalorder 1, %s7
      %p84 = scmp.lt.s32.totalorder %s7, 5
      %p85 = pnand %p83, %p84
      %p86 = pneg %p85
      // Predicated region
      $region9: #{lightweight_feat_forward.31} parent=5 // pred_check
        _
      $region10: #{lightweight_feat_forward.31} parent=5 // pred_check_branch
        %88 = sbr.rel (%p85) target = $region12
      $region11: #{lightweight_feat_forward.31} parent=5 // pred_region
        %s89 = ssub.s32 %s7, 1
      $region12: #{lightweight_feat_forward.31} parent=5 // pred_fallthru
        _
      %p90 = scmp.lt.s32.totalorder %s7, 4
      // Predicated region
      $region13: #{lightweight_feat_forward.31} parent=5 // pred_check
        %p91 = pneg %p90
      $region14: #{lightweight_feat_forward.31} parent=5 // pred_check_branch
        %93 = sbr.rel (%p91) target = $region16
      $region15: #{lightweight_feat_forward.31} parent=5 // pred_region
        // Predicated region
        $region17: #{lightweight_feat_forward.31} parent=15 // pred_check
          %p94 = pneg %p41
        $region18: #{lightweight_feat_forward.31} parent=15 // pred_check_branch
          %96 = sbr.rel (%p94) target = $region20
        $region19: #{lightweight_feat_forward.31} parent=15 // pred_region
          %s97 = sand.u32 %s31, 1
          %s98 = sand.u32 %s31, 1
          %s99 = smul.addr %s98, 6
          %s100 = scalar_lea.vmem [#allocation2], %s99
          %s101 = smul.addr %s14, 6
          %s102 = sadd.s32 %s15, %s101
          %s103 = smul.addr %s102, 2
          %s104 = scalar_lea.vmem %s0, %s103
          // Predicated region
          $region21: #{lightweight_feat_forward.31} parent=19 // pred_check
            _
          $region22: #{lightweight_feat_forward.31} parent=19 // pred_check_branch
            %106 = sbr.rel (0) target = $region24
          $region23: #{lightweight_feat_forward.31} parent=19 // pred_region
            // Predicated region
            $region25: #{lightweight_feat_forward.31} parent=23 // pred_check
              _
            $region26: #{lightweight_feat_forward.31} parent=23 // pred_check_branch
              %108 = sbr.rel target = $region28
            $region27: #{lightweight_feat_forward.31} parent=23 // pred_region
              // Predicated region
              $region40: #{lightweight_feat_forward.31} parent=27 // pred_check
                _
              $region41: #{lightweight_feat_forward.31} parent=27 // pred_check_branch
                %128 = sbr.rel (0) target = $region43
              $region42: #{lightweight_feat_forward.31} parent=27 // pred_region
                %s130 = ssub.s32 4, 1
                loop: start=0, step=1, limit=1
                $region44: #{lightweight_feat_forward.31} parent=42 // loop_pre_header
                  _
                $region45: #{lightweight_feat_forward.31} parent=42 // loop_header
                  %s132 = sphi 0, %s136
                  %p133 = scmp.ge.s32.totalorder %s132, 1
                  %s137 = sphi %s104, %s104
                  %s138 = sphi %s100, %s100
                $region46: #{lightweight_feat_forward.31} parent=42 // loop_header_branch
                  %135 = sbr.rel (%p133) target = $region50
                $region47: #{lightweight_feat_forward.31} parent=42 // loop_body
                  %v139 = vld [vmem:[%s137] sm:%s130]
                  %140 = vst [vmem:[%s138] sm:%s130] %v139
                  %v141 = vld [vmem:[%s137 + $0x4] sm:%s130]
                  %142 = vst [vmem:[%s138 + $0x2] sm:%s130] %v141
                  %v143 = vld [vmem:[%s137 + $0x8] sm:%s130]
                  %144 = vst [vmem:[%s138 + $0x4] sm:%s130] %v143
                $region48: #{lightweight_feat_forward.31} parent=42 // loop_footer
                  %s136 = sadd.s32 1, %s132
                $region49: #{lightweight_feat_forward.31} parent=42 // loop_footer_branch
                  %131 = sbr.rel target = $region45
                $region50: #{lightweight_feat_forward.31} parent=42 // loop_exit
                  _
              $region43: #{lightweight_feat_forward.31} parent=27 // pred_fallthru
                _
            $region28: #{lightweight_feat_forward.31} parent=23 // pred_fallthru
              _
            // Predicated region
            $region29: #{lightweight_feat_forward.31} parent=23 // pred_check
              _
            $region30: #{lightweight_feat_forward.31} parent=23 // pred_check_branch
              %110 = sbr.rel (0) target = $region32
            $region31: #{lightweight_feat_forward.31} parent=23 // pred_region
              %s112 = ssub.s32 4, 1
              loop: start=0, step=1, limit=1
              $region33: #{lightweight_feat_forward.31} parent=31 // loop_pre_header
                _
              $region34: #{lightweight_feat_forward.31} parent=31 // loop_header
                %s114 = sphi 0, %s118
                %p115 = scmp.ge.s32.totalorder %s114, 1
                %s119 = sphi %s104, %s104
                %s120 = sphi %s100, %s100
              $region35: #{lightweight_feat_forward.31} parent=31 // loop_header_branch
                %117 = sbr.rel (%p115) target = $region39
              $region36: #{lightweight_feat_forward.31} parent=31 // loop_body
                %v121 = vld [vmem:[%s119] sm:%s112]
                %122 = vst [vmem:[%s120] sm:%s112] %v121
                %v123 = vld [vmem:[%s119 + $0x4] sm:%s112]
                %124 = vst [vmem:[%s120 + $0x2] sm:%s112] %v123
                %v125 = vld [vmem:[%s119 + $0x8] sm:%s112]
                %126 = vst [vmem:[%s120 + $0x4] sm:%s112] %v125
              $region37: #{lightweight_feat_forward.31} parent=31 // loop_footer
                %s118 = sadd.s32 1, %s114
              $region38: #{lightweight_feat_forward.31} parent=31 // loop_footer_branch
                %113 = sbr.rel target = $region34
              $region39: #{lightweight_feat_forward.31} parent=31 // loop_exit
                _
            $region32: #{lightweight_feat_forward.31} parent=23 // pred_fallthru
              _
          $region24: #{lightweight_feat_forward.31} parent=19 // pred_fallthru
            _
          %145 = vnop
        $region20: #{lightweight_feat_forward.31} parent=15 // pred_fallthru
          _
      $region16: #{lightweight_feat_forward.31} parent=5 // pred_fallthru
        _
      %p146 = scmp.le.s32.totalorder 1, %s7
      %p147 = scmp.lt.s32.totalorder %s7, 5
      %p148 = pnand %p146, %p147
      %p149 = pneg %p148
      // Predicated region
      $region51: #{lightweight_feat_forward.31} parent=5 // pred_check
        _
      $region52: #{lightweight_feat_forward.31} parent=5 // pred_check_branch
        %151 = sbr.rel (%p148) target = $region54
      $region53: #{lightweight_feat_forward.31} parent=5 // pred_region
        %s152 = ssub.s32 %s7, 1
        %s153 = sand.u32 %s34, 1
        %s154 = sand.u32 %s34, 1
        %s155 = smul.addr %s154, 6
        %s156 = scalar_lea.vmem [#allocation2], %s155
        // Predicated region
        $region55: #{lightweight_feat_forward.31} parent=53 // pred_check
          %p157 = pneg %p47
        $region56: #{lightweight_feat_forward.31} parent=53 // pred_check_branch
          %159 = sbr.rel (%p157) target = $region58
        $region57: #{lightweight_feat_forward.31} parent=53 // pred_region
          _
        $region58: #{lightweight_feat_forward.31} parent=53 // pred_fallthru
          _
        %s160 = sand.u32 %s34, 1
        %s161 = sand.u32 %s34, 1
        %s162 = smul.addr %s161, 6
        %s163 = scalar_lea.vmem [#allocation2], %s162
        %p164 = pneg %p47
        %p165 = pneg %p44
        %p166 = pneg %p75
        %p167 = pneg %p72
        %p168 = scmp.lt.s32.totalorder %s16, 1
        %s169 = scalar_select %p168, %s16, 1
        %p170 = scmp.lt.s32.totalorder %s17, 1
        %s171 = scalar_select %p170, %s17, 1
        %s172 = smul.addr %s169, 2
        %s173 = sadd.s32 %s171, %s172
        %s174 = scalar_lea.vmem %s1, %s173
        %p175 = scmp.lt.s32.totalorder %s16, 1
        %s176 = scalar_select %p175, %s16, 1
        %p177 = scmp.lt.s32.totalorder %s17, 1
        %s178 = scalar_select %p177, %s17, 1
        %s179 = smul.addr %s176, 2
        %s180 = sadd.s32 %s178, %s179
        %s181 = scalar_lea.vmem %s1, %s180
        %v182 = vld [vmem:[%s156] sm:$0x3]
        %s183 = scalar_lea.vmem %s156, 2 [#allocation2]
        %v184 = vld [vmem:[%s183] sm:$0x3]
        %v185 = vmax.bf16 %v182, %v184
        %s186 = scalar_lea.vmem %s156, 4 [#allocation2]
        %v187 = vld [vmem:[%s186] sm:$0x3]
        %v188 = vmax.bf16 %v185, %v187
        %v190 = vshrl.u32 %v188, 16
        %v192 = vrot.slane %v190, 6
        %v193 = vrot.slane %v192, 2
        %v195 = vmax.bf16 %v188, %v193
        %v197 = vrot.slane %v188, 7
        %v198 = vrot.slane %v197, 2
        %v200 = vmax.bf16 %v195, %v198
        %vm201 = vcmask 1040384
        %vm202 = vsmask.f32 256
        %vm203 = vmand %vm201, %vm202
        %v204 = vld [vmem:[%s181] sm:$0x1]
        %v205 = vsel %vm203, %v200, %v204
        %206 = vst [vmem:[%s181] sm:$0x1] %v205
        %p207 = scmp.lt.s32.totalorder %s16, 1
        %s208 = scalar_select %p207, %s16, 1
        %p209 = scmp.lt.s32.totalorder %s17, 1
        %s210 = scalar_select %p209, %s17, 1
        %s211 = smul.addr %s208, 2
        %s212 = sadd.s32 %s210, %s211
        %s213 = scalar_lea.vmem %s1, %s212
        // Predicated region
        $region59: #{lightweight_feat_forward.31} parent=53 // pred_check
          %p214 = pneg %p72
        $region60: #{lightweight_feat_forward.31} parent=53 // pred_check_branch
          %216 = sbr.rel (%p214) target = $region62
        $region61: #{lightweight_feat_forward.31} parent=53 // pred_region
          _
        $region62: #{lightweight_feat_forward.31} parent=53 // pred_fallthru
          _
      $region54: #{lightweight_feat_forward.31} parent=5 // pred_fallthru
        _
      %p217 = scmp.le.s32.totalorder 2, %s7
      // Predicated region
      $region63: #{lightweight_feat_forward.31} parent=5 // pred_check
        %p218 = pneg %p217
      $region64: #{lightweight_feat_forward.31} parent=5 // pred_check_branch
        %220 = sbr.rel (%p218) target = $region66
      $region65: #{lightweight_feat_forward.31} parent=5 // pred_region
        %s221 = ssub.s32 %s7, 2
        // Predicated region
        $region67: #{lightweight_feat_forward.31} parent=65 // pred_check
          %p222 = pneg %p78
        $region68: #{lightweight_feat_forward.31} parent=65 // pred_check_branch
          %224 = sbr.rel (%p222) target = $region70
        $region69: #{lightweight_feat_forward.31} parent=65 // pred_region
          %p225 = scmp.lt.s32.totalorder %s18, 1
          %s226 = scalar_select %p225, %s18, 1
          %p227 = scmp.lt.s32.totalorder %s19, 1
          %s228 = scalar_select %p227, %s19, 1
          %s229 = smul.addr %s226, 2
          %s230 = sadd.s32 %s228, %s229
          %s231 = scalar_lea.vmem %s1, %s230
        $region70: #{lightweight_feat_forward.31} parent=65 // pred_fallthru
          _
      $region66: #{lightweight_feat_forward.31} parent=5 // pred_fallthru
        _
    $region6: #{lightweight_feat_forward.31} parent=1 // loop_footer
      %s11 = sadd.s32 1, %s7
    $region7: #{lightweight_feat_forward.31} parent=1 // loop_footer_branch
      %6 = sbr.rel target = $region3
    $region8: #{lightweight_feat_forward.31} parent=1 // loop_exit
      _

// kernel: lightweight_feat_forward.29
$region0: #{lightweight_feat_forward.29}
  #allocation0 [shape = 'u32[]', space=smem, size = 0x4, offset = 0x4, fixed_abs, tag = 'smem constant byte address 0x4 - core index']
  #allocation1 [shape = 'u32[144,128]{1,0:T(1,128)}', space=vmem, size = 0x12000, scoped, tag = 'internal scratch']
  %s0 = inlined_call_operand.vmem [shape: bf16[18,256], index: 0, kind: input, shape index: {}]
  %s1 = inlined_call_operand.vmem [shape: bf16[256,32], index: 1, kind: input, shape index: {}]
  %s2 = inlined_call_operand.vmem [shape: f32[1,32], index: 2, kind: input, shape index: {}]
  %s3 = inlined_call_operand.vmem [shape: bf16[18,32], index: 3, kind: output, shape index: {}]
  %s4 = sld [smem:[#allocation0]]
  $region22: #{lightweight_feat_forward.29} parent=0
    _
  %s6 = ssub.s32 1, %s4
  %s7 = scalar_select 0, %s6, %s4
  // Predicated region
  $region2: #{lightweight_feat_forward.29} parent=0 // pred_check
    _
  $region3: #{lightweight_feat_forward.29} parent=0 // pred_check_branch
    %9 = sbr.rel (0) target = $region5
  $region4: #{lightweight_feat_forward.29} parent=0 // pred_region
    _
  $region5: #{lightweight_feat_forward.29} parent=0 // pred_fallthru
    _
  // Predicated region
  $region6: #{lightweight_feat_forward.29} parent=0 // pred_check
    _
  $region7: #{lightweight_feat_forward.29} parent=0 // pred_check_branch
    %11 = sbr.rel (0) target = $region9
  $region8: #{lightweight_feat_forward.29} parent=0 // pred_region
    _
  $region9: #{lightweight_feat_forward.29} parent=0 // pred_fallthru
    _
  // Predicated region
  $region10: #{lightweight_feat_forward.29} parent=0 // pred_check
    _
  $region11: #{lightweight_feat_forward.29} parent=0 // pred_check_branch
    %13 = sbr.rel (0) target = $region13
  $region12: #{lightweight_feat_forward.29} parent=0 // pred_region
    _
  $region13: #{lightweight_feat_forward.29} parent=0 // pred_fallthru
    _
  %v15 = vld [vmem:[%s0] sm:$0xff]
  %v16 = vld [vmem:[%s0 + $0x8] sm:$0xff]
  %v17 = vld [vmem:[%s0 + $0x10] sm:$0x11]
  %v18 = vld [vmem:[%s1] sm:$0xf]
  %v19 = vld [vmem:[%s1 + $0x4] sm:$0xf]
  %v20 = vld [vmem:[%s1 + $0x8] sm:$0xf]
  %v21 = vld [vmem:[%s1 + $0xc] sm:$0xf]
  %v22 = vld [vmem:[%s1 + $0x10] sm:$0xf]
  %v23 = vld [vmem:[%s1 + $0x14] sm:$0xf]
  %v24 = vld [vmem:[%s1 + $0x18] sm:$0xf]
  %v25 = vld [vmem:[%s1 + $0x1c] sm:$0xf]
  %v26 = vld [vmem:[%s1 + $0x20] sm:$0xf]
  %v27 = vld [vmem:[%s1 + $0x24] sm:$0xf]
  %v28 = vld [vmem:[%s1 + $0x28] sm:$0xf]
  %v29 = vld [vmem:[%s1 + $0x2c] sm:$0xf]
  %v30 = vld [vmem:[%s1 + $0x30] sm:$0xf]
  %v31 = vld [vmem:[%s1 + $0x34] sm:$0xf]
  %v32 = vld [vmem:[%s1 + $0x38] sm:$0xf]
  %v33 = vld [vmem:[%s1 + $0x3c] sm:$0xf]
  %v34 = vld [vmem:[%s1 + $0x40] sm:$0xf]
  %v35 = vld [vmem:[%s1 + $0x44] sm:$0xf]
  %v36 = vld [vmem:[%s1 + $0x48] sm:$0xf]
  %v37 = vld [vmem:[%s1 + $0x4c] sm:$0xf]
  %v38 = vld [vmem:[%s1 + $0x50] sm:$0xf]
  %v39 = vld [vmem:[%s1 + $0x54] sm:$0xf]
  %v40 = vld [vmem:[%s1 + $0x58] sm:$0xf]
  %v41 = vld [vmem:[%s1 + $0x5c] sm:$0xf]
  %v42 = vld [vmem:[%s1 + $0x60] sm:$0xf]
  %v43 = vld [vmem:[%s1 + $0x64] sm:$0xf]
  %v44 = vld [vmem:[%s1 + $0x68] sm:$0xf]
  %v45 = vld [vmem:[%s1 + $0x6c] sm:$0xf]
  %v46 = vld [vmem:[%s1 + $0x70] sm:$0xf]
  %v47 = vld [vmem:[%s1 + $0x74] sm:$0xf]
  %v48 = vld [vmem:[%s1 + $0x78] sm:$0xf]
  %v49 = vld [vmem:[%s1 + $0x7c] sm:$0xf]
  %v50 = vld [vmem:[%s2] sm:$0x1]
  %v52 = vlaneseq
  %v53 = vshrl.u32 %v52, 7
  %v54 = vsub.s32 0, %v53
  %v55 = vrot.slane %v50, %v54
  %v60 = vunpack.c.l.b16 %v15
  %v61 = vunpack.c.h.b16 %v15
  %v62 = vunpack.c.l.b16 %v16
  %v63 = vunpack.c.h.b16 %v16
  %v64 = vunpack.c.l.b16 %v17
  %v65 = vunpack.c.h.b16 %v17
  %v66 = vpack.c.b16 %v62, %v60
  %v67 = vpack.c.b16 %v63, %v61
  %v68 = vpack.c.b16 %v64, %v64
  %v69 = vpack.c.b16 %v65, %v65
  %v106 = vunpack.c.l.b16 %v18
  %v107 = vunpack.c.l.b16 %v19
  %v108 = vunpack.c.l.b16 %v20
  %v109 = vunpack.c.l.b16 %v21
  %v110 = vunpack.c.l.b16 %v22
  %v111 = vunpack.c.l.b16 %v23
  %v112 = vunpack.c.l.b16 %v24
  %v113 = vunpack.c.l.b16 %v25
  %v114 = vunpack.c.l.b16 %v26
  %v115 = vunpack.c.l.b16 %v27
  %v116 = vunpack.c.l.b16 %v28
  %v117 = vunpack.c.l.b16 %v29
  %v118 = vunpack.c.l.b16 %v30
  %v119 = vunpack.c.l.b16 %v31
  %v120 = vunpack.c.l.b16 %v32
  %v121 = vunpack.c.l.b16 %v33
  %v122 = vunpack.c.l.b16 %v34
  %v123 = vunpack.c.l.b16 %v35
  %v124 = vunpack.c.l.b16 %v36
  %v125 = vunpack.c.l.b16 %v37
  %v126 = vunpack.c.l.b16 %v38
  %v127 = vunpack.c.l.b16 %v39
  %v128 = vunpack.c.l.b16 %v40
  %v129 = vunpack.c.l.b16 %v41
  %v130 = vunpack.c.l.b16 %v42
  %v131 = vunpack.c.l.b16 %v43
  %v132 = vunpack.c.l.b16 %v44
  %v133 = vunpack.c.l.b16 %v45
  %v134 = vunpack.c.l.b16 %v46
  %v135 = vunpack.c.l.b16 %v47
  %v136 = vunpack.c.l.b16 %v48
  %v137 = vunpack.c.l.b16 %v49
  %v138 = vpack.c.b16 %v107, %v106
  %v139 = vpack.c.b16 %v109, %v108
  %v140 = vpack.c.b16 %v111, %v110
  %v141 = vpack.c.b16 %v113, %v112
  %v142 = vpack.c.b16 %v115, %v114
  %v143 = vpack.c.b16 %v117, %v116
  %v144 = vpack.c.b16 %v119, %v118
  %v145 = vpack.c.b16 %v121, %v120
  %v146 = vpack.c.b16 %v123, %v122
  %v147 = vpack.c.b16 %v125, %v124
  %v148 = vpack.c.b16 %v127, %v126
  %v149 = vpack.c.b16 %v129, %v128
  %v150 = vpack.c.b16 %v131, %v130
  %v151 = vpack.c.b16 %v133, %v132
  %v152 = vpack.c.b16 %v135, %v134
  %v153 = vpack.c.b16 %v137, %v136
  %170 = vmatprep.subr.bf16.mxu0 0
  %171 = vmatpush1.bf16.msra.mxu0 %v145
  %172 = vmatprep.subr.bf16.mxu0 0
  %173 = vmatpush1.bf16.msra.mxu0 %v144
  %174 = vmatprep.subr.bf16.mxu0 0
  %175 = vmatpush1.bf16.msra.mxu0 %v143
  %176 = vmatprep.subr.bf16.mxu0 0
  %177 = vmatpush1.bf16.msra.mxu0 %v142
  %178 = vmatprep.subr.bf16.mxu0 0
  %179 = vmatpush1.bf16.msra.mxu0 %v141
  %180 = vmatprep.subr.bf16.mxu0 0
  %181 = vmatpush1.bf16.msra.mxu0 %v140
  %182 = vmatprep.subr.bf16.mxu0 0
  %183 = vmatpush1.bf16.msra.mxu0 %v139
  %184 = vmatprep.subr.bf16.mxu0 0
  %185 = vmatpush1.bf16.msra.mxu0 %v138
  %186 = vmatprep.subr.bf16.mxu0 0
  %187 = vmatpush2.bf16.msra.mxu0 %v153
  %188 = vmatprep.subr.bf16.mxu0 0
  %189 = vmatpush2.bf16.msra.mxu0 %v152
  %190 = vmatprep.subr.bf16.mxu0 0
  %191 = vmatpush2.bf16.msra.mxu0 %v151
  %192 = vmatprep.subr.bf16.mxu0 0
  %193 = vmatpush2.bf16.msra.mxu0 %v150
  %194 = vmatprep.subr.bf16.mxu0 0
  %195 = vmatpush2.bf16.msra.mxu0 %v149
  %196 = vmatprep.subr.bf16.mxu0 0
  %197 = vmatpush2.bf16.msra.mxu0 %v148
  %198 = vmatprep.subr.bf16.mxu0 0
  %199 = vmatpush2.bf16.msra.mxu0 %v147
  %200 = vmatprep.subr.bf16.mxu0 0
  %201 = vmatpush2.bf16.msra.mxu0 %v146
  %202 = vmatprep.mubr.bf16.mxu0 %v67
  %203 = vmatmul.mubr.bf16.gmra.mxu0 %v66
  %v204 = vpop.f32.mrf.mxu0
  %v205 = vadd.f32 %v55, %v204
  %v206 = vpop.f32.mrf.mxu0
  %v207 = vpop.f32.mrf.mxu0
  %v208 = vadd.f32 %v55, %v207
  %v209 = vpop.f32.mrf.mxu0
  %210 = vmatprep.mubr.bf16.mxu0 %v69
  %211 = vmatmul.mubr.bf16.gmra.mxu0 %v68
  %v212 = vpop.f32.mrf.mxu0
  %v213 = vadd.f32 %v55, %v212
  %v214 = vpop.f32.mrf.mxu0
  %v215 = vpop.f32.mrf.mxu0
  %v216 = vpop.f32.mrf.mxu0
  %217 = vdwg.mxu0
  %v218 = vmax.f32 %v205, 0.0
  %v219 = vmax.f32 %v208, 0.0
  %v220 = vmax.f32 %v213, 0.0
  %v221 = vpack.c.bf16 %v219, %v218
  %v222 = vpack.c.bf16 %v220, %v220
  %v225 = vunpack.c.l.b16 %v221
  %v226 = vunpack.c.h.b16 %v221
  %v227 = vunpack.c.l.b16 %v222
  %v228 = vpack.c.b16 %v225, %v225
  %v229 = vpack.c.b16 %v226, %v226
  %v230 = vpack.c.b16 %v227, %v227
  %vm234 = vcmask 257024
  %235 = vst.msk [vmem:[%s3] sm:$0xf] %vm234, %v228
  %236 = vst.msk [vmem:[%s3 + $0x4] sm:$0xf] %vm234, %v229
  %vm237 = vcmask 253952
  %238 = vst.msk [vmem:[%s3 + $0x8] sm:$0x1] %vm237, %v230
  // Predicated region
  $region14: #{lightweight_feat_forward.29} parent=0 // pred_check
    _
  $region15: #{lightweight_feat_forward.29} parent=0 // pred_check_branch
    %240 = sbr.rel (0) target = $region17
  $region16: #{lightweight_feat_forward.29} parent=0 // pred_region
    _
  $region17: #{lightweight_feat_forward.29} parent=0 // pred_fallthru
    _
  // Predicated region
  $region18: #{lightweight_feat_forward.29} parent=0 // pred_check
    _
  $region19: #{lightweight_feat_forward.29} parent=0 // pred_check_branch
    %242 = sbr.rel (0) target = $region21
  $region20: #{lightweight_feat_forward.29} parent=0 // pred_region
    _
  $region21: #{lightweight_feat_forward.29} parent=0 // pred_fallthru
    _

// kernel: lightweight_feat_forward.28
$region0: #{lightweight_feat_forward.28}
  #allocation0 [shape = 'u32[]', space=smem, size = 0x4, offset = 0x4, fixed_abs, tag = 'smem constant byte address 0x4 - core index']
  #allocation1 [shape = 'u32[144,128]{1,0:T(1,128)}', space=vmem, size = 0x12000, scoped, tag = 'internal scratch']
  %s0 = inlined_call_operand.vmem [shape: bf16[2,33,32], index: 0, kind: input, shape index: {}]
  %s1 = inlined_call_operand.vmem [shape: bf16[32,128], index: 1, kind: input, shape index: {}]
  %s2 = inlined_call_operand.vmem [shape: bf16[9,32,128], index: 2, kind: input, shape index: {}]
  %s3 = inlined_call_operand.vmem [shape: f32[1,128], index: 3, kind: input, shape index: {}]
  %s4 = inlined_call_operand.vmem [shape: f32[1,128], index: 4, kind: input, shape index: {}]
  %s5 = inlined_call_operand.vmem [shape: bf16[2,15,256], index: 5, kind: output, shape index: {}]
  %s6 = sld [smem:[#allocation0]]
  $region53: #{lightweight_feat_forward.28} parent=0
    _
  %s8 = ssub.s32 1, %s6
  %s9 = scalar_select 0, %s8, %s6
  loop: start=0, step=1, limit=4
  $region2: #{lightweight_feat_forward.28} parent=0 // loop_pre_header
    _
  $region3: #{lightweight_feat_forward.28} parent=0 // loop_header
    %s11 = sphi 0, %s15
    %p12 = scmp.ge.s32.totalorder %s11, 4
    %s21 = sphi 0, %s23
    %s24 = sphi 0, %s21
    %s25 = sphi 0, %s24
    %s41 = sphi 0, %s25
    %s45 = sphi 0, %s45
    %s47 = sphi 0, %s45
    %s48 = sphi 0, %s47
    %s62 = sphi 0, %s48
    %s66 = sphi 0, %s66
    %s68 = sphi 0, %s66
    %s69 = sphi 0, %s68
    %s83 = sphi 0, %s69
    %s87 = sphi 0, %s87
    %s89 = sphi 0, %s87
    %s90 = sphi 0, %s89
    %s104 = sphi 0, %s90
    %s108 = sphi 0, %s108
    %s110 = sphi 0, %s108
    %s111 = sphi 0, %s110
    %s125 = sphi 0, %s111
    %s131 = sphi 0, %s133
    %s134 = sphi 0, %s131
    %s135 = sphi 0, %s134
    %s151 = sphi 0, %s135
  $region4: #{lightweight_feat_forward.28} parent=0 // loop_header_branch
    %14 = sbr.rel (%p12) target = $region8
  $region5: #{lightweight_feat_forward.28} parent=0 // loop_body
    %s16 = ssub.s32 %s11, 1
    %s17 = ssub.s32 %s11, 2
    %s18 = sadd.s32 %s11, 1
    %s19 = ssub.s32 %s11, %s18
    %p20 = scmp.eq.s32.totalorder %s19, 0
    %s22 = sadd.s32 %s21, 1
    %s23 = scalar_select %p20, %s21, %s22
    %p26 = pneg %p20
    %p27 = scmp.eq.s32.totalorder %s11, 1
    %p28 = por %p26, %p27
    %p29 = scmp.ne.s32.totalorder %s21, %s24
    %p30 = scmp.eq.s32.totalorder %s11, 0
    %p31 = por %p29, %p30
    %p32 = scmp.ne.s32.totalorder %s21, %s24
    %p33 = scmp.eq.s32.totalorder %s16, 1
    %p34 = por %p32, %p33
    %p35 = scmp.ne.s32.totalorder %s24, %s25
    %p36 = scmp.eq.s32.totalorder %s16, 0
    %p37 = por %p35, %p36
    %p38 = scmp.ne.s32.totalorder %s24, %s25
    %p39 = scmp.eq.s32.totalorder %s17, 1
    %p40 = por %p38, %p39
    %p42 = scmp.ne.s32.totalorder %s25, %s41
    %p43 = scmp.eq.s32.totalorder %s17, 0
    %p44 = por %p42, %p43
    %s46 = sadd.s32 %s45, 1
    %p49 = scmp.eq.s32.totalorder %s11, 1
    %p50 = scmp.ne.s32.totalorder %s45, %s47
    %p51 = scmp.eq.s32.totalorder %s11, 0
    %p52 = por %p50, %p51
    %p53 = scmp.ne.s32.totalorder %s45, %s47
    %p54 = scmp.eq.s32.totalorder %s16, 1
    %p55 = por %p53, %p54
    %p56 = scmp.ne.s32.totalorder %s47, %s48
    %p57 = scmp.eq.s32.totalorder %s16, 0
    %p58 = por %p56, %p57
    %p59 = scmp.ne.s32.totalorder %s47, %s48
    %p60 = scmp.eq.s32.totalorder %s17, 1
    %p61 = por %p59, %p60
    %p63 = scmp.ne.s32.totalorder %s48, %s62
    %p64 = scmp.eq.s32.totalorder %s17, 0
    %p65 = por %p63, %p64
    %s67 = sadd.s32 %s66, 1
    %p70 = scmp.eq.s32.totalorder %s11, 1
    %p71 = scmp.ne.s32.totalorder %s66, %s68
    %p72 = scmp.eq.s32.totalorder %s11, 0
    %p73 = por %p71, %p72
    %p74 = scmp.ne.s32.totalorder %s66, %s68
    %p75 = scmp.eq.s32.totalorder %s16, 1
    %p76 = por %p74, %p75
    %p77 = scmp.ne.s32.totalorder %s68, %s69
    %p78 = scmp.eq.s32.totalorder %s16, 0
    %p79 = por %p77, %p78
    %p80 = scmp.ne.s32.totalorder %s68, %s69
    %p81 = scmp.eq.s32.totalorder %s17, 1
    %p82 = por %p80, %p81
    %p84 = scmp.ne.s32.totalorder %s69, %s83
    %p85 = scmp.eq.s32.totalorder %s17, 0
    %p86 = por %p84, %p85
    %s88 = sadd.s32 %s87, 1
    %p91 = scmp.eq.s32.totalorder %s11, 1
    %p92 = scmp.ne.s32.totalorder %s87, %s89
    %p93 = scmp.eq.s32.totalorder %s11, 0
    %p94 = por %p92, %p93
    %p95 = scmp.ne.s32.totalorder %s87, %s89
    %p96 = scmp.eq.s32.totalorder %s16, 1
    %p97 = por %p95, %p96
    %p98 = scmp.ne.s32.totalorder %s89, %s90
    %p99 = scmp.eq.s32.totalorder %s16, 0
    %p100 = por %p98, %p99
    %p101 = scmp.ne.s32.totalorder %s89, %s90
    %p102 = scmp.eq.s32.totalorder %s17, 1
    %p103 = por %p101, %p102
    %p105 = scmp.ne.s32.totalorder %s90, %s104
    %p106 = scmp.eq.s32.totalorder %s17, 0
    %p107 = por %p105, %p106
    %s109 = sadd.s32 %s108, 1
    %p112 = scmp.eq.s32.totalorder %s11, 1
    %p113 = scmp.ne.s32.totalorder %s108, %s110
    %p114 = scmp.eq.s32.totalorder %s11, 0
    %p115 = por %p113, %p114
    %p116 = scmp.ne.s32.totalorder %s108, %s110
    %p117 = scmp.eq.s32.totalorder %s16, 1
    %p118 = por %p116, %p117
    %p119 = scmp.ne.s32.totalorder %s110, %s111
    %p120 = scmp.eq.s32.totalorder %s16, 0
    %p121 = por %p119, %p120
    %p122 = scmp.ne.s32.totalorder %s110, %s111
    %p123 = scmp.eq.s32.totalorder %s17, 1
    %p124 = por %p122, %p123
    %p126 = scmp.ne.s32.totalorder %s111, %s125
    %p127 = scmp.eq.s32.totalorder %s17, 0
    %p128 = por %p126, %p127
    %s129 = ssub.s32 %s11, %s18
    %p130 = scmp.eq.s32.totalorder %s129, 0
    %s132 = sadd.s32 %s131, 1
    %s133 = scalar_select %p130, %s131, %s132
    %p136 = pneg %p130
    %p137 = scmp.eq.s32.totalorder %s11, 1
    %p138 = por %p136, %p137
    %p139 = scmp.ne.s32.totalorder %s131, %s134
    %p140 = scmp.eq.s32.totalorder %s11, 0
    %p141 = por %p139, %p140
    %p142 = scmp.ne.s32.totalorder %s131, %s134
    %p143 = scmp.eq.s32.totalorder %s16, 1
    %p144 = por %p142, %p143
    %p145 = scmp.ne.s32.totalorder %s134, %s135
    %p146 = scmp.eq.s32.totalorder %s16, 0
    %p147 = por %p145, %p146
    %p148 = scmp.ne.s32.totalorder %s134, %s135
    %p149 = scmp.eq.s32.totalorder %s17, 1
    %p150 = por %p148, %p149
    %p152 = scmp.ne.s32.totalorder %s135, %s151
    %p153 = scmp.eq.s32.totalorder %s17, 0
    %p154 = por %p152, %p153
    %p155 = scmp.le.s32.totalorder 1, %s11
    %p156 = scmp.lt.s32.totalorder %s11, 3
    %p157 = pnand %p155, %p156
    %p158 = pneg %p157
    // Predicated region
    $region9: #{lightweight_feat_forward.28} parent=5 // pred_check
      _
    $region10: #{lightweight_feat_forward.28} parent=5 // pred_check_branch
      %160 = sbr.rel (%p157) target = $region12
    $region11: #{lightweight_feat_forward.28} parent=5 // pred_region
      %s161 = ssub.s32 %s11, 1
      // Predicated region
      $region13: #{lightweight_feat_forward.28} parent=11 // pred_check
        %p162 = pneg %p58
      $region14: #{lightweight_feat_forward.28} parent=11 // pred_check_branch
        %164 = sbr.rel (%p162) target = $region16
      $region15: #{lightweight_feat_forward.28} parent=11 // pred_region
        _
      $region16: #{lightweight_feat_forward.28} parent=11 // pred_fallthru
        _
      // Predicated region
      $region17: #{lightweight_feat_forward.28} parent=11 // pred_check
        %p165 = pneg %p79
      $region18: #{lightweight_feat_forward.28} parent=11 // pred_check_branch
        %167 = sbr.rel (%p165) target = $region20
      $region19: #{lightweight_feat_forward.28} parent=11 // pred_region
        _
      $region20: #{lightweight_feat_forward.28} parent=11 // pred_fallthru
        _
      // Predicated region
      $region21: #{lightweight_feat_forward.28} parent=11 // pred_check
        %p168 = pneg %p100
      $region22: #{lightweight_feat_forward.28} parent=11 // pred_check_branch
        %170 = sbr.rel (%p168) target = $region24
      $region23: #{lightweight_feat_forward.28} parent=11 // pred_region
        _
      $region24: #{lightweight_feat_forward.28} parent=11 // pred_fallthru
        _
      // Predicated region
      $region25: #{lightweight_feat_forward.28} parent=11 // pred_check
        %p171 = pneg %p121
      $region26: #{lightweight_feat_forward.28} parent=11 // pred_check_branch
        %173 = sbr.rel (%p171) target = $region28
      $region27: #{lightweight_feat_forward.28} parent=11 // pred_region
        _
      $region28: #{lightweight_feat_forward.28} parent=11 // pred_fallthru
        _
    $region12: #{lightweight_feat_forward.28} parent=5 // pred_fallthru
      _
    %p174 = scmp.lt.s32.totalorder %s11, 2
    // Predicated region
    $region29: #{lightweight_feat_forward.28} parent=5 // pred_check
      %p175 = pneg %p174
    $region30: #{lightweight_feat_forward.28} parent=5 // pred_check_branch
      %177 = sbr.rel (%p175) target = $region32
    $region31: #{lightweight_feat_forward.28} parent=5 // pred_region
      // Predicated region
      $region33: #{lightweight_feat_forward.28} parent=31 // pred_check
        %p178 = pneg %p31
      $region34: #{lightweight_feat_forward.28} parent=31 // pred_check_branch
        %180 = sbr.rel (%p178) target = $region36
      $region35: #{lightweight_feat_forward.28} parent=31 // pred_region
        %p181 = scmp.lt.s32.totalorder %s11, 1
        %s182 = scalar_select %p181, %s11, 1
        %s183 = smul.addr %s182, 5
        %s184 = smul.addr %s183, 4
        %s185 = scalar_lea.vmem %s0, %s184
      $region36: #{lightweight_feat_forward.28} parent=31 // pred_fallthru
        _
    $region32: #{lightweight_feat_forward.28} parent=5 // pred_fallthru
      _
    %p186 = scmp.le.s32.totalorder 1, %s11
    %p187 = scmp.lt.s32.totalorder %s11, 3
    %p188 = pnand %p186, %p187
    %p189 = pneg %p188
    // Predicated region
    $region37: #{lightweight_feat_forward.28} parent=5 // pred_check
      _
    $region38: #{lightweight_feat_forward.28} parent=5 // pred_check_branch
      %191 = sbr.rel (%p188) target = $region40
    $region39: #{lightweight_feat_forward.28} parent=5 // pred_region
      %s192 = ssub.s32 %s11, 1
      %p193 = scmp.lt.s32.totalorder %s16, 1
      %s194 = scalar_select %p193, %s16, 1
      %s195 = smul.addr %s194, 5
      %s196 = smul.addr %s195, 4
      %s197 = scalar_lea.vmem %s0, %s196
      %p198 = pneg %p37
      %p199 = pneg %p34
      %p200 = pneg %p58
      %p201 = pneg %p55
      %p202 = pneg %p79
      %p203 = pneg %p76
      %p204 = pneg %p100
      %p205 = pneg %p97
      %p206 = pneg %p121
      %p207 = pneg %p118
      %p208 = pneg %p147
      %p209 = pneg %p144
      %p210 = scmp.lt.s32.totalorder %s16, 1
      %s211 = scalar_select %p210, %s16, 1
      %s212 = smul.addr %s211, 4
      %s213 = smul.addr %s212, 4
      %s214 = scalar_lea.vmem %s5, %s213
      %p215 = scmp.lt.s32.totalorder %s16, 1
      %s216 = scalar_select %p215, %s16, 1
      %s217 = smul.addr %s216, 5
      %s218 = smul.addr %s217, 4
      %s219 = scalar_lea.vmem %s0, %s218
      %p220 = scmp.lt.s32.totalorder %s16, 1
      %s221 = scalar_select %p220, %s16, 1
      %s222 = smul.addr %s221, 4
      %s223 = smul.addr %s222, 4
      %s224 = scalar_lea.vmem %s5, %s223
      %v226 = vld [vmem:[%s219] sm:$0x8]
      %v227 = vld [vmem:[%s219 + $0x4] sm:$0xf]
      %v228 = vld [vmem:[%s219 + $0x8] sm:$0x7]
      %v229 = vld [vmem:[%s1] sm:$0xf]
      %v230 = vld [vmem:[%s1 + $0x4] sm:$0xf]
      %v231 = vld [vmem:[%s1 + $0x8] sm:$0xf]
      %v232 = vld [vmem:[%s1 + $0xc] sm:$0xf]
      %v233 = vld [vmem:[%s3] sm:$0x1]
      %v235 = vlaneseq
      %v236 = vshrl.u32 %v235, 7
      %v237 = vsub.s32 0, %v236
      %v238 = vrot.slane %v233, %v237
      %v243 = vunpack.c.l.b16 %v226
      %v244 = vunpack.c.l.b16 %v227
      %v245 = vunpack.c.l.b16 %v228
      %v246 = vpack.c.b16 %v244, %v243
      %v247 = vpack.c.b16 %v245, %v245
      %vm248 = vcmask 1044480
      %v249 = vrot.slane %v246, 3
      %v250 = vrot.slane %v247, 3
      %v251 = vsel %vm248, %v249, %v250
      %v256 = vunpack.c.l.b16 %v229
      %v257 = vunpack.c.l.b16 %v230
      %v258 = vunpack.c.l.b16 %v231
      %v259 = vunpack.c.l.b16 %v232
      %v260 = vpack.c.b16 %v257, %v256
      %v261 = vpack.c.b16 %v259, %v258
      %vm264 = vcmask 261120
      %v266 = vsel %vm264, %v251, 0
      %268 = vmatprep.subr.bf16.mxu0 0
      %269 = vmatpush1.bf16.msra.mxu0 0
      %270 = vmatprep.subr.bf16.mxu0 0
      %271 = vmatpush1.bf16.msra.mxu0 0
      %272 = vmatprep.subr.bf16.mxu0 0
      %273 = vmatpush1.bf16.msra.mxu0 0
      %274 = vmatprep.subr.bf16.mxu0 0
      %275 = vmatpush1.bf16.msra.mxu0 0
      %276 = vmatprep.subr.bf16.mxu0 0
      %277 = vmatpush1.bf16.msra.mxu0 0
      %278 = vmatprep.subr.bf16.mxu0 0
      %279 = vmatpush1.bf16.msra.mxu0 0
      %280 = vmatprep.subr.bf16.mxu0 0
      %281 = vmatpush1.bf16.msra.mxu0 %v261
      %282 = vmatprep.subr.bf16.mxu0 0
      %283 = vmatpush1.bf16.msra.mxu0 %v260
      %284 = vmatprep.subr.bf16.mxu0 0
      %285 = vmatpush2.bf16.msra.mxu0 0
      %286 = vmatprep.subr.bf16.mxu0 0
      %287 = vmatpush2.bf16.msra.mxu0 0
      %288 = vmatprep.subr.bf16.mxu0 0
      %289 = vmatpush2.bf16.msra.mxu0 0
      %290 = vmatprep.subr.bf16.mxu0 0
      %291 = vmatpush2.bf16.msra.mxu0 0
      %292 = vmatprep.subr.bf16.mxu0 0
      %293 = vmatpush2.bf16.msra.mxu0 0
      %294 = vmatprep.subr.bf16.mxu0 0
      %295 = vmatpush2.bf16.msra.mxu0 0
      %296 = vmatprep.subr.bf16.mxu0 0
      %297 = vmatpush2.bf16.msra.mxu0 0
      %298 = vmatprep.subr.bf16.mxu0 0
      %299 = vmatpush2.bf16.msra.mxu0 0
      %300 = vmatprep.mubr.bf16.mxu0 0
      %301 = vmatmul.mubr.bf16.gmra.mxu0 %v266
      %v302 = vpop.f32.mrf.mxu0
      %v303 = vadd.f32 %v238, %v302
      %v304 = vpop.f32.mrf.mxu0
      %v305 = vpop.f32.mrf.mxu0
      %v306 = vadd.f32 %v238, %v305
      %v307 = vpop.f32.mrf.mxu0
      %308 = vdwg.mxu0
      %v309 = vld [vmem:[%s219] sm:$0xf]
      %v310 = vld [vmem:[%s219 + $0x4] sm:$0xf]
      %v311 = vld [vmem:[%s2] sm:$0xf]
      %v312 = vld [vmem:[%s2 + $0x4] sm:$0xf]
      %v313 = vld [vmem:[%s2 + $0x8] sm:$0xf]
      %v314 = vld [vmem:[%s2 + $0xc] sm:$0xf]
      %s315 = scalar_lea.vmem %s2, 16
      %v316 = vld [vmem:[%s315] sm:$0xf]
      %v317 = vld [vmem:[%s315 + $0x4] sm:$0xf]
      %v318 = vld [vmem:[%s315 + $0x8] sm:$0xf]
      %v319 = vld [vmem:[%s315 + $0xc] sm:$0xf]
      %v322 = vunpack.c.l.b16 %v309
      %v323 = vunpack.c.l.b16 %v310
      %v324 = vpack.c.b16 %v323, %v322
      %v326 = vshrl.u32 %v324, 16
      %v328 = vshll.u32 %v324, 16
      %v330 = vrot.slane %v328, 1
      %v331 = vor.u32 %v326, %v330
      %v336 = vunpack.c.l.b16 %v316
      %v337 = vunpack.c.l.b16 %v317
      %v338 = vunpack.c.l.b16 %v318
      %v339 = vunpack.c.l.b16 %v319
      %v340 = vpack.c.b16 %v337, %v336
      %v341 = vpack.c.b16 %v339, %v338
      %v345 = vsel %vm264, %v331, 0
      %347 = vmatprep.subr.bf16.mxu0 0
      %348 = vmatpush1.bf16.msra.mxu0 0
      %349 = vmatprep.subr.bf16.mxu0 0
      %350 = vmatpush1.bf16.msra.mxu0 0
      %351 = vmatprep.subr.bf16.mxu0 0
      %352 = vmatpush1.bf16.msra.mxu0 0
      %353 = vmatprep.subr.bf16.mxu0 0
      %354 = vmatpush1.bf16.msra.mxu0 0
      %355 = vmatprep.subr.bf16.mxu0 0
      %356 = vmatpush1.bf16.msra.mxu0 0
      %357 = vmatprep.subr.bf16.mxu0 0
      %358 = vmatpush1.bf16.msra.mxu0 0
      %359 = vmatprep.subr.bf16.mxu0 0
      %360 = vmatpush1.bf16.msra.mxu0 %v341
      %361 = vmatprep.subr.bf16.mxu0 0
      %362 = vmatpush1.bf16.msra.mxu0 %v340
      %363 = vmatprep.subr.bf16.mxu0 0
      %364 = vmatpush2.bf16.msra.mxu0 0
      %365 = vmatprep.subr.bf16.mxu0 0
      %366 = vmatpush2.bf16.msra.mxu0 0
      %367 = vmatprep.subr.bf16.mxu0 0
      %368 = vmatpush2.bf16.msra.mxu0 0
      %369 = vmatprep.subr.bf16.mxu0 0
      %370 = vmatpush2.bf16.msra.mxu0 0
      %371 = vmatprep.subr.bf16.mxu0 0
      %372 = vmatpush2.bf16.msra.mxu0 0
      %373 = vmatprep.subr.bf16.mxu0 0
      %374 = vmatpush2.bf16.msra.mxu0 0
      %375 = vmatprep.subr.bf16.mxu0 0
      %376 = vmatpush2.bf16.msra.mxu0 0
      %377 = vmatprep.subr.bf16.mxu0 0
      %378 = vmatpush2.bf16.msra.mxu0 0
      %379 = vmatprep.mubr.bf16.mxu0 0
      %380 = vmatmul.mubr.bf16.gmra.mxu0 %v345
      %v381 = vpop.f32.mrf.mxu0
      %v382 = vadd.f32 0.0, %v381
      %v383 = vpop.f32.mrf.mxu0
      %v384 = vpop.f32.mrf.mxu0
      %v385 = vadd.f32 0.0, %v384
      %v386 = vpop.f32.mrf.mxu0
      %387 = vdwg.mxu0
      %v392 = vunpack.c.l.b16 %v311
      %v393 = vunpack.c.l.b16 %v312
      %v394 = vunpack.c.l.b16 %v313
      %v395 = vunpack.c.l.b16 %v314
      %v396 = vpack.c.b16 %v393, %v392
      %v397 = vpack.c.b16 %v395, %v394
      %v400 = vsel %vm264, %v324, 0
      %402 = vmatprep.subr.bf16.mxu0 0
      %403 = vmatpush1.bf16.msra.mxu0 0
      %404 = vmatprep.subr.bf16.mxu0 0
      %405 = vmatpush1.bf16.msra.mxu0 0
      %406 = vmatprep.subr.bf16.mxu0 0
      %407 = vmatpush1.bf16.msra.mxu0 0
      %408 = vmatprep.subr.bf16.mxu0 0
      %409 = vmatpush1.bf16.msra.mxu0 0
      %410 = vmatprep.subr.bf16.mxu0 0
      %411 = vmatpush1.bf16.msra.mxu0 0
      %412 = vmatprep.subr.bf16.mxu0 0
      %413 = vmatpush1.bf16.msra.mxu0 0
      %414 = vmatprep.subr.bf16.mxu0 0
      %415 = vmatpush1.bf16.msra.mxu0 %v397
      %416 = vmatprep.subr.bf16.mxu0 0
      %417 = vmatpush1.bf16.msra.mxu0 %v396
      %418 = vmatprep.subr.bf16.mxu0 0
      %419 = vmatpush2.bf16.msra.mxu0 0
      %420 = vmatprep.subr.bf16.mxu0 0
      %421 = vmatpush2.bf16.msra.mxu0 0
      %422 = vmatprep.subr.bf16.mxu0 0
      %423 = vmatpush2.bf16.msra.mxu0 0
      %424 = vmatprep.subr.bf16.mxu0 0
      %425 = vmatpush2.bf16.msra.mxu0 0
      %426 = vmatprep.subr.bf16.mxu0 0
      %427 = vmatpush2.bf16.msra.mxu0 0
      %428 = vmatprep.subr.bf16.mxu0 0
      %429 = vmatpush2.bf16.msra.mxu0 0
      %430 = vmatprep.subr.bf16.mxu0 0
      %431 = vmatpush2.bf16.msra.mxu0 0
      %432 = vmatprep.subr.bf16.mxu0 0
      %433 = vmatpush2.bf16.msra.mxu0 0
      %434 = vmatprep.mubr.bf16.mxu0 0
      %435 = vmatmul.mubr.bf16.gmra.mxu0 %v400
      %v436 = vpop.f32.mrf.mxu0
      %v437 = vadd.f32 %v382, %v436
      %v438 = vpop.f32.mrf.mxu0
      %v439 = vpop.f32.mrf.mxu0
      %v440 = vadd.f32 %v385, %v439
      %v441 = vpop.f32.mrf.mxu0
      %442 = vdwg.mxu0
      %v443 = vld [vmem:[%s219] sm:$0xe]
      %v444 = vld [vmem:[%s219 + $0x8] sm:$0x1]
      %s445 = scalar_lea.vmem %s2, 32
      %v446 = vld [vmem:[%s445] sm:$0xf]
      %v447 = vld [vmem:[%s445 + $0x4] sm:$0xf]
      %v448 = vld [vmem:[%s445 + $0x8] sm:$0xf]
      %v449 = vld [vmem:[%s445 + $0xc] sm:$0xf]
      %v452 = vunpack.c.l.b16 %v443
      %v453 = vunpack.c.l.b16 %v444
      %v454 = vpack.c.b16 %v244, %v452
      %v455 = vpack.c.b16 %v453, %v453
      %vm456 = vcmask 1046528
      %v457 = vrot.slane %v454, 1
      %v458 = vrot.slane %v455, 1
      %v459 = vsel %vm456, %v457, %v458
      %v464 = vunpack.c.l.b16 %v446
      %v465 = vunpack.c.l.b16 %v447
      %v466 = vunpack.c.l.b16 %v448
      %v467 = vunpack.c.l.b16 %v449
      %v468 = vpack.c.b16 %v465, %v464
      %v469 = vpack.c.b16 %v467, %v466
      %v473 = vsel %vm264, %v459, 0
      %475 = vmatprep.subr.bf16.mxu0 0
      %476 = vmatpush1.bf16.msra.mxu0 0
      %477 = vmatprep.subr.bf16.mxu0 0
      %478 = vmatpush1.bf16.msra.mxu0 0
      %479 = vmatprep.subr.bf16.mxu0 0
      %480 = vmatpush1.bf16.msra.mxu0 0
      %481 = vmatprep.subr.bf16.mxu0 0
      %482 = vmatpush1.bf16.msra.mxu0 0
      %483 = vmatprep.subr.bf16.mxu0 0
      %484 = vmatpush1.bf16.msra.mxu0 0
      %485 = vmatprep.subr.bf16.mxu0 0
      %486 = vmatpush1.bf16.msra.mxu0 0
      %487 = vmatprep.subr.bf16.mxu0 0
      %488 = vmatpush1.bf16.msra.mxu0 %v469
      %489 = vmatprep.subr.bf16.mxu0 0
      %490 = vmatpush1.bf16.msra.mxu0 %v468
      %491 = vmatprep.subr.bf16.mxu0 0
      %492 = vmatpush2.bf16.msra.mxu0 0
      %493 = vmatprep.subr.bf16.mxu0 0
      %494 = vmatpush2.bf16.msra.mxu0 0
      %495 = vmatprep.subr.bf16.mxu0 0
      %496 = vmatpush2.bf16.msra.mxu0 0
      %497 = vmatprep.subr.bf16.mxu0 0
      %498 = vmatpush2.bf16.msra.mxu0 0
      %499 = vmatprep.subr.bf16.mxu0 0
      %500 = vmatpush2.bf16.msra.mxu0 0
      %501 = vmatprep.subr.bf16.mxu0 0
      %502 = vmatpush2.bf16.msra.mxu0 0
      %503 = vmatprep.subr.bf16.mxu0 0
      %504 = vmatpush2.bf16.msra.mxu0 0
      %505 = vmatprep.subr.bf16.mxu0 0
      %506 = vmatpush2.bf16.msra.mxu0 0
      %507 = vmatprep.mubr.bf16.mxu0 0
      %508 = vmatmul.mubr.bf16.gmra.mxu0 %v473
      %v509 = vpop.f32.mrf.mxu0
      %v510 = vadd.f32 0.0, %v509
      %v511 = vpop.f32.mrf.mxu0
      %v512 = vpop.f32.mrf.mxu0
      %v513 = vadd.f32 0.0, %v512
      %v514 = vpop.f32.mrf.mxu0
      %515 = vdwg.mxu0
      %v516 = vadd.f32 %v437, %v510
      %v517 = vadd.f32 %v440, %v513
      %v518 = vld [vmem:[%s219] sm:$0xc]
      %v519 = vld [vmem:[%s219 + $0x8] sm:$0x3]
      %s520 = scalar_lea.vmem %s2, 48
      %v521 = vld [vmem:[%s520] sm:$0xf]
      %v522 = vld [vmem:[%s520 + $0x4] sm:$0xf]
      %v523 = vld [vmem:[%s520 + $0x8] sm:$0xf]
      %v524 = vld [vmem:[%s520 + $0xc] sm:$0xf]
      %v527 = vunpack.c.l.b16 %v518
      %v528 = vunpack.c.l.b16 %v519
      %v529 = vpack.c.b16 %v244, %v527
      %v530 = vpack.c.b16 %v528, %v528
      %vm531 = vsmask.f32 5376
      %v533 = vshrl.u32 %v529, 16
      %v535 = vrot.slane %v533, 2
      %v536 = vshll.u32 %v529, 16
      %v538 = vrot.slane %v536, 3
      %v539 = vor.u32 %v535, %v538
      %v541 = vshrl.u32 %v530, 16
      %v543 = vrot.slane %v541, 2
      %v544 = vshll.u32 %v530, 16
      %v546 = vrot.slane %v544, 3
      %v547 = vor.u32 %v543, %v546
      %v548 = vsel %vm531, %v539, %v547
      %v553 = vunpack.c.l.b16 %v521
      %v554 = vunpack.c.l.b16 %v522
      %v555 = vunpack.c.l.b16 %v523
      %v556 = vunpack.c.l.b16 %v524
      %v557 = vpack.c.b16 %v554, %v553
      %v558 = vpack.c.b16 %v556, %v555
      %v562 = vsel %vm264, %v548, 0
      %564 = vmatprep.subr.bf16.mxu0 0
      %565 = vmatpush1.bf16.msra.mxu0 0
      %566 = vmatprep.subr.bf16.mxu0 0
      %567 = vmatpush1.bf16.msra.mxu0 0
      %568 = vmatprep.subr.bf16.mxu0 0
      %569 = vmatpush1.bf16.msra.mxu0 0
      %570 = vmatprep.subr.bf16.mxu0 0
      %571 = vmatpush1.bf16.msra.mxu0 0
      %572 = vmatprep.subr.bf16.mxu0 0
      %573 = vmatpush1.bf16.msra.mxu0 0
      %574 = vmatprep.subr.bf16.mxu0 0
      %575 = vmatpush1.bf16.msra.mxu0 0
      %576 = vmatprep.subr.bf16.mxu0 0
      %577 = vmatpush1.bf16.msra.mxu0 %v558
      %578 = vmatprep.subr.bf16.mxu0 0
      %579 = vmatpush1.bf16.msra.mxu0 %v557
      %580 = vmatprep.subr.bf16.mxu0 0
      %581 = vmatpush2.bf16.msra.mxu0 0
      %582 = vmatprep.subr.bf16.mxu0 0
      %583 = vmatpush2.bf16.msra.mxu0 0
      %584 = vmatprep.subr.bf16.mxu0 0
      %585 = vmatpush2.bf16.msra.mxu0 0
      %586 = vmatprep.subr.bf16.mxu0 0
      %587 = vmatpush2.bf16.msra.mxu0 0
      %588 = vmatprep.subr.bf16.mxu0 0
      %589 = vmatpush2.bf16.msra.mxu0 0
      %590 = vmatprep.subr.bf16.mxu0 0
      %591 = vmatpush2.bf16.msra.mxu0 0
      %592 = vmatprep.subr.bf16.mxu0 0
      %593 = vmatpush2.bf16.msra.mxu0 0
      %594 = vmatprep.subr.bf16.mxu0 0
      %595 = vmatpush2.bf16.msra.mxu0 0
      %596 = vmatprep.mubr.bf16.mxu0 0
      %597 = vmatmul.mubr.bf16.gmra.mxu0 %v562
      %v598 = vpop.f32.mrf.mxu0
      %v599 = vadd.f32 0.0, %v598
      %v600 = vpop.f32.mrf.mxu0
      %v601 = vpop.f32.mrf.mxu0
      %v602 = vadd.f32 0.0, %v601
      %v603 = vpop.f32.mrf.mxu0
      %604 = vdwg.mxu0
      %v605 = vadd.f32 %v516, %v599
      %v606 = vadd.f32 %v517, %v602
      %s607 = scalar_lea.vmem %s2, 64
      %v608 = vld [vmem:[%s607] sm:$0xf]
      %v609 = vld [vmem:[%s607 + $0x4] sm:$0xf]
      %v610 = vld [vmem:[%s607 + $0x8] sm:$0xf]
      %v611 = vld [vmem:[%s607 + $0xc] sm:$0xf]
      %v616 = vunpack.c.l.b16 %v608
      %v617 = vunpack.c.l.b16 %v609
      %v618 = vunpack.c.l.b16 %v610
      %v619 = vunpack.c.l.b16 %v611
      %v620 = vpack.c.b16 %v617, %v616
      %v621 = vpack.c.b16 %v619, %v618
      %624 = vmatprep.subr.bf16.mxu0 0
      %625 = vmatpush1.bf16.msra.mxu0 0
      %626 = vmatprep.subr.bf16.mxu0 0
      %627 = vmatpush1.bf16.msra.mxu0 0
      %628 = vmatprep.subr.bf16.mxu0 0
      %629 = vmatpush1.bf16.msra.mxu0 0
      %630 = vmatprep.subr.bf16.mxu0 0
      %631 = vmatpush1.bf16.msra.mxu0 0
      %632 = vmatprep.subr.bf16.mxu0 0
      %633 = vmatpush1.bf16.msra.mxu0 0
      %634 = vmatprep.subr.bf16.mxu0 0
      %635 = vmatpush1.bf16.msra.mxu0 0
      %636 = vmatprep.subr.bf16.mxu0 0
      %637 = vmatpush1.bf16.msra.mxu0 %v621
      %638 = vmatprep.subr.bf16.mxu0 0
      %639 = vmatpush1.bf16.msra.mxu0 %v620
      %640 = vmatprep.subr.bf16.mxu0 0
      %641 = vmatpush2.bf16.msra.mxu0 0
      %642 = vmatprep.subr.bf16.mxu0 0
      %643 = vmatpush2.bf16.msra.mxu0 0
      %644 = vmatprep.subr.bf16.mxu0 0
      %645 = vmatpush2.bf16.msra.mxu0 0
      %646 = vmatprep.subr.bf16.mxu0 0
      %647 = vmatpush2.bf16.msra.mxu0 0
      %648 = vmatprep.subr.bf16.mxu0 0
      %649 = vmatpush2.bf16.msra.mxu0 0
      %650 = vmatprep.subr.bf16.mxu0 0
      %651 = vmatpush2.bf16.msra.mxu0 0
      %652 = vmatprep.subr.bf16.mxu0 0
      %653 = vmatpush2.bf16.msra.mxu0 0
      %654 = vmatprep.subr.bf16.mxu0 0
      %655 = vmatpush2.bf16.msra.mxu0 0
      %656 = vmatprep.mubr.bf16.mxu0 0
      %657 = vmatmul.mubr.bf16.gmra.mxu0 %v266
      %v658 = vpop.f32.mrf.mxu0
      %v659 = vadd.f32 0.0, %v658
      %v660 = vpop.f32.mrf.mxu0
      %v661 = vpop.f32.mrf.mxu0
      %v662 = vadd.f32 0.0, %v661
      %v663 = vpop.f32.mrf.mxu0
      %664 = vdwg.mxu0
      %v665 = vadd.f32 %v605, %v659
      %v666 = vadd.f32 %v606, %v662
      %s667 = scalar_lea.vmem %s2, 80
      %v668 = vld [vmem:[%s667] sm:$0xf]
      %v669 = vld [vmem:[%s667 + $0x4] sm:$0xf]
      %v670 = vld [vmem:[%s667 + $0x8] sm:$0xf]
      %v671 = vld [vmem:[%s667 + $0xc] sm:$0xf]
      %vm672 = vsmask.f32 4352
      %v674 = vshrl.u32 %v246, 16
      %v676 = vrot.slane %v674, 3
      %v677 = vshll.u32 %v246, 16
      %v679 = vrot.slane %v677, 4
      %v680 = vor.u32 %v676, %v679
      %v682 = vshrl.u32 %v247, 16
      %v684 = vrot.slane %v682, 3
      %v685 = vshll.u32 %v247, 16
      %v687 = vrot.slane %v685, 4
      %v688 = vor.u32 %v684, %v687
      %v689 = vsel %vm672, %v680, %v688
      %v694 = vunpack.c.l.b16 %v668
      %v695 = vunpack.c.l.b16 %v669
      %v696 = vunpack.c.l.b16 %v670
      %v697 = vunpack.c.l.b16 %v671
      %v698 = vpack.c.b16 %v695, %v694
      %v699 = vpack.c.b16 %v697, %v696
      %v703 = vsel %vm264, %v689, 0
      %705 = vmatprep.subr.bf16.mxu0 0
      %706 = vmatpush1.bf16.msra.mxu0 0
      %707 = vmatprep.subr.bf16.mxu0 0
      %708 = vmatpush1.bf16.msra.mxu0 0
      %709 = vmatprep.subr.bf16.mxu0 0
      %710 = vmatpush1.bf16.msra.mxu0 0
      %711 = vmatprep.subr.bf16.mxu0 0
      %712 = vmatpush1.bf16.msra.mxu0 0
      %713 = vmatprep.subr.bf16.mxu0 0
      %714 = vmatpush1.bf16.msra.mxu0 0
      %715 = vmatprep.subr.bf16.mxu0 0
      %716 = vmatpush1.bf16.msra.mxu0 0
      %717 = vmatprep.subr.bf16.mxu0 0
      %718 = vmatpush1.bf16.msra.mxu0 %v699
      %719 = vmatprep.subr.bf16.mxu0 0
      %720 = vmatpush1.bf16.msra.mxu0 %v698
      %721 = vmatprep.subr.bf16.mxu0 0
      %722 = vmatpush2.bf16.msra.mxu0 0
      %723 = vmatprep.subr.bf16.mxu0 0
      %724 = vmatpush2.bf16.msra.mxu0 0
      %725 = vmatprep.subr.bf16.mxu0 0
      %726 = vmatpush2.bf16.msra.mxu0 0
      %727 = vmatprep.subr.bf16.mxu0 0
      %728 = vmatpush2.bf16.msra.mxu0 0
      %729 = vmatprep.subr.bf16.mxu0 0
      %730 = vmatpush2.bf16.msra.mxu0 0
      %731 = vmatprep.subr.bf16.mxu0 0
      %732 = vmatpush2.bf16.msra.mxu0 0
      %733 = vmatprep.subr.bf16.mxu0 0
      %734 = vmatpush2.bf16.msra.mxu0 0
      %735 = vmatprep.subr.bf16.mxu0 0
      %736 = vmatpush2.bf16.msra.mxu0 0
      %737 = vmatprep.mubr.bf16.mxu0 0
      %738 = vmatmul.mubr.bf16.gmra.mxu0 %v703
      %v739 = vpop.f32.mrf.mxu0
      %v740 = vadd.f32 0.0, %v739
      %v741 = vpop.f32.mrf.mxu0
      %v742 = vpop.f32.mrf.mxu0
      %v743 = vadd.f32 0.0, %v742
      %v744 = vpop.f32.mrf.mxu0
      %745 = vdwg.mxu0
      %v746 = vadd.f32 %v665, %v740
      %v747 = vadd.f32 %v666, %v743
      %v748 = vld [vmem:[%s219 + $0x4] sm:$0xe]
      %v749 = vld [vmem:[%s219 + $0x8] sm:$0xf]
      %v750 = vld [vmem:[%s219 + $0xc] sm:$0x1]
      %s751 = scalar_lea.vmem %s2, 96
      %v752 = vld [vmem:[%s751] sm:$0xf]
      %v753 = vld [vmem:[%s751 + $0x4] sm:$0xf]
      %v754 = vld [vmem:[%s751 + $0x8] sm:$0xf]
      %v755 = vld [vmem:[%s751 + $0xc] sm:$0xf]
      %v759 = vunpack.c.l.b16 %v748
      %v760 = vunpack.c.l.b16 %v749
      %v761 = vunpack.c.l.b16 %v750
      %v762 = vpack.c.b16 %v760, %v759
      %v763 = vpack.c.b16 %v761, %v761
      %v764 = vrot.slane %v762, 1
      %v765 = vrot.slane %v763, 1
      %v766 = vsel %vm456, %v764, %v765
      %v771 = vunpack.c.l.b16 %v752
      %v772 = vunpack.c.l.b16 %v753
      %v773 = vunpack.c.l.b16 %v754
      %v774 = vunpack.c.l.b16 %v755
      %v775 = vpack.c.b16 %v772, %v771
      %v776 = vpack.c.b16 %v774, %v773
      %v780 = vsel %vm264, %v766, 0
      %782 = vmatprep.subr.bf16.mxu0 0
      %783 = vmatpush1.bf16.msra.mxu0 0
      %784 = vmatprep.subr.bf16.mxu0 0
      %785 = vmatpush1.bf16.msra.mxu0 0
      %786 = vmatprep.subr.bf16.mxu0 0
      %787 = vmatpush1.bf16.msra.mxu0 0
      %788 = vmatprep.subr.bf16.mxu0 0
      %789 = vmatpush1.bf16.msra.mxu0 0
      %790 = vmatprep.subr.bf16.mxu0 0
      %791 = vmatpush1.bf16.msra.mxu0 0
      %792 = vmatprep.subr.bf16.mxu0 0
      %793 = vmatpush1.bf16.msra.mxu0 0
      %794 = vmatprep.subr.bf16.mxu0 0
      %795 = vmatpush1.bf16.msra.mxu0 %v776
      %796 = vmatprep.subr.bf16.mxu0 0
      %797 = vmatpush1.bf16.msra.mxu0 %v775
      %798 = vmatprep.subr.bf16.mxu0 0
      %799 = vmatpush2.bf16.msra.mxu0 0
      %800 = vmatprep.subr.bf16.mxu0 0
      %801 = vmatpush2.bf16.msra.mxu0 0
      %802 = vmatprep.subr.bf16.mxu0 0
      %803 = vmatpush2.bf16.msra.mxu0 0
      %804 = vmatprep.subr.bf16.mxu0 0
      %805 = vmatpush2.bf16.msra.mxu0 0
      %806 = vmatprep.subr.bf16.mxu0 0
      %807 = vmatpush2.bf16.msra.mxu0 0
      %808 = vmatprep.subr.bf16.mxu0 0
      %809 = vmatpush2.bf16.msra.mxu0 0
      %810 = vmatprep.subr.bf16.mxu0 0
      %811 = vmatpush2.bf16.msra.mxu0 0
      %812 = vmatprep.subr.bf16.mxu0 0
      %813 = vmatpush2.bf16.msra.mxu0 0
      %814 = vmatprep.mubr.bf16.mxu0 0
      %815 = vmatmul.mubr.bf16.gmra.mxu0 %v780
      %v816 = vpop.f32.mrf.mxu0
      %v817 = vadd.f32 0.0, %v816
      %v818 = vpop.f32.mrf.mxu0
      %v819 = vpop.f32.mrf.mxu0
      %v820 = vadd.f32 0.0, %v819
      %v821 = vpop.f32.mrf.mxu0
      %822 = vdwg.mxu0
      %v823 = vadd.f32 %v746, %v817
      %v824 = vadd.f32 %v747, %v820
      %s825 = scalar_lea.vmem %s2, 112
      %v826 = vld [vmem:[%s825] sm:$0xf]
      %v827 = vld [vmem:[%s825 + $0x4] sm:$0xf]
      %v828 = vld [vmem:[%s825 + $0x8] sm:$0xf]
      %v829 = vld [vmem:[%s825 + $0xc] sm:$0xf]
      %vm830 = vsmask.f32 6400
      %v832 = vshrl.u32 %v762, 16
      %v834 = vrot.slane %v832, 1
      %v835 = vshll.u32 %v762, 16
      %v837 = vrot.slane %v835, 2
      %v838 = vor.u32 %v834, %v837
      %v840 = vshrl.u32 %v763, 16
      %v842 = vrot.slane %v840, 1
      %v843 = vshll.u32 %v763, 16
      %v845 = vrot.slane %v843, 2
      %v846 = vor.u32 %v842, %v845
      %v847 = vsel %vm830, %v838, %v846
      %v852 = vunpack.c.l.b16 %v826
      %v853 = vunpack.c.l.b16 %v827
      %v854 = vunpack.c.l.b16 %v828
      %v855 = vunpack.c.l.b16 %v829
      %v856 = vpack.c.b16 %v853, %v852
      %v857 = vpack.c.b16 %v855, %v854
      %v861 = vsel %vm264, %v847, 0
      %863 = vmatprep.subr.bf16.mxu0 0
      %864 = vmatpush1.bf16.msra.mxu0 0
      %865 = vmatprep.subr.bf16.mxu0 0
      %866 = vmatpush1.bf16.msra.mxu0 0
      %867 = vmatprep.subr.bf16.mxu0 0
      %868 = vmatpush1.bf16.msra.mxu0 0
      %869 = vmatprep.subr.bf16.mxu0 0
      %870 = vmatpush1.bf16.msra.mxu0 0
      %871 = vmatprep.subr.bf16.mxu0 0
      %872 = vmatpush1.bf16.msra.mxu0 0
      %873 = vmatprep.subr.bf16.mxu0 0
      %874 = vmatpush1.bf16.msra.mxu0 0
      %875 = vmatprep.subr.bf16.mxu0 0
      %876 = vmatpush1.bf16.msra.mxu0 %v857
      %877 = vmatprep.subr.bf16.mxu0 0
      %878 = vmatpush1.bf16.msra.mxu0 %v856
      %879 = vmatprep.subr.bf16.mxu0 0
      %880 = vmatpush2.bf16.msra.mxu0 0
      %881 = vmatprep.subr.bf16.mxu0 0
      %882 = vmatpush2.bf16.msra.mxu0 0
      %883 = vmatprep.subr.bf16.mxu0 0
      %884 = vmatpush2.bf16.msra.mxu0 0
      %885 = vmatprep.subr.bf16.mxu0 0
      %886 = vmatpush2.bf16.msra.mxu0 0
      %887 = vmatprep.subr.bf16.mxu0 0
      %888 = vmatpush2.bf16.msra.mxu0 0
      %889 = vmatprep.subr.bf16.mxu0 0
      %890 = vmatpush2.bf16.msra.mxu0 0
      %891 = vmatprep.subr.bf16.mxu0 0
      %892 = vmatpush2.bf16.msra.mxu0 0
      %893 = vmatprep.subr.bf16.mxu0 0
      %894 = vmatpush2.bf16.msra.mxu0 0
      %895 = vmatprep.mubr.bf16.mxu0 0
      %896 = vmatmul.mubr.bf16.gmra.mxu0 %v861
      %v897 = vpop.f32.mrf.mxu0
      %v898 = vadd.f32 0.0, %v897
      %v899 = vpop.f32.mrf.mxu0
      %v900 = vpop.f32.mrf.mxu0
      %v901 = vadd.f32 0.0, %v900
      %v902 = vpop.f32.mrf.mxu0
      %903 = vdwg.mxu0
      %v904 = vadd.f32 %v823, %v898
      %v905 = vadd.f32 %v824, %v901
      %v906 = vld [vmem:[%s219 + $0x4] sm:$0xc]
      %v907 = vld [vmem:[%s219 + $0xc] sm:$0x3]
      %s908 = scalar_lea.vmem %s2, 128
      %v909 = vld [vmem:[%s908] sm:$0xf]
      %v910 = vld [vmem:[%s908 + $0x4] sm:$0xf]
      %v911 = vld [vmem:[%s908 + $0x8] sm:$0xf]
      %v912 = vld [vmem:[%s908 + $0xc] sm:$0xf]
      %v915 = vunpack.c.l.b16 %v906
      %v916 = vunpack.c.l.b16 %v907
      %v917 = vpack.c.b16 %v760, %v915
      %v918 = vpack.c.b16 %v916, %v916
      %vm919 = vcmask 1045504
      %v920 = vrot.slane %v917, 2
      %v921 = vrot.slane %v918, 2
      %v922 = vsel %vm919, %v920, %v921
      %v927 = vunpack.c.l.b16 %v909
      %v928 = vunpack.c.l.b16 %v910
      %v929 = vunpack.c.l.b16 %v911
      %v930 = vunpack.c.l.b16 %v912
      %v931 = vpack.c.b16 %v928, %v927
      %v932 = vpack.c.b16 %v930, %v929
      %v936 = vsel %vm264, %v922, 0
      %938 = vmatprep.subr.bf16.mxu0 0
      %939 = vmatpush1.bf16.msra.mxu0 0
      %940 = vmatprep.subr.bf16.mxu0 0
      %941 = vmatpush1.bf16.msra.mxu0 0
      %942 = vmatprep.subr.bf16.mxu0 0
      %943 = vmatpush1.bf16.msra.mxu0 0
      %944 = vmatprep.subr.bf16.mxu0 0
      %945 = vmatpush1.bf16.msra.mxu0 0
      %946 = vmatprep.subr.bf16.mxu0 0
      %947 = vmatpush1.bf16.msra.mxu0 0
      %948 = vmatprep.subr.bf16.mxu0 0
      %949 = vmatpush1.bf16.msra.mxu0 0
      %950 = vmatprep.subr.bf16.mxu0 0
      %951 = vmatpush1.bf16.msra.mxu0 %v932
      %952 = vmatprep.subr.bf16.mxu0 0
      %953 = vmatpush1.bf16.msra.mxu0 %v931
      %954 = vmatprep.subr.bf16.mxu0 0
      %955 = vmatpush2.bf16.msra.mxu0 0
      %956 = vmatprep.subr.bf16.mxu0 0
      %957 = vmatpush2.bf16.msra.mxu0 0
      %958 = vmatprep.subr.bf16.mxu0 0
      %959 = vmatpush2.bf16.msra.mxu0 0
      %960 = vmatprep.subr.bf16.mxu0 0
      %961 = vmatpush2.bf16.msra.mxu0 0
      %962 = vmatprep.subr.bf16.mxu0 0
      %963 = vmatpush2.bf16.msra.mxu0 0
      %964 = vmatprep.subr.bf16.mxu0 0
      %965 = vmatpush2.bf16.msra.mxu0 0
      %966 = vmatprep.subr.bf16.mxu0 0
      %967 = vmatpush2.bf16.msra.mxu0 0
      %968 = vmatprep.subr.bf16.mxu0 0
      %969 = vmatpush2.bf16.msra.mxu0 0
      %970 = vmatprep.mubr.bf16.mxu0 0
      %971 = vmatmul.mubr.bf16.gmra.mxu0 %v936
      %v972 = vpop.f32.mrf.mxu0
      %v973 = vadd.f32 0.0, %v972
      %v974 = vpop.f32.mrf.mxu0
      %v975 = vpop.f32.mrf.mxu0
      %v976 = vadd.f32 0.0, %v975
      %v977 = vpop.f32.mrf.mxu0
      %978 = vdwg.mxu0
      %v979 = vadd.f32 %v904, %v973
      %v980 = vadd.f32 %v905, %v976
      %v981 = vld [vmem:[%s4] sm:$0x1]
      %v983 = vlaneseq
      %v984 = vshrl.u32 %v983, 7
      %v985 = vsub.s32 0, %v984
      %v986 = vrot.slane %v981, %v985
      %v988 = vadd.f32 %v979, %v986
      %v989 = vadd.f32 %v980, %v986
      %v990 = vmax.f32 %v303, 0.0
      %v991 = vmax.f32 %v988, 0.0
      %v992 = vmax.f32 %v306, 0.0
      %v993 = vmax.f32 %v989, 0.0
      %v994 = vpack.c.bf16 %v992, %v990
      %v995 = vpack.c.bf16 %v993, %v991
      %v998 = vunpack.c.l.b16 %v994
      %v999 = vunpack.c.l.b16 %v995
      %v1000 = vunpack.c.h.b16 %v994
      %v1001 = vunpack.c.h.b16 %v995
      %v1002 = vpack.c.b16 %v999, %v998
      %v1003 = vpack.c.b16 %v1001, %v1000
      %1006 = vst [vmem:[%s224] sm:$0xff] %v1002
      %vm1007 = vcmask 1043456
      %vm1008 = vsmask.f32 3328
      %vm1009 = vmand %vm1007, %vm1008
      %vm1010 = vcmask 1047556
      %vm1011 = vsmask.f32 7424
      %vm1012 = vmand %vm1010, %vm1011
      %vm1013 = vmor %vm1012, %vm1009
      %v1014 = vld [vmem:[%s224 + $0x8] sm:$0xff]
      %v1015 = vsel %vm1013, %v1003, %v1014
      %1016 = vst [vmem:[%s224 + $0x8] sm:$0xff] %v1015
      %p1017 = scmp.lt.s32.totalorder %s16, 1
      %s1018 = scalar_select %p1017, %s16, 1
      %s1019 = smul.addr %s1018, 4
      %s1020 = smul.addr %s1019, 4
      %s1021 = scalar_lea.vmem %s5, %s1020
      // Predicated region
      $region41: #{lightweight_feat_forward.28} parent=39 // pred_check
        %p1022 = pneg %p144
      $region42: #{lightweight_feat_forward.28} parent=39 // pred_check_branch
        %1024 = sbr.rel (%p1022) target = $region44
      $region43: #{lightweight_feat_forward.28} parent=39 // pred_region
        _
      $region44: #{lightweight_feat_forward.28} parent=39 // pred_fallthru
        _
    $region40: #{lightweight_feat_forward.28} parent=5 // pred_fallthru
      _
    %p1025 = scmp.le.s32.totalorder 2, %s11
    // Predicated region
    $region45: #{lightweight_feat_forward.28} parent=5 // pred_check
      %p1026 = pneg %p1025
    $region46: #{lightweight_feat_forward.28} parent=5 // pred_check_branch
      %1028 = sbr.rel (%p1026) target = $region48
    $region47: #{lightweight_feat_forward.28} parent=5 // pred_region
      %s1029 = ssub.s32 %s11, 2
      // Predicated region
      $region49: #{lightweight_feat_forward.28} parent=47 // pred_check
        %p1030 = pneg %p150
      $region50: #{lightweight_feat_forward.28} parent=47 // pred_check_branch
        %1032 = sbr.rel (%p1030) target = $region52
      $region51: #{lightweight_feat_forward.28} parent=47 // pred_region
        %p1033 = scmp.lt.s32.totalorder %s17, 1
        %s1034 = scalar_select %p1033, %s17, 1
        %s1035 = smul.addr %s1034, 4
        %s1036 = smul.addr %s1035, 4
        %s1037 = scalar_lea.vmem %s5, %s1036
      $region52: #{lightweight_feat_forward.28} parent=47 // pred_fallthru
        _
    $region48: #{lightweight_feat_forward.28} parent=5 // pred_fallthru
      _
  $region6: #{lightweight_feat_forward.28} parent=0 // loop_footer
    %s15 = sadd.s32 1, %s11
  $region7: #{lightweight_feat_forward.28} parent=0 // loop_footer_branch
    %10 = sbr.rel target = $region3
  $region8: #{lightweight_feat_forward.28} parent=0 // loop_exit
    _

// kernel: lightweight_feat_forward.32
$region0: #{lightweight_feat_forward.32}
  #allocation0 [shape = 'u32[]', space=smem, size = 0x4, offset = 0x4, fixed_abs, tag = 'smem constant byte address 0x4 - core index']
  #allocation1 [shape = 'u32[144,128]{1,0:T(1,128)}', space=vmem, size = 0x12000, scoped, tag = 'internal scratch']
  %s0 = inlined_call_operand.vmem [shape: bf16[2,256], index: 0, kind: input, shape index: {}]
  %s1 = inlined_call_operand.vmem [shape: bf16[256,48], index: 1, kind: input, shape index: {}]
  %s2 = inlined_call_operand.vmem [shape: f32[1,48], index: 2, kind: input, shape index: {}]
  %s3 = inlined_call_operand.vmem [shape: bf16[2,48], index: 3, kind: output, shape index: {}]
  %s4 = sld [smem:[#allocation0]]
  $region22: #{lightweight_feat_forward.32} parent=0
    _
  %s6 = ssub.s32 1, %s4
  %s7 = scalar_select 0, %s6, %s4
  // Predicated region
  $region2: #{lightweight_feat_forward.32} parent=0 // pred_check
    _
  $region3: #{lightweight_feat_forward.32} parent=0 // pred_check_branch
    %9 = sbr.rel (0) target = $region5
  $region4: #{lightweight_feat_forward.32} parent=0 // pred_region
    _
  $region5: #{lightweight_feat_forward.32} parent=0 // pred_fallthru
    _
  // Predicated region
  $region6: #{lightweight_feat_forward.32} parent=0 // pred_check
    _
  $region7: #{lightweight_feat_forward.32} parent=0 // pred_check_branch
    %11 = sbr.rel (0) target = $region9
  $region8: #{lightweight_feat_forward.32} parent=0 // pred_region
    _
  $region9: #{lightweight_feat_forward.32} parent=0 // pred_fallthru
    _
  // Predicated region
  $region10: #{lightweight_feat_forward.32} parent=0 // pred_check
    _
  $region11: #{lightweight_feat_forward.32} parent=0 // pred_check_branch
    %13 = sbr.rel (0) target = $region13
  $region12: #{lightweight_feat_forward.32} parent=0 // pred_region
    _
  $region13: #{lightweight_feat_forward.32} parent=0 // pred_fallthru
    _
  %v15 = vld [vmem:[%s0] sm:$0x3]
  %v16 = vld [vmem:[%s1] sm:$0xf]
  %v17 = vld [vmem:[%s1 + $0x4] sm:$0xf]
  %v18 = vld [vmem:[%s1 + $0x8] sm:$0xf]
  %v19 = vld [vmem:[%s1 + $0xc] sm:$0xf]
  %v20 = vld [vmem:[%s1 + $0x10] sm:$0xf]
  %v21 = vld [vmem:[%s1 + $0x14] sm:$0xf]
  %v22 = vld [vmem:[%s1 + $0x18] sm:$0xf]
  %v23 = vld [vmem:[%s1 + $0x1c] sm:$0xf]
  %v24 = vld [vmem:[%s1 + $0x20] sm:$0xf]
  %v25 = vld [vmem:[%s1 + $0x24] sm:$0xf]
  %v26 = vld [vmem:[%s1 + $0x28] sm:$0xf]
  %v27 = vld [vmem:[%s1 + $0x2c] sm:$0xf]
  %v28 = vld [vmem:[%s1 + $0x30] sm:$0xf]
  %v29 = vld [vmem:[%s1 + $0x34] sm:$0xf]
  %v30 = vld [vmem:[%s1 + $0x38] sm:$0xf]
  %v31 = vld [vmem:[%s1 + $0x3c] sm:$0xf]
  %v32 = vld [vmem:[%s1 + $0x40] sm:$0xf]
  %v33 = vld [vmem:[%s1 + $0x44] sm:$0xf]
  %v34 = vld [vmem:[%s1 + $0x48] sm:$0xf]
  %v35 = vld [vmem:[%s1 + $0x4c] sm:$0xf]
  %v36 = vld [vmem:[%s1 + $0x50] sm:$0xf]
  %v37 = vld [vmem:[%s1 + $0x54] sm:$0xf]
  %v38 = vld [vmem:[%s1 + $0x58] sm:$0xf]
  %v39 = vld [vmem:[%s1 + $0x5c] sm:$0xf]
  %v40 = vld [vmem:[%s1 + $0x60] sm:$0xf]
  %v41 = vld [vmem:[%s1 + $0x64] sm:$0xf]
  %v42 = vld [vmem:[%s1 + $0x68] sm:$0xf]
  %v43 = vld [vmem:[%s1 + $0x6c] sm:$0xf]
  %v44 = vld [vmem:[%s1 + $0x70] sm:$0xf]
  %v45 = vld [vmem:[%s1 + $0x74] sm:$0xf]
  %v46 = vld [vmem:[%s1 + $0x78] sm:$0xf]
  %v47 = vld [vmem:[%s1 + $0x7c] sm:$0xf]
  %v48 = vld [vmem:[%s2] sm:$0x1]
  %v50 = vlaneseq
  %v51 = vshrl.u32 %v50, 7
  %v52 = vsub.s32 0, %v51
  %v53 = vrot.slane %v48, %v52
  %v57 = vunpack.c.l.s4 1966171168
  %v58 = vunpack.c.0.s8 %v57
  %v59 = vlaneseq
  %v60 = vshrl.u32 %v59, 7
  %v61 = vsub.s32 %v58, %v60
  %v62 = vrot.slane %v15, %v61
  %v63 = vcombine.high %v62, %v62
  %v65 = vunpack.c.l.s4 1966171168
  %v66 = vunpack.c.0.s8 %v65
  %v67 = vlaneseq
  %v68 = vshrl.u32 %v67, 7
  %v69 = vsub.s32 %v66, %v68
  %v70 = vrot.slane %v62, %v69
  %v72 = vunpack.c.l.s4 1966171168
  %v73 = vunpack.c.0.s8 %v72
  %v74 = vlaneseq
  %v75 = vshrl.u32 %v74, 7
  %v76 = vsub.s32 %v73, %v75
  %v77 = vrot.slane %v63, %v76
  %v112 = vunpack.c.l.b16 %v16
  %v113 = vunpack.c.l.b16 %v17
  %v114 = vunpack.c.l.b16 %v18
  %v115 = vunpack.c.l.b16 %v19
  %v116 = vunpack.c.l.b16 %v20
  %v117 = vunpack.c.l.b16 %v21
  %v118 = vunpack.c.l.b16 %v22
  %v119 = vunpack.c.l.b16 %v23
  %v120 = vunpack.c.l.b16 %v24
  %v121 = vunpack.c.l.b16 %v25
  %v122 = vunpack.c.l.b16 %v26
  %v123 = vunpack.c.l.b16 %v27
  %v124 = vunpack.c.l.b16 %v28
  %v125 = vunpack.c.l.b16 %v29
  %v126 = vunpack.c.l.b16 %v30
  %v127 = vunpack.c.l.b16 %v31
  %v128 = vunpack.c.l.b16 %v32
  %v129 = vunpack.c.l.b16 %v33
  %v130 = vunpack.c.l.b16 %v34
  %v131 = vunpack.c.l.b16 %v35
  %v132 = vunpack.c.l.b16 %v36
  %v133 = vunpack.c.l.b16 %v37
  %v134 = vunpack.c.l.b16 %v38
  %v135 = vunpack.c.l.b16 %v39
  %v136 = vunpack.c.l.b16 %v40
  %v137 = vunpack.c.l.b16 %v41
  %v138 = vunpack.c.l.b16 %v42
  %v139 = vunpack.c.l.b16 %v43
  %v140 = vunpack.c.l.b16 %v44
  %v141 = vunpack.c.l.b16 %v45
  %v142 = vunpack.c.l.b16 %v46
  %v143 = vunpack.c.l.b16 %v47
  %v144 = vpack.c.b16 %v113, %v112
  %v145 = vpack.c.b16 %v115, %v114
  %v146 = vpack.c.b16 %v117, %v116
  %v147 = vpack.c.b16 %v119, %v118
  %v148 = vpack.c.b16 %v121, %v120
  %v149 = vpack.c.b16 %v123, %v122
  %v150 = vpack.c.b16 %v125, %v124
  %v151 = vpack.c.b16 %v127, %v126
  %v152 = vpack.c.b16 %v129, %v128
  %v153 = vpack.c.b16 %v131, %v130
  %v154 = vpack.c.b16 %v133, %v132
  %v155 = vpack.c.b16 %v135, %v134
  %v156 = vpack.c.b16 %v137, %v136
  %v157 = vpack.c.b16 %v139, %v138
  %v158 = vpack.c.b16 %v141, %v140
  %v159 = vpack.c.b16 %v143, %v142
  %176 = vmatprep.subr.bf16.mxu0 0
  %177 = vmatpush1.bf16.msra.mxu0 %v151
  %178 = vmatprep.subr.bf16.mxu0 0
  %179 = vmatpush1.bf16.msra.mxu0 %v150
  %180 = vmatprep.subr.bf16.mxu0 0
  %181 = vmatpush1.bf16.msra.mxu0 %v149
  %182 = vmatprep.subr.bf16.mxu0 0
  %183 = vmatpush1.bf16.msra.mxu0 %v148
  %184 = vmatprep.subr.bf16.mxu0 0
  %185 = vmatpush1.bf16.msra.mxu0 %v147
  %186 = vmatprep.subr.bf16.mxu0 0
  %187 = vmatpush1.bf16.msra.mxu0 %v146
  %188 = vmatprep.subr.bf16.mxu0 0
  %189 = vmatpush1.bf16.msra.mxu0 %v145
  %190 = vmatprep.subr.bf16.mxu0 0
  %191 = vmatpush1.bf16.msra.mxu0 %v144
  %192 = vmatprep.subr.bf16.mxu0 0
  %193 = vmatpush2.bf16.msra.mxu0 %v159
  %194 = vmatprep.subr.bf16.mxu0 0
  %195 = vmatpush2.bf16.msra.mxu0 %v158
  %196 = vmatprep.subr.bf16.mxu0 0
  %197 = vmatpush2.bf16.msra.mxu0 %v157
  %198 = vmatprep.subr.bf16.mxu0 0
  %199 = vmatpush2.bf16.msra.mxu0 %v156
  %200 = vmatprep.subr.bf16.mxu0 0
  %201 = vmatpush2.bf16.msra.mxu0 %v155
  %202 = vmatprep.subr.bf16.mxu0 0
  %203 = vmatpush2.bf16.msra.mxu0 %v154
  %204 = vmatprep.subr.bf16.mxu0 0
  %205 = vmatpush2.bf16.msra.mxu0 %v153
  %206 = vmatprep.subr.bf16.mxu0 0
  %207 = vmatpush2.bf16.msra.mxu0 %v152
  %208 = vmatprep.mubr.bf16.mxu0 %v77
  %209 = vmatmul.mubr.bf16.gmra.mxu0 %v70
  %v210 = vpop.f32.mrf.mxu0
  %v211 = vadd.f32 %v53, %v210
  %v212 = vpop.f32.mrf.mxu0
  %v213 = vpop.f32.mrf.mxu0
  %v214 = vpop.f32.mrf.mxu0
  %215 = vdwg.mxu0
  %v216 = vmax.f32 %v211, 0.0
  %v217 = vpack.c.bf16 %v216, %v216
  %vm218 = vcmask 385024
  %219 = vst.msk [vmem:[%s3] sm:$0x1] %vm218, %v217
  // Predicated region
  $region14: #{lightweight_feat_forward.32} parent=0 // pred_check
    _
  $region15: #{lightweight_feat_forward.32} parent=0 // pred_check_branch
    %221 = sbr.rel (0) target = $region17
  $region16: #{lightweight_feat_forward.32} parent=0 // pred_region
    _
  $region17: #{lightweight_feat_forward.32} parent=0 // pred_fallthru
    _
  // Predicated region
  $region18: #{lightweight_feat_forward.32} parent=0 // pred_check
    _
  $region19: #{lightweight_feat_forward.32} parent=0 // pred_check_branch
    %223 = sbr.rel (0) target = $region21
  $region20: #{lightweight_feat_forward.32} parent=0 // pred_region
    _
  $region21: #{lightweight_feat_forward.32} parent=0 // pred_fallthru
    _

// kernel: lightweight_feat_forward.34
$region0: #{lightweight_feat_forward.34}
  #allocation0 [shape = 'u32[]', space=smem, size = 0x4, offset = 0x4, fixed_abs, tag = 'smem constant byte address 0x4 - core index']
  #allocation1 [shape = 'u32[144,128]{1,0:T(1,128)}', space=vmem, size = 0x12000, scoped, tag = 'internal scratch']
  %s0 = inlined_call_operand.vmem [shape: bf16[2,384], index: 0, kind: input, shape index: {}]
  %s1 = inlined_call_operand.vmem [shape: bf16[384,48], index: 1, kind: input, shape index: {}]
  %s2 = inlined_call_operand.vmem [shape: f32[1,48], index: 2, kind: input, shape index: {}]
  %s3 = inlined_call_operand.vmem [shape: bf16[2,48], index: 3, kind: output, shape index: {}]
  %s4 = sld [smem:[#allocation0]]
  $region22: #{lightweight_feat_forward.34} parent=0
    _
  %s6 = ssub.s32 1, %s4
  %s7 = scalar_select 0, %s6, %s4
  // Predicated region
  $region2: #{lightweight_feat_forward.34} parent=0 // pred_check
    _
  $region3: #{lightweight_feat_forward.34} parent=0 // pred_check_branch
    %9 = sbr.rel (0) target = $region5
  $region4: #{lightweight_feat_forward.34} parent=0 // pred_region
    _
  $region5: #{lightweight_feat_forward.34} parent=0 // pred_fallthru
    _
  // Predicated region
  $region6: #{lightweight_feat_forward.34} parent=0 // pred_check
    _
  $region7: #{lightweight_feat_forward.34} parent=0 // pred_check_branch
    %11 = sbr.rel (0) target = $region9
  $region8: #{lightweight_feat_forward.34} parent=0 // pred_region
    _
  $region9: #{lightweight_feat_forward.34} parent=0 // pred_fallthru
    _
  // Predicated region
  $region10: #{lightweight_feat_forward.34} parent=0 // pred_check
    _
  $region11: #{lightweight_feat_forward.34} parent=0 // pred_check_branch
    %13 = sbr.rel (0) target = $region13
  $region12: #{lightweight_feat_forward.34} parent=0 // pred_region
    _
  $region13: #{lightweight_feat_forward.34} parent=0 // pred_fallthru
    _
  %v15 = vld [vmem:[%s0] sm:$0x7]
  %v16 = vld [vmem:[%s1] sm:$0xf]
  %v17 = vld [vmem:[%s1 + $0x4] sm:$0xf]
  %v18 = vld [vmem:[%s1 + $0x8] sm:$0xf]
  %v19 = vld [vmem:[%s1 + $0xc] sm:$0xf]
  %v20 = vld [vmem:[%s1 + $0x10] sm:$0xf]
  %v21 = vld [vmem:[%s1 + $0x14] sm:$0xf]
  %v22 = vld [vmem:[%s1 + $0x18] sm:$0xf]
  %v23 = vld [vmem:[%s1 + $0x1c] sm:$0xf]
  %v24 = vld [vmem:[%s1 + $0x20] sm:$0xf]
  %v25 = vld [vmem:[%s1 + $0x24] sm:$0xf]
  %v26 = vld [vmem:[%s1 + $0x28] sm:$0xf]
  %v27 = vld [vmem:[%s1 + $0x2c] sm:$0xf]
  %v28 = vld [vmem:[%s1 + $0x30] sm:$0xf]
  %v29 = vld [vmem:[%s1 + $0x34] sm:$0xf]
  %v30 = vld [vmem:[%s1 + $0x38] sm:$0xf]
  %v31 = vld [vmem:[%s1 + $0x3c] sm:$0xf]
  %v32 = vld [vmem:[%s1 + $0x40] sm:$0xf]
  %v33 = vld [vmem:[%s1 + $0x44] sm:$0xf]
  %v34 = vld [vmem:[%s1 + $0x48] sm:$0xf]
  %v35 = vld [vmem:[%s1 + $0x4c] sm:$0xf]
  %v36 = vld [vmem:[%s1 + $0x50] sm:$0xf]
  %v37 = vld [vmem:[%s1 + $0x54] sm:$0xf]
  %v38 = vld [vmem:[%s1 + $0x58] sm:$0xf]
  %v39 = vld [vmem:[%s1 + $0x5c] sm:$0xf]
  %v40 = vld [vmem:[%s1 + $0x60] sm:$0xf]
  %v41 = vld [vmem:[%s1 + $0x64] sm:$0xf]
  %v42 = vld [vmem:[%s1 + $0x68] sm:$0xf]
  %v43 = vld [vmem:[%s1 + $0x6c] sm:$0xf]
  %v44 = vld [vmem:[%s1 + $0x70] sm:$0xf]
  %v45 = vld [vmem:[%s1 + $0x74] sm:$0xf]
  %v46 = vld [vmem:[%s1 + $0x78] sm:$0xf]
  %v47 = vld [vmem:[%s1 + $0x7c] sm:$0xf]
  %v48 = vld [vmem:[%s1 + $0x80] sm:$0xf]
  %v49 = vld [vmem:[%s1 + $0x84] sm:$0xf]
  %v50 = vld [vmem:[%s1 + $0x88] sm:$0xf]
  %v51 = vld [vmem:[%s1 + $0x8c] sm:$0xf]
  %v52 = vld [vmem:[%s1 + $0x90] sm:$0xf]
  %v53 = vld [vmem:[%s1 + $0x94] sm:$0xf]
  %v54 = vld [vmem:[%s1 + $0x98] sm:$0xf]
  %v55 = vld [vmem:[%s1 + $0x9c] sm:$0xf]
  %v56 = vld [vmem:[%s1 + $0xa0] sm:$0xf]
  %v57 = vld [vmem:[%s1 + $0xa4] sm:$0xf]
  %v58 = vld [vmem:[%s1 + $0xa8] sm:$0xf]
  %v59 = vld [vmem:[%s1 + $0xac] sm:$0xf]
  %v60 = vld [vmem:[%s1 + $0xb0] sm:$0xf]
  %v61 = vld [vmem:[%s1 + $0xb4] sm:$0xf]
  %v62 = vld [vmem:[%s1 + $0xb8] sm:$0xf]
  %v63 = vld [vmem:[%s1 + $0xbc] sm:$0xf]
  %v64 = vld [vmem:[%s2] sm:$0x1]
  %v66 = vlaneseq
  %v67 = vshrl.u32 %v66, 7
  %v68 = vsub.s32 0, %v67
  %v69 = vrot.slane %v64, %v68
  %v73 = vunpack.c.l.s4 1966171168
  %v74 = vunpack.c.0.s8 %v73
  %v75 = vlaneseq
  %v76 = vshrl.u32 %v75, 7
  %v77 = vsub.s32 %v74, %v76
  %v78 = vrot.slane %v15, %v77
  %v79 = vcombine.high %v78, %v78
  %v81 = vunpack.c.l.s4 1966171168
  %v82 = vunpack.c.0.s8 %v81
  %v83 = vlaneseq
  %v84 = vshrl.u32 %v83, 7
  %v85 = vsub.s32 %v82, %v84
  %v86 = vrot.slane %v78, %v85
  %v88 = vunpack.c.l.s4 1966171168
  %v89 = vunpack.c.0.s8 %v88
  %v90 = vlaneseq
  %v91 = vshrl.u32 %v90, 7
  %v92 = vsub.s32 %v89, %v91
  %v93 = vrot.slane %v79, %v92
  %v94 = vcombine.high %v86, %v86
  %v146 = vunpack.c.l.b16 %v16
  %v147 = vunpack.c.l.b16 %v17
  %v148 = vunpack.c.l.b16 %v18
  %v149 = vunpack.c.l.b16 %v19
  %v150 = vunpack.c.l.b16 %v20
  %v151 = vunpack.c.l.b16 %v21
  %v152 = vunpack.c.l.b16 %v22
  %v153 = vunpack.c.l.b16 %v23
  %v154 = vunpack.c.l.b16 %v24
  %v155 = vunpack.c.l.b16 %v25
  %v156 = vunpack.c.l.b16 %v26
  %v157 = vunpack.c.l.b16 %v27
  %v158 = vunpack.c.l.b16 %v28
  %v159 = vunpack.c.l.b16 %v29
  %v160 = vunpack.c.l.b16 %v30
  %v161 = vunpack.c.l.b16 %v31
  %v162 = vunpack.c.l.b16 %v32
  %v163 = vunpack.c.l.b16 %v33
  %v164 = vunpack.c.l.b16 %v34
  %v165 = vunpack.c.l.b16 %v35
  %v166 = vunpack.c.l.b16 %v36
  %v167 = vunpack.c.l.b16 %v37
  %v168 = vunpack.c.l.b16 %v38
  %v169 = vunpack.c.l.b16 %v39
  %v170 = vunpack.c.l.b16 %v40
  %v171 = vunpack.c.l.b16 %v41
  %v172 = vunpack.c.l.b16 %v42
  %v173 = vunpack.c.l.b16 %v43
  %v174 = vunpack.c.l.b16 %v44
  %v175 = vunpack.c.l.b16 %v45
  %v176 = vunpack.c.l.b16 %v46
  %v177 = vunpack.c.l.b16 %v47
  %v178 = vunpack.c.l.b16 %v48
  %v179 = vunpack.c.l.b16 %v49
  %v180 = vunpack.c.l.b16 %v50
  %v181 = vunpack.c.l.b16 %v51
  %v182 = vunpack.c.l.b16 %v52
  %v183 = vunpack.c.l.b16 %v53
  %v184 = vunpack.c.l.b16 %v54
  %v185 = vunpack.c.l.b16 %v55
  %v186 = vunpack.c.l.b16 %v56
  %v187 = vunpack.c.l.b16 %v57
  %v188 = vunpack.c.l.b16 %v58
  %v189 = vunpack.c.l.b16 %v59
  %v190 = vunpack.c.l.b16 %v60
  %v191 = vunpack.c.l.b16 %v61
  %v192 = vunpack.c.l.b16 %v62
  %v193 = vunpack.c.l.b16 %v63
  %v194 = vpack.c.b16 %v147, %v146
  %v195 = vpack.c.b16 %v149, %v148
  %v196 = vpack.c.b16 %v151, %v150
  %v197 = vpack.c.b16 %v153, %v152
  %v198 = vpack.c.b16 %v155, %v154
  %v199 = vpack.c.b16 %v157, %v156
  %v200 = vpack.c.b16 %v159, %v158
  %v201 = vpack.c.b16 %v161, %v160
  %v202 = vpack.c.b16 %v163, %v162
  %v203 = vpack.c.b16 %v165, %v164
  %v204 = vpack.c.b16 %v167, %v166
  %v205 = vpack.c.b16 %v169, %v168
  %v206 = vpack.c.b16 %v171, %v170
  %v207 = vpack.c.b16 %v173, %v172
  %v208 = vpack.c.b16 %v175, %v174
  %v209 = vpack.c.b16 %v177, %v176
  %v210 = vpack.c.b16 %v179, %v178
  %v211 = vpack.c.b16 %v181, %v180
  %v212 = vpack.c.b16 %v183, %v182
  %v213 = vpack.c.b16 %v185, %v184
  %v214 = vpack.c.b16 %v187, %v186
  %v215 = vpack.c.b16 %v189, %v188
  %v216 = vpack.c.b16 %v191, %v190
  %v217 = vpack.c.b16 %v193, %v192
  %242 = vmatprep.subr.bf16.mxu0 0
  %243 = vmatpush1.bf16.msra.mxu0 %v201
  %244 = vmatprep.subr.bf16.mxu0 0
  %245 = vmatpush1.bf16.msra.mxu0 %v200
  %246 = vmatprep.subr.bf16.mxu0 0
  %247 = vmatpush1.bf16.msra.mxu0 %v199
  %248 = vmatprep.subr.bf16.mxu0 0
  %249 = vmatpush1.bf16.msra.mxu0 %v198
  %250 = vmatprep.subr.bf16.mxu0 0
  %251 = vmatpush1.bf16.msra.mxu0 %v197
  %252 = vmatprep.subr.bf16.mxu0 0
  %253 = vmatpush1.bf16.msra.mxu0 %v196
  %254 = vmatprep.subr.bf16.mxu0 0
  %255 = vmatpush1.bf16.msra.mxu0 %v195
  %256 = vmatprep.subr.bf16.mxu0 0
  %257 = vmatpush1.bf16.msra.mxu0 %v194
  %258 = vmatprep.subr.bf16.mxu0 0
  %259 = vmatpush2.bf16.msra.mxu0 %v209
  %260 = vmatprep.subr.bf16.mxu0 0
  %261 = vmatpush2.bf16.msra.mxu0 %v208
  %262 = vmatprep.subr.bf16.mxu0 0
  %263 = vmatpush2.bf16.msra.mxu0 %v207
  %264 = vmatprep.subr.bf16.mxu0 0
  %265 = vmatpush2.bf16.msra.mxu0 %v206
  %266 = vmatprep.subr.bf16.mxu0 0
  %267 = vmatpush2.bf16.msra.mxu0 %v205
  %268 = vmatprep.subr.bf16.mxu0 0
  %269 = vmatpush2.bf16.msra.mxu0 %v204
  %270 = vmatprep.subr.bf16.mxu0 0
  %271 = vmatpush2.bf16.msra.mxu0 %v203
  %272 = vmatprep.subr.bf16.mxu0 0
  %273 = vmatpush2.bf16.msra.mxu0 %v202
  %274 = vmatprep.mubr.bf16.mxu0 %v93
  %275 = vmatmul.mubr.bf16.gmra.mxu0 %v86
  %v276 = vpop.f32.mrf.mxu0
  %v277 = vadd.f32 %v69, %v276
  %v278 = vpop.f32.mrf.mxu0
  %v279 = vpop.f32.mrf.mxu0
  %v280 = vpop.f32.mrf.mxu0
  %281 = vdwg.mxu0
  %282 = vmatprep.subr.bf16.mxu0 0
  %283 = vmatpush1.bf16.msra.mxu0 %v217
  %284 = vmatprep.subr.bf16.mxu0 0
  %285 = vmatpush1.bf16.msra.mxu0 %v216
  %286 = vmatprep.subr.bf16.mxu0 0
  %287 = vmatpush1.bf16.msra.mxu0 %v215
  %288 = vmatprep.subr.bf16.mxu0 0
  %289 = vmatpush1.bf16.msra.mxu0 %v214
  %290 = vmatprep.subr.bf16.mxu0 0
  %291 = vmatpush1.bf16.msra.mxu0 %v213
  %292 = vmatprep.subr.bf16.mxu0 0
  %293 = vmatpush1.bf16.msra.mxu0 %v212
  %294 = vmatprep.subr.bf16.mxu0 0
  %295 = vmatpush1.bf16.msra.mxu0 %v211
  %296 = vmatprep.subr.bf16.mxu0 0
  %297 = vmatpush1.bf16.msra.mxu0 %v210
  %298 = vmatprep.subr.bf16.mxu0 0
  %299 = vmatpush2.bf16.msra.mxu0 0
  %300 = vmatprep.subr.bf16.mxu0 0
  %301 = vmatpush2.bf16.msra.mxu0 0
  %302 = vmatprep.subr.bf16.mxu0 0
  %303 = vmatpush2.bf16.msra.mxu0 0
  %304 = vmatprep.subr.bf16.mxu0 0
  %305 = vmatpush2.bf16.msra.mxu0 0
  %306 = vmatprep.subr.bf16.mxu0 0
  %307 = vmatpush2.bf16.msra.mxu0 0
  %308 = vmatprep.subr.bf16.mxu0 0
  %309 = vmatpush2.bf16.msra.mxu0 0
  %310 = vmatprep.subr.bf16.mxu0 0
  %311 = vmatpush2.bf16.msra.mxu0 0
  %312 = vmatprep.subr.bf16.mxu0 0
  %313 = vmatpush2.bf16.msra.mxu0 0
  %314 = vmatprep.mubr.bf16.mxu0 0
  %315 = vmatmul.mubr.bf16.gmra.mxu0 %v94
  %v316 = vpop.f32.mrf.mxu0
  %v317 = vadd.f32 %v277, %v316
  %v318 = vpop.f32.mrf.mxu0
  %v319 = vpop.f32.mrf.mxu0
  %v320 = vpop.f32.mrf.mxu0
  %321 = vdwg.mxu0
  %v322 = vmax.f32 %v317, 0.0
  %v323 = vpack.c.bf16 %v322, %v322
  %vm324 = vcmask 385024
  %325 = vst.msk [vmem:[%s3] sm:$0x1] %vm324, %v323
  // Predicated region
  $region14: #{lightweight_feat_forward.34} parent=0 // pred_check
    _
  $region15: #{lightweight_feat_forward.34} parent=0 // pred_check_branch
    %327 = sbr.rel (0) target = $region17
  $region16: #{lightweight_feat_forward.34} parent=0 // pred_region
    _
  $region17: #{lightweight_feat_forward.34} parent=0 // pred_fallthru
    _
  // Predicated region
  $region18: #{lightweight_feat_forward.34} parent=0 // pred_check
    _
  $region19: #{lightweight_feat_forward.34} parent=0 // pred_check_branch
    %329 = sbr.rel (0) target = $region21
  $region20: #{lightweight_feat_forward.34} parent=0 // pred_region
    _
  $region21: #{lightweight_feat_forward.34} parent=0 // pred_fallthru
    _

// kernel: lightweight_feat_forward.36
$region0: #{lightweight_feat_forward.36}
  #allocation0 [shape = 'u32[]', space=smem, size = 0x4, offset = 0x4, fixed_abs, tag = 'smem constant byte address 0x4 - core index']
  #allocation1 [shape = 'u32[144,128]{1,0:T(1,128)}', space=vmem, size = 0x12000, scoped, tag = 'internal scratch']
  %s0 = inlined_call_operand.vmem [shape: bf16[2,384], index: 0, kind: input, shape index: {}]
  %s1 = inlined_call_operand.vmem [shape: bf16[384,64], index: 1, kind: input, shape index: {}]
  %s2 = inlined_call_operand.vmem [shape: f32[1,64], index: 2, kind: input, shape index: {}]
  %s3 = inlined_call_operand.vmem [shape: bf16[2,64], index: 3, kind: output, shape index: {}]
  %s4 = sld [smem:[#allocation0]]
  $region22: #{lightweight_feat_forward.36} parent=0
    _
  %s6 = ssub.s32 1, %s4
  %s7 = scalar_select 0, %s6, %s4
  // Predicated region
  $region2: #{lightweight_feat_forward.36} parent=0 // pred_check
    _
  $region3: #{lightweight_feat_forward.36} parent=0 // pred_check_branch
    %9 = sbr.rel (0) target = $region5
  $region4: #{lightweight_feat_forward.36} parent=0 // pred_region
    _
  $region5: #{lightweight_feat_forward.36} parent=0 // pred_fallthru
    _
  // Predicated region
  $region6: #{lightweight_feat_forward.36} parent=0 // pred_check
    _
  $region7: #{lightweight_feat_forward.36} parent=0 // pred_check_branch
    %11 = sbr.rel (0) target = $region9
  $region8: #{lightweight_feat_forward.36} parent=0 // pred_region
    _
  $region9: #{lightweight_feat_forward.36} parent=0 // pred_fallthru
    _
  // Predicated region
  $region10: #{lightweight_feat_forward.36} parent=0 // pred_check
    _
  $region11: #{lightweight_feat_forward.36} parent=0 // pred_check_branch
    %13 = sbr.rel (0) target = $region13
  $region12: #{lightweight_feat_forward.36} parent=0 // pred_region
    _
  $region13: #{lightweight_feat_forward.36} parent=0 // pred_fallthru
    _
  %v15 = vld [vmem:[%s0] sm:$0x7]
  %v16 = vld [vmem:[%s1] sm:$0xf]
  %v17 = vld [vmem:[%s1 + $0x4] sm:$0xf]
  %v18 = vld [vmem:[%s1 + $0x8] sm:$0xf]
  %v19 = vld [vmem:[%s1 + $0xc] sm:$0xf]
  %v20 = vld [vmem:[%s1 + $0x10] sm:$0xf]
  %v21 = vld [vmem:[%s1 + $0x14] sm:$0xf]
  %v22 = vld [vmem:[%s1 + $0x18] sm:$0xf]
  %v23 = vld [vmem:[%s1 + $0x1c] sm:$0xf]
  %v24 = vld [vmem:[%s1 + $0x20] sm:$0xf]
  %v25 = vld [vmem:[%s1 + $0x24] sm:$0xf]
  %v26 = vld [vmem:[%s1 + $0x28] sm:$0xf]
  %v27 = vld [vmem:[%s1 + $0x2c] sm:$0xf]
  %v28 = vld [vmem:[%s1 + $0x30] sm:$0xf]
  %v29 = vld [vmem:[%s1 + $0x34] sm:$0xf]
  %v30 = vld [vmem:[%s1 + $0x38] sm:$0xf]
  %v31 = vld [vmem:[%s1 + $0x3c] sm:$0xf]
  %v32 = vld [vmem:[%s1 + $0x40] sm:$0xf]
  %v33 = vld [vmem:[%s1 + $0x44] sm:$0xf]
  %v34 = vld [vmem:[%s1 + $0x48] sm:$0xf]
  %v35 = vld [vmem:[%s1 + $0x4c] sm:$0xf]
  %v36 = vld [vmem:[%s1 + $0x50] sm:$0xf]
  %v37 = vld [vmem:[%s1 + $0x54] sm:$0xf]
  %v38 = vld [vmem:[%s1 + $0x58] sm:$0xf]
  %v39 = vld [vmem:[%s1 + $0x5c] sm:$0xf]
  %v40 = vld [vmem:[%s1 + $0x60] sm:$0xf]
  %v41 = vld [vmem:[%s1 + $0x64] sm:$0xf]
  %v42 = vld [vmem:[%s1 + $0x68] sm:$0xf]
  %v43 = vld [vmem:[%s1 + $0x6c] sm:$0xf]
  %v44 = vld [vmem:[%s1 + $0x70] sm:$0xf]
  %v45 = vld [vmem:[%s1 + $0x74] sm:$0xf]
  %v46 = vld [vmem:[%s1 + $0x78] sm:$0xf]
  %v47 = vld [vmem:[%s1 + $0x7c] sm:$0xf]
  %v48 = vld [vmem:[%s1 + $0x80] sm:$0xf]
  %v49 = vld [vmem:[%s1 + $0x84] sm:$0xf]
  %v50 = vld [vmem:[%s1 + $0x88] sm:$0xf]
  %v51 = vld [vmem:[%s1 + $0x8c] sm:$0xf]
  %v52 = vld [vmem:[%s1 + $0x90] sm:$0xf]
  %v53 = vld [vmem:[%s1 + $0x94] sm:$0xf]
  %v54 = vld [vmem:[%s1 + $0x98] sm:$0xf]
  %v55 = vld [vmem:[%s1 + $0x9c] sm:$0xf]
  %v56 = vld [vmem:[%s1 + $0xa0] sm:$0xf]
  %v57 = vld [vmem:[%s1 + $0xa4] sm:$0xf]
  %v58 = vld [vmem:[%s1 + $0xa8] sm:$0xf]
  %v59 = vld [vmem:[%s1 + $0xac] sm:$0xf]
  %v60 = vld [vmem:[%s1 + $0xb0] sm:$0xf]
  %v61 = vld [vmem:[%s1 + $0xb4] sm:$0xf]
  %v62 = vld [vmem:[%s1 + $0xb8] sm:$0xf]
  %v63 = vld [vmem:[%s1 + $0xbc] sm:$0xf]
  %v64 = vld [vmem:[%s2] sm:$0x1]
  %v66 = vlaneseq
  %v67 = vshrl.u32 %v66, 7
  %v68 = vsub.s32 0, %v67
  %v69 = vrot.slane %v64, %v68
  %v73 = vunpack.c.l.s4 1966171168
  %v74 = vunpack.c.0.s8 %v73
  %v75 = vlaneseq
  %v76 = vshrl.u32 %v75, 7
  %v77 = vsub.s32 %v74, %v76
  %v78 = vrot.slane %v15, %v77
  %v79 = vcombine.high %v78, %v78
  %v81 = vunpack.c.l.s4 1966171168
  %v82 = vunpack.c.0.s8 %v81
  %v83 = vlaneseq
  %v84 = vshrl.u32 %v83, 7
  %v85 = vsub.s32 %v82, %v84
  %v86 = vrot.slane %v78, %v85
  %v88 = vunpack.c.l.s4 1966171168
  %v89 = vunpack.c.0.s8 %v88
  %v90 = vlaneseq
  %v91 = vshrl.u32 %v90, 7
  %v92 = vsub.s32 %v89, %v91
  %v93 = vrot.slane %v79, %v92
  %v94 = vcombine.high %v86, %v86
  %v146 = vunpack.c.l.b16 %v16
  %v147 = vunpack.c.l.b16 %v17
  %v148 = vunpack.c.l.b16 %v18
  %v149 = vunpack.c.l.b16 %v19
  %v150 = vunpack.c.l.b16 %v20
  %v151 = vunpack.c.l.b16 %v21
  %v152 = vunpack.c.l.b16 %v22
  %v153 = vunpack.c.l.b16 %v23
  %v154 = vunpack.c.l.b16 %v24
  %v155 = vunpack.c.l.b16 %v25
  %v156 = vunpack.c.l.b16 %v26
  %v157 = vunpack.c.l.b16 %v27
  %v158 = vunpack.c.l.b16 %v28
  %v159 = vunpack.c.l.b16 %v29
  %v160 = vunpack.c.l.b16 %v30
  %v161 = vunpack.c.l.b16 %v31
  %v162 = vunpack.c.l.b16 %v32
  %v163 = vunpack.c.l.b16 %v33
  %v164 = vunpack.c.l.b16 %v34
  %v165 = vunpack.c.l.b16 %v35
  %v166 = vunpack.c.l.b16 %v36
  %v167 = vunpack.c.l.b16 %v37
  %v168 = vunpack.c.l.b16 %v38
  %v169 = vunpack.c.l.b16 %v39
  %v170 = vunpack.c.l.b16 %v40
  %v171 = vunpack.c.l.b16 %v41
  %v172 = vunpack.c.l.b16 %v42
  %v173 = vunpack.c.l.b16 %v43
  %v174 = vunpack.c.l.b16 %v44
  %v175 = vunpack.c.l.b16 %v45
  %v176 = vunpack.c.l.b16 %v46
  %v177 = vunpack.c.l.b16 %v47
  %v178 = vunpack.c.l.b16 %v48
  %v179 = vunpack.c.l.b16 %v49
  %v180 = vunpack.c.l.b16 %v50
  %v181 = vunpack.c.l.b16 %v51
  %v182 = vunpack.c.l.b16 %v52
  %v183 = vunpack.c.l.b16 %v53
  %v184 = vunpack.c.l.b16 %v54
  %v185 = vunpack.c.l.b16 %v55
  %v186 = vunpack.c.l.b16 %v56
  %v187 = vunpack.c.l.b16 %v57
  %v188 = vunpack.c.l.b16 %v58
  %v189 = vunpack.c.l.b16 %v59
  %v190 = vunpack.c.l.b16 %v60
  %v191 = vunpack.c.l.b16 %v61
  %v192 = vunpack.c.l.b16 %v62
  %v193 = vunpack.c.l.b16 %v63
  %v194 = vpack.c.b16 %v147, %v146
  %v195 = vpack.c.b16 %v149, %v148
  %v196 = vpack.c.b16 %v151, %v150
  %v197 = vpack.c.b16 %v153, %v152
  %v198 = vpack.c.b16 %v155, %v154
  %v199 = vpack.c.b16 %v157, %v156
  %v200 = vpack.c.b16 %v159, %v158
  %v201 = vpack.c.b16 %v161, %v160
  %v202 = vpack.c.b16 %v163, %v162
  %v203 = vpack.c.b16 %v165, %v164
  %v204 = vpack.c.b16 %v167, %v166
  %v205 = vpack.c.b16 %v169, %v168
  %v206 = vpack.c.b16 %v171, %v170
  %v207 = vpack.c.b16 %v173, %v172
  %v208 = vpack.c.b16 %v175, %v174
  %v209 = vpack.c.b16 %v177, %v176
  %v210 = vpack.c.b16 %v179, %v178
  %v211 = vpack.c.b16 %v181, %v180
  %v212 = vpack.c.b16 %v183, %v182
  %v213 = vpack.c.b16 %v185, %v184
  %v214 = vpack.c.b16 %v187, %v186
  %v215 = vpack.c.b16 %v189, %v188
  %v216 = vpack.c.b16 %v191, %v190
  %v217 = vpack.c.b16 %v193, %v192
  %242 = vmatprep.subr.bf16.mxu0 0
  %243 = vmatpush1.bf16.msra.mxu0 %v201
  %244 = vmatprep.subr.bf16.mxu0 0
  %245 = vmatpush1.bf16.msra.mxu0 %v200
  %246 = vmatprep.subr.bf16.mxu0 0
  %247 = vmatpush1.bf16.msra.mxu0 %v199
  %248 = vmatprep.subr.bf16.mxu0 0
  %249 = vmatpush1.bf16.msra.mxu0 %v198
  %250 = vmatprep.subr.bf16.mxu0 0
  %251 = vmatpush1.bf16.msra.mxu0 %v197
  %252 = vmatprep.subr.bf16.mxu0 0
  %253 = vmatpush1.bf16.msra.mxu0 %v196
  %254 = vmatprep.subr.bf16.mxu0 0
  %255 = vmatpush1.bf16.msra.mxu0 %v195
  %256 = vmatprep.subr.bf16.mxu0 0
  %257 = vmatpush1.bf16.msra.mxu0 %v194
  %258 = vmatprep.subr.bf16.mxu0 0
  %259 = vmatpush2.bf16.msra.mxu0 %v209
  %260 = vmatprep.subr.bf16.mxu0 0
  %261 = vmatpush2.bf16.msra.mxu0 %v208
  %262 = vmatprep.subr.bf16.mxu0 0
  %263 = vmatpush2.bf16.msra.mxu0 %v207
  %264 = vmatprep.subr.bf16.mxu0 0
  %265 = vmatpush2.bf16.msra.mxu0 %v206
  %266 = vmatprep.subr.bf16.mxu0 0
  %267 = vmatpush2.bf16.msra.mxu0 %v205
  %268 = vmatprep.subr.bf16.mxu0 0
  %269 = vmatpush2.bf16.msra.mxu0 %v204
  %270 = vmatprep.subr.bf16.mxu0 0
  %271 = vmatpush2.bf16.msra.mxu0 %v203
  %272 = vmatprep.subr.bf16.mxu0 0
  %273 = vmatpush2.bf16.msra.mxu0 %v202
  %274 = vmatprep.mubr.bf16.mxu0 %v93
  %275 = vmatmul.mubr.bf16.gmra.mxu0 %v86
  %v276 = vpop.f32.mrf.mxu0
  %v277 = vadd.f32 %v69, %v276
  %v278 = vpop.f32.mrf.mxu0
  %v279 = vpop.f32.mrf.mxu0
  %v280 = vpop.f32.mrf.mxu0
  %281 = vdwg.mxu0
  %282 = vmatprep.subr.bf16.mxu0 0
  %283 = vmatpush1.bf16.msra.mxu0 %v217
  %284 = vmatprep.subr.bf16.mxu0 0
  %285 = vmatpush1.bf16.msra.mxu0 %v216
  %286 = vmatprep.subr.bf16.mxu0 0
  %287 = vmatpush1.bf16.msra.mxu0 %v215
  %288 = vmatprep.subr.bf16.mxu0 0
  %289 = vmatpush1.bf16.msra.mxu0 %v214
  %290 = vmatprep.subr.bf16.mxu0 0
  %291 = vmatpush1.bf16.msra.mxu0 %v213
  %292 = vmatprep.subr.bf16.mxu0 0
  %293 = vmatpush1.bf16.msra.mxu0 %v212
  %294 = vmatprep.subr.bf16.mxu0 0
  %295 = vmatpush1.bf16.msra.mxu0 %v211
  %296 = vmatprep.subr.bf16.mxu0 0
  %297 = vmatpush1.bf16.msra.mxu0 %v210
  %298 = vmatprep.subr.bf16.mxu0 0
  %299 = vmatpush2.bf16.msra.mxu0 0
  %300 = vmatprep.subr.bf16.mxu0 0
  %301 = vmatpush2.bf16.msra.mxu0 0
  %302 = vmatprep.subr.bf16.mxu0 0
  %303 = vmatpush2.bf16.msra.mxu0 0
  %304 = vmatprep.subr.bf16.mxu0 0
  %305 = vmatpush2.bf16.msra.mxu0 0
  %306 = vmatprep.subr.bf16.mxu0 0
  %307 = vmatpush2.bf16.msra.mxu0 0
  %308 = vmatprep.subr.bf16.mxu0 0
  %309 = vmatpush2.bf16.msra.mxu0 0
  %310 = vmatprep.subr.bf16.mxu0 0
  %311 = vmatpush2.bf16.msra.mxu0 0
  %312 = vmatprep.subr.bf16.mxu0 0
  %313 = vmatpush2.bf16.msra.mxu0 0
  %314 = vmatprep.mubr.bf16.mxu0 0
  %315 = vmatmul.mubr.bf16.gmra.mxu0 %v94
  %v316 = vpop.f32.mrf.mxu0
  %v317 = vadd.f32 %v277, %v316
  %v318 = vpop.f32.mrf.mxu0
  %v319 = vpop.f32.mrf.mxu0
  %v320 = vpop.f32.mrf.mxu0
  %321 = vdwg.mxu0
  %v322 = vmax.f32 %v317, 0.0
  %v323 = vpack.c.bf16 %v322, %v322
  %vm324 = vcmask 516096
  %325 = vst.msk [vmem:[%s3] sm:$0x1] %vm324, %v323
  // Predicated region
  $region14: #{lightweight_feat_forward.36} parent=0 // pred_check
    _
  $region15: #{lightweight_feat_forward.36} parent=0 // pred_check_branch
    %327 = sbr.rel (0) target = $region17
  $region16: #{lightweight_feat_forward.36} parent=0 // pred_region
    _
  $region17: #{lightweight_feat_forward.36} parent=0 // pred_fallthru
    _
  // Predicated region
  $region18: #{lightweight_feat_forward.36} parent=0 // pred_check
    _
  $region19: #{lightweight_feat_forward.36} parent=0 // pred_check_branch
    %329 = sbr.rel (0) target = $region21
  $region20: #{lightweight_feat_forward.36} parent=0 // pred_region
    _
  $region21: #{lightweight_feat_forward.36} parent=0 // pred_fallthru
    _

// kernel: lightweight_feat_forward.33
$region0: #{lightweight_feat_forward.33}
  #allocation0 [shape = 'u32[]', space=smem, size = 0x4, offset = 0x4, fixed_abs, tag = 'smem constant byte address 0x4 - core index']
  #allocation1 [shape = 'u32[144,128]{1,0:T(1,128)}', space=vmem, size = 0x12000, scoped, tag = 'internal scratch']
  %s0 = inlined_call_operand.vmem [shape: bf16[2,17,48], index: 0, kind: input, shape index: {}]
  %s1 = inlined_call_operand.vmem [shape: bf16[48,192], index: 1, kind: input, shape index: {}]
  %s2 = inlined_call_operand.vmem [shape: bf16[9,48,192], index: 2, kind: input, shape index: {}]
  %s3 = inlined_call_operand.vmem [shape: f32[1,192], index: 3, kind: input, shape index: {}]
  %s4 = inlined_call_operand.vmem [shape: f32[1,192], index: 4, kind: input, shape index: {}]
  %s5 = inlined_call_operand.vmem [shape: bf16[2,3,384], index: 5, kind: output, shape index: {}]
  %s6 = sld [smem:[#allocation0]]
  $region53: #{lightweight_feat_forward.33} parent=0
    _
  %s8 = ssub.s32 1, %s6
  %s9 = scalar_select 0, %s8, %s6
  loop: start=0, step=1, limit=4
  $region2: #{lightweight_feat_forward.33} parent=0 // loop_pre_header
    _
  $region3: #{lightweight_feat_forward.33} parent=0 // loop_header
    %s11 = sphi 0, %s15
    %p12 = scmp.ge.s32.totalorder %s11, 4
    %s21 = sphi 0, %s23
    %s24 = sphi 0, %s21
    %s25 = sphi 0, %s24
    %s41 = sphi 0, %s25
    %s45 = sphi 0, %s45
    %s47 = sphi 0, %s45
    %s48 = sphi 0, %s47
    %s62 = sphi 0, %s48
    %s66 = sphi 0, %s66
    %s68 = sphi 0, %s66
    %s69 = sphi 0, %s68
    %s83 = sphi 0, %s69
    %s87 = sphi 0, %s87
    %s89 = sphi 0, %s87
    %s90 = sphi 0, %s89
    %s104 = sphi 0, %s90
    %s108 = sphi 0, %s108
    %s110 = sphi 0, %s108
    %s111 = sphi 0, %s110
    %s125 = sphi 0, %s111
    %s131 = sphi 0, %s133
    %s134 = sphi 0, %s131
    %s135 = sphi 0, %s134
    %s151 = sphi 0, %s135
  $region4: #{lightweight_feat_forward.33} parent=0 // loop_header_branch
    %14 = sbr.rel (%p12) target = $region8
  $region5: #{lightweight_feat_forward.33} parent=0 // loop_body
    %s16 = ssub.s32 %s11, 1
    %s17 = ssub.s32 %s11, 2
    %s18 = sadd.s32 %s11, 1
    %s19 = ssub.s32 %s11, %s18
    %p20 = scmp.eq.s32.totalorder %s19, 0
    %s22 = sadd.s32 %s21, 1
    %s23 = scalar_select %p20, %s21, %s22
    %p26 = pneg %p20
    %p27 = scmp.eq.s32.totalorder %s11, 1
    %p28 = por %p26, %p27
    %p29 = scmp.ne.s32.totalorder %s21, %s24
    %p30 = scmp.eq.s32.totalorder %s11, 0
    %p31 = por %p29, %p30
    %p32 = scmp.ne.s32.totalorder %s21, %s24
    %p33 = scmp.eq.s32.totalorder %s16, 1
    %p34 = por %p32, %p33
    %p35 = scmp.ne.s32.totalorder %s24, %s25
    %p36 = scmp.eq.s32.totalorder %s16, 0
    %p37 = por %p35, %p36
    %p38 = scmp.ne.s32.totalorder %s24, %s25
    %p39 = scmp.eq.s32.totalorder %s17, 1
    %p40 = por %p38, %p39
    %p42 = scmp.ne.s32.totalorder %s25, %s41
    %p43 = scmp.eq.s32.totalorder %s17, 0
    %p44 = por %p42, %p43
    %s46 = sadd.s32 %s45, 1
    %p49 = scmp.eq.s32.totalorder %s11, 1
    %p50 = scmp.ne.s32.totalorder %s45, %s47
    %p51 = scmp.eq.s32.totalorder %s11, 0
    %p52 = por %p50, %p51
    %p53 = scmp.ne.s32.totalorder %s45, %s47
    %p54 = scmp.eq.s32.totalorder %s16, 1
    %p55 = por %p53, %p54
    %p56 = scmp.ne.s32.totalorder %s47, %s48
    %p57 = scmp.eq.s32.totalorder %s16, 0
    %p58 = por %p56, %p57
    %p59 = scmp.ne.s32.totalorder %s47, %s48
    %p60 = scmp.eq.s32.totalorder %s17, 1
    %p61 = por %p59, %p60
    %p63 = scmp.ne.s32.totalorder %s48, %s62
    %p64 = scmp.eq.s32.totalorder %s17, 0
    %p65 = por %p63, %p64
    %s67 = sadd.s32 %s66, 1
    %p70 = scmp.eq.s32.totalorder %s11, 1
    %p71 = scmp.ne.s32.totalorder %s66, %s68
    %p72 = scmp.eq.s32.totalorder %s11, 0
    %p73 = por %p71, %p72
    %p74 = scmp.ne.s32.totalorder %s66, %s68
    %p75 = scmp.eq.s32.totalorder %s16, 1
    %p76 = por %p74, %p75
    %p77 = scmp.ne.s32.totalorder %s68, %s69
    %p78 = scmp.eq.s32.totalorder %s16, 0
    %p79 = por %p77, %p78
    %p80 = scmp.ne.s32.totalorder %s68, %s69
    %p81 = scmp.eq.s32.totalorder %s17, 1
    %p82 = por %p80, %p81
    %p84 = scmp.ne.s32.totalorder %s69, %s83
    %p85 = scmp.eq.s32.totalorder %s17, 0
    %p86 = por %p84, %p85
    %s88 = sadd.s32 %s87, 1
    %p91 = scmp.eq.s32.totalorder %s11, 1
    %p92 = scmp.ne.s32.totalorder %s87, %s89
    %p93 = scmp.eq.s32.totalorder %s11, 0
    %p94 = por %p92, %p93
    %p95 = scmp.ne.s32.totalorder %s87, %s89
    %p96 = scmp.eq.s32.totalorder %s16, 1
    %p97 = por %p95, %p96
    %p98 = scmp.ne.s32.totalorder %s89, %s90
    %p99 = scmp.eq.s32.totalorder %s16, 0
    %p100 = por %p98, %p99
    %p101 = scmp.ne.s32.totalorder %s89, %s90
    %p102 = scmp.eq.s32.totalorder %s17, 1
    %p103 = por %p101, %p102
    %p105 = scmp.ne.s32.totalorder %s90, %s104
    %p106 = scmp.eq.s32.totalorder %s17, 0
    %p107 = por %p105, %p106
    %s109 = sadd.s32 %s108, 1
    %p112 = scmp.eq.s32.totalorder %s11, 1
    %p113 = scmp.ne.s32.totalorder %s108, %s110
    %p114 = scmp.eq.s32.totalorder %s11, 0
    %p115 = por %p113, %p114
    %p116 = scmp.ne.s32.totalorder %s108, %s110
    %p117 = scmp.eq.s32.totalorder %s16, 1
    %p118 = por %p116, %p117
    %p119 = scmp.ne.s32.totalorder %s110, %s111
    %p120 = scmp.eq.s32.totalorder %s16, 0
    %p121 = por %p119, %p120
    %p122 = scmp.ne.s32.totalorder %s110, %s111
    %p123 = scmp.eq.s32.totalorder %s17, 1
    %p124 = por %p122, %p123
    %p126 = scmp.ne.s32.totalorder %s111, %s125
    %p127 = scmp.eq.s32.totalorder %s17, 0
    %p128 = por %p126, %p127
    %s129 = ssub.s32 %s11, %s18
    %p130 = scmp.eq.s32.totalorder %s129, 0
    %s132 = sadd.s32 %s131, 1
    %s133 = scalar_select %p130, %s131, %s132
    %p136 = pneg %p130
    %p137 = scmp.eq.s32.totalorder %s11, 1
    %p138 = por %p136, %p137
    %p139 = scmp.ne.s32.totalorder %s131, %s134
    %p140 = scmp.eq.s32.totalorder %s11, 0
    %p141 = por %p139, %p140
    %p142 = scmp.ne.s32.totalorder %s131, %s134
    %p143 = scmp.eq.s32.totalorder %s16, 1
    %p144 = por %p142, %p143
    %p145 = scmp.ne.s32.totalorder %s134, %s135
    %p146 = scmp.eq.s32.totalorder %s16, 0
    %p147 = por %p145, %p146
    %p148 = scmp.ne.s32.totalorder %s134, %s135
    %p149 = scmp.eq.s32.totalorder %s17, 1
    %p150 = por %p148, %p149
    %p152 = scmp.ne.s32.totalorder %s135, %s151
    %p153 = scmp.eq.s32.totalorder %s17, 0
    %p154 = por %p152, %p153
    %p155 = scmp.le.s32.totalorder 1, %s11
    %p156 = scmp.lt.s32.totalorder %s11, 3
    %p157 = pnand %p155, %p156
    %p158 = pneg %p157
    // Predicated region
    $region9: #{lightweight_feat_forward.33} parent=5 // pred_check
      _
    $region10: #{lightweight_feat_forward.33} parent=5 // pred_check_branch
      %160 = sbr.rel (%p157) target = $region12
    $region11: #{lightweight_feat_forward.33} parent=5 // pred_region
      %s161 = ssub.s32 %s11, 1
      // Predicated region
      $region13: #{lightweight_feat_forward.33} parent=11 // pred_check
        %p162 = pneg %p58
      $region14: #{lightweight_feat_forward.33} parent=11 // pred_check_branch
        %164 = sbr.rel (%p162) target = $region16
      $region15: #{lightweight_feat_forward.33} parent=11 // pred_region
        _
      $region16: #{lightweight_feat_forward.33} parent=11 // pred_fallthru
        _
      // Predicated region
      $region17: #{lightweight_feat_forward.33} parent=11 // pred_check
        %p165 = pneg %p79
      $region18: #{lightweight_feat_forward.33} parent=11 // pred_check_branch
        %167 = sbr.rel (%p165) target = $region20
      $region19: #{lightweight_feat_forward.33} parent=11 // pred_region
        _
      $region20: #{lightweight_feat_forward.33} parent=11 // pred_fallthru
        _
      // Predicated region
      $region21: #{lightweight_feat_forward.33} parent=11 // pred_check
        %p168 = pneg %p100
      $region22: #{lightweight_feat_forward.33} parent=11 // pred_check_branch
        %170 = sbr.rel (%p168) target = $region24
      $region23: #{lightweight_feat_forward.33} parent=11 // pred_region
        _
      $region24: #{lightweight_feat_forward.33} parent=11 // pred_fallthru
        _
      // Predicated region
      $region25: #{lightweight_feat_forward.33} parent=11 // pred_check
        %p171 = pneg %p121
      $region26: #{lightweight_feat_forward.33} parent=11 // pred_check_branch
        %173 = sbr.rel (%p171) target = $region28
      $region27: #{lightweight_feat_forward.33} parent=11 // pred_region
        _
      $region28: #{lightweight_feat_forward.33} parent=11 // pred_fallthru
        _
    $region12: #{lightweight_feat_forward.33} parent=5 // pred_fallthru
      _
    %p174 = scmp.lt.s32.totalorder %s11, 2
    // Predicated region
    $region29: #{lightweight_feat_forward.33} parent=5 // pred_check
      %p175 = pneg %p174
    $region30: #{lightweight_feat_forward.33} parent=5 // pred_check_branch
      %177 = sbr.rel (%p175) target = $region32
    $region31: #{lightweight_feat_forward.33} parent=5 // pred_region
      // Predicated region
      $region33: #{lightweight_feat_forward.33} parent=31 // pred_check
        %p178 = pneg %p31
      $region34: #{lightweight_feat_forward.33} parent=31 // pred_check_branch
        %180 = sbr.rel (%p178) target = $region36
      $region35: #{lightweight_feat_forward.33} parent=31 // pred_region
        %p181 = scmp.lt.s32.totalorder %s11, 1
        %s182 = scalar_select %p181, %s11, 1
        %s183 = smul.addr %s182, 3
        %s184 = smul.addr %s183, 4
        %s185 = scalar_lea.vmem %s0, %s184
      $region36: #{lightweight_feat_forward.33} parent=31 // pred_fallthru
        _
    $region32: #{lightweight_feat_forward.33} parent=5 // pred_fallthru
      _
    %p186 = scmp.le.s32.totalorder 1, %s11
    %p187 = scmp.lt.s32.totalorder %s11, 3
    %p188 = pnand %p186, %p187
    %p189 = pneg %p188
    // Predicated region
    $region37: #{lightweight_feat_forward.33} parent=5 // pred_check
      _
    $region38: #{lightweight_feat_forward.33} parent=5 // pred_check_branch
      %191 = sbr.rel (%p188) target = $region40
    $region39: #{lightweight_feat_forward.33} parent=5 // pred_region
      %s192 = ssub.s32 %s11, 1
      %p193 = scmp.lt.s32.totalorder %s16, 1
      %s194 = scalar_select %p193, %s16, 1
      %s195 = smul.addr %s194, 3
      %s196 = smul.addr %s195, 4
      %s197 = scalar_lea.vmem %s0, %s196
      %p198 = pneg %p37
      %p199 = pneg %p34
      %p200 = pneg %p58
      %p201 = pneg %p55
      %p202 = pneg %p79
      %p203 = pneg %p76
      %p204 = pneg %p100
      %p205 = pneg %p97
      %p206 = pneg %p121
      %p207 = pneg %p118
      %p208 = pneg %p147
      %p209 = pneg %p144
      %p210 = scmp.lt.s32.totalorder %s16, 1
      %s211 = scalar_select %p210, %s16, 1
      %s212 = smul.addr %s211, 3
      %s213 = smul.addr %s212, 2
      %s214 = scalar_lea.vmem %s5, %s213
      %p215 = scmp.lt.s32.totalorder %s16, 1
      %s216 = scalar_select %p215, %s16, 1
      %s217 = smul.addr %s216, 3
      %s218 = smul.addr %s217, 4
      %s219 = scalar_lea.vmem %s0, %s218
      %p220 = scmp.lt.s32.totalorder %s16, 1
      %s221 = scalar_select %p220, %s16, 1
      %s222 = smul.addr %s221, 3
      %s223 = smul.addr %s222, 2
      %s224 = scalar_lea.vmem %s5, %s223
      %v226 = vld [vmem:[%s219] sm:$0xc]
      %v227 = vld [vmem:[%s1] sm:$0xff]
      %v228 = vld [vmem:[%s1 + $0x8] sm:$0xff]
      %v229 = vld [vmem:[%s1 + $0x10] sm:$0xff]
      %v230 = vld [vmem:[%s1 + $0x18] sm:$0xff]
      %v231 = vld [vmem:[%s1 + $0x20] sm:$0xff]
      %v232 = vld [vmem:[%s1 + $0x28] sm:$0xff]
      %v233 = vld [vmem:[%s3] sm:$0x3]
      %v235 = vlaneseq
      %v236 = vshrl.u32 %v235, 7
      %v237 = vsub.s32 0, %v236
      %v238 = vrot.slane %v233, %v237
      %v239 = vlaneseq
      %v240 = vshrl.u32 %v239, 7
      %v241 = vsub.s32 1, %v240
      %v242 = vrot.slane %v233, %v241
      %v246 = vunpack.c.l.b16 %v226
      %v247 = vpack.c.b16 %v246, %v246
      %v248 = vrot.slane %v247, 2
      %v255 = vunpack.c.l.b16 %v227
      %v256 = vunpack.c.h.b16 %v227
      %v257 = vunpack.c.l.b16 %v228
      %v258 = vunpack.c.h.b16 %v228
      %v259 = vunpack.c.l.b16 %v229
      %v260 = vunpack.c.h.b16 %v229
      %v261 = vunpack.c.l.b16 %v230
      %v262 = vunpack.c.h.b16 %v230
      %v263 = vunpack.c.l.b16 %v231
      %v264 = vunpack.c.h.b16 %v231
      %v265 = vunpack.c.l.b16 %v232
      %v266 = vunpack.c.h.b16 %v232
      %v267 = vpack.c.b16 %v257, %v255
      %v268 = vpack.c.b16 %v258, %v256
      %v269 = vpack.c.b16 %v261, %v259
      %v270 = vpack.c.b16 %v262, %v260
      %v271 = vpack.c.b16 %v265, %v263
      %v272 = vpack.c.b16 %v266, %v264
      %vm279 = vcmask 392192
      %v281 = vsel %vm279, %v248, 0
      %283 = vmatprep.subr.bf16.mxu0 0
      %284 = vmatpush1.bf16.msra.mxu0 0
      %285 = vmatprep.subr.bf16.mxu0 0
      %286 = vmatpush1.bf16.msra.mxu0 0
      %287 = vmatprep.subr.bf16.mxu0 0
      %288 = vmatpush1.bf16.msra.mxu0 0
      %289 = vmatprep.subr.bf16.mxu0 0
      %290 = vmatpush1.bf16.msra.mxu0 0
      %291 = vmatprep.subr.bf16.mxu0 0
      %292 = vmatpush1.bf16.msra.mxu0 0
      %293 = vmatprep.subr.bf16.mxu0 %v272
      %294 = vmatpush1.bf16.msra.mxu0 %v271
      %295 = vmatprep.subr.bf16.mxu0 %v270
      %296 = vmatpush1.bf16.msra.mxu0 %v269
      %297 = vmatprep.subr.bf16.mxu0 %v268
      %298 = vmatpush1.bf16.msra.mxu0 %v267
      %299 = vmatprep.subr.bf16.mxu0 0
      %300 = vmatpush2.bf16.msra.mxu0 0
      %301 = vmatprep.subr.bf16.mxu0 0
      %302 = vmatpush2.bf16.msra.mxu0 0
      %303 = vmatprep.subr.bf16.mxu0 0
      %304 = vmatpush2.bf16.msra.mxu0 0
      %305 = vmatprep.subr.bf16.mxu0 0
      %306 = vmatpush2.bf16.msra.mxu0 0
      %307 = vmatprep.subr.bf16.mxu0 0
      %308 = vmatpush2.bf16.msra.mxu0 0
      %309 = vmatprep.subr.bf16.mxu0 0
      %310 = vmatpush2.bf16.msra.mxu0 0
      %311 = vmatprep.subr.bf16.mxu0 0
      %312 = vmatpush2.bf16.msra.mxu0 0
      %313 = vmatprep.subr.bf16.mxu0 0
      %314 = vmatpush2.bf16.msra.mxu0 0
      %315 = vmatprep.mubr.bf16.mxu0 0
      %316 = vmatmul.mubr.bf16.gmra.mxu0 %v281
      %v317 = vpop.f32.mrf.mxu0
      %v318 = vadd.f32 %v238, %v317
      %v319 = vpop.f32.mrf.mxu0
      %v320 = vadd.f32 %v242, %v319
      %v321 = vpop.f32.mrf.mxu0
      %v322 = vpop.f32.mrf.mxu0
      %323 = vdwg.mxu0
      %v324 = vld [vmem:[%s219] sm:$0x3]
      %v325 = vld [vmem:[%s2] sm:$0xff]
      %v326 = vld [vmem:[%s2 + $0x8] sm:$0xff]
      %v327 = vld [vmem:[%s2 + $0x10] sm:$0xff]
      %v328 = vld [vmem:[%s2 + $0x18] sm:$0xff]
      %v329 = vld [vmem:[%s2 + $0x20] sm:$0xff]
      %v330 = vld [vmem:[%s2 + $0x28] sm:$0xff]
      %s331 = scalar_lea.vmem %s2, 48
      %v332 = vld [vmem:[%s331] sm:$0xff]
      %v333 = vld [vmem:[%s331 + $0x8] sm:$0xff]
      %v334 = vld [vmem:[%s331 + $0x10] sm:$0xff]
      %v335 = vld [vmem:[%s331 + $0x18] sm:$0xff]
      %v336 = vld [vmem:[%s331 + $0x20] sm:$0xff]
      %v337 = vld [vmem:[%s331 + $0x28] sm:$0xff]
      %v339 = vunpack.c.l.b16 %v324
      %v340 = vpack.c.b16 %v339, %v339
      %v342 = vshrl.u32 %v340, 16
      %v344 = vshll.u32 %v340, 16
      %v346 = vrot.slane %v344, 1
      %v347 = vor.u32 %v342, %v346
      %v354 = vunpack.c.l.b16 %v332
      %v355 = vunpack.c.h.b16 %v332
      %v356 = vunpack.c.l.b16 %v333
      %v357 = vunpack.c.h.b16 %v333
      %v358 = vunpack.c.l.b16 %v334
      %v359 = vunpack.c.h.b16 %v334
      %v360 = vunpack.c.l.b16 %v335
      %v361 = vunpack.c.h.b16 %v335
      %v362 = vunpack.c.l.b16 %v336
      %v363 = vunpack.c.h.b16 %v336
      %v364 = vunpack.c.l.b16 %v337
      %v365 = vunpack.c.h.b16 %v337
      %v366 = vpack.c.b16 %v356, %v354
      %v367 = vpack.c.b16 %v357, %v355
      %v368 = vpack.c.b16 %v360, %v358
      %v369 = vpack.c.b16 %v361, %v359
      %v370 = vpack.c.b16 %v364, %v362
      %v371 = vpack.c.b16 %v365, %v363
      %v379 = vsel %vm279, %v347, 0
      %381 = vmatprep.subr.bf16.mxu0 0
      %382 = vmatpush1.bf16.msra.mxu0 0
      %383 = vmatprep.subr.bf16.mxu0 0
      %384 = vmatpush1.bf16.msra.mxu0 0
      %385 = vmatprep.subr.bf16.mxu0 0
      %386 = vmatpush1.bf16.msra.mxu0 0
      %387 = vmatprep.subr.bf16.mxu0 0
      %388 = vmatpush1.bf16.msra.mxu0 0
      %389 = vmatprep.subr.bf16.mxu0 0
      %390 = vmatpush1.bf16.msra.mxu0 0
      %391 = vmatprep.subr.bf16.mxu0 %v371
      %392 = vmatpush1.bf16.msra.mxu0 %v370
      %393 = vmatprep.subr.bf16.mxu0 %v369
      %394 = vmatpush1.bf16.msra.mxu0 %v368
      %395 = vmatprep.subr.bf16.mxu0 %v367
      %396 = vmatpush1.bf16.msra.mxu0 %v366
      %397 = vmatprep.subr.bf16.mxu0 0
      %398 = vmatpush2.bf16.msra.mxu0 0
      %399 = vmatprep.subr.bf16.mxu0 0
      %400 = vmatpush2.bf16.msra.mxu0 0
      %401 = vmatprep.subr.bf16.mxu0 0
      %402 = vmatpush2.bf16.msra.mxu0 0
      %403 = vmatprep.subr.bf16.mxu0 0
      %404 = vmatpush2.bf16.msra.mxu0 0
      %405 = vmatprep.subr.bf16.mxu0 0
      %406 = vmatpush2.bf16.msra.mxu0 0
      %407 = vmatprep.subr.bf16.mxu0 0
      %408 = vmatpush2.bf16.msra.mxu0 0
      %409 = vmatprep.subr.bf16.mxu0 0
      %410 = vmatpush2.bf16.msra.mxu0 0
      %411 = vmatprep.subr.bf16.mxu0 0
      %412 = vmatpush2.bf16.msra.mxu0 0
      %413 = vmatprep.mubr.bf16.mxu0 0
      %414 = vmatmul.mubr.bf16.gmra.mxu0 %v379
      %v415 = vpop.f32.mrf.mxu0
      %v416 = vadd.f32 0.0, %v415
      %v417 = vpop.f32.mrf.mxu0
      %v418 = vadd.f32 0.0, %v417
      %v419 = vpop.f32.mrf.mxu0
      %v420 = vpop.f32.mrf.mxu0
      %421 = vdwg.mxu0
      %v428 = vunpack.c.l.b16 %v325
      %v429 = vunpack.c.h.b16 %v325
      %v430 = vunpack.c.l.b16 %v326
      %v431 = vunpack.c.h.b16 %v326
      %v432 = vunpack.c.l.b16 %v327
      %v433 = vunpack.c.h.b16 %v327
      %v434 = vunpack.c.l.b16 %v328
      %v435 = vunpack.c.h.b16 %v328
      %v436 = vunpack.c.l.b16 %v329
      %v437 = vunpack.c.h.b16 %v329
      %v438 = vunpack.c.l.b16 %v330
      %v439 = vunpack.c.h.b16 %v330
      %v440 = vpack.c.b16 %v430, %v428
      %v441 = vpack.c.b16 %v431, %v429
      %v442 = vpack.c.b16 %v434, %v432
      %v443 = vpack.c.b16 %v435, %v433
      %v444 = vpack.c.b16 %v438, %v436
      %v445 = vpack.c.b16 %v439, %v437
      %v453 = vsel %vm279, %v324, 0
      %455 = vmatprep.subr.bf16.mxu0 0
      %456 = vmatpush1.bf16.msra.mxu0 0
      %457 = vmatprep.subr.bf16.mxu0 0
      %458 = vmatpush1.bf16.msra.mxu0 0
      %459 = vmatprep.subr.bf16.mxu0 0
      %460 = vmatpush1.bf16.msra.mxu0 0
      %461 = vmatprep.subr.bf16.mxu0 0
      %462 = vmatpush1.bf16.msra.mxu0 0
      %463 = vmatprep.subr.bf16.mxu0 0
      %464 = vmatpush1.bf16.msra.mxu0 0
      %465 = vmatprep.subr.bf16.mxu0 %v445
      %466 = vmatpush1.bf16.msra.mxu0 %v444
      %467 = vmatprep.subr.bf16.mxu0 %v443
      %468 = vmatpush1.bf16.msra.mxu0 %v442
      %469 = vmatprep.subr.bf16.mxu0 %v441
      %470 = vmatpush1.bf16.msra.mxu0 %v440
      %471 = vmatprep.subr.bf16.mxu0 0
      %472 = vmatpush2.bf16.msra.mxu0 0
      %473 = vmatprep.subr.bf16.mxu0 0
      %474 = vmatpush2.bf16.msra.mxu0 0
      %475 = vmatprep.subr.bf16.mxu0 0
      %476 = vmatpush2.bf16.msra.mxu0 0
      %477 = vmatprep.subr.bf16.mxu0 0
      %478 = vmatpush2.bf16.msra.mxu0 0
      %479 = vmatprep.subr.bf16.mxu0 0
      %480 = vmatpush2.bf16.msra.mxu0 0
      %481 = vmatprep.subr.bf16.mxu0 0
      %482 = vmatpush2.bf16.msra.mxu0 0
      %483 = vmatprep.subr.bf16.mxu0 0
      %484 = vmatpush2.bf16.msra.mxu0 0
      %485 = vmatprep.subr.bf16.mxu0 0
      %486 = vmatpush2.bf16.msra.mxu0 0
      %487 = vmatprep.mubr.bf16.mxu0 0
      %488 = vmatmul.mubr.bf16.gmra.mxu0 %v453
      %v489 = vpop.f32.mrf.mxu0
      %v490 = vadd.f32 %v416, %v489
      %v491 = vpop.f32.mrf.mxu0
      %v492 = vadd.f32 %v418, %v491
      %v493 = vpop.f32.mrf.mxu0
      %v494 = vpop.f32.mrf.mxu0
      %495 = vdwg.mxu0
      %v496 = vld [vmem:[%s219] sm:$0x6]
      %s497 = scalar_lea.vmem %s2, 96
      %v498 = vld [vmem:[%s497] sm:$0xff]
      %v499 = vld [vmem:[%s497 + $0x8] sm:$0xff]
      %v500 = vld [vmem:[%s497 + $0x10] sm:$0xff]
      %v501 = vld [vmem:[%s497 + $0x18] sm:$0xff]
      %v502 = vld [vmem:[%s497 + $0x20] sm:$0xff]
      %v503 = vld [vmem:[%s497 + $0x28] sm:$0xff]
      %v505 = vunpack.c.l.b16 %v496
      %v506 = vpack.c.b16 %v505, %v505
      %v507 = vrot.slane %v506, 1
      %v514 = vunpack.c.l.b16 %v498
      %v515 = vunpack.c.h.b16 %v498
      %v516 = vunpack.c.l.b16 %v499
      %v517 = vunpack.c.h.b16 %v499
      %v518 = vunpack.c.l.b16 %v500
      %v519 = vunpack.c.h.b16 %v500
      %v520 = vunpack.c.l.b16 %v501
      %v521 = vunpack.c.h.b16 %v501
      %v522 = vunpack.c.l.b16 %v502
      %v523 = vunpack.c.h.b16 %v502
      %v524 = vunpack.c.l.b16 %v503
      %v525 = vunpack.c.h.b16 %v503
      %v526 = vpack.c.b16 %v516, %v514
      %v527 = vpack.c.b16 %v517, %v515
      %v528 = vpack.c.b16 %v520, %v518
      %v529 = vpack.c.b16 %v521, %v519
      %v530 = vpack.c.b16 %v524, %v522
      %v531 = vpack.c.b16 %v525, %v523
      %v539 = vsel %vm279, %v507, 0
      %541 = vmatprep.subr.bf16.mxu0 0
      %542 = vmatpush1.bf16.msra.mxu0 0
      %543 = vmatprep.subr.bf16.mxu0 0
      %544 = vmatpush1.bf16.msra.mxu0 0
      %545 = vmatprep.subr.bf16.mxu0 0
      %546 = vmatpush1.bf16.msra.mxu0 0
      %547 = vmatprep.subr.bf16.mxu0 0
      %548 = vmatpush1.bf16.msra.mxu0 0
      %549 = vmatprep.subr.bf16.mxu0 0
      %550 = vmatpush1.bf16.msra.mxu0 0
      %551 = vmatprep.subr.bf16.mxu0 %v531
      %552 = vmatpush1.bf16.msra.mxu0 %v530
      %553 = vmatprep.subr.bf16.mxu0 %v529
      %554 = vmatpush1.bf16.msra.mxu0 %v528
      %555 = vmatprep.subr.bf16.mxu0 %v527
      %556 = vmatpush1.bf16.msra.mxu0 %v526
      %557 = vmatprep.subr.bf16.mxu0 0
      %558 = vmatpush2.bf16.msra.mxu0 0
      %559 = vmatprep.subr.bf16.mxu0 0
      %560 = vmatpush2.bf16.msra.mxu0 0
      %561 = vmatprep.subr.bf16.mxu0 0
      %562 = vmatpush2.bf16.msra.mxu0 0
      %563 = vmatprep.subr.bf16.mxu0 0
      %564 = vmatpush2.bf16.msra.mxu0 0
      %565 = vmatprep.subr.bf16.mxu0 0
      %566 = vmatpush2.bf16.msra.mxu0 0
      %567 = vmatprep.subr.bf16.mxu0 0
      %568 = vmatpush2.bf16.msra.mxu0 0
      %569 = vmatprep.subr.bf16.mxu0 0
      %570 = vmatpush2.bf16.msra.mxu0 0
      %571 = vmatprep.subr.bf16.mxu0 0
      %572 = vmatpush2.bf16.msra.mxu0 0
      %573 = vmatprep.mubr.bf16.mxu0 0
      %574 = vmatmul.mubr.bf16.gmra.mxu0 %v539
      %v575 = vpop.f32.mrf.mxu0
      %v576 = vadd.f32 0.0, %v575
      %v577 = vpop.f32.mrf.mxu0
      %v578 = vadd.f32 0.0, %v577
      %v579 = vpop.f32.mrf.mxu0
      %v580 = vpop.f32.mrf.mxu0
      %581 = vdwg.mxu0
      %v582 = vadd.f32 %v490, %v576
      %v583 = vadd.f32 %v492, %v578
      %s584 = scalar_lea.vmem %s2, 144
      %v585 = vld [vmem:[%s584] sm:$0xff]
      %v586 = vld [vmem:[%s584 + $0x8] sm:$0xff]
      %v587 = vld [vmem:[%s584 + $0x10] sm:$0xff]
      %v588 = vld [vmem:[%s584 + $0x18] sm:$0xff]
      %v589 = vld [vmem:[%s584 + $0x20] sm:$0xff]
      %v590 = vld [vmem:[%s584 + $0x28] sm:$0xff]
      %v592 = vshrl.u32 %v506, 16
      %v594 = vrot.slane %v592, 1
      %v595 = vshll.u32 %v506, 16
      %v597 = vrot.slane %v595, 2
      %v598 = vor.u32 %v594, %v597
      %v605 = vunpack.c.l.b16 %v585
      %v606 = vunpack.c.h.b16 %v585
      %v607 = vunpack.c.l.b16 %v586
      %v608 = vunpack.c.h.b16 %v586
      %v609 = vunpack.c.l.b16 %v587
      %v610 = vunpack.c.h.b16 %v587
      %v611 = vunpack.c.l.b16 %v588
      %v612 = vunpack.c.h.b16 %v588
      %v613 = vunpack.c.l.b16 %v589
      %v614 = vunpack.c.h.b16 %v589
      %v615 = vunpack.c.l.b16 %v590
      %v616 = vunpack.c.h.b16 %v590
      %v617 = vpack.c.b16 %v607, %v605
      %v618 = vpack.c.b16 %v608, %v606
      %v619 = vpack.c.b16 %v611, %v609
      %v620 = vpack.c.b16 %v612, %v610
      %v621 = vpack.c.b16 %v615, %v613
      %v622 = vpack.c.b16 %v616, %v614
      %v630 = vsel %vm279, %v598, 0
      %632 = vmatprep.subr.bf16.mxu0 0
      %633 = vmatpush1.bf16.msra.mxu0 0
      %634 = vmatprep.subr.bf16.mxu0 0
      %635 = vmatpush1.bf16.msra.mxu0 0
      %636 = vmatprep.subr.bf16.mxu0 0
      %637 = vmatpush1.bf16.msra.mxu0 0
      %638 = vmatprep.subr.bf16.mxu0 0
      %639 = vmatpush1.bf16.msra.mxu0 0
      %640 = vmatprep.subr.bf16.mxu0 0
      %641 = vmatpush1.bf16.msra.mxu0 0
      %642 = vmatprep.subr.bf16.mxu0 %v622
      %643 = vmatpush1.bf16.msra.mxu0 %v621
      %644 = vmatprep.subr.bf16.mxu0 %v620
      %645 = vmatpush1.bf16.msra.mxu0 %v619
      %646 = vmatprep.subr.bf16.mxu0 %v618
      %647 = vmatpush1.bf16.msra.mxu0 %v617
      %648 = vmatprep.subr.bf16.mxu0 0
      %649 = vmatpush2.bf16.msra.mxu0 0
      %650 = vmatprep.subr.bf16.mxu0 0
      %651 = vmatpush2.bf16.msra.mxu0 0
      %652 = vmatprep.subr.bf16.mxu0 0
      %653 = vmatpush2.bf16.msra.mxu0 0
      %654 = vmatprep.subr.bf16.mxu0 0
      %655 = vmatpush2.bf16.msra.mxu0 0
      %656 = vmatprep.subr.bf16.mxu0 0
      %657 = vmatpush2.bf16.msra.mxu0 0
      %658 = vmatprep.subr.bf16.mxu0 0
      %659 = vmatpush2.bf16.msra.mxu0 0
      %660 = vmatprep.subr.bf16.mxu0 0
      %661 = vmatpush2.bf16.msra.mxu0 0
      %662 = vmatprep.subr.bf16.mxu0 0
      %663 = vmatpush2.bf16.msra.mxu0 0
      %664 = vmatprep.mubr.bf16.mxu0 0
      %665 = vmatmul.mubr.bf16.gmra.mxu0 %v630
      %v666 = vpop.f32.mrf.mxu0
      %v667 = vadd.f32 0.0, %v666
      %v668 = vpop.f32.mrf.mxu0
      %v669 = vadd.f32 0.0, %v668
      %v670 = vpop.f32.mrf.mxu0
      %v671 = vpop.f32.mrf.mxu0
      %672 = vdwg.mxu0
      %v673 = vadd.f32 %v582, %v667
      %v674 = vadd.f32 %v583, %v669
      %s675 = scalar_lea.vmem %s2, 192
      %v676 = vld [vmem:[%s675] sm:$0xff]
      %v677 = vld [vmem:[%s675 + $0x8] sm:$0xff]
      %v678 = vld [vmem:[%s675 + $0x10] sm:$0xff]
      %v679 = vld [vmem:[%s675 + $0x18] sm:$0xff]
      %v680 = vld [vmem:[%s675 + $0x20] sm:$0xff]
      %v681 = vld [vmem:[%s675 + $0x28] sm:$0xff]
      %v688 = vunpack.c.l.b16 %v676
      %v689 = vunpack.c.h.b16 %v676
      %v690 = vunpack.c.l.b16 %v677
      %v691 = vunpack.c.h.b16 %v677
      %v692 = vunpack.c.l.b16 %v678
      %v693 = vunpack.c.h.b16 %v678
      %v694 = vunpack.c.l.b16 %v679
      %v695 = vunpack.c.h.b16 %v679
      %v696 = vunpack.c.l.b16 %v680
      %v697 = vunpack.c.h.b16 %v680
      %v698 = vunpack.c.l.b16 %v681
      %v699 = vunpack.c.h.b16 %v681
      %v700 = vpack.c.b16 %v690, %v688
      %v701 = vpack.c.b16 %v691, %v689
      %v702 = vpack.c.b16 %v694, %v692
      %v703 = vpack.c.b16 %v695, %v693
      %v704 = vpack.c.b16 %v698, %v696
      %v705 = vpack.c.b16 %v699, %v697
      %712 = vmatprep.subr.bf16.mxu0 0
      %713 = vmatpush1.bf16.msra.mxu0 0
      %714 = vmatprep.subr.bf16.mxu0 0
      %715 = vmatpush1.bf16.msra.mxu0 0
      %716 = vmatprep.subr.bf16.mxu0 0
      %717 = vmatpush1.bf16.msra.mxu0 0
      %718 = vmatprep.subr.bf16.mxu0 0
      %719 = vmatpush1.bf16.msra.mxu0 0
      %720 = vmatprep.subr.bf16.mxu0 0
      %721 = vmatpush1.bf16.msra.mxu0 0
      %722 = vmatprep.subr.bf16.mxu0 %v705
      %723 = vmatpush1.bf16.msra.mxu0 %v704
      %724 = vmatprep.subr.bf16.mxu0 %v703
      %725 = vmatpush1.bf16.msra.mxu0 %v702
      %726 = vmatprep.subr.bf16.mxu0 %v701
      %727 = vmatpush1.bf16.msra.mxu0 %v700
      %728 = vmatprep.subr.bf16.mxu0 0
      %729 = vmatpush2.bf16.msra.mxu0 0
      %730 = vmatprep.subr.bf16.mxu0 0
      %731 = vmatpush2.bf16.msra.mxu0 0
      %732 = vmatprep.subr.bf16.mxu0 0
      %733 = vmatpush2.bf16.msra.mxu0 0
      %734 = vmatprep.subr.bf16.mxu0 0
      %735 = vmatpush2.bf16.msra.mxu0 0
      %736 = vmatprep.subr.bf16.mxu0 0
      %737 = vmatpush2.bf16.msra.mxu0 0
      %738 = vmatprep.subr.bf16.mxu0 0
      %739 = vmatpush2.bf16.msra.mxu0 0
      %740 = vmatprep.subr.bf16.mxu0 0
      %741 = vmatpush2.bf16.msra.mxu0 0
      %742 = vmatprep.subr.bf16.mxu0 0
      %743 = vmatpush2.bf16.msra.mxu0 0
      %744 = vmatprep.mubr.bf16.mxu0 0
      %745 = vmatmul.mubr.bf16.gmra.mxu0 %v281
      %v746 = vpop.f32.mrf.mxu0
      %v747 = vadd.f32 0.0, %v746
      %v748 = vpop.f32.mrf.mxu0
      %v749 = vadd.f32 0.0, %v748
      %v750 = vpop.f32.mrf.mxu0
      %v751 = vpop.f32.mrf.mxu0
      %752 = vdwg.mxu0
      %v753 = vadd.f32 %v673, %v747
      %v754 = vadd.f32 %v674, %v749
      %s755 = scalar_lea.vmem %s2, 240
      %v756 = vld [vmem:[%s755] sm:$0xff]
      %v757 = vld [vmem:[%s755 + $0x8] sm:$0xff]
      %v758 = vld [vmem:[%s755 + $0x10] sm:$0xff]
      %v759 = vld [vmem:[%s755 + $0x18] sm:$0xff]
      %v760 = vld [vmem:[%s755 + $0x20] sm:$0xff]
      %v761 = vld [vmem:[%s755 + $0x28] sm:$0xff]
      %v763 = vshrl.u32 %v247, 16
      %v765 = vrot.slane %v763, 2
      %v766 = vshll.u32 %v247, 16
      %v768 = vrot.slane %v766, 3
      %v769 = vor.u32 %v765, %v768
      %v776 = vunpack.c.l.b16 %v756
      %v777 = vunpack.c.h.b16 %v756
      %v778 = vunpack.c.l.b16 %v757
      %v779 = vunpack.c.h.b16 %v757
      %v780 = vunpack.c.l.b16 %v758
      %v781 = vunpack.c.h.b16 %v758
      %v782 = vunpack.c.l.b16 %v759
      %v783 = vunpack.c.h.b16 %v759
      %v784 = vunpack.c.l.b16 %v760
      %v785 = vunpack.c.h.b16 %v760
      %v786 = vunpack.c.l.b16 %v761
      %v787 = vunpack.c.h.b16 %v761
      %v788 = vpack.c.b16 %v778, %v776
      %v789 = vpack.c.b16 %v779, %v777
      %v790 = vpack.c.b16 %v782, %v780
      %v791 = vpack.c.b16 %v783, %v781
      %v792 = vpack.c.b16 %v786, %v784
      %v793 = vpack.c.b16 %v787, %v785
      %v801 = vsel %vm279, %v769, 0
      %803 = vmatprep.subr.bf16.mxu0 0
      %804 = vmatpush1.bf16.msra.mxu0 0
      %805 = vmatprep.subr.bf16.mxu0 0
      %806 = vmatpush1.bf16.msra.mxu0 0
      %807 = vmatprep.subr.bf16.mxu0 0
      %808 = vmatpush1.bf16.msra.mxu0 0
      %809 = vmatprep.subr.bf16.mxu0 0
      %810 = vmatpush1.bf16.msra.mxu0 0
      %811 = vmatprep.subr.bf16.mxu0 0
      %812 = vmatpush1.bf16.msra.mxu0 0
      %813 = vmatprep.subr.bf16.mxu0 %v793
      %814 = vmatpush1.bf16.msra.mxu0 %v792
      %815 = vmatprep.subr.bf16.mxu0 %v791
      %816 = vmatpush1.bf16.msra.mxu0 %v790
      %817 = vmatprep.subr.bf16.mxu0 %v789
      %818 = vmatpush1.bf16.msra.mxu0 %v788
      %819 = vmatprep.subr.bf16.mxu0 0
      %820 = vmatpush2.bf16.msra.mxu0 0
      %821 = vmatprep.subr.bf16.mxu0 0
      %822 = vmatpush2.bf16.msra.mxu0 0
      %823 = vmatprep.subr.bf16.mxu0 0
      %824 = vmatpush2.bf16.msra.mxu0 0
      %825 = vmatprep.subr.bf16.mxu0 0
      %826 = vmatpush2.bf16.msra.mxu0 0
      %827 = vmatprep.subr.bf16.mxu0 0
      %828 = vmatpush2.bf16.msra.mxu0 0
      %829 = vmatprep.subr.bf16.mxu0 0
      %830 = vmatpush2.bf16.msra.mxu0 0
      %831 = vmatprep.subr.bf16.mxu0 0
      %832 = vmatpush2.bf16.msra.mxu0 0
      %833 = vmatprep.subr.bf16.mxu0 0
      %834 = vmatpush2.bf16.msra.mxu0 0
      %835 = vmatprep.mubr.bf16.mxu0 0
      %836 = vmatmul.mubr.bf16.gmra.mxu0 %v801
      %v837 = vpop.f32.mrf.mxu0
      %v838 = vadd.f32 0.0, %v837
      %v839 = vpop.f32.mrf.mxu0
      %v840 = vadd.f32 0.0, %v839
      %v841 = vpop.f32.mrf.mxu0
      %v842 = vpop.f32.mrf.mxu0
      %843 = vdwg.mxu0
      %v844 = vadd.f32 %v753, %v838
      %v845 = vadd.f32 %v754, %v840
      %v846 = vld [vmem:[%s219] sm:$0x8]
      %v847 = vld [vmem:[%s219 + $0x4] sm:$0x1]
      %s848 = scalar_lea.vmem %s2, 288
      %v849 = vld [vmem:[%s848] sm:$0xff]
      %v850 = vld [vmem:[%s848 + $0x8] sm:$0xff]
      %v851 = vld [vmem:[%s848 + $0x10] sm:$0xff]
      %v852 = vld [vmem:[%s848 + $0x18] sm:$0xff]
      %v853 = vld [vmem:[%s848 + $0x20] sm:$0xff]
      %v854 = vld [vmem:[%s848 + $0x28] sm:$0xff]
      %v857 = vunpack.c.l.b16 %v846
      %v858 = vunpack.c.l.b16 %v847
      %v859 = vpack.c.b16 %v858, %v857
      %v860 = vrot.slane %v859, 3
      %v867 = vunpack.c.l.b16 %v849
      %v868 = vunpack.c.h.b16 %v849
      %v869 = vunpack.c.l.b16 %v850
      %v870 = vunpack.c.h.b16 %v850
      %v871 = vunpack.c.l.b16 %v851
      %v872 = vunpack.c.h.b16 %v851
      %v873 = vunpack.c.l.b16 %v852
      %v874 = vunpack.c.h.b16 %v852
      %v875 = vunpack.c.l.b16 %v853
      %v876 = vunpack.c.h.b16 %v853
      %v877 = vunpack.c.l.b16 %v854
      %v878 = vunpack.c.h.b16 %v854
      %v879 = vpack.c.b16 %v869, %v867
      %v880 = vpack.c.b16 %v870, %v868
      %v881 = vpack.c.b16 %v873, %v871
      %v882 = vpack.c.b16 %v874, %v872
      %v883 = vpack.c.b16 %v877, %v875
      %v884 = vpack.c.b16 %v878, %v876
      %v892 = vsel %vm279, %v860, 0
      %894 = vmatprep.subr.bf16.mxu0 0
      %895 = vmatpush1.bf16.msra.mxu0 0
      %896 = vmatprep.subr.bf16.mxu0 0
      %897 = vmatpush1.bf16.msra.mxu0 0
      %898 = vmatprep.subr.bf16.mxu0 0
      %899 = vmatpush1.bf16.msra.mxu0 0
      %900 = vmatprep.subr.bf16.mxu0 0
      %901 = vmatpush1.bf16.msra.mxu0 0
      %902 = vmatprep.subr.bf16.mxu0 0
      %903 = vmatpush1.bf16.msra.mxu0 0
      %904 = vmatprep.subr.bf16.mxu0 %v884
      %905 = vmatpush1.bf16.msra.mxu0 %v883
      %906 = vmatprep.subr.bf16.mxu0 %v882
      %907 = vmatpush1.bf16.msra.mxu0 %v881
      %908 = vmatprep.subr.bf16.mxu0 %v880
      %909 = vmatpush1.bf16.msra.mxu0 %v879
      %910 = vmatprep.subr.bf16.mxu0 0
      %911 = vmatpush2.bf16.msra.mxu0 0
      %912 = vmatprep.subr.bf16.mxu0 0
      %913 = vmatpush2.bf16.msra.mxu0 0
      %914 = vmatprep.subr.bf16.mxu0 0
      %915 = vmatpush2.bf16.msra.mxu0 0
      %916 = vmatprep.subr.bf16.mxu0 0
      %917 = vmatpush2.bf16.msra.mxu0 0
      %918 = vmatprep.subr.bf16.mxu0 0
      %919 = vmatpush2.bf16.msra.mxu0 0
      %920 = vmatprep.subr.bf16.mxu0 0
      %921 = vmatpush2.bf16.msra.mxu0 0
      %922 = vmatprep.subr.bf16.mxu0 0
      %923 = vmatpush2.bf16.msra.mxu0 0
      %924 = vmatprep.subr.bf16.mxu0 0
      %925 = vmatpush2.bf16.msra.mxu0 0
      %926 = vmatprep.mubr.bf16.mxu0 0
      %927 = vmatmul.mubr.bf16.gmra.mxu0 %v892
      %v928 = vpop.f32.mrf.mxu0
      %v929 = vadd.f32 0.0, %v928
      %v930 = vpop.f32.mrf.mxu0
      %v931 = vadd.f32 0.0, %v930
      %v932 = vpop.f32.mrf.mxu0
      %v933 = vpop.f32.mrf.mxu0
      %934 = vdwg.mxu0
      %v935 = vadd.f32 %v844, %v929
      %v936 = vadd.f32 %v845, %v931
      %s937 = scalar_lea.vmem %s2, 336
      %v938 = vld [vmem:[%s937] sm:$0xff]
      %v939 = vld [vmem:[%s937 + $0x8] sm:$0xff]
      %v940 = vld [vmem:[%s937 + $0x10] sm:$0xff]
      %v941 = vld [vmem:[%s937 + $0x18] sm:$0xff]
      %v942 = vld [vmem:[%s937 + $0x20] sm:$0xff]
      %v943 = vld [vmem:[%s937 + $0x28] sm:$0xff]
      %v945 = vshrl.u32 %v859, 16
      %v947 = vrot.slane %v945, 3
      %v948 = vshll.u32 %v859, 16
      %v950 = vrot.slane %v948, 4
      %v951 = vor.u32 %v947, %v950
      %v958 = vunpack.c.l.b16 %v938
      %v959 = vunpack.c.h.b16 %v938
      %v960 = vunpack.c.l.b16 %v939
      %v961 = vunpack.c.h.b16 %v939
      %v962 = vunpack.c.l.b16 %v940
      %v963 = vunpack.c.h.b16 %v940
      %v964 = vunpack.c.l.b16 %v941
      %v965 = vunpack.c.h.b16 %v941
      %v966 = vunpack.c.l.b16 %v942
      %v967 = vunpack.c.h.b16 %v942
      %v968 = vunpack.c.l.b16 %v943
      %v969 = vunpack.c.h.b16 %v943
      %v970 = vpack.c.b16 %v960, %v958
      %v971 = vpack.c.b16 %v961, %v959
      %v972 = vpack.c.b16 %v964, %v962
      %v973 = vpack.c.b16 %v965, %v963
      %v974 = vpack.c.b16 %v968, %v966
      %v975 = vpack.c.b16 %v969, %v967
      %v983 = vsel %vm279, %v951, 0
      %985 = vmatprep.subr.bf16.mxu0 0
      %986 = vmatpush1.bf16.msra.mxu0 0
      %987 = vmatprep.subr.bf16.mxu0 0
      %988 = vmatpush1.bf16.msra.mxu0 0
      %989 = vmatprep.subr.bf16.mxu0 0
      %990 = vmatpush1.bf16.msra.mxu0 0
      %991 = vmatprep.subr.bf16.mxu0 0
      %992 = vmatpush1.bf16.msra.mxu0 0
      %993 = vmatprep.subr.bf16.mxu0 0
      %994 = vmatpush1.bf16.msra.mxu0 0
      %995 = vmatprep.subr.bf16.mxu0 %v975
      %996 = vmatpush1.bf16.msra.mxu0 %v974
      %997 = vmatprep.subr.bf16.mxu0 %v973
      %998 = vmatpush1.bf16.msra.mxu0 %v972
      %999 = vmatprep.subr.bf16.mxu0 %v971
      %1000 = vmatpush1.bf16.msra.mxu0 %v970
      %1001 = vmatprep.subr.bf16.mxu0 0
      %1002 = vmatpush2.bf16.msra.mxu0 0
      %1003 = vmatprep.subr.bf16.mxu0 0
      %1004 = vmatpush2.bf16.msra.mxu0 0
      %1005 = vmatprep.subr.bf16.mxu0 0
      %1006 = vmatpush2.bf16.msra.mxu0 0
      %1007 = vmatprep.subr.bf16.mxu0 0
      %1008 = vmatpush2.bf16.msra.mxu0 0
      %1009 = vmatprep.subr.bf16.mxu0 0
      %1010 = vmatpush2.bf16.msra.mxu0 0
      %1011 = vmatprep.subr.bf16.mxu0 0
      %1012 = vmatpush2.bf16.msra.mxu0 0
      %1013 = vmatprep.subr.bf16.mxu0 0
      %1014 = vmatpush2.bf16.msra.mxu0 0
      %1015 = vmatprep.subr.bf16.mxu0 0
      %1016 = vmatpush2.bf16.msra.mxu0 0
      %1017 = vmatprep.mubr.bf16.mxu0 0
      %1018 = vmatmul.mubr.bf16.gmra.mxu0 %v983
      %v1019 = vpop.f32.mrf.mxu0
      %v1020 = vadd.f32 0.0, %v1019
      %v1021 = vpop.f32.mrf.mxu0
      %v1022 = vadd.f32 0.0, %v1021
      %v1023 = vpop.f32.mrf.mxu0
      %v1024 = vpop.f32.mrf.mxu0
      %1025 = vdwg.mxu0
      %v1026 = vadd.f32 %v935, %v1020
      %v1027 = vadd.f32 %v936, %v1022
      %v1028 = vld [vmem:[%s219 + $0x4] sm:$0x3]
      %s1029 = scalar_lea.vmem %s2, 384
      %v1030 = vld [vmem:[%s1029] sm:$0xff]
      %v1031 = vld [vmem:[%s1029 + $0x8] sm:$0xff]
      %v1032 = vld [vmem:[%s1029 + $0x10] sm:$0xff]
      %v1033 = vld [vmem:[%s1029 + $0x18] sm:$0xff]
      %v1034 = vld [vmem:[%s1029 + $0x20] sm:$0xff]
      %v1035 = vld [vmem:[%s1029 + $0x28] sm:$0xff]
      %v1042 = vunpack.c.l.b16 %v1030
      %v1043 = vunpack.c.h.b16 %v1030
      %v1044 = vunpack.c.l.b16 %v1031
      %v1045 = vunpack.c.h.b16 %v1031
      %v1046 = vunpack.c.l.b16 %v1032
      %v1047 = vunpack.c.h.b16 %v1032
      %v1048 = vunpack.c.l.b16 %v1033
      %v1049 = vunpack.c.h.b16 %v1033
      %v1050 = vunpack.c.l.b16 %v1034
      %v1051 = vunpack.c.h.b16 %v1034
      %v1052 = vunpack.c.l.b16 %v1035
      %v1053 = vunpack.c.h.b16 %v1035
      %v1054 = vpack.c.b16 %v1044, %v1042
      %v1055 = vpack.c.b16 %v1045, %v1043
      %v1056 = vpack.c.b16 %v1048, %v1046
      %v1057 = vpack.c.b16 %v1049, %v1047
      %v1058 = vpack.c.b16 %v1052, %v1050
      %v1059 = vpack.c.b16 %v1053, %v1051
      %v1067 = vsel %vm279, %v1028, 0
      %1069 = vmatprep.subr.bf16.mxu0 0
      %1070 = vmatpush1.bf16.msra.mxu0 0
      %1071 = vmatprep.subr.bf16.mxu0 0
      %1072 = vmatpush1.bf16.msra.mxu0 0
      %1073 = vmatprep.subr.bf16.mxu0 0
      %1074 = vmatpush1.bf16.msra.mxu0 0
      %1075 = vmatprep.subr.bf16.mxu0 0
      %1076 = vmatpush1.bf16.msra.mxu0 0
      %1077 = vmatprep.subr.bf16.mxu0 0
      %1078 = vmatpush1.bf16.msra.mxu0 0
      %1079 = vmatprep.subr.bf16.mxu0 %v1059
      %1080 = vmatpush1.bf16.msra.mxu0 %v1058
      %1081 = vmatprep.subr.bf16.mxu0 %v1057
      %1082 = vmatpush1.bf16.msra.mxu0 %v1056
      %1083 = vmatprep.subr.bf16.mxu0 %v1055
      %1084 = vmatpush1.bf16.msra.mxu0 %v1054
      %1085 = vmatprep.subr.bf16.mxu0 0
      %1086 = vmatpush2.bf16.msra.mxu0 0
      %1087 = vmatprep.subr.bf16.mxu0 0
      %1088 = vmatpush2.bf16.msra.mxu0 0
      %1089 = vmatprep.subr.bf16.mxu0 0
      %1090 = vmatpush2.bf16.msra.mxu0 0
      %1091 = vmatprep.subr.bf16.mxu0 0
      %1092 = vmatpush2.bf16.msra.mxu0 0
      %1093 = vmatprep.subr.bf16.mxu0 0
      %1094 = vmatpush2.bf16.msra.mxu0 0
      %1095 = vmatprep.subr.bf16.mxu0 0
      %1096 = vmatpush2.bf16.msra.mxu0 0
      %1097 = vmatprep.subr.bf16.mxu0 0
      %1098 = vmatpush2.bf16.msra.mxu0 0
      %1099 = vmatprep.subr.bf16.mxu0 0
      %1100 = vmatpush2.bf16.msra.mxu0 0
      %1101 = vmatprep.mubr.bf16.mxu0 0
      %1102 = vmatmul.mubr.bf16.gmra.mxu0 %v1067
      %v1103 = vpop.f32.mrf.mxu0
      %v1104 = vadd.f32 0.0, %v1103
      %v1105 = vpop.f32.mrf.mxu0
      %v1106 = vadd.f32 0.0, %v1105
      %v1107 = vpop.f32.mrf.mxu0
      %v1108 = vpop.f32.mrf.mxu0
      %1109 = vdwg.mxu0
      %v1110 = vadd.f32 %v1026, %v1104
      %v1111 = vadd.f32 %v1027, %v1106
      %v1112 = vld [vmem:[%s4] sm:$0x3]
      %v1114 = vlaneseq
      %v1115 = vshrl.u32 %v1114, 7
      %v1116 = vsub.s32 0, %v1115
      %v1117 = vrot.slane %v1112, %v1116
      %v1118 = vlaneseq
      %v1119 = vshrl.u32 %v1118, 7
      %v1120 = vsub.s32 1, %v1119
      %v1121 = vrot.slane %v1112, %v1120
      %v1124 = vadd.f32 %v1110, %v1117
      %v1125 = vadd.f32 %v1111, %v1121
      %1128 = vrot.lane.b32.xlu0 %v1124, 64
      %v1129 = vpop.permute.xlu0 %1128
      %1130 = vrot.lane.b32.xlu0 %v1125, 64
      %v1131 = vpop.permute.xlu0 %1130
      %vm1132 = vcmask 523264
      %v1133 = vsel %vm1132, %v1129, %v1131
      %v1136 = vsel %vm1132, %v320, %v1129
      %v1137 = vmax.f32 %v318, 0.0
      %v1138 = vmax.f32 %v1136, 0.0
      %v1139 = vmax.f32 %v1133, 0.0
      %v1140 = vpack.c.bf16 %v1137, %v1137
      %v1141 = vpack.c.bf16 %v1138, %v1138
      %v1142 = vpack.c.bf16 %v1139, %v1139
      %v1146 = vcombine.low %v1140, %v1141
      %v1148 = vunpack.c.l.s4 1983009808
      %v1149 = vunpack.c.0.s8 %v1148
      %v1150 = vlaneseq
      %v1151 = vshrl.u32 %v1150, 7
      %v1152 = vsub.s32 %v1149, %v1151
      %v1153 = vrot.slane %v1146, %v1152
      %v1155 = vunpack.c.l.s4 1983009808
      %v1156 = vunpack.c.0.s8 %v1155
      %v1157 = vlaneseq
      %v1158 = vshrl.u32 %v1157, 7
      %v1159 = vsub.s32 %v1156, %v1158
      %v1160 = vrot.slane %v1142, %v1159
      %v1161 = vcombine.low %v1153, %v1160
      %vm1163 = vcmask 1041408
      %vm1164 = vsmask.f32 1280
      %vm1165 = vmand %vm1163, %vm1164
      %vm1166 = vcmask 1043458
      %vm1167 = vsmask.f32 3328
      %vm1168 = vmand %vm1166, %vm1167
      %vm1169 = vmor %vm1168, %vm1165
      %vm1170 = vcmask 1045508
      %vm1171 = vsmask.f32 5376
      %vm1172 = vmand %vm1170, %vm1171
      %vm1173 = vmor %vm1172, %vm1169
      %v1174 = vld [vmem:[%s224] sm:$0x3f]
      %v1175 = vsel %vm1173, %v1161, %v1174
      %1176 = vst [vmem:[%s224] sm:$0x3f] %v1175
      %p1177 = scmp.lt.s32.totalorder %s16, 1
      %s1178 = scalar_select %p1177, %s16, 1
      %s1179 = smul.addr %s1178, 3
      %s1180 = smul.addr %s1179, 2
      %s1181 = scalar_lea.vmem %s5, %s1180
      // Predicated region
      $region41: #{lightweight_feat_forward.33} parent=39 // pred_check
        %p1182 = pneg %p144
      $region42: #{lightweight_feat_forward.33} parent=39 // pred_check_branch
        %1184 = sbr.rel (%p1182) target = $region44
      $region43: #{lightweight_feat_forward.33} parent=39 // pred_region
        _
      $region44: #{lightweight_feat_forward.33} parent=39 // pred_fallthru
        _
    $region40: #{lightweight_feat_forward.33} parent=5 // pred_fallthru
      _
    %p1185 = scmp.le.s32.totalorder 2, %s11
    // Predicated region
    $region45: #{lightweight_feat_forward.33} parent=5 // pred_check
      %p1186 = pneg %p1185
    $region46: #{lightweight_feat_forward.33} parent=5 // pred_check_branch
      %1188 = sbr.rel (%p1186) target = $region48
    $region47: #{lightweight_feat_forward.33} parent=5 // pred_region
      %s1189 = ssub.s32 %s11, 2
      // Predicated region
      $region49: #{lightweight_feat_forward.33} parent=47 // pred_check
        %p1190 = pneg %p150
      $region50: #{lightweight_feat_forward.33} parent=47 // pred_check_branch
        %1192 = sbr.rel (%p1190) target = $region52
      $region51: #{lightweight_feat_forward.33} parent=47 // pred_region
        %p1193 = scmp.lt.s32.totalorder %s17, 1
        %s1194 = scalar_select %p1193, %s17, 1
        %s1195 = smul.addr %s1194, 3
        %s1196 = smul.addr %s1195, 2
        %s1197 = scalar_lea.vmem %s5, %s1196
      $region52: #{lightweight_feat_forward.33} parent=47 // pred_fallthru
        _
    $region48: #{lightweight_feat_forward.33} parent=5 // pred_fallthru
      _
  $region6: #{lightweight_feat_forward.33} parent=0 // loop_footer
    %s15 = sadd.s32 1, %s11
  $region7: #{lightweight_feat_forward.33} parent=0 // loop_footer_branch
    %10 = sbr.rel target = $region3
  $region8: #{lightweight_feat_forward.33} parent=0 // loop_exit
    _

// kernel: lightweight_feat_forward.38
$region0: #{lightweight_feat_forward.38}
  #allocation0 [shape = 'u32[]', space=smem, size = 0x4, offset = 0x4, fixed_abs, tag = 'smem constant byte address 0x4 - core index']
  #allocation1 [shape = 'u32[144,128]{1,0:T(1,128)}', space=vmem, size = 0x12000, scoped, tag = 'internal scratch']
  %s0 = inlined_call_operand.vmem [shape: bf16[2,512], index: 0, kind: input, shape index: {}]
  %s1 = inlined_call_operand.vmem [shape: bf16[512,64], index: 1, kind: input, shape index: {}]
  %s2 = inlined_call_operand.vmem [shape: f32[1,64], index: 2, kind: input, shape index: {}]
  %s3 = inlined_call_operand.vmem [shape: bf16[2,64], index: 3, kind: output, shape index: {}]
  %s4 = sld [smem:[#allocation0]]
  $region22: #{lightweight_feat_forward.38} parent=0
    _
  %s6 = ssub.s32 1, %s4
  %s7 = scalar_select 0, %s6, %s4
  // Predicated region
  $region2: #{lightweight_feat_forward.38} parent=0 // pred_check
    _
  $region3: #{lightweight_feat_forward.38} parent=0 // pred_check_branch
    %9 = sbr.rel (0) target = $region5
  $region4: #{lightweight_feat_forward.38} parent=0 // pred_region
    _
  $region5: #{lightweight_feat_forward.38} parent=0 // pred_fallthru
    _
  // Predicated region
  $region6: #{lightweight_feat_forward.38} parent=0 // pred_check
    _
  $region7: #{lightweight_feat_forward.38} parent=0 // pred_check_branch
    %11 = sbr.rel (0) target = $region9
  $region8: #{lightweight_feat_forward.38} parent=0 // pred_region
    _
  $region9: #{lightweight_feat_forward.38} parent=0 // pred_fallthru
    _
  // Predicated region
  $region10: #{lightweight_feat_forward.38} parent=0 // pred_check
    _
  $region11: #{lightweight_feat_forward.38} parent=0 // pred_check_branch
    %13 = sbr.rel (0) target = $region13
  $region12: #{lightweight_feat_forward.38} parent=0 // pred_region
    _
  $region13: #{lightweight_feat_forward.38} parent=0 // pred_fallthru
    _
  %v15 = vld [vmem:[%s0] sm:$0xf]
  %v16 = vld [vmem:[%s1] sm:$0xf]
  %v17 = vld [vmem:[%s1 + $0x4] sm:$0xf]
  %v18 = vld [vmem:[%s1 + $0x8] sm:$0xf]
  %v19 = vld [vmem:[%s1 + $0xc] sm:$0xf]
  %v20 = vld [vmem:[%s1 + $0x10] sm:$0xf]
  %v21 = vld [vmem:[%s1 + $0x14] sm:$0xf]
  %v22 = vld [vmem:[%s1 + $0x18] sm:$0xf]
  %v23 = vld [vmem:[%s1 + $0x1c] sm:$0xf]
  %v24 = vld [vmem:[%s1 + $0x20] sm:$0xf]
  %v25 = vld [vmem:[%s1 + $0x24] sm:$0xf]
  %v26 = vld [vmem:[%s1 + $0x28] sm:$0xf]
  %v27 = vld [vmem:[%s1 + $0x2c] sm:$0xf]
  %v28 = vld [vmem:[%s1 + $0x30] sm:$0xf]
  %v29 = vld [vmem:[%s1 + $0x34] sm:$0xf]
  %v30 = vld [vmem:[%s1 + $0x38] sm:$0xf]
  %v31 = vld [vmem:[%s1 + $0x3c] sm:$0xf]
  %v32 = vld [vmem:[%s1 + $0x40] sm:$0xf]
  %v33 = vld [vmem:[%s1 + $0x44] sm:$0xf]
  %v34 = vld [vmem:[%s1 + $0x48] sm:$0xf]
  %v35 = vld [vmem:[%s1 + $0x4c] sm:$0xf]
  %v36 = vld [vmem:[%s1 + $0x50] sm:$0xf]
  %v37 = vld [vmem:[%s1 + $0x54] sm:$0xf]
  %v38 = vld [vmem:[%s1 + $0x58] sm:$0xf]
  %v39 = vld [vmem:[%s1 + $0x5c] sm:$0xf]
  %v40 = vld [vmem:[%s1 + $0x60] sm:$0xf]
  %v41 = vld [vmem:[%s1 + $0x64] sm:$0xf]
  %v42 = vld [vmem:[%s1 + $0x68] sm:$0xf]
  %v43 = vld [vmem:[%s1 + $0x6c] sm:$0xf]
  %v44 = vld [vmem:[%s1 + $0x70] sm:$0xf]
  %v45 = vld [vmem:[%s1 + $0x74] sm:$0xf]
  %v46 = vld [vmem:[%s1 + $0x78] sm:$0xf]
  %v47 = vld [vmem:[%s1 + $0x7c] sm:$0xf]
  %v48 = vld [vmem:[%s1 + $0x80] sm:$0xf]
  %v49 = vld [vmem:[%s1 + $0x84] sm:$0xf]
  %v50 = vld [vmem:[%s1 + $0x88] sm:$0xf]
  %v51 = vld [vmem:[%s1 + $0x8c] sm:$0xf]
  %v52 = vld [vmem:[%s1 + $0x90] sm:$0xf]
  %v53 = vld [vmem:[%s1 + $0x94] sm:$0xf]
  %v54 = vld [vmem:[%s1 + $0x98] sm:$0xf]
  %v55 = vld [vmem:[%s1 + $0x9c] sm:$0xf]
  %v56 = vld [vmem:[%s1 + $0xa0] sm:$0xf]
  %v57 = vld [vmem:[%s1 + $0xa4] sm:$0xf]
  %v58 = vld [vmem:[%s1 + $0xa8] sm:$0xf]
  %v59 = vld [vmem:[%s1 + $0xac] sm:$0xf]
  %v60 = vld [vmem:[%s1 + $0xb0] sm:$0xf]
  %v61 = vld [vmem:[%s1 + $0xb4] sm:$0xf]
  %v62 = vld [vmem:[%s1 + $0xb8] sm:$0xf]
  %v63 = vld [vmem:[%s1 + $0xbc] sm:$0xf]
  %v64 = vld [vmem:[%s1 + $0xc0] sm:$0xf]
  %v65 = vld [vmem:[%s1 + $0xc4] sm:$0xf]
  %v66 = vld [vmem:[%s1 + $0xc8] sm:$0xf]
  %v67 = vld [vmem:[%s1 + $0xcc] sm:$0xf]
  %v68 = vld [vmem:[%s1 + $0xd0] sm:$0xf]
  %v69 = vld [vmem:[%s1 + $0xd4] sm:$0xf]
  %v70 = vld [vmem:[%s1 + $0xd8] sm:$0xf]
  %v71 = vld [vmem:[%s1 + $0xdc] sm:$0xf]
  %v72 = vld [vmem:[%s1 + $0xe0] sm:$0xf]
  %v73 = vld [vmem:[%s1 + $0xe4] sm:$0xf]
  %v74 = vld [vmem:[%s1 + $0xe8] sm:$0xf]
  %v75 = vld [vmem:[%s1 + $0xec] sm:$0xf]
  %v76 = vld [vmem:[%s1 + $0xf0] sm:$0xf]
  %v77 = vld [vmem:[%s1 + $0xf4] sm:$0xf]
  %v78 = vld [vmem:[%s1 + $0xf8] sm:$0xf]
  %v79 = vld [vmem:[%s1 + $0xfc] sm:$0xf]
  %v80 = vld [vmem:[%s2] sm:$0x1]
  %v82 = vlaneseq
  %v83 = vshrl.u32 %v82, 7
  %v84 = vsub.s32 0, %v83
  %v85 = vrot.slane %v80, %v84
  %v89 = vunpack.c.l.s4 1966171168
  %v90 = vunpack.c.0.s8 %v89
  %v91 = vlaneseq
  %v92 = vshrl.u32 %v91, 7
  %v93 = vsub.s32 %v90, %v92
  %v94 = vrot.slane %v15, %v93
  %v95 = vcombine.high %v94, %v94
  %v97 = vunpack.c.l.s4 1966171168
  %v98 = vunpack.c.0.s8 %v97
  %v99 = vlaneseq
  %v100 = vshrl.u32 %v99, 7
  %v101 = vsub.s32 %v98, %v100
  %v102 = vrot.slane %v94, %v101
  %v104 = vunpack.c.l.s4 1966171168
  %v105 = vunpack.c.0.s8 %v104
  %v106 = vlaneseq
  %v107 = vshrl.u32 %v106, 7
  %v108 = vsub.s32 %v105, %v107
  %v109 = vrot.slane %v95, %v108
  %v110 = vcombine.high %v102, %v102
  %v111 = vcombine.high %v109, %v109
  %v180 = vunpack.c.l.b16 %v16
  %v181 = vunpack.c.l.b16 %v17
  %v182 = vunpack.c.l.b16 %v18
  %v183 = vunpack.c.l.b16 %v19
  %v184 = vunpack.c.l.b16 %v20
  %v185 = vunpack.c.l.b16 %v21
  %v186 = vunpack.c.l.b16 %v22
  %v187 = vunpack.c.l.b16 %v23
  %v188 = vunpack.c.l.b16 %v24
  %v189 = vunpack.c.l.b16 %v25
  %v190 = vunpack.c.l.b16 %v26
  %v191 = vunpack.c.l.b16 %v27
  %v192 = vunpack.c.l.b16 %v28
  %v193 = vunpack.c.l.b16 %v29
  %v194 = vunpack.c.l.b16 %v30
  %v195 = vunpack.c.l.b16 %v31
  %v196 = vunpack.c.l.b16 %v32
  %v197 = vunpack.c.l.b16 %v33
  %v198 = vunpack.c.l.b16 %v34
  %v199 = vunpack.c.l.b16 %v35
  %v200 = vunpack.c.l.b16 %v36
  %v201 = vunpack.c.l.b16 %v37
  %v202 = vunpack.c.l.b16 %v38
  %v203 = vunpack.c.l.b16 %v39
  %v204 = vunpack.c.l.b16 %v40
  %v205 = vunpack.c.l.b16 %v41
  %v206 = vunpack.c.l.b16 %v42
  %v207 = vunpack.c.l.b16 %v43
  %v208 = vunpack.c.l.b16 %v44
  %v209 = vunpack.c.l.b16 %v45
  %v210 = vunpack.c.l.b16 %v46
  %v211 = vunpack.c.l.b16 %v47
  %v212 = vunpack.c.l.b16 %v48
  %v213 = vunpack.c.l.b16 %v49
  %v214 = vunpack.c.l.b16 %v50
  %v215 = vunpack.c.l.b16 %v51
  %v216 = vunpack.c.l.b16 %v52
  %v217 = vunpack.c.l.b16 %v53
  %v218 = vunpack.c.l.b16 %v54
  %v219 = vunpack.c.l.b16 %v55
  %v220 = vunpack.c.l.b16 %v56
  %v221 = vunpack.c.l.b16 %v57
  %v222 = vunpack.c.l.b16 %v58
  %v223 = vunpack.c.l.b16 %v59
  %v224 = vunpack.c.l.b16 %v60
  %v225 = vunpack.c.l.b16 %v61
  %v226 = vunpack.c.l.b16 %v62
  %v227 = vunpack.c.l.b16 %v63
  %v228 = vunpack.c.l.b16 %v64
  %v229 = vunpack.c.l.b16 %v65
  %v230 = vunpack.c.l.b16 %v66
  %v231 = vunpack.c.l.b16 %v67
  %v232 = vunpack.c.l.b16 %v68
  %v233 = vunpack.c.l.b16 %v69
  %v234 = vunpack.c.l.b16 %v70
  %v235 = vunpack.c.l.b16 %v71
  %v236 = vunpack.c.l.b16 %v72
  %v237 = vunpack.c.l.b16 %v73
  %v238 = vunpack.c.l.b16 %v74
  %v239 = vunpack.c.l.b16 %v75
  %v240 = vunpack.c.l.b16 %v76
  %v241 = vunpack.c.l.b16 %v77
  %v242 = vunpack.c.l.b16 %v78
  %v243 = vunpack.c.l.b16 %v79
  %v244 = vpack.c.b16 %v181, %v180
  %v245 = vpack.c.b16 %v183, %v182
  %v246 = vpack.c.b16 %v185, %v184
  %v247 = vpack.c.b16 %v187, %v186
  %v248 = vpack.c.b16 %v189, %v188
  %v249 = vpack.c.b16 %v191, %v190
  %v250 = vpack.c.b16 %v193, %v192
  %v251 = vpack.c.b16 %v195, %v194
  %v252 = vpack.c.b16 %v197, %v196
  %v253 = vpack.c.b16 %v199, %v198
  %v254 = vpack.c.b16 %v201, %v200
  %v255 = vpack.c.b16 %v203, %v202
  %v256 = vpack.c.b16 %v205, %v204
  %v257 = vpack.c.b16 %v207, %v206
  %v258 = vpack.c.b16 %v209, %v208
  %v259 = vpack.c.b16 %v211, %v210
  %v260 = vpack.c.b16 %v213, %v212
  %v261 = vpack.c.b16 %v215, %v214
  %v262 = vpack.c.b16 %v217, %v216
  %v263 = vpack.c.b16 %v219, %v218
  %v264 = vpack.c.b16 %v221, %v220
  %v265 = vpack.c.b16 %v223, %v222
  %v266 = vpack.c.b16 %v225, %v224
  %v267 = vpack.c.b16 %v227, %v226
  %v268 = vpack.c.b16 %v229, %v228
  %v269 = vpack.c.b16 %v231, %v230
  %v270 = vpack.c.b16 %v233, %v232
  %v271 = vpack.c.b16 %v235, %v234
  %v272 = vpack.c.b16 %v237, %v236
  %v273 = vpack.c.b16 %v239, %v238
  %v274 = vpack.c.b16 %v241, %v240
  %v275 = vpack.c.b16 %v243, %v242
  %308 = vmatprep.subr.bf16.mxu0 0
  %309 = vmatpush1.bf16.msra.mxu0 %v251
  %310 = vmatprep.subr.bf16.mxu0 0
  %311 = vmatpush1.bf16.msra.mxu0 %v250
  %312 = vmatprep.subr.bf16.mxu0 0
  %313 = vmatpush1.bf16.msra.mxu0 %v249
  %314 = vmatprep.subr.bf16.mxu0 0
  %315 = vmatpush1.bf16.msra.mxu0 %v248
  %316 = vmatprep.subr.bf16.mxu0 0
  %317 = vmatpush1.bf16.msra.mxu0 %v247
  %318 = vmatprep.subr.bf16.mxu0 0
  %319 = vmatpush1.bf16.msra.mxu0 %v246
  %320 = vmatprep.subr.bf16.mxu0 0
  %321 = vmatpush1.bf16.msra.mxu0 %v245
  %322 = vmatprep.subr.bf16.mxu0 0
  %323 = vmatpush1.bf16.msra.mxu0 %v244
  %324 = vmatprep.subr.bf16.mxu0 0
  %325 = vmatpush2.bf16.msra.mxu0 %v259
  %326 = vmatprep.subr.bf16.mxu0 0
  %327 = vmatpush2.bf16.msra.mxu0 %v258
  %328 = vmatprep.subr.bf16.mxu0 0
  %329 = vmatpush2.bf16.msra.mxu0 %v257
  %330 = vmatprep.subr.bf16.mxu0 0
  %331 = vmatpush2.bf16.msra.mxu0 %v256
  %332 = vmatprep.subr.bf16.mxu0 0
  %333 = vmatpush2.bf16.msra.mxu0 %v255
  %334 = vmatprep.subr.bf16.mxu0 0
  %335 = vmatpush2.bf16.msra.mxu0 %v254
  %336 = vmatprep.subr.bf16.mxu0 0
  %337 = vmatpush2.bf16.msra.mxu0 %v253
  %338 = vmatprep.subr.bf16.mxu0 0
  %339 = vmatpush2.bf16.msra.mxu0 %v252
  %340 = vmatprep.mubr.bf16.mxu0 %v109
  %341 = vmatmul.mubr.bf16.gmra.mxu0 %v102
  %v342 = vpop.f32.mrf.mxu0
  %v343 = vadd.f32 %v85, %v342
  %v344 = vpop.f32.mrf.mxu0
  %v345 = vpop.f32.mrf.mxu0
  %v346 = vpop.f32.mrf.mxu0
  %347 = vdwg.mxu0
  %348 = vmatprep.subr.bf16.mxu0 0
  %349 = vmatpush1.bf16.msra.mxu0 %v267
  %350 = vmatprep.subr.bf16.mxu0 0
  %351 = vmatpush1.bf16.msra.mxu0 %v266
  %352 = vmatprep.subr.bf16.mxu0 0
  %353 = vmatpush1.bf16.msra.mxu0 %v265
  %354 = vmatprep.subr.bf16.mxu0 0
  %355 = vmatpush1.bf16.msra.mxu0 %v264
  %356 = vmatprep.subr.bf16.mxu0 0
  %357 = vmatpush1.bf16.msra.mxu0 %v263
  %358 = vmatprep.subr.bf16.mxu0 0
  %359 = vmatpush1.bf16.msra.mxu0 %v262
  %360 = vmatprep.subr.bf16.mxu0 0
  %361 = vmatpush1.bf16.msra.mxu0 %v261
  %362 = vmatprep.subr.bf16.mxu0 0
  %363 = vmatpush1.bf16.msra.mxu0 %v260
  %364 = vmatprep.subr.bf16.mxu0 0
  %365 = vmatpush2.bf16.msra.mxu0 %v275
  %366 = vmatprep.subr.bf16.mxu0 0
  %367 = vmatpush2.bf16.msra.mxu0 %v274
  %368 = vmatprep.subr.bf16.mxu0 0
  %369 = vmatpush2.bf16.msra.mxu0 %v273
  %370 = vmatprep.subr.bf16.mxu0 0
  %371 = vmatpush2.bf16.msra.mxu0 %v272
  %372 = vmatprep.subr.bf16.mxu0 0
  %373 = vmatpush2.bf16.msra.mxu0 %v271
  %374 = vmatprep.subr.bf16.mxu0 0
  %375 = vmatpush2.bf16.msra.mxu0 %v270
  %376 = vmatprep.subr.bf16.mxu0 0
  %377 = vmatpush2.bf16.msra.mxu0 %v269
  %378 = vmatprep.subr.bf16.mxu0 0
  %379 = vmatpush2.bf16.msra.mxu0 %v268
  %380 = vmatprep.mubr.bf16.mxu0 %v111
  %381 = vmatmul.mubr.bf16.gmra.mxu0 %v110
  %v382 = vpop.f32.mrf.mxu0
  %v383 = vadd.f32 %v343, %v382
  %v384 = vpop.f32.mrf.mxu0
  %v385 = vpop.f32.mrf.mxu0
  %v386 = vpop.f32.mrf.mxu0
  %387 = vdwg.mxu0
  %v388 = vmax.f32 %v383, 0.0
  %v389 = vpack.c.bf16 %v388, %v388
  %vm390 = vcmask 516096
  %391 = vst.msk [vmem:[%s3] sm:$0x1] %vm390, %v389
  // Predicated region
  $region14: #{lightweight_feat_forward.38} parent=0 // pred_check
    _
  $region15: #{lightweight_feat_forward.38} parent=0 // pred_check_branch
    %393 = sbr.rel (0) target = $region17
  $region16: #{lightweight_feat_forward.38} parent=0 // pred_region
    _
  $region17: #{lightweight_feat_forward.38} parent=0 // pred_fallthru
    _
  // Predicated region
  $region18: #{lightweight_feat_forward.38} parent=0 // pred_check
    _
  $region19: #{lightweight_feat_forward.38} parent=0 // pred_check_branch
    %395 = sbr.rel (0) target = $region21
  $region20: #{lightweight_feat_forward.38} parent=0 // pred_region
    _
  $region21: #{lightweight_feat_forward.38} parent=0 // pred_fallthru
    _

// kernel: lightweight_feat_forward.37
$region0: #{lightweight_feat_forward.37}
  #allocation0 [shape = 'u32[]', space=smem, size = 0x4, offset = 0x4, fixed_abs, tag = 'smem constant byte address 0x4 - core index']
  #allocation1 [shape = 'u32[144,128]{1,0:T(1,128)}', space=vmem, size = 0x12000, scoped, tag = 'internal scratch']
  %s0 = inlined_call_operand.vmem [shape: bf16[2,17,64], index: 0, kind: input, shape index: {}]
  %s1 = inlined_call_operand.vmem [shape: bf16[64,256], index: 1, kind: input, shape index: {}]
  %s2 = inlined_call_operand.vmem [shape: bf16[9,64,256], index: 2, kind: input, shape index: {}]
  %s3 = inlined_call_operand.vmem [shape: f32[1,256], index: 3, kind: input, shape index: {}]
  %s4 = inlined_call_operand.vmem [shape: f32[1,256], index: 4, kind: input, shape index: {}]
  %s5 = inlined_call_operand.vmem [shape: bf16[2,3,512], index: 5, kind: output, shape index: {}]
  %s6 = sld [smem:[#allocation0]]
  $region53: #{lightweight_feat_forward.37} parent=0
    _
  %s8 = ssub.s32 1, %s6
  %s9 = scalar_select 0, %s8, %s6
  loop: start=0, step=1, limit=4
  $region2: #{lightweight_feat_forward.37} parent=0 // loop_pre_header
    _
  $region3: #{lightweight_feat_forward.37} parent=0 // loop_header
    %s11 = sphi 0, %s15
    %p12 = scmp.ge.s32.totalorder %s11, 4
    %s21 = sphi 0, %s23
    %s24 = sphi 0, %s21
    %s25 = sphi 0, %s24
    %s41 = sphi 0, %s25
    %s45 = sphi 0, %s45
    %s47 = sphi 0, %s45
    %s48 = sphi 0, %s47
    %s62 = sphi 0, %s48
    %s66 = sphi 0, %s66
    %s68 = sphi 0, %s66
    %s69 = sphi 0, %s68
    %s83 = sphi 0, %s69
    %s87 = sphi 0, %s87
    %s89 = sphi 0, %s87
    %s90 = sphi 0, %s89
    %s104 = sphi 0, %s90
    %s108 = sphi 0, %s108
    %s110 = sphi 0, %s108
    %s111 = sphi 0, %s110
    %s125 = sphi 0, %s111
    %s131 = sphi 0, %s133
    %s134 = sphi 0, %s131
    %s135 = sphi 0, %s134
    %s151 = sphi 0, %s135
  $region4: #{lightweight_feat_forward.37} parent=0 // loop_header_branch
    %14 = sbr.rel (%p12) target = $region8
  $region5: #{lightweight_feat_forward.37} parent=0 // loop_body
    %s16 = ssub.s32 %s11, 1
    %s17 = ssub.s32 %s11, 2
    %s18 = sadd.s32 %s11, 1
    %s19 = ssub.s32 %s11, %s18
    %p20 = scmp.eq.s32.totalorder %s19, 0
    %s22 = sadd.s32 %s21, 1
    %s23 = scalar_select %p20, %s21, %s22
    %p26 = pneg %p20
    %p27 = scmp.eq.s32.totalorder %s11, 1
    %p28 = por %p26, %p27
    %p29 = scmp.ne.s32.totalorder %s21, %s24
    %p30 = scmp.eq.s32.totalorder %s11, 0
    %p31 = por %p29, %p30
    %p32 = scmp.ne.s32.totalorder %s21, %s24
    %p33 = scmp.eq.s32.totalorder %s16, 1
    %p34 = por %p32, %p33
    %p35 = scmp.ne.s32.totalorder %s24, %s25
    %p36 = scmp.eq.s32.totalorder %s16, 0
    %p37 = por %p35, %p36
    %p38 = scmp.ne.s32.totalorder %s24, %s25
    %p39 = scmp.eq.s32.totalorder %s17, 1
    %p40 = por %p38, %p39
    %p42 = scmp.ne.s32.totalorder %s25, %s41
    %p43 = scmp.eq.s32.totalorder %s17, 0
    %p44 = por %p42, %p43
    %s46 = sadd.s32 %s45, 1
    %p49 = scmp.eq.s32.totalorder %s11, 1
    %p50 = scmp.ne.s32.totalorder %s45, %s47
    %p51 = scmp.eq.s32.totalorder %s11, 0
    %p52 = por %p50, %p51
    %p53 = scmp.ne.s32.totalorder %s45, %s47
    %p54 = scmp.eq.s32.totalorder %s16, 1
    %p55 = por %p53, %p54
    %p56 = scmp.ne.s32.totalorder %s47, %s48
    %p57 = scmp.eq.s32.totalorder %s16, 0
    %p58 = por %p56, %p57
    %p59 = scmp.ne.s32.totalorder %s47, %s48
    %p60 = scmp.eq.s32.totalorder %s17, 1
    %p61 = por %p59, %p60
    %p63 = scmp.ne.s32.totalorder %s48, %s62
    %p64 = scmp.eq.s32.totalorder %s17, 0
    %p65 = por %p63, %p64
    %s67 = sadd.s32 %s66, 1
    %p70 = scmp.eq.s32.totalorder %s11, 1
    %p71 = scmp.ne.s32.totalorder %s66, %s68
    %p72 = scmp.eq.s32.totalorder %s11, 0
    %p73 = por %p71, %p72
    %p74 = scmp.ne.s32.totalorder %s66, %s68
    %p75 = scmp.eq.s32.totalorder %s16, 1
    %p76 = por %p74, %p75
    %p77 = scmp.ne.s32.totalorder %s68, %s69
    %p78 = scmp.eq.s32.totalorder %s16, 0
    %p79 = por %p77, %p78
    %p80 = scmp.ne.s32.totalorder %s68, %s69
    %p81 = scmp.eq.s32.totalorder %s17, 1
    %p82 = por %p80, %p81
    %p84 = scmp.ne.s32.totalorder %s69, %s83
    %p85 = scmp.eq.s32.totalorder %s17, 0
    %p86 = por %p84, %p85
    %s88 = sadd.s32 %s87, 1
    %p91 = scmp.eq.s32.totalorder %s11, 1
    %p92 = scmp.ne.s32.totalorder %s87, %s89
    %p93 = scmp.eq.s32.totalorder %s11, 0
    %p94 = por %p92, %p93
    %p95 = scmp.ne.s32.totalorder %s87, %s89
    %p96 = scmp.eq.s32.totalorder %s16, 1
    %p97 = por %p95, %p96
    %p98 = scmp.ne.s32.totalorder %s89, %s90
    %p99 = scmp.eq.s32.totalorder %s16, 0
    %p100 = por %p98, %p99
    %p101 = scmp.ne.s32.totalorder %s89, %s90
    %p102 = scmp.eq.s32.totalorder %s17, 1
    %p103 = por %p101, %p102
    %p105 = scmp.ne.s32.totalorder %s90, %s104
    %p106 = scmp.eq.s32.totalorder %s17, 0
    %p107 = por %p105, %p106
    %s109 = sadd.s32 %s108, 1
    %p112 = scmp.eq.s32.totalorder %s11, 1
    %p113 = scmp.ne.s32.totalorder %s108, %s110
    %p114 = scmp.eq.s32.totalorder %s11, 0
    %p115 = por %p113, %p114
    %p116 = scmp.ne.s32.totalorder %s108, %s110
    %p117 = scmp.eq.s32.totalorder %s16, 1
    %p118 = por %p116, %p117
    %p119 = scmp.ne.s32.totalorder %s110, %s111
    %p120 = scmp.eq.s32.totalorder %s16, 0
    %p121 = por %p119, %p120
    %p122 = scmp.ne.s32.totalorder %s110, %s111
    %p123 = scmp.eq.s32.totalorder %s17, 1
    %p124 = por %p122, %p123
    %p126 = scmp.ne.s32.totalorder %s111, %s125
    %p127 = scmp.eq.s32.totalorder %s17, 0
    %p128 = por %p126, %p127
    %s129 = ssub.s32 %s11, %s18
    %p130 = scmp.eq.s32.totalorder %s129, 0
    %s132 = sadd.s32 %s131, 1
    %s133 = scalar_select %p130, %s131, %s132
    %p136 = pneg %p130
    %p137 = scmp.eq.s32.totalorder %s11, 1
    %p138 = por %p136, %p137
    %p139 = scmp.ne.s32.totalorder %s131, %s134
    %p140 = scmp.eq.s32.totalorder %s11, 0
    %p141 = por %p139, %p140
    %p142 = scmp.ne.s32.totalorder %s131, %s134
    %p143 = scmp.eq.s32.totalorder %s16, 1
    %p144 = por %p142, %p143
    %p145 = scmp.ne.s32.totalorder %s134, %s135
    %p146 = scmp.eq.s32.totalorder %s16, 0
    %p147 = por %p145, %p146
    %p148 = scmp.ne.s32.totalorder %s134, %s135
    %p149 = scmp.eq.s32.totalorder %s17, 1
    %p150 = por %p148, %p149
    %p152 = scmp.ne.s32.totalorder %s135, %s151
    %p153 = scmp.eq.s32.totalorder %s17, 0
    %p154 = por %p152, %p153
    %p155 = scmp.le.s32.totalorder 1, %s11
    %p156 = scmp.lt.s32.totalorder %s11, 3
    %p157 = pnand %p155, %p156
    %p158 = pneg %p157
    // Predicated region
    $region9: #{lightweight_feat_forward.37} parent=5 // pred_check
      _
    $region10: #{lightweight_feat_forward.37} parent=5 // pred_check_branch
      %160 = sbr.rel (%p157) target = $region12
    $region11: #{lightweight_feat_forward.37} parent=5 // pred_region
      %s161 = ssub.s32 %s11, 1
      // Predicated region
      $region13: #{lightweight_feat_forward.37} parent=11 // pred_check
        %p162 = pneg %p58
      $region14: #{lightweight_feat_forward.37} parent=11 // pred_check_branch
        %164 = sbr.rel (%p162) target = $region16
      $region15: #{lightweight_feat_forward.37} parent=11 // pred_region
        _
      $region16: #{lightweight_feat_forward.37} parent=11 // pred_fallthru
        _
      // Predicated region
      $region17: #{lightweight_feat_forward.37} parent=11 // pred_check
        %p165 = pneg %p79
      $region18: #{lightweight_feat_forward.37} parent=11 // pred_check_branch
        %167 = sbr.rel (%p165) target = $region20
      $region19: #{lightweight_feat_forward.37} parent=11 // pred_region
        _
      $region20: #{lightweight_feat_forward.37} parent=11 // pred_fallthru
        _
      // Predicated region
      $region21: #{lightweight_feat_forward.37} parent=11 // pred_check
        %p168 = pneg %p100
      $region22: #{lightweight_feat_forward.37} parent=11 // pred_check_branch
        %170 = sbr.rel (%p168) target = $region24
      $region23: #{lightweight_feat_forward.37} parent=11 // pred_region
        _
      $region24: #{lightweight_feat_forward.37} parent=11 // pred_fallthru
        _
      // Predicated region
      $region25: #{lightweight_feat_forward.37} parent=11 // pred_check
        %p171 = pneg %p121
      $region26: #{lightweight_feat_forward.37} parent=11 // pred_check_branch
        %173 = sbr.rel (%p171) target = $region28
      $region27: #{lightweight_feat_forward.37} parent=11 // pred_region
        _
      $region28: #{lightweight_feat_forward.37} parent=11 // pred_fallthru
        _
    $region12: #{lightweight_feat_forward.37} parent=5 // pred_fallthru
      _
    %p174 = scmp.lt.s32.totalorder %s11, 2
    // Predicated region
    $region29: #{lightweight_feat_forward.37} parent=5 // pred_check
      %p175 = pneg %p174
    $region30: #{lightweight_feat_forward.37} parent=5 // pred_check_branch
      %177 = sbr.rel (%p175) target = $region32
    $region31: #{lightweight_feat_forward.37} parent=5 // pred_region
      // Predicated region
      $region33: #{lightweight_feat_forward.37} parent=31 // pred_check
        %p178 = pneg %p31
      $region34: #{lightweight_feat_forward.37} parent=31 // pred_check_branch
        %180 = sbr.rel (%p178) target = $region36
      $region35: #{lightweight_feat_forward.37} parent=31 // pred_region
        %p181 = scmp.lt.s32.totalorder %s11, 1
        %s182 = scalar_select %p181, %s11, 1
        %s183 = smul.addr %s182, 3
        %s184 = smul.addr %s183, 4
        %s185 = scalar_lea.vmem %s0, %s184
      $region36: #{lightweight_feat_forward.37} parent=31 // pred_fallthru
        _
    $region32: #{lightweight_feat_forward.37} parent=5 // pred_fallthru
      _
    %p186 = scmp.le.s32.totalorder 1, %s11
    %p187 = scmp.lt.s32.totalorder %s11, 3
    %p188 = pnand %p186, %p187
    %p189 = pneg %p188
    // Predicated region
    $region37: #{lightweight_feat_forward.37} parent=5 // pred_check
      _
    $region38: #{lightweight_feat_forward.37} parent=5 // pred_check_branch
      %191 = sbr.rel (%p188) target = $region40
    $region39: #{lightweight_feat_forward.37} parent=5 // pred_region
      %s192 = ssub.s32 %s11, 1
      %p193 = scmp.lt.s32.totalorder %s16, 1
      %s194 = scalar_select %p193, %s16, 1
      %s195 = smul.addr %s194, 3
      %s196 = smul.addr %s195, 4
      %s197 = scalar_lea.vmem %s0, %s196
      %p198 = pneg %p37
      %p199 = pneg %p34
      %p200 = pneg %p58
      %p201 = pneg %p55
      %p202 = pneg %p79
      %p203 = pneg %p76
      %p204 = pneg %p100
      %p205 = pneg %p97
      %p206 = pneg %p121
      %p207 = pneg %p118
      %p208 = pneg %p147
      %p209 = pneg %p144
      %p210 = scmp.lt.s32.totalorder %s16, 1
      %s211 = scalar_select %p210, %s16, 1
      %s212 = smul.addr %s211, 4
      %s213 = smul.addr %s212, 2
      %s214 = scalar_lea.vmem %s5, %s213
      %p215 = scmp.lt.s32.totalorder %s16, 1
      %s216 = scalar_select %p215, %s16, 1
      %s217 = smul.addr %s216, 3
      %s218 = smul.addr %s217, 4
      %s219 = scalar_lea.vmem %s0, %s218
      %p220 = scmp.lt.s32.totalorder %s16, 1
      %s221 = scalar_select %p220, %s16, 1
      %s222 = smul.addr %s221, 4
      %s223 = smul.addr %s222, 2
      %s224 = scalar_lea.vmem %s5, %s223
      %v226 = vld [vmem:[%s219] sm:$0xc]
      %v227 = vld [vmem:[%s1] sm:$0xff]
      %v228 = vld [vmem:[%s1 + $0x8] sm:$0xff]
      %v229 = vld [vmem:[%s1 + $0x10] sm:$0xff]
      %v230 = vld [vmem:[%s1 + $0x18] sm:$0xff]
      %v231 = vld [vmem:[%s1 + $0x20] sm:$0xff]
      %v232 = vld [vmem:[%s1 + $0x28] sm:$0xff]
      %v233 = vld [vmem:[%s1 + $0x30] sm:$0xff]
      %v234 = vld [vmem:[%s1 + $0x38] sm:$0xff]
      %v235 = vld [vmem:[%s3] sm:$0x3]
      %v237 = vlaneseq
      %v238 = vshrl.u32 %v237, 7
      %v239 = vsub.s32 0, %v238
      %v240 = vrot.slane %v235, %v239
      %v241 = vlaneseq
      %v242 = vshrl.u32 %v241, 7
      %v243 = vsub.s32 1, %v242
      %v244 = vrot.slane %v235, %v243
      %v248 = vunpack.c.l.b16 %v226
      %v249 = vpack.c.b16 %v248, %v248
      %v250 = vrot.slane %v249, 2
      %v259 = vunpack.c.l.b16 %v227
      %v260 = vunpack.c.h.b16 %v227
      %v261 = vunpack.c.l.b16 %v228
      %v262 = vunpack.c.h.b16 %v228
      %v263 = vunpack.c.l.b16 %v229
      %v264 = vunpack.c.h.b16 %v229
      %v265 = vunpack.c.l.b16 %v230
      %v266 = vunpack.c.h.b16 %v230
      %v267 = vunpack.c.l.b16 %v231
      %v268 = vunpack.c.h.b16 %v231
      %v269 = vunpack.c.l.b16 %v232
      %v270 = vunpack.c.h.b16 %v232
      %v271 = vunpack.c.l.b16 %v233
      %v272 = vunpack.c.h.b16 %v233
      %v273 = vunpack.c.l.b16 %v234
      %v274 = vunpack.c.h.b16 %v234
      %v275 = vpack.c.b16 %v261, %v259
      %v276 = vpack.c.b16 %v262, %v260
      %v277 = vpack.c.b16 %v265, %v263
      %v278 = vpack.c.b16 %v266, %v264
      %v279 = vpack.c.b16 %v269, %v267
      %v280 = vpack.c.b16 %v270, %v268
      %v281 = vpack.c.b16 %v273, %v271
      %v282 = vpack.c.b16 %v274, %v272
      %vm291 = vcmask 523264
      %v293 = vsel %vm291, %v250, 0
      %295 = vmatprep.subr.bf16.mxu0 0
      %296 = vmatpush1.bf16.msra.mxu0 0
      %297 = vmatprep.subr.bf16.mxu0 0
      %298 = vmatpush1.bf16.msra.mxu0 0
      %299 = vmatprep.subr.bf16.mxu0 0
      %300 = vmatpush1.bf16.msra.mxu0 0
      %301 = vmatprep.subr.bf16.mxu0 0
      %302 = vmatpush1.bf16.msra.mxu0 0
      %303 = vmatprep.subr.bf16.mxu0 %v282
      %304 = vmatpush1.bf16.msra.mxu0 %v281
      %305 = vmatprep.subr.bf16.mxu0 %v280
      %306 = vmatpush1.bf16.msra.mxu0 %v279
      %307 = vmatprep.subr.bf16.mxu0 %v278
      %308 = vmatpush1.bf16.msra.mxu0 %v277
      %309 = vmatprep.subr.bf16.mxu0 %v276
      %310 = vmatpush1.bf16.msra.mxu0 %v275
      %311 = vmatprep.subr.bf16.mxu0 0
      %312 = vmatpush2.bf16.msra.mxu0 0
      %313 = vmatprep.subr.bf16.mxu0 0
      %314 = vmatpush2.bf16.msra.mxu0 0
      %315 = vmatprep.subr.bf16.mxu0 0
      %316 = vmatpush2.bf16.msra.mxu0 0
      %317 = vmatprep.subr.bf16.mxu0 0
      %318 = vmatpush2.bf16.msra.mxu0 0
      %319 = vmatprep.subr.bf16.mxu0 0
      %320 = vmatpush2.bf16.msra.mxu0 0
      %321 = vmatprep.subr.bf16.mxu0 0
      %322 = vmatpush2.bf16.msra.mxu0 0
      %323 = vmatprep.subr.bf16.mxu0 0
      %324 = vmatpush2.bf16.msra.mxu0 0
      %325 = vmatprep.subr.bf16.mxu0 0
      %326 = vmatpush2.bf16.msra.mxu0 0
      %327 = vmatprep.mubr.bf16.mxu0 0
      %328 = vmatmul.mubr.bf16.gmra.mxu0 %v293
      %v329 = vpop.f32.mrf.mxu0
      %v330 = vadd.f32 %v240, %v329
      %v331 = vpop.f32.mrf.mxu0
      %v332 = vadd.f32 %v244, %v331
      %v333 = vpop.f32.mrf.mxu0
      %v334 = vpop.f32.mrf.mxu0
      %335 = vdwg.mxu0
      %v336 = vld [vmem:[%s219] sm:$0x3]
      %v337 = vld [vmem:[%s2] sm:$0xff]
      %v338 = vld [vmem:[%s2 + $0x8] sm:$0xff]
      %v339 = vld [vmem:[%s2 + $0x10] sm:$0xff]
      %v340 = vld [vmem:[%s2 + $0x18] sm:$0xff]
      %v341 = vld [vmem:[%s2 + $0x20] sm:$0xff]
      %v342 = vld [vmem:[%s2 + $0x28] sm:$0xff]
      %v343 = vld [vmem:[%s2 + $0x30] sm:$0xff]
      %v344 = vld [vmem:[%s2 + $0x38] sm:$0xff]
      %s345 = scalar_lea.vmem %s2, 64
      %v346 = vld [vmem:[%s345] sm:$0xff]
      %v347 = vld [vmem:[%s345 + $0x8] sm:$0xff]
      %v348 = vld [vmem:[%s345 + $0x10] sm:$0xff]
      %v349 = vld [vmem:[%s345 + $0x18] sm:$0xff]
      %v350 = vld [vmem:[%s345 + $0x20] sm:$0xff]
      %v351 = vld [vmem:[%s345 + $0x28] sm:$0xff]
      %v352 = vld [vmem:[%s345 + $0x30] sm:$0xff]
      %v353 = vld [vmem:[%s345 + $0x38] sm:$0xff]
      %v355 = vunpack.c.l.b16 %v336
      %v356 = vpack.c.b16 %v355, %v355
      %v358 = vshrl.u32 %v356, 16
      %v360 = vshll.u32 %v356, 16
      %v362 = vrot.slane %v360, 1
      %v363 = vor.u32 %v358, %v362
      %v372 = vunpack.c.l.b16 %v346
      %v373 = vunpack.c.h.b16 %v346
      %v374 = vunpack.c.l.b16 %v347
      %v375 = vunpack.c.h.b16 %v347
      %v376 = vunpack.c.l.b16 %v348
      %v377 = vunpack.c.h.b16 %v348
      %v378 = vunpack.c.l.b16 %v349
      %v379 = vunpack.c.h.b16 %v349
      %v380 = vunpack.c.l.b16 %v350
      %v381 = vunpack.c.h.b16 %v350
      %v382 = vunpack.c.l.b16 %v351
      %v383 = vunpack.c.h.b16 %v351
      %v384 = vunpack.c.l.b16 %v352
      %v385 = vunpack.c.h.b16 %v352
      %v386 = vunpack.c.l.b16 %v353
      %v387 = vunpack.c.h.b16 %v353
      %v388 = vpack.c.b16 %v374, %v372
      %v389 = vpack.c.b16 %v375, %v373
      %v390 = vpack.c.b16 %v378, %v376
      %v391 = vpack.c.b16 %v379, %v377
      %v392 = vpack.c.b16 %v382, %v380
      %v393 = vpack.c.b16 %v383, %v381
      %v394 = vpack.c.b16 %v386, %v384
      %v395 = vpack.c.b16 %v387, %v385
      %v405 = vsel %vm291, %v363, 0
      %407 = vmatprep.subr.bf16.mxu0 0
      %408 = vmatpush1.bf16.msra.mxu0 0
      %409 = vmatprep.subr.bf16.mxu0 0
      %410 = vmatpush1.bf16.msra.mxu0 0
      %411 = vmatprep.subr.bf16.mxu0 0
      %412 = vmatpush1.bf16.msra.mxu0 0
      %413 = vmatprep.subr.bf16.mxu0 0
      %414 = vmatpush1.bf16.msra.mxu0 0
      %415 = vmatprep.subr.bf16.mxu0 %v395
      %416 = vmatpush1.bf16.msra.mxu0 %v394
      %417 = vmatprep.subr.bf16.mxu0 %v393
      %418 = vmatpush1.bf16.msra.mxu0 %v392
      %419 = vmatprep.subr.bf16.mxu0 %v391
      %420 = vmatpush1.bf16.msra.mxu0 %v390
      %421 = vmatprep.subr.bf16.mxu0 %v389
      %422 = vmatpush1.bf16.msra.mxu0 %v388
      %423 = vmatprep.subr.bf16.mxu0 0
      %424 = vmatpush2.bf16.msra.mxu0 0
      %425 = vmatprep.subr.bf16.mxu0 0
      %426 = vmatpush2.bf16.msra.mxu0 0
      %427 = vmatprep.subr.bf16.mxu0 0
      %428 = vmatpush2.bf16.msra.mxu0 0
      %429 = vmatprep.subr.bf16.mxu0 0
      %430 = vmatpush2.bf16.msra.mxu0 0
      %431 = vmatprep.subr.bf16.mxu0 0
      %432 = vmatpush2.bf16.msra.mxu0 0
      %433 = vmatprep.subr.bf16.mxu0 0
      %434 = vmatpush2.bf16.msra.mxu0 0
      %435 = vmatprep.subr.bf16.mxu0 0
      %436 = vmatpush2.bf16.msra.mxu0 0
      %437 = vmatprep.subr.bf16.mxu0 0
      %438 = vmatpush2.bf16.msra.mxu0 0
      %439 = vmatprep.mubr.bf16.mxu0 0
      %440 = vmatmul.mubr.bf16.gmra.mxu0 %v405
      %v441 = vpop.f32.mrf.mxu0
      %v442 = vadd.f32 0.0, %v441
      %v443 = vpop.f32.mrf.mxu0
      %v444 = vadd.f32 0.0, %v443
      %v445 = vpop.f32.mrf.mxu0
      %v446 = vpop.f32.mrf.mxu0
      %447 = vdwg.mxu0
      %v456 = vunpack.c.l.b16 %v337
      %v457 = vunpack.c.h.b16 %v337
      %v458 = vunpack.c.l.b16 %v338
      %v459 = vunpack.c.h.b16 %v338
      %v460 = vunpack.c.l.b16 %v339
      %v461 = vunpack.c.h.b16 %v339
      %v462 = vunpack.c.l.b16 %v340
      %v463 = vunpack.c.h.b16 %v340
      %v464 = vunpack.c.l.b16 %v341
      %v465 = vunpack.c.h.b16 %v341
      %v466 = vunpack.c.l.b16 %v342
      %v467 = vunpack.c.h.b16 %v342
      %v468 = vunpack.c.l.b16 %v343
      %v469 = vunpack.c.h.b16 %v343
      %v470 = vunpack.c.l.b16 %v344
      %v471 = vunpack.c.h.b16 %v344
      %v472 = vpack.c.b16 %v458, %v456
      %v473 = vpack.c.b16 %v459, %v457
      %v474 = vpack.c.b16 %v462, %v460
      %v475 = vpack.c.b16 %v463, %v461
      %v476 = vpack.c.b16 %v466, %v464
      %v477 = vpack.c.b16 %v467, %v465
      %v478 = vpack.c.b16 %v470, %v468
      %v479 = vpack.c.b16 %v471, %v469
      %v489 = vsel %vm291, %v336, 0
      %491 = vmatprep.subr.bf16.mxu0 0
      %492 = vmatpush1.bf16.msra.mxu0 0
      %493 = vmatprep.subr.bf16.mxu0 0
      %494 = vmatpush1.bf16.msra.mxu0 0
      %495 = vmatprep.subr.bf16.mxu0 0
      %496 = vmatpush1.bf16.msra.mxu0 0
      %497 = vmatprep.subr.bf16.mxu0 0
      %498 = vmatpush1.bf16.msra.mxu0 0
      %499 = vmatprep.subr.bf16.mxu0 %v479
      %500 = vmatpush1.bf16.msra.mxu0 %v478
      %501 = vmatprep.subr.bf16.mxu0 %v477
      %502 = vmatpush1.bf16.msra.mxu0 %v476
      %503 = vmatprep.subr.bf16.mxu0 %v475
      %504 = vmatpush1.bf16.msra.mxu0 %v474
      %505 = vmatprep.subr.bf16.mxu0 %v473
      %506 = vmatpush1.bf16.msra.mxu0 %v472
      %507 = vmatprep.subr.bf16.mxu0 0
      %508 = vmatpush2.bf16.msra.mxu0 0
      %509 = vmatprep.subr.bf16.mxu0 0
      %510 = vmatpush2.bf16.msra.mxu0 0
      %511 = vmatprep.subr.bf16.mxu0 0
      %512 = vmatpush2.bf16.msra.mxu0 0
      %513 = vmatprep.subr.bf16.mxu0 0
      %514 = vmatpush2.bf16.msra.mxu0 0
      %515 = vmatprep.subr.bf16.mxu0 0
      %516 = vmatpush2.bf16.msra.mxu0 0
      %517 = vmatprep.subr.bf16.mxu0 0
      %518 = vmatpush2.bf16.msra.mxu0 0
      %519 = vmatprep.subr.bf16.mxu0 0
      %520 = vmatpush2.bf16.msra.mxu0 0
      %521 = vmatprep.subr.bf16.mxu0 0
      %522 = vmatpush2.bf16.msra.mxu0 0
      %523 = vmatprep.mubr.bf16.mxu0 0
      %524 = vmatmul.mubr.bf16.gmra.mxu0 %v489
      %v525 = vpop.f32.mrf.mxu0
      %v526 = vadd.f32 %v442, %v525
      %v527 = vpop.f32.mrf.mxu0
      %v528 = vadd.f32 %v444, %v527
      %v529 = vpop.f32.mrf.mxu0
      %v530 = vpop.f32.mrf.mxu0
      %531 = vdwg.mxu0
      %v532 = vld [vmem:[%s219] sm:$0x6]
      %s533 = scalar_lea.vmem %s2, 128
      %v534 = vld [vmem:[%s533] sm:$0xff]
      %v535 = vld [vmem:[%s533 + $0x8] sm:$0xff]
      %v536 = vld [vmem:[%s533 + $0x10] sm:$0xff]
      %v537 = vld [vmem:[%s533 + $0x18] sm:$0xff]
      %v538 = vld [vmem:[%s533 + $0x20] sm:$0xff]
      %v539 = vld [vmem:[%s533 + $0x28] sm:$0xff]
      %v540 = vld [vmem:[%s533 + $0x30] sm:$0xff]
      %v541 = vld [vmem:[%s533 + $0x38] sm:$0xff]
      %v543 = vunpack.c.l.b16 %v532
      %v544 = vpack.c.b16 %v543, %v543
      %v545 = vrot.slane %v544, 1
      %v554 = vunpack.c.l.b16 %v534
      %v555 = vunpack.c.h.b16 %v534
      %v556 = vunpack.c.l.b16 %v535
      %v557 = vunpack.c.h.b16 %v535
      %v558 = vunpack.c.l.b16 %v536
      %v559 = vunpack.c.h.b16 %v536
      %v560 = vunpack.c.l.b16 %v537
      %v561 = vunpack.c.h.b16 %v537
      %v562 = vunpack.c.l.b16 %v538
      %v563 = vunpack.c.h.b16 %v538
      %v564 = vunpack.c.l.b16 %v539
      %v565 = vunpack.c.h.b16 %v539
      %v566 = vunpack.c.l.b16 %v540
      %v567 = vunpack.c.h.b16 %v540
      %v568 = vunpack.c.l.b16 %v541
      %v569 = vunpack.c.h.b16 %v541
      %v570 = vpack.c.b16 %v556, %v554
      %v571 = vpack.c.b16 %v557, %v555
      %v572 = vpack.c.b16 %v560, %v558
      %v573 = vpack.c.b16 %v561, %v559
      %v574 = vpack.c.b16 %v564, %v562
      %v575 = vpack.c.b16 %v565, %v563
      %v576 = vpack.c.b16 %v568, %v566
      %v577 = vpack.c.b16 %v569, %v567
      %v587 = vsel %vm291, %v545, 0
      %589 = vmatprep.subr.bf16.mxu0 0
      %590 = vmatpush1.bf16.msra.mxu0 0
      %591 = vmatprep.subr.bf16.mxu0 0
      %592 = vmatpush1.bf16.msra.mxu0 0
      %593 = vmatprep.subr.bf16.mxu0 0
      %594 = vmatpush1.bf16.msra.mxu0 0
      %595 = vmatprep.subr.bf16.mxu0 0
      %596 = vmatpush1.bf16.msra.mxu0 0
      %597 = vmatprep.subr.bf16.mxu0 %v577
      %598 = vmatpush1.bf16.msra.mxu0 %v576
      %599 = vmatprep.subr.bf16.mxu0 %v575
      %600 = vmatpush1.bf16.msra.mxu0 %v574
      %601 = vmatprep.subr.bf16.mxu0 %v573
      %602 = vmatpush1.bf16.msra.mxu0 %v572
      %603 = vmatprep.subr.bf16.mxu0 %v571
      %604 = vmatpush1.bf16.msra.mxu0 %v570
      %605 = vmatprep.subr.bf16.mxu0 0
      %606 = vmatpush2.bf16.msra.mxu0 0
      %607 = vmatprep.subr.bf16.mxu0 0
      %608 = vmatpush2.bf16.msra.mxu0 0
      %609 = vmatprep.subr.bf16.mxu0 0
      %610 = vmatpush2.bf16.msra.mxu0 0
      %611 = vmatprep.subr.bf16.mxu0 0
      %612 = vmatpush2.bf16.msra.mxu0 0
      %613 = vmatprep.subr.bf16.mxu0 0
      %614 = vmatpush2.bf16.msra.mxu0 0
      %615 = vmatprep.subr.bf16.mxu0 0
      %616 = vmatpush2.bf16.msra.mxu0 0
      %617 = vmatprep.subr.bf16.mxu0 0
      %618 = vmatpush2.bf16.msra.mxu0 0
      %619 = vmatprep.subr.bf16.mxu0 0
      %620 = vmatpush2.bf16.msra.mxu0 0
      %621 = vmatprep.mubr.bf16.mxu0 0
      %622 = vmatmul.mubr.bf16.gmra.mxu0 %v587
      %v623 = vpop.f32.mrf.mxu0
      %v624 = vadd.f32 0.0, %v623
      %v625 = vpop.f32.mrf.mxu0
      %v626 = vadd.f32 0.0, %v625
      %v627 = vpop.f32.mrf.mxu0
      %v628 = vpop.f32.mrf.mxu0
      %629 = vdwg.mxu0
      %v630 = vadd.f32 %v526, %v624
      %v631 = vadd.f32 %v528, %v626
      %s632 = scalar_lea.vmem %s2, 192
      %v633 = vld [vmem:[%s632] sm:$0xff]
      %v634 = vld [vmem:[%s632 + $0x8] sm:$0xff]
      %v635 = vld [vmem:[%s632 + $0x10] sm:$0xff]
      %v636 = vld [vmem:[%s632 + $0x18] sm:$0xff]
      %v637 = vld [vmem:[%s632 + $0x20] sm:$0xff]
      %v638 = vld [vmem:[%s632 + $0x28] sm:$0xff]
      %v639 = vld [vmem:[%s632 + $0x30] sm:$0xff]
      %v640 = vld [vmem:[%s632 + $0x38] sm:$0xff]
      %v642 = vshrl.u32 %v544, 16
      %v644 = vrot.slane %v642, 1
      %v645 = vshll.u32 %v544, 16
      %v647 = vrot.slane %v645, 2
      %v648 = vor.u32 %v644, %v647
      %v657 = vunpack.c.l.b16 %v633
      %v658 = vunpack.c.h.b16 %v633
      %v659 = vunpack.c.l.b16 %v634
      %v660 = vunpack.c.h.b16 %v634
      %v661 = vunpack.c.l.b16 %v635
      %v662 = vunpack.c.h.b16 %v635
      %v663 = vunpack.c.l.b16 %v636
      %v664 = vunpack.c.h.b16 %v636
      %v665 = vunpack.c.l.b16 %v637
      %v666 = vunpack.c.h.b16 %v637
      %v667 = vunpack.c.l.b16 %v638
      %v668 = vunpack.c.h.b16 %v638
      %v669 = vunpack.c.l.b16 %v639
      %v670 = vunpack.c.h.b16 %v639
      %v671 = vunpack.c.l.b16 %v640
      %v672 = vunpack.c.h.b16 %v640
      %v673 = vpack.c.b16 %v659, %v657
      %v674 = vpack.c.b16 %v660, %v658
      %v675 = vpack.c.b16 %v663, %v661
      %v676 = vpack.c.b16 %v664, %v662
      %v677 = vpack.c.b16 %v667, %v665
      %v678 = vpack.c.b16 %v668, %v666
      %v679 = vpack.c.b16 %v671, %v669
      %v680 = vpack.c.b16 %v672, %v670
      %v690 = vsel %vm291, %v648, 0
      %692 = vmatprep.subr.bf16.mxu0 0
      %693 = vmatpush1.bf16.msra.mxu0 0
      %694 = vmatprep.subr.bf16.mxu0 0
      %695 = vmatpush1.bf16.msra.mxu0 0
      %696 = vmatprep.subr.bf16.mxu0 0
      %697 = vmatpush1.bf16.msra.mxu0 0
      %698 = vmatprep.subr.bf16.mxu0 0
      %699 = vmatpush1.bf16.msra.mxu0 0
      %700 = vmatprep.subr.bf16.mxu0 %v680
      %701 = vmatpush1.bf16.msra.mxu0 %v679
      %702 = vmatprep.subr.bf16.mxu0 %v678
      %703 = vmatpush1.bf16.msra.mxu0 %v677
      %704 = vmatprep.subr.bf16.mxu0 %v676
      %705 = vmatpush1.bf16.msra.mxu0 %v675
      %706 = vmatprep.subr.bf16.mxu0 %v674
      %707 = vmatpush1.bf16.msra.mxu0 %v673
      %708 = vmatprep.subr.bf16.mxu0 0
      %709 = vmatpush2.bf16.msra.mxu0 0
      %710 = vmatprep.subr.bf16.mxu0 0
      %711 = vmatpush2.bf16.msra.mxu0 0
      %712 = vmatprep.subr.bf16.mxu0 0
      %713 = vmatpush2.bf16.msra.mxu0 0
      %714 = vmatprep.subr.bf16.mxu0 0
      %715 = vmatpush2.bf16.msra.mxu0 0
      %716 = vmatprep.subr.bf16.mxu0 0
      %717 = vmatpush2.bf16.msra.mxu0 0
      %718 = vmatprep.subr.bf16.mxu0 0
      %719 = vmatpush2.bf16.msra.mxu0 0
      %720 = vmatprep.subr.bf16.mxu0 0
      %721 = vmatpush2.bf16.msra.mxu0 0
      %722 = vmatprep.subr.bf16.mxu0 0
      %723 = vmatpush2.bf16.msra.mxu0 0
      %724 = vmatprep.mubr.bf16.mxu0 0
      %725 = vmatmul.mubr.bf16.gmra.mxu0 %v690
      %v726 = vpop.f32.mrf.mxu0
      %v727 = vadd.f32 0.0, %v726
      %v728 = vpop.f32.mrf.mxu0
      %v729 = vadd.f32 0.0, %v728
      %v730 = vpop.f32.mrf.mxu0
      %v731 = vpop.f32.mrf.mxu0
      %732 = vdwg.mxu0
      %v733 = vadd.f32 %v630, %v727
      %v734 = vadd.f32 %v631, %v729
      %s735 = scalar_lea.vmem %s2, 256
      %v736 = vld [vmem:[%s735] sm:$0xff]
      %v737 = vld [vmem:[%s735 + $0x8] sm:$0xff]
      %v738 = vld [vmem:[%s735 + $0x10] sm:$0xff]
      %v739 = vld [vmem:[%s735 + $0x18] sm:$0xff]
      %v740 = vld [vmem:[%s735 + $0x20] sm:$0xff]
      %v741 = vld [vmem:[%s735 + $0x28] sm:$0xff]
      %v742 = vld [vmem:[%s735 + $0x30] sm:$0xff]
      %v743 = vld [vmem:[%s735 + $0x38] sm:$0xff]
      %v752 = vunpack.c.l.b16 %v736
      %v753 = vunpack.c.h.b16 %v736
      %v754 = vunpack.c.l.b16 %v737
      %v755 = vunpack.c.h.b16 %v737
      %v756 = vunpack.c.l.b16 %v738
      %v757 = vunpack.c.h.b16 %v738
      %v758 = vunpack.c.l.b16 %v739
      %v759 = vunpack.c.h.b16 %v739
      %v760 = vunpack.c.l.b16 %v740
      %v761 = vunpack.c.h.b16 %v740
      %v762 = vunpack.c.l.b16 %v741
      %v763 = vunpack.c.h.b16 %v741
      %v764 = vunpack.c.l.b16 %v742
      %v765 = vunpack.c.h.b16 %v742
      %v766 = vunpack.c.l.b16 %v743
      %v767 = vunpack.c.h.b16 %v743
      %v768 = vpack.c.b16 %v754, %v752
      %v769 = vpack.c.b16 %v755, %v753
      %v770 = vpack.c.b16 %v758, %v756
      %v771 = vpack.c.b16 %v759, %v757
      %v772 = vpack.c.b16 %v762, %v760
      %v773 = vpack.c.b16 %v763, %v761
      %v774 = vpack.c.b16 %v766, %v764
      %v775 = vpack.c.b16 %v767, %v765
      %784 = vmatprep.subr.bf16.mxu0 0
      %785 = vmatpush1.bf16.msra.mxu0 0
      %786 = vmatprep.subr.bf16.mxu0 0
      %787 = vmatpush1.bf16.msra.mxu0 0
      %788 = vmatprep.subr.bf16.mxu0 0
      %789 = vmatpush1.bf16.msra.mxu0 0
      %790 = vmatprep.subr.bf16.mxu0 0
      %791 = vmatpush1.bf16.msra.mxu0 0
      %792 = vmatprep.subr.bf16.mxu0 %v775
      %793 = vmatpush1.bf16.msra.mxu0 %v774
      %794 = vmatprep.subr.bf16.mxu0 %v773
      %795 = vmatpush1.bf16.msra.mxu0 %v772
      %796 = vmatprep.subr.bf16.mxu0 %v771
      %797 = vmatpush1.bf16.msra.mxu0 %v770
      %798 = vmatprep.subr.bf16.mxu0 %v769
      %799 = vmatpush1.bf16.msra.mxu0 %v768
      %800 = vmatprep.subr.bf16.mxu0 0
      %801 = vmatpush2.bf16.msra.mxu0 0
      %802 = vmatprep.subr.bf16.mxu0 0
      %803 = vmatpush2.bf16.msra.mxu0 0
      %804 = vmatprep.subr.bf16.mxu0 0
      %805 = vmatpush2.bf16.msra.mxu0 0
      %806 = vmatprep.subr.bf16.mxu0 0
      %807 = vmatpush2.bf16.msra.mxu0 0
      %808 = vmatprep.subr.bf16.mxu0 0
      %809 = vmatpush2.bf16.msra.mxu0 0
      %810 = vmatprep.subr.bf16.mxu0 0
      %811 = vmatpush2.bf16.msra.mxu0 0
      %812 = vmatprep.subr.bf16.mxu0 0
      %813 = vmatpush2.bf16.msra.mxu0 0
      %814 = vmatprep.subr.bf16.mxu0 0
      %815 = vmatpush2.bf16.msra.mxu0 0
      %816 = vmatprep.mubr.bf16.mxu0 0
      %817 = vmatmul.mubr.bf16.gmra.mxu0 %v293
      %v818 = vpop.f32.mrf.mxu0
      %v819 = vadd.f32 0.0, %v818
      %v820 = vpop.f32.mrf.mxu0
      %v821 = vadd.f32 0.0, %v820
      %v822 = vpop.f32.mrf.mxu0
      %v823 = vpop.f32.mrf.mxu0
      %824 = vdwg.mxu0
      %v825 = vadd.f32 %v733, %v819
      %v826 = vadd.f32 %v734, %v821
      %s827 = scalar_lea.vmem %s2, 320
      %v828 = vld [vmem:[%s827] sm:$0xff]
      %v829 = vld [vmem:[%s827 + $0x8] sm:$0xff]
      %v830 = vld [vmem:[%s827 + $0x10] sm:$0xff]
      %v831 = vld [vmem:[%s827 + $0x18] sm:$0xff]
      %v832 = vld [vmem:[%s827 + $0x20] sm:$0xff]
      %v833 = vld [vmem:[%s827 + $0x28] sm:$0xff]
      %v834 = vld [vmem:[%s827 + $0x30] sm:$0xff]
      %v835 = vld [vmem:[%s827 + $0x38] sm:$0xff]
      %v837 = vshrl.u32 %v249, 16
      %v839 = vrot.slane %v837, 2
      %v840 = vshll.u32 %v249, 16
      %v842 = vrot.slane %v840, 3
      %v843 = vor.u32 %v839, %v842
      %v852 = vunpack.c.l.b16 %v828
      %v853 = vunpack.c.h.b16 %v828
      %v854 = vunpack.c.l.b16 %v829
      %v855 = vunpack.c.h.b16 %v829
      %v856 = vunpack.c.l.b16 %v830
      %v857 = vunpack.c.h.b16 %v830
      %v858 = vunpack.c.l.b16 %v831
      %v859 = vunpack.c.h.b16 %v831
      %v860 = vunpack.c.l.b16 %v832
      %v861 = vunpack.c.h.b16 %v832
      %v862 = vunpack.c.l.b16 %v833
      %v863 = vunpack.c.h.b16 %v833
      %v864 = vunpack.c.l.b16 %v834
      %v865 = vunpack.c.h.b16 %v834
      %v866 = vunpack.c.l.b16 %v835
      %v867 = vunpack.c.h.b16 %v835
      %v868 = vpack.c.b16 %v854, %v852
      %v869 = vpack.c.b16 %v855, %v853
      %v870 = vpack.c.b16 %v858, %v856
      %v871 = vpack.c.b16 %v859, %v857
      %v872 = vpack.c.b16 %v862, %v860
      %v873 = vpack.c.b16 %v863, %v861
      %v874 = vpack.c.b16 %v866, %v864
      %v875 = vpack.c.b16 %v867, %v865
      %v885 = vsel %vm291, %v843, 0
      %887 = vmatprep.subr.bf16.mxu0 0
      %888 = vmatpush1.bf16.msra.mxu0 0
      %889 = vmatprep.subr.bf16.mxu0 0
      %890 = vmatpush1.bf16.msra.mxu0 0
      %891 = vmatprep.subr.bf16.mxu0 0
      %892 = vmatpush1.bf16.msra.mxu0 0
      %893 = vmatprep.subr.bf16.mxu0 0
      %894 = vmatpush1.bf16.msra.mxu0 0
      %895 = vmatprep.subr.bf16.mxu0 %v875
      %896 = vmatpush1.bf16.msra.mxu0 %v874
      %897 = vmatprep.subr.bf16.mxu0 %v873
      %898 = vmatpush1.bf16.msra.mxu0 %v872
      %899 = vmatprep.subr.bf16.mxu0 %v871
      %900 = vmatpush1.bf16.msra.mxu0 %v870
      %901 = vmatprep.subr.bf16.mxu0 %v869
      %902 = vmatpush1.bf16.msra.mxu0 %v868
      %903 = vmatprep.subr.bf16.mxu0 0
      %904 = vmatpush2.bf16.msra.mxu0 0
      %905 = vmatprep.subr.bf16.mxu0 0
      %906 = vmatpush2.bf16.msra.mxu0 0
      %907 = vmatprep.subr.bf16.mxu0 0
      %908 = vmatpush2.bf16.msra.mxu0 0
      %909 = vmatprep.subr.bf16.mxu0 0
      %910 = vmatpush2.bf16.msra.mxu0 0
      %911 = vmatprep.subr.bf16.mxu0 0
      %912 = vmatpush2.bf16.msra.mxu0 0
      %913 = vmatprep.subr.bf16.mxu0 0
      %914 = vmatpush2.bf16.msra.mxu0 0
      %915 = vmatprep.subr.bf16.mxu0 0
      %916 = vmatpush2.bf16.msra.mxu0 0
      %917 = vmatprep.subr.bf16.mxu0 0
      %918 = vmatpush2.bf16.msra.mxu0 0
      %919 = vmatprep.mubr.bf16.mxu0 0
      %920 = vmatmul.mubr.bf16.gmra.mxu0 %v885
      %v921 = vpop.f32.mrf.mxu0
      %v922 = vadd.f32 0.0, %v921
      %v923 = vpop.f32.mrf.mxu0
      %v924 = vadd.f32 0.0, %v923
      %v925 = vpop.f32.mrf.mxu0
      %v926 = vpop.f32.mrf.mxu0
      %927 = vdwg.mxu0
      %v928 = vadd.f32 %v825, %v922
      %v929 = vadd.f32 %v826, %v924
      %v930 = vld [vmem:[%s219] sm:$0x8]
      %v931 = vld [vmem:[%s219 + $0x4] sm:$0x1]
      %s932 = scalar_lea.vmem %s2, 384
      %v933 = vld [vmem:[%s932] sm:$0xff]
      %v934 = vld [vmem:[%s932 + $0x8] sm:$0xff]
      %v935 = vld [vmem:[%s932 + $0x10] sm:$0xff]
      %v936 = vld [vmem:[%s932 + $0x18] sm:$0xff]
      %v937 = vld [vmem:[%s932 + $0x20] sm:$0xff]
      %v938 = vld [vmem:[%s932 + $0x28] sm:$0xff]
      %v939 = vld [vmem:[%s932 + $0x30] sm:$0xff]
      %v940 = vld [vmem:[%s932 + $0x38] sm:$0xff]
      %v943 = vunpack.c.l.b16 %v930
      %v944 = vunpack.c.l.b16 %v931
      %v945 = vpack.c.b16 %v944, %v943
      %v946 = vrot.slane %v945, 3
      %v955 = vunpack.c.l.b16 %v933
      %v956 = vunpack.c.h.b16 %v933
      %v957 = vunpack.c.l.b16 %v934
      %v958 = vunpack.c.h.b16 %v934
      %v959 = vunpack.c.l.b16 %v935
      %v960 = vunpack.c.h.b16 %v935
      %v961 = vunpack.c.l.b16 %v936
      %v962 = vunpack.c.h.b16 %v936
      %v963 = vunpack.c.l.b16 %v937
      %v964 = vunpack.c.h.b16 %v937
      %v965 = vunpack.c.l.b16 %v938
      %v966 = vunpack.c.h.b16 %v938
      %v967 = vunpack.c.l.b16 %v939
      %v968 = vunpack.c.h.b16 %v939
      %v969 = vunpack.c.l.b16 %v940
      %v970 = vunpack.c.h.b16 %v940
      %v971 = vpack.c.b16 %v957, %v955
      %v972 = vpack.c.b16 %v958, %v956
      %v973 = vpack.c.b16 %v961, %v959
      %v974 = vpack.c.b16 %v962, %v960
      %v975 = vpack.c.b16 %v965, %v963
      %v976 = vpack.c.b16 %v966, %v964
      %v977 = vpack.c.b16 %v969, %v967
      %v978 = vpack.c.b16 %v970, %v968
      %v988 = vsel %vm291, %v946, 0
      %990 = vmatprep.subr.bf16.mxu0 0
      %991 = vmatpush1.bf16.msra.mxu0 0
      %992 = vmatprep.subr.bf16.mxu0 0
      %993 = vmatpush1.bf16.msra.mxu0 0
      %994 = vmatprep.subr.bf16.mxu0 0
      %995 = vmatpush1.bf16.msra.mxu0 0
      %996 = vmatprep.subr.bf16.mxu0 0
      %997 = vmatpush1.bf16.msra.mxu0 0
      %998 = vmatprep.subr.bf16.mxu0 %v978
      %999 = vmatpush1.bf16.msra.mxu0 %v977
      %1000 = vmatprep.subr.bf16.mxu0 %v976
      %1001 = vmatpush1.bf16.msra.mxu0 %v975
      %1002 = vmatprep.subr.bf16.mxu0 %v974
      %1003 = vmatpush1.bf16.msra.mxu0 %v973
      %1004 = vmatprep.subr.bf16.mxu0 %v972
      %1005 = vmatpush1.bf16.msra.mxu0 %v971
      %1006 = vmatprep.subr.bf16.mxu0 0
      %1007 = vmatpush2.bf16.msra.mxu0 0
      %1008 = vmatprep.subr.bf16.mxu0 0
      %1009 = vmatpush2.bf16.msra.mxu0 0
      %1010 = vmatprep.subr.bf16.mxu0 0
      %1011 = vmatpush2.bf16.msra.mxu0 0
      %1012 = vmatprep.subr.bf16.mxu0 0
      %1013 = vmatpush2.bf16.msra.mxu0 0
      %1014 = vmatprep.subr.bf16.mxu0 0
      %1015 = vmatpush2.bf16.msra.mxu0 0
      %1016 = vmatprep.subr.bf16.mxu0 0
      %1017 = vmatpush2.bf16.msra.mxu0 0
      %1018 = vmatprep.subr.bf16.mxu0 0
      %1019 = vmatpush2.bf16.msra.mxu0 0
      %1020 = vmatprep.subr.bf16.mxu0 0
      %1021 = vmatpush2.bf16.msra.mxu0 0
      %1022 = vmatprep.mubr.bf16.mxu0 0
      %1023 = vmatmul.mubr.bf16.gmra.mxu0 %v988
      %v1024 = vpop.f32.mrf.mxu0
      %v1025 = vadd.f32 0.0, %v1024
      %v1026 = vpop.f32.mrf.mxu0
      %v1027 = vadd.f32 0.0, %v1026
      %v1028 = vpop.f32.mrf.mxu0
      %v1029 = vpop.f32.mrf.mxu0
      %1030 = vdwg.mxu0
      %v1031 = vadd.f32 %v928, %v1025
      %v1032 = vadd.f32 %v929, %v1027
      %s1033 = scalar_lea.vmem %s2, 448
      %v1034 = vld [vmem:[%s1033] sm:$0xff]
      %v1035 = vld [vmem:[%s1033 + $0x8] sm:$0xff]
      %v1036 = vld [vmem:[%s1033 + $0x10] sm:$0xff]
      %v1037 = vld [vmem:[%s1033 + $0x18] sm:$0xff]
      %v1038 = vld [vmem:[%s1033 + $0x20] sm:$0xff]
      %v1039 = vld [vmem:[%s1033 + $0x28] sm:$0xff]
      %v1040 = vld [vmem:[%s1033 + $0x30] sm:$0xff]
      %v1041 = vld [vmem:[%s1033 + $0x38] sm:$0xff]
      %v1043 = vshrl.u32 %v945, 16
      %v1045 = vrot.slane %v1043, 3
      %v1046 = vshll.u32 %v945, 16
      %v1048 = vrot.slane %v1046, 4
      %v1049 = vor.u32 %v1045, %v1048
      %v1058 = vunpack.c.l.b16 %v1034
      %v1059 = vunpack.c.h.b16 %v1034
      %v1060 = vunpack.c.l.b16 %v1035
      %v1061 = vunpack.c.h.b16 %v1035
      %v1062 = vunpack.c.l.b16 %v1036
      %v1063 = vunpack.c.h.b16 %v1036
      %v1064 = vunpack.c.l.b16 %v1037
      %v1065 = vunpack.c.h.b16 %v1037
      %v1066 = vunpack.c.l.b16 %v1038
      %v1067 = vunpack.c.h.b16 %v1038
      %v1068 = vunpack.c.l.b16 %v1039
      %v1069 = vunpack.c.h.b16 %v1039
      %v1070 = vunpack.c.l.b16 %v1040
      %v1071 = vunpack.c.h.b16 %v1040
      %v1072 = vunpack.c.l.b16 %v1041
      %v1073 = vunpack.c.h.b16 %v1041
      %v1074 = vpack.c.b16 %v1060, %v1058
      %v1075 = vpack.c.b16 %v1061, %v1059
      %v1076 = vpack.c.b16 %v1064, %v1062
      %v1077 = vpack.c.b16 %v1065, %v1063
      %v1078 = vpack.c.b16 %v1068, %v1066
      %v1079 = vpack.c.b16 %v1069, %v1067
      %v1080 = vpack.c.b16 %v1072, %v1070
      %v1081 = vpack.c.b16 %v1073, %v1071
      %v1091 = vsel %vm291, %v1049, 0
      %1093 = vmatprep.subr.bf16.mxu0 0
      %1094 = vmatpush1.bf16.msra.mxu0 0
      %1095 = vmatprep.subr.bf16.mxu0 0
      %1096 = vmatpush1.bf16.msra.mxu0 0
      %1097 = vmatprep.subr.bf16.mxu0 0
      %1098 = vmatpush1.bf16.msra.mxu0 0
      %1099 = vmatprep.subr.bf16.mxu0 0
      %1100 = vmatpush1.bf16.msra.mxu0 0
      %1101 = vmatprep.subr.bf16.mxu0 %v1081
      %1102 = vmatpush1.bf16.msra.mxu0 %v1080
      %1103 = vmatprep.subr.bf16.mxu0 %v1079
      %1104 = vmatpush1.bf16.msra.mxu0 %v1078
      %1105 = vmatprep.subr.bf16.mxu0 %v1077
      %1106 = vmatpush1.bf16.msra.mxu0 %v1076
      %1107 = vmatprep.subr.bf16.mxu0 %v1075
      %1108 = vmatpush1.bf16.msra.mxu0 %v1074
      %1109 = vmatprep.subr.bf16.mxu0 0
      %1110 = vmatpush2.bf16.msra.mxu0 0
      %1111 = vmatprep.subr.bf16.mxu0 0
      %1112 = vmatpush2.bf16.msra.mxu0 0
      %1113 = vmatprep.subr.bf16.mxu0 0
      %1114 = vmatpush2.bf16.msra.mxu0 0
      %1115 = vmatprep.subr.bf16.mxu0 0
      %1116 = vmatpush2.bf16.msra.mxu0 0
      %1117 = vmatprep.subr.bf16.mxu0 0
      %1118 = vmatpush2.bf16.msra.mxu0 0
      %1119 = vmatprep.subr.bf16.mxu0 0
      %1120 = vmatpush2.bf16.msra.mxu0 0
      %1121 = vmatprep.subr.bf16.mxu0 0
      %1122 = vmatpush2.bf16.msra.mxu0 0
      %1123 = vmatprep.subr.bf16.mxu0 0
      %1124 = vmatpush2.bf16.msra.mxu0 0
      %1125 = vmatprep.mubr.bf16.mxu0 0
      %1126 = vmatmul.mubr.bf16.gmra.mxu0 %v1091
      %v1127 = vpop.f32.mrf.mxu0
      %v1128 = vadd.f32 0.0, %v1127
      %v1129 = vpop.f32.mrf.mxu0
      %v1130 = vadd.f32 0.0, %v1129
      %v1131 = vpop.f32.mrf.mxu0
      %v1132 = vpop.f32.mrf.mxu0
      %1133 = vdwg.mxu0
      %v1134 = vadd.f32 %v1031, %v1128
      %v1135 = vadd.f32 %v1032, %v1130
      %v1136 = vld [vmem:[%s219 + $0x4] sm:$0x3]
      %s1137 = scalar_lea.vmem %s2, 512
      %v1138 = vld [vmem:[%s1137] sm:$0xff]
      %v1139 = vld [vmem:[%s1137 + $0x8] sm:$0xff]
      %v1140 = vld [vmem:[%s1137 + $0x10] sm:$0xff]
      %v1141 = vld [vmem:[%s1137 + $0x18] sm:$0xff]
      %v1142 = vld [vmem:[%s1137 + $0x20] sm:$0xff]
      %v1143 = vld [vmem:[%s1137 + $0x28] sm:$0xff]
      %v1144 = vld [vmem:[%s1137 + $0x30] sm:$0xff]
      %v1145 = vld [vmem:[%s1137 + $0x38] sm:$0xff]
      %v1154 = vunpack.c.l.b16 %v1138
      %v1155 = vunpack.c.h.b16 %v1138
      %v1156 = vunpack.c.l.b16 %v1139
      %v1157 = vunpack.c.h.b16 %v1139
      %v1158 = vunpack.c.l.b16 %v1140
      %v1159 = vunpack.c.h.b16 %v1140
      %v1160 = vunpack.c.l.b16 %v1141
      %v1161 = vunpack.c.h.b16 %v1141
      %v1162 = vunpack.c.l.b16 %v1142
      %v1163 = vunpack.c.h.b16 %v1142
      %v1164 = vunpack.c.l.b16 %v1143
      %v1165 = vunpack.c.h.b16 %v1143
      %v1166 = vunpack.c.l.b16 %v1144
      %v1167 = vunpack.c.h.b16 %v1144
      %v1168 = vunpack.c.l.b16 %v1145
      %v1169 = vunpack.c.h.b16 %v1145
      %v1170 = vpack.c.b16 %v1156, %v1154
      %v1171 = vpack.c.b16 %v1157, %v1155
      %v1172 = vpack.c.b16 %v1160, %v1158
      %v1173 = vpack.c.b16 %v1161, %v1159
      %v1174 = vpack.c.b16 %v1164, %v1162
      %v1175 = vpack.c.b16 %v1165, %v1163
      %v1176 = vpack.c.b16 %v1168, %v1166
      %v1177 = vpack.c.b16 %v1169, %v1167
      %v1187 = vsel %vm291, %v1136, 0
      %1189 = vmatprep.subr.bf16.mxu0 0
      %1190 = vmatpush1.bf16.msra.mxu0 0
      %1191 = vmatprep.subr.bf16.mxu0 0
      %1192 = vmatpush1.bf16.msra.mxu0 0
      %1193 = vmatprep.subr.bf16.mxu0 0
      %1194 = vmatpush1.bf16.msra.mxu0 0
      %1195 = vmatprep.subr.bf16.mxu0 0
      %1196 = vmatpush1.bf16.msra.mxu0 0
      %1197 = vmatprep.subr.bf16.mxu0 %v1177
      %1198 = vmatpush1.bf16.msra.mxu0 %v1176
      %1199 = vmatprep.subr.bf16.mxu0 %v1175
      %1200 = vmatpush1.bf16.msra.mxu0 %v1174
      %1201 = vmatprep.subr.bf16.mxu0 %v1173
      %1202 = vmatpush1.bf16.msra.mxu0 %v1172
      %1203 = vmatprep.subr.bf16.mxu0 %v1171
      %1204 = vmatpush1.bf16.msra.mxu0 %v1170
      %1205 = vmatprep.subr.bf16.mxu0 0
      %1206 = vmatpush2.bf16.msra.mxu0 0
      %1207 = vmatprep.subr.bf16.mxu0 0
      %1208 = vmatpush2.bf16.msra.mxu0 0
      %1209 = vmatprep.subr.bf16.mxu0 0
      %1210 = vmatpush2.bf16.msra.mxu0 0
      %1211 = vmatprep.subr.bf16.mxu0 0
      %1212 = vmatpush2.bf16.msra.mxu0 0
      %1213 = vmatprep.subr.bf16.mxu0 0
      %1214 = vmatpush2.bf16.msra.mxu0 0
      %1215 = vmatprep.subr.bf16.mxu0 0
      %1216 = vmatpush2.bf16.msra.mxu0 0
      %1217 = vmatprep.subr.bf16.mxu0 0
      %1218 = vmatpush2.bf16.msra.mxu0 0
      %1219 = vmatprep.subr.bf16.mxu0 0
      %1220 = vmatpush2.bf16.msra.mxu0 0
      %1221 = vmatprep.mubr.bf16.mxu0 0
      %1222 = vmatmul.mubr.bf16.gmra.mxu0 %v1187
      %v1223 = vpop.f32.mrf.mxu0
      %v1224 = vadd.f32 0.0, %v1223
      %v1225 = vpop.f32.mrf.mxu0
      %v1226 = vadd.f32 0.0, %v1225
      %v1227 = vpop.f32.mrf.mxu0
      %v1228 = vpop.f32.mrf.mxu0
      %1229 = vdwg.mxu0
      %v1230 = vadd.f32 %v1134, %v1224
      %v1231 = vadd.f32 %v1135, %v1226
      %v1232 = vld [vmem:[%s4] sm:$0x3]
      %v1234 = vlaneseq
      %v1235 = vshrl.u32 %v1234, 7
      %v1236 = vsub.s32 0, %v1235
      %v1237 = vrot.slane %v1232, %v1236
      %v1238 = vlaneseq
      %v1239 = vshrl.u32 %v1238, 7
      %v1240 = vsub.s32 1, %v1239
      %v1241 = vrot.slane %v1232, %v1240
      %v1244 = vadd.f32 %v1230, %v1237
      %v1245 = vadd.f32 %v1231, %v1241
      %v1246 = vmax.f32 %v330, 0.0
      %v1247 = vmax.f32 %v332, 0.0
      %v1248 = vmax.f32 %v1244, 0.0
      %v1249 = vmax.f32 %v1245, 0.0
      %v1250 = vpack.c.bf16 %v1246, %v1246
      %v1251 = vpack.c.bf16 %v1247, %v1247
      %v1252 = vpack.c.bf16 %v1248, %v1248
      %v1253 = vpack.c.bf16 %v1249, %v1249
      %v1258 = vcombine.low %v1250, %v1251
      %v1259 = vcombine.low %v1252, %v1253
      %v1261 = vunpack.c.l.s4 1983009808
      %v1262 = vunpack.c.0.s8 %v1261
      %v1263 = vlaneseq
      %v1264 = vshrl.u32 %v1263, 7
      %v1265 = vsub.s32 %v1262, %v1264
      %v1266 = vrot.slane %v1258, %v1265
      %v1268 = vunpack.c.l.s4 1983009808
      %v1269 = vunpack.c.0.s8 %v1268
      %v1270 = vlaneseq
      %v1271 = vshrl.u32 %v1270, 7
      %v1272 = vsub.s32 %v1269, %v1271
      %v1273 = vrot.slane %v1259, %v1272
      %v1274 = vcombine.low %v1266, %v1273
      %vm1276 = vcmask 1041408
      %vm1277 = vsmask.f32 1280
      %vm1278 = vmand %vm1276, %vm1277
      %vm1279 = vcmask 1043458
      %vm1280 = vsmask.f32 3328
      %vm1281 = vmand %vm1279, %vm1280
      %vm1282 = vmor %vm1281, %vm1278
      %vm1283 = vcmask 1045508
      %vm1284 = vsmask.f32 5376
      %vm1285 = vmand %vm1283, %vm1284
      %vm1286 = vmor %vm1285, %vm1282
      %vm1287 = vcmask 1047558
      %vm1288 = vsmask.f32 7424
      %vm1289 = vmand %vm1287, %vm1288
      %vm1290 = vmor %vm1289, %vm1286
      %v1291 = vld [vmem:[%s224] sm:$0xff]
      %v1292 = vsel %vm1290, %v1274, %v1291
      %1293 = vst [vmem:[%s224] sm:$0xff] %v1292
      %p1294 = scmp.lt.s32.totalorder %s16, 1
      %s1295 = scalar_select %p1294, %s16, 1
      %s1296 = smul.addr %s1295, 4
      %s1297 = smul.addr %s1296, 2
      %s1298 = scalar_lea.vmem %s5, %s1297
      // Predicated region
      $region41: #{lightweight_feat_forward.37} parent=39 // pred_check
        %p1299 = pneg %p144
      $region42: #{lightweight_feat_forward.37} parent=39 // pred_check_branch
        %1301 = sbr.rel (%p1299) target = $region44
      $region43: #{lightweight_feat_forward.37} parent=39 // pred_region
        _
      $region44: #{lightweight_feat_forward.37} parent=39 // pred_fallthru
        _
    $region40: #{lightweight_feat_forward.37} parent=5 // pred_fallthru
      _
    %p1302 = scmp.le.s32.totalorder 2, %s11
    // Predicated region
    $region45: #{lightweight_feat_forward.37} parent=5 // pred_check
      %p1303 = pneg %p1302
    $region46: #{lightweight_feat_forward.37} parent=5 // pred_check_branch
      %1305 = sbr.rel (%p1303) target = $region48
    $region47: #{lightweight_feat_forward.37} parent=5 // pred_region
      %s1306 = ssub.s32 %s11, 2
      // Predicated region
      $region49: #{lightweight_feat_forward.37} parent=47 // pred_check
        %p1307 = pneg %p150
      $region50: #{lightweight_feat_forward.37} parent=47 // pred_check_branch
        %1309 = sbr.rel (%p1307) target = $region52
      $region51: #{lightweight_feat_forward.37} parent=47 // pred_region
        %p1310 = scmp.lt.s32.totalorder %s17, 1
        %s1311 = scalar_select %p1310, %s17, 1
        %s1312 = smul.addr %s1311, 4
        %s1313 = smul.addr %s1312, 2
        %s1314 = scalar_lea.vmem %s5, %s1313
      $region52: #{lightweight_feat_forward.37} parent=47 // pred_fallthru
        _
    $region48: #{lightweight_feat_forward.37} parent=5 // pred_fallthru
      _
  $region6: #{lightweight_feat_forward.37} parent=0 // loop_footer
    %s15 = sadd.s32 1, %s11
  $region7: #{lightweight_feat_forward.37} parent=0 // loop_footer_branch
    %10 = sbr.rel target = $region3
  $region8: #{lightweight_feat_forward.37} parent=0 // loop_exit
    _

</llo_original>
